<compile_context>
chip_gen: v6e
topology: v6e:2x2x1
jax: 0.10.0
libtpu: 0.0.40
codegen_flags: <defaults>
</compile_context>

<pallas_src>
import math

import numpy as np

import jax
import jax.numpy as jnp
from jax.experimental import pallas as pl
from jax.experimental.pallas import tpu as pltpu

HID = 256            # LSTM hidden size
CONV_OC = 32         # output channels of every conv layer
FEAT = 32 * 3 * 3    # flattened conv features (requires 42x42 spatial input)

_VMEM = pl.BlockSpec(memory_space=pltpu.MemorySpace.VMEM)
_HBM = pl.BlockSpec(memory_space=pl.ANY)


# ----------------------------------------------------------------------------
# Fused forward kernel: 4 convs + LSTMCell + heads + softmax, all in VMEM.
# ----------------------------------------------------------------------------
def _fused_actor_critic_kernel(
        a0_ref, hx_ref, cx_ref,
        r1_ref, t1_ref, b1_ref,
        r2_ref, t2_ref, b2_ref,
        r3_ref, t3_ref, b3_ref,
        r4_ref, t4_ref, b4_ref,
        wcat_hbm, bcat_ref, wheads_ref, bheads_ref,
        v_ref, prob_ref, hout_ref, cout_ref,
        wcat_vmem, wcat_sem):
    # Start the DMA of the fused LSTM weight matrix (the dominant HBM bytes)
    # immediately; the conv chain compute hides it.
    wcat_copy = pltpu.make_async_copy(wcat_hbm, wcat_vmem, wcat_sem)
    wcat_copy.start()

    def conv_layer(a, r_ref, t_ref, b_ref):
        # a: (B*H_in, W_in*C_in) -> (B*H_out, W_out*C_out)
        rows_out = r_ref.shape[0] // 3                 # B * H_out
        # One-hot row gather (+ H zero-padding): row (i, b, oh) of g is padded
        # input row 2*oh + i - 1 of sample b.
        g = jnp.dot(r_ref[...], a, preferred_element_type=jnp.float32)
        acc = jnp.dot(g[0:rows_out, :], t_ref[0],
                      preferred_element_type=jnp.float32)
        acc = acc + jnp.dot(g[rows_out:2 * rows_out, :], t_ref[1],
                            preferred_element_type=jnp.float32)
        acc = acc + jnp.dot(g[2 * rows_out:3 * rows_out, :], t_ref[2],
                            preferred_element_type=jnp.float32)
        y = acc + b_ref[...]
        # ELU: exp is only evaluated on min(y, 0) so the discarded positive
        # branch never produces inf (expm1-vs-(exp-1) gap is below f32 noise).
        return jnp.where(y > 0, y, jnp.exp(jnp.minimum(y, 0.0)) - 1.0)

    a = conv_layer(a0_ref[...], r1_ref, t1_ref, b1_ref)   # (B*21, 21*32)
    a = conv_layer(a, r2_ref, t2_ref, b2_ref)             # (B*11, 11*32)
    a = conv_layer(a, r3_ref, t3_ref, b3_ref)             # (B*6,  6*32)
    a = conv_layer(a, r4_ref, t4_ref, b4_ref)             # (B*3,  3*32)

    batch = hx_ref.shape[0]
    h_rows = a.shape[0] // batch                          # 3
    hx = hx_ref[...]
    # Regroup the (B*3, 96) conv features into one (B, 288) row per sample and
    # append h, so the LSTM gates come from a single fused matmul on [x, h].
    xh_rows = []
    for b in range(batch):
        pieces = [a[b * h_rows + r: b * h_rows + r + 1, :]
                  for r in range(h_rows)]
        pieces.append(hx[b:b + 1, :])
        xh_rows.append(jnp.concatenate(pieces, axis=1))   # (1, FEAT + HID)
    xh = jnp.concatenate(xh_rows, axis=0)                 # (B, FEAT + HID)

    wcat_copy.wait()
    gates = jnp.dot(xh, wcat_vmem[...],
                    preferred_element_type=jnp.float32) + bcat_ref[...]
    i_g = jax.nn.sigmoid(gates[:, 0 * HID:1 * HID])
    f_g = jax.nn.sigmoid(gates[:, 1 * HID:2 * HID])
    g_g = jnp.tanh(gates[:, 2 * HID:3 * HID])
    o_g = jax.nn.sigmoid(gates[:, 3 * HID:4 * HID])
    c_new = f_g * cx_ref[...] + i_g * g_g
    h_new = o_g * jnp.tanh(c_new)
    cout_ref[...] = c_new
    hout_ref[...] = h_new

    # Fused critic + actor heads: one (HID, 1 + A) matmul, column 0 = value.
    ho = jnp.dot(h_new, wheads_ref[...],
                 preferred_element_type=jnp.float32) + bheads_ref[...]
    v_ref[...] = ho[:, 0:1]
    logit = ho[:, 1:]
    m = jnp.max(logit, axis=1, keepdims=True)
    e = jnp.exp(logit - m)
    prob_ref[...] = e / jnp.sum(e, axis=1, keepdims=True)


# ----------------------------------------------------------------------------
# Wrapper
# ----------------------------------------------------------------------------
def actor_critic_forward(fused, x, hx, cx):
    """x: (B, C, 42, 42) NCHW float32; hx, cx: (B, 256). Returns (v, prob, (h, c))."""
    B, C, H, W = x.shape
    assert fused["r1"].shape[1] == B * H, "fused params built for another batch size"
    a0 = x.transpose(0, 2, 3, 1).reshape(B * H, W * C)    # (B*H, W*C) layout
    A = fused["w_heads"].shape[1] - 1

    out_shape = (
        jax.ShapeDtypeStruct((B, 1), jnp.float32),        # value
        jax.ShapeDtypeStruct((B, A), jnp.float32),        # action probabilities
        jax.ShapeDtypeStruct((B, HID), jnp.float32),      # hx
        jax.ShapeDtypeStruct((B, HID), jnp.float32),      # cx
    )
    v, prob, h_new, c_new = pl.pallas_call(
        _fused_actor_critic_kernel,
        out_shape=out_shape,
        in_specs=[_VMEM] * 15 + [_HBM, _VMEM, _VMEM, _VMEM],
        out_specs=(_VMEM, _VMEM, _VMEM, _VMEM),
        scratch_shapes=[
            pltpu.VMEM((FEAT + HID, 4 * HID), jnp.float32),   # LSTM weight buffer
            pltpu.SemaphoreType.DMA(()),
        ],
        compiler_params=pltpu.CompilerParams(vmem_limit_bytes=32 * 1024 * 1024),
    )(a0, hx, cx,
      fused["r1"], fused["t1"], fused["b1"],
      fused["r2"], fused["t2"], fused["b2"],
      fused["r3"], fused["t3"], fused["b3"],
      fused["r4"], fused["t4"], fused["b4"],
      fused["w_cat"], fused["b_cat"], fused["w_heads"], fused["b_heads"])
    return v, prob, (h_new, c_new)


# ----------------------------------------------------------------------------
# One-time weight preprocessing (no per-step weight work remains)
# ----------------------------------------------------------------------------
def _fold_conv(w, b, h_in, w_in, batch):
    """Fold one stride-2 / pad-1 / 3x3 Conv2d into (R, T, bias_row) so that,
    with activations in a (B*H, W*C) layout, the layer is
        G = R @ A ;  Y = ELU(sum_i G[i-th block] @ T[i] + bias_row)."""
    oc, c, _, _ = w.shape
    h_out = (h_in - 1) // 2 + 1
    w_out = (w_in - 1) // 2 + 1
    wn = np.asarray(w, dtype=np.float32)
    bn = np.asarray(b, dtype=np.float32)

    rows = np.zeros((3 * batch * h_out, batch * h_in), np.float32)
    for i in range(3):
        for bb in range(batch):
            for oh in range(h_out):
                h = 2 * oh + i - 1
                if 0 <= h < h_in:
                    rows[i * batch * h_out + bb * h_out + oh, bb * h_in + h] = 1.0

    taps = np.zeros((3, w_in * c, w_out * oc), np.float32)
    for i in range(3):
        for ow in range(w_out):
            for j in range(3):
                wi = 2 * ow + j - 1
                if 0 <= wi < w_in:
                    taps[i, wi * c:(wi + 1) * c, ow * oc:(ow + 1) * oc] = wn[:, :, i, j].T

    bias_row = np.tile(bn, w_out).reshape(1, w_out * oc)
    return (jnp.asarray(rows), jnp.asarray(taps), jnp.asarray(bias_row),
            h_out, w_out)


def build_fused_params(params, batch, height=42, width=42):
    fused = {}
    h, w = height, width
    for idx in range(1, 5):
        r, t, brow, h, w = _fold_conv(params[f"c{idx}_w"], params[f"c{idx}_b"],
                                      h, w, batch)
        fused[f"r{idx}"], fused[f"t{idx}"], fused[f"b{idx}"] = r, t, brow
    oc = params["c4_w"].shape[0]
    assert h * w * oc == FEAT, "input spatial size must be 42x42"

    # LSTM: permute w_ih's columns from PyTorch's (c, h, w) flatten order to
    # the kernel's (h, w, c) order, stack [w_ih.T ; w_hh.T], pre-add biases.
    w_ih = np.asarray(params["w_ih"], np.float32)
    w_hh = np.asarray(params["w_hh"], np.float32)
    perm = np.empty(FEAT, np.int32)
    for cc in range(oc):
        for oh in range(h):
            for ow in range(w):
                perm[oh * (w * oc) + ow * oc + cc] = cc * (h * w) + oh * w + ow
    fused["w_cat"] = jnp.asarray(
        np.concatenate([w_ih[:, perm].T, w_hh.T], axis=0))       # (FEAT+HID, 4*HID)
    fused["b_cat"] = (params["b_ih"] + params["b_hh"]).reshape(1, 4 * HID)

    # Heads: critic column first, then actor columns.
    fused["w_heads"] = jnp.asarray(np.concatenate(
        [np.asarray(params["wc"], np.float32).T,
         np.asarray(params["wa"], np.float32).T], axis=1))       # (HID, 1+A)
    fused["b_heads"] = jnp.asarray(np.concatenate(
        [np.asarray(params["bc"], np.float32),
         np.asarray(params["ba"], np.float32)]).reshape(1, -1))
    return fused


# ----------------------------------------------------------------------------
# Deterministic parameter init (mirrors the PyTorch init scheme)
# ----------------------------------------------------------------------------
def _conv_init(key, oc, ic, k=3):
    fan_in = ic * k * k
    fan_out = k * k * oc
    bound = math.sqrt(6.0 / (fan_in + fan_out))
    w = jax.random.uniform(key, (oc, ic, k, k), jnp.float32, -bound, bound)
    return w, jnp.zeros((oc,), jnp.float32)


def _normalized_columns(key, shape, std):
    out = jax.random.normal(key, shape, jnp.float32)
    return out * std / jnp.sqrt(jnp.sum(out ** 2, axis=1, keepdims=True))


def init_params(key, num_inputs, action_space):
    ks = jax.random.split(key, 8)
    p = {}
    p["c1_w"], p["c1_b"] = _conv_init(ks[0], CONV_OC, num_inputs)
    p["c2_w"], p["c2_b"] = _conv_init(ks[1], CONV_OC, CONV_OC)
    p["c3_w"], p["c3_b"] = _conv_init(ks[2], CONV_OC, CONV_OC)
    p["c4_w"], p["c4_b"] = _conv_init(ks[3], CONV_OC, CONV_OC)
    k = 1.0 / math.sqrt(HID)   # PyTorch LSTMCell default (weights_init skips LSTM)
    p["w_ih"] = jax.random.uniform(ks[4], (4 * HID, FEAT), jnp.float32, -k, k)
    p["w_hh"] = jax.random.uniform(ks[5], (4 * HID, HID), jnp.float32, -k, k)
    p["b_ih"] = jnp.zeros((4 * HID,), jnp.float32)
    p["b_hh"] = jnp.zeros((4 * HID,), jnp.float32)
    p["wa"] = _normalized_columns(ks[6], (action_space, HID), 0.01)
    p["ba"] = jnp.zeros((action_space,), jnp.float32)
    p["wc"] = _normalized_columns(ks[7], (1, HID), 1.0)
    p["bc"] = jnp.zeros((1,), jnp.float32)
    return p


# ----------------------------------------------------------------------------
# Plain-JAX reference (for a numerical self-check)
# ----------------------------------------------------------------------------
def reference_forward(params, x, hx, cx):
    hi = jax.lax.Precision.HIGHEST

    def conv(z, w, b):
        y = jax.lax.conv_general_dilated(
            z, w, window_strides=(2, 2), padding=((1, 1), (1, 1)),
            dimension_numbers=("NCHW", "OIHW", "NCHW"), precision=hi)
        y = y + b.reshape(1, -1, 1, 1)
        return jnp.where(y > 0, y, jnp.expm1(jnp.minimum(y, 0.0)))

    z = conv(x, params["c1_w"], params["c1_b"])
    z = conv(z, params["c2_w"], params["c2_b"])
    z = conv(z, params["c3_w"], params["c3_b"])
    z = conv(z, params["c4_w"], params["c4_b"])
    feat = z.reshape(z.shape[0], -1)
    gates = (jnp.dot(feat, params["w_ih"].T, precision=hi)
             + jnp.dot(hx, params["w_hh"].T, precision=hi)
             + params["b_ih"] + params["b_hh"])
    i_g, f_g, g_g, o_g = jnp.split(gates, 4, axis=1)
    c = jax.nn.sigmoid(f_g) * cx + jax.nn.sigmoid(i_g) * jnp.tanh(g_g)
    h = jax.nn.sigmoid(o_g) * jnp.tanh(c)
    v = jnp.dot(h, params["wc"].T, precision=hi) + params["bc"]
    logit = jnp.dot(h, params["wa"].T, precision=hi) + params["ba"]
    return v, jax.nn.softmax(logit, axis=1), h, c


if __name__ == "__main__":
    num_inputs = 4
    action_space = 6
    B = 2
    H = W = 42   # 4 stride-2 convs -> 3x3, as required by view(-1, 32*3*3)

    key = jax.random.PRNGKey(0)
    kp, kx, kh, kc = jax.random.split(key, 4)
    params = init_params(kp, num_inputs, action_space)
    fused = build_fused_params(params, batch=B, height=H, width=W)

    x = jax.random.normal(kx, (B, num_inputs, H, W), jnp.float32)
    hx = 0.1 * jax.random.normal(kh, (B, HID), jnp.float32)
    cx = 0.1 * jax.random.normal(kc, (B, HID), jnp.float32)

    fwd = jax.jit(actor_critic_forward)
    v, prob, (hx_out, cx_out) = fwd(fused, x, hx, cx)
    jax.block_until_ready((v, prob, hx_out, cx_out))

    assert v.shape == (B, 1)
    assert prob.shape == (B, action_space)
    assert hx_out.shape == (B, HID) and cx_out.shape == (B, HID)

    # Numerical self-check against the plain-JAX reference.
    rv, rp, rh, rc = reference_forward(params, x, hx, cx)
    for got, want, name in ((v, rv, "v"), (prob, rp, "prob"),
                            (hx_out, rh, "hx"), (cx_out, rc, "cx")):
        err = float(jnp.max(jnp.abs(got - want)))
        assert err < 2e-2, f"{name} mismatch: max abs err {err}"

    print("KERNEL_OK")
</pallas_src>

<mosaic_0001>
module attributes {stable_mosaic.version = 11 : i64} {
  func.func @_fused_actor_critic_kernel(%arg0: memref<84x168xf32, #tpu.memory_space<vmem>>, %arg1: memref<2x256xf32, #tpu.memory_space<vmem>>, %arg2: memref<2x256xf32, #tpu.memory_space<vmem>>, %arg3: memref<126x84xf32, #tpu.memory_space<vmem>>, %arg4: memref<3x168x672xf32, #tpu.memory_space<vmem>>, %arg5: memref<1x672xf32, #tpu.memory_space<vmem>>, %arg6: memref<66x42xf32, #tpu.memory_space<vmem>>, %arg7: memref<3x672x352xf32, #tpu.memory_space<vmem>>, %arg8: memref<1x352xf32, #tpu.memory_space<vmem>>, %arg9: memref<36x22xf32, #tpu.memory_space<vmem>>, %arg10: memref<3x352x192xf32, #tpu.memory_space<vmem>>, %arg11: memref<1x192xf32, #tpu.memory_space<vmem>>, %arg12: memref<18x12xf32, #tpu.memory_space<vmem>>, %arg13: memref<3x192x96xf32, #tpu.memory_space<vmem>>, %arg14: memref<1x96xf32, #tpu.memory_space<vmem>>, %arg15: memref<544x1024xf32, #tpu.memory_space<any>>, %arg16: memref<1x1024xf32, #tpu.memory_space<vmem>>, %arg17: memref<256x7xf32, #tpu.memory_space<vmem>>, %arg18: memref<1x7xf32, #tpu.memory_space<vmem>>, %arg19: memref<2x1xf32, #tpu.memory_space<vmem>>, %arg20: memref<2x6xf32, #tpu.memory_space<vmem>>, %arg21: memref<2x256xf32, #tpu.memory_space<vmem>>, %arg22: memref<2x256xf32, #tpu.memory_space<vmem>>, %arg23: memref<544x1024xf32, #tpu.memory_space<vmem>>, %arg24: memref<!tpu.dma_semaphore, #tpu.memory_space<semaphore_mem>>) attributes {dimension_semantics = [], scalar_prefetch = 0 : i64, scratch_operands = 2 : i64, tpu.core_type = #tpu.core_type<tc>} {
    tpu.enqueue_dma source(%arg15 : memref<544x1024xf32, #tpu.memory_space<any>>) target(%arg23 : memref<544x1024xf32, #tpu.memory_space<vmem>>) target_semaphore(%arg24 : memref<!tpu.dma_semaphore, #tpu.memory_space<semaphore_mem>>)
    %c0 = arith.constant 0 : index
    %c0_0 = arith.constant 0 : index
    %0 = vector.load %arg0[%c0, %c0_0] : memref<84x168xf32, #tpu.memory_space<vmem>>, vector<84x168xf32>
    %c0_1 = arith.constant 0 : index
    %c0_2 = arith.constant 0 : index
    %1 = vector.load %arg3[%c0_1, %c0_2] : memref<126x84xf32, #tpu.memory_space<vmem>>, vector<126x84xf32>
    %cst = arith.constant dense<0.000000e+00> : vector<126x168xf32>
    %2 = tpu.matmul %1, %0, %cst {dimension_numbers = #tpu.dot_dimension_numbers<[1], [0], [0], [1], [0, 0, 1, 1], [], []>} : vector<126x84xf32>, vector<84x168xf32>, vector<126x168xf32> -> vector<126x168xf32>
    %3 = vector.extract_strided_slice %2 {offsets = [0, 0], sizes = [42, 168], strides = [1, 1]} : vector<126x168xf32> to vector<42x168xf32>
    %c0_3 = arith.constant 0 : index
    %c0_4 = arith.constant 0 : index
    %c0_5 = arith.constant 0 : index
    %4 = vector.load %arg4[%c0_3, %c0_4, %c0_5] : memref<3x168x672xf32, #tpu.memory_space<vmem>>, vector<1x168x672xf32>
    %5 = vector.shape_cast %4 : vector<1x168x672xf32> to vector<168x672xf32>
    %cst_6 = arith.constant dense<0.000000e+00> : vector<42x672xf32>
    %6 = tpu.matmul %3, %5, %cst_6 {dimension_numbers = #tpu.dot_dimension_numbers<[1], [0], [0], [1], [0, 0, 1, 1], [], []>} : vector<42x168xf32>, vector<168x672xf32>, vector<42x672xf32> -> vector<42x672xf32>
    %7 = vector.extract_strided_slice %2 {offsets = [42, 0], sizes = [42, 168], strides = [1, 1]} : vector<126x168xf32> to vector<42x168xf32>
    %c1 = arith.constant 1 : index
    %c0_7 = arith.constant 0 : index
    %c0_8 = arith.constant 0 : index
    %8 = vector.load %arg4[%c1, %c0_7, %c0_8] : memref<3x168x672xf32, #tpu.memory_space<vmem>>, vector<1x168x672xf32>
    %9 = vector.shape_cast %8 : vector<1x168x672xf32> to vector<168x672xf32>
    %cst_9 = arith.constant dense<0.000000e+00> : vector<42x672xf32>
    %10 = tpu.matmul %7, %9, %cst_9 {dimension_numbers = #tpu.dot_dimension_numbers<[1], [0], [0], [1], [0, 0, 1, 1], [], []>} : vector<42x168xf32>, vector<168x672xf32>, vector<42x672xf32> -> vector<42x672xf32>
    %11 = arith.addf %6, %10 : vector<42x672xf32>
    %12 = vector.extract_strided_slice %2 {offsets = [84, 0], sizes = [42, 168], strides = [1, 1]} : vector<126x168xf32> to vector<42x168xf32>
    %c2 = arith.constant 2 : index
    %c0_10 = arith.constant 0 : index
    %c0_11 = arith.constant 0 : index
    %13 = vector.load %arg4[%c2, %c0_10, %c0_11] : memref<3x168x672xf32, #tpu.memory_space<vmem>>, vector<1x168x672xf32>
    %14 = vector.shape_cast %13 : vector<1x168x672xf32> to vector<168x672xf32>
    %cst_12 = arith.constant dense<0.000000e+00> : vector<42x672xf32>
    %15 = tpu.matmul %12, %14, %cst_12 {dimension_numbers = #tpu.dot_dimension_numbers<[1], [0], [0], [1], [0, 0, 1, 1], [], []>} : vector<42x168xf32>, vector<168x672xf32>, vector<42x672xf32> -> vector<42x672xf32>
    %16 = arith.addf %11, %15 : vector<42x672xf32>
    %c0_13 = arith.constant 0 : index
    %c0_14 = arith.constant 0 : index
    %17 = vector.load %arg5[%c0_13, %c0_14] : memref<1x672xf32, #tpu.memory_space<vmem>>, vector<1x672xf32>
    %18 = vector.broadcast %17 : vector<1x672xf32> to vector<42x672xf32>
    %19 = arith.addf %16, %18 : vector<42x672xf32>
    %cst_15 = arith.constant 0.000000e+00 : f32
    %20 = vector.broadcast %cst_15 : f32 to vector<42x672xf32>
    %21 = arith.cmpf ogt, %19, %20 : vector<42x672xf32>
    %cst_16 = arith.constant 0.000000e+00 : f32
    %22 = vector.broadcast %cst_16 : f32 to vector<42x672xf32>
    %23 = arith.minimumf %19, %22 : vector<42x672xf32>
    %24 = math.exp %23 : vector<42x672xf32>
    %cst_17 = arith.constant 1.000000e+00 : f32
    %25 = vector.broadcast %cst_17 : f32 to vector<42x672xf32>
    %26 = arith.subf %24, %25 : vector<42x672xf32>
    %27 = arith.select %21, %19, %26 : vector<42x672xi1>, vector<42x672xf32>
    %c0_18 = arith.constant 0 : index
    %c0_19 = arith.constant 0 : index
    %28 = vector.load %arg6[%c0_18, %c0_19] : memref<66x42xf32, #tpu.memory_space<vmem>>, vector<66x42xf32>
    %cst_20 = arith.constant dense<0.000000e+00> : vector<66x672xf32>
    %29 = tpu.matmul %28, %27, %cst_20 {dimension_numbers = #tpu.dot_dimension_numbers<[1], [0], [0], [1], [0, 0, 1, 1], [], []>} : vector<66x42xf32>, vector<42x672xf32>, vector<66x672xf32> -> vector<66x672xf32>
    %30 = vector.extract_strided_slice %29 {offsets = [0, 0], sizes = [22, 672], strides = [1, 1]} : vector<66x672xf32> to vector<22x672xf32>
    %c0_21 = arith.constant 0 : index
    %c0_22 = arith.constant 0 : index
    %c0_23 = arith.constant 0 : index
    %31 = vector.load %arg7[%c0_21, %c0_22, %c0_23] : memref<3x672x352xf32, #tpu.memory_space<vmem>>, vector<1x672x352xf32>
    %32 = vector.shape_cast %31 : vector<1x672x352xf32> to vector<672x352xf32>
    %cst_24 = arith.constant dense<0.000000e+00> : vector<22x352xf32>
    %33 = tpu.matmul %30, %32, %cst_24 {dimension_numbers = #tpu.dot_dimension_numbers<[1], [0], [0], [1], [0, 0, 1, 1], [], []>} : vector<22x672xf32>, vector<672x352xf32>, vector<22x352xf32> -> vector<22x352xf32>
    %34 = vector.extract_strided_slice %29 {offsets = [22, 0], sizes = [22, 672], strides = [1, 1]} : vector<66x672xf32> to vector<22x672xf32>
    %c1_25 = arith.constant 1 : index
    %c0_26 = arith.constant 0 : index
    %c0_27 = arith.constant 0 : index
    %35 = vector.load %arg7[%c1_25, %c0_26, %c0_27] : memref<3x672x352xf32, #tpu.memory_space<vmem>>, vector<1x672x352xf32>
    %36 = vector.shape_cast %35 : vector<1x672x352xf32> to vector<672x352xf32>
    %cst_28 = arith.constant dense<0.000000e+00> : vector<22x352xf32>
    %37 = tpu.matmul %34, %36, %cst_28 {dimension_numbers = #tpu.dot_dimension_numbers<[1], [0], [0], [1], [0, 0, 1, 1], [], []>} : vector<22x672xf32>, vector<672x352xf32>, vector<22x352xf32> -> vector<22x352xf32>
    %38 = arith.addf %33, %37 : vector<22x352xf32>
    %39 = vector.extract_strided_slice %29 {offsets = [44, 0], sizes = [22, 672], strides = [1, 1]} : vector<66x672xf32> to vector<22x672xf32>
    %c2_29 = arith.constant 2 : index
    %c0_30 = arith.constant 0 : index
    %c0_31 = arith.constant 0 : index
    %40 = vector.load %arg7[%c2_29, %c0_30, %c0_31] : memref<3x672x352xf32, #tpu.memory_space<vmem>>, vector<1x672x352xf32>
    %41 = vector.shape_cast %40 : vector<1x672x352xf32> to vector<672x352xf32>
    %cst_32 = arith.constant dense<0.000000e+00> : vector<22x352xf32>
    %42 = tpu.matmul %39, %41, %cst_32 {dimension_numbers = #tpu.dot_dimension_numbers<[1], [0], [0], [1], [0, 0, 1, 1], [], []>} : vector<22x672xf32>, vector<672x352xf32>, vector<22x352xf32> -> vector<22x352xf32>
    %43 = arith.addf %38, %42 : vector<22x352xf32>
    %c0_33 = arith.constant 0 : index
    %c0_34 = arith.constant 0 : index
    %44 = vector.load %arg8[%c0_33, %c0_34] : memref<1x352xf32, #tpu.memory_space<vmem>>, vector<1x352xf32>
    %45 = vector.broadcast %44 : vector<1x352xf32> to vector<22x352xf32>
    %46 = arith.addf %43, %45 : vector<22x352xf32>
    %cst_35 = arith.constant 0.000000e+00 : f32
    %47 = vector.broadcast %cst_35 : f32 to vector<22x352xf32>
    %48 = arith.cmpf ogt, %46, %47 : vector<22x352xf32>
    %cst_36 = arith.constant 0.000000e+00 : f32
    %49 = vector.broadcast %cst_36 : f32 to vector<22x352xf32>
    %50 = arith.minimumf %46, %49 : vector<22x352xf32>
    %51 = math.exp %50 : vector<22x352xf32>
    %cst_37 = arith.constant 1.000000e+00 : f32
    %52 = vector.broadcast %cst_37 : f32 to vector<22x352xf32>
    %53 = arith.subf %51, %52 : vector<22x352xf32>
    %54 = arith.select %48, %46, %53 : vector<22x352xi1>, vector<22x352xf32>
    %c0_38 = arith.constant 0 : index
    %c0_39 = arith.constant 0 : index
    %55 = vector.load %arg9[%c0_38, %c0_39] : memref<36x22xf32, #tpu.memory_space<vmem>>, vector<36x22xf32>
    %cst_40 = arith.constant dense<0.000000e+00> : vector<36x352xf32>
    %56 = tpu.matmul %55, %54, %cst_40 {dimension_numbers = #tpu.dot_dimension_numbers<[1], [0], [0], [1], [0, 0, 1, 1], [], []>} : vector<36x22xf32>, vector<22x352xf32>, vector<36x352xf32> -> vector<36x352xf32>
    %57 = vector.extract_strided_slice %56 {offsets = [0, 0], sizes = [12, 352], strides = [1, 1]} : vector<36x352xf32> to vector<12x352xf32>
    %c0_41 = arith.constant 0 : index
    %c0_42 = arith.constant 0 : index
    %c0_43 = arith.constant 0 : index
    %58 = vector.load %arg10[%c0_41, %c0_42, %c0_43] : memref<3x352x192xf32, #tpu.memory_space<vmem>>, vector<1x352x192xf32>
    %59 = vector.shape_cast %58 : vector<1x352x192xf32> to vector<352x192xf32>
    %cst_44 = arith.constant dense<0.000000e+00> : vector<12x192xf32>
    %60 = tpu.matmul %57, %59, %cst_44 {dimension_numbers = #tpu.dot_dimension_numbers<[1], [0], [0], [1], [0, 0, 1, 1], [], []>} : vector<12x352xf32>, vector<352x192xf32>, vector<12x192xf32> -> vector<12x192xf32>
    %61 = vector.extract_strided_slice %56 {offsets = [12, 0], sizes = [12, 352], strides = [1, 1]} : vector<36x352xf32> to vector<12x352xf32>
    %c1_45 = arith.constant 1 : index
    %c0_46 = arith.constant 0 : index
    %c0_47 = arith.constant 0 : index
    %62 = vector.load %arg10[%c1_45, %c0_46, %c0_47] : memref<3x352x192xf32, #tpu.memory_space<vmem>>, vector<1x352x192xf32>
    %63 = vector.shape_cast %62 : vector<1x352x192xf32> to vector<352x192xf32>
    %cst_48 = arith.constant dense<0.000000e+00> : vector<12x192xf32>
    %64 = tpu.matmul %61, %63, %cst_48 {dimension_numbers = #tpu.dot_dimension_numbers<[1], [0], [0], [1], [0, 0, 1, 1], [], []>} : vector<12x352xf32>, vector<352x192xf32>, vector<12x192xf32> -> vector<12x192xf32>
    %65 = arith.addf %60, %64 : vector<12x192xf32>
    %66 = vector.extract_strided_slice %56 {offsets = [24, 0], sizes = [12, 352], strides = [1, 1]} : vector<36x352xf32> to vector<12x352xf32>
    %c2_49 = arith.constant 2 : index
    %c0_50 = arith.constant 0 : index
    %c0_51 = arith.constant 0 : index
    %67 = vector.load %arg10[%c2_49, %c0_50, %c0_51] : memref<3x352x192xf32, #tpu.memory_space<vmem>>, vector<1x352x192xf32>
    %68 = vector.shape_cast %67 : vector<1x352x192xf32> to vector<352x192xf32>
    %cst_52 = arith.constant dense<0.000000e+00> : vector<12x192xf32>
    %69 = tpu.matmul %66, %68, %cst_52 {dimension_numbers = #tpu.dot_dimension_numbers<[1], [0], [0], [1], [0, 0, 1, 1], [], []>} : vector<12x352xf32>, vector<352x192xf32>, vector<12x192xf32> -> vector<12x192xf32>
    %70 = arith.addf %65, %69 : vector<12x192xf32>
    %c0_53 = arith.constant 0 : index
    %c0_54 = arith.constant 0 : index
    %71 = vector.load %arg11[%c0_53, %c0_54] : memref<1x192xf32, #tpu.memory_space<vmem>>, vector<1x192xf32>
    %72 = vector.broadcast %71 : vector<1x192xf32> to vector<12x192xf32>
    %73 = arith.addf %70, %72 : vector<12x192xf32>
    %cst_55 = arith.constant 0.000000e+00 : f32
    %74 = vector.broadcast %cst_55 : f32 to vector<12x192xf32>
    %75 = arith.cmpf ogt, %73, %74 : vector<12x192xf32>
    %cst_56 = arith.constant 0.000000e+00 : f32
    %76 = vector.broadcast %cst_56 : f32 to vector<12x192xf32>
    %77 = arith.minimumf %73, %76 : vector<12x192xf32>
    %78 = math.exp %77 : vector<12x192xf32>
    %cst_57 = arith.constant 1.000000e+00 : f32
    %79 = vector.broadcast %cst_57 : f32 to vector<12x192xf32>
    %80 = arith.subf %78, %79 : vector<12x192xf32>
    %81 = arith.select %75, %73, %80 : vector<12x192xi1>, vector<12x192xf32>
    %c0_58 = arith.constant 0 : index
    %c0_59 = arith.constant 0 : index
    %82 = vector.load %arg12[%c0_58, %c0_59] : memref<18x12xf32, #tpu.memory_space<vmem>>, vector<18x12xf32>
    %cst_60 = arith.constant dense<0.000000e+00> : vector<18x192xf32>
    %83 = tpu.matmul %82, %81, %cst_60 {dimension_numbers = #tpu.dot_dimension_numbers<[1], [0], [0], [1], [0, 0, 1, 1], [], []>} : vector<18x12xf32>, vector<12x192xf32>, vector<18x192xf32> -> vector<18x192xf32>
    %84 = vector.extract_strided_slice %83 {offsets = [0, 0], sizes = [6, 192], strides = [1, 1]} : vector<18x192xf32> to vector<6x192xf32>
    %c0_61 = arith.constant 0 : index
    %c0_62 = arith.constant 0 : index
    %c0_63 = arith.constant 0 : index
    %85 = vector.load %arg13[%c0_61, %c0_62, %c0_63] : memref<3x192x96xf32, #tpu.memory_space<vmem>>, vector<1x192x96xf32>
    %86 = vector.shape_cast %85 : vector<1x192x96xf32> to vector<192x96xf32>
    %cst_64 = arith.constant dense<0.000000e+00> : vector<6x96xf32>
    %87 = tpu.matmul %84, %86, %cst_64 {dimension_numbers = #tpu.dot_dimension_numbers<[1], [0], [0], [1], [0, 0, 1, 1], [], []>} : vector<6x192xf32>, vector<192x96xf32>, vector<6x96xf32> -> vector<6x96xf32>
    %88 = vector.extract_strided_slice %83 {offsets = [6, 0], sizes = [6, 192], strides = [1, 1]} : vector<18x192xf32> to vector<6x192xf32>
    %c1_65 = arith.constant 1 : index
    %c0_66 = arith.constant 0 : index
    %c0_67 = arith.constant 0 : index
    %89 = vector.load %arg13[%c1_65, %c0_66, %c0_67] : memref<3x192x96xf32, #tpu.memory_space<vmem>>, vector<1x192x96xf32>
    %90 = vector.shape_cast %89 : vector<1x192x96xf32> to vector<192x96xf32>
    %cst_68 = arith.constant dense<0.000000e+00> : vector<6x96xf32>
    %91 = tpu.matmul %88, %90, %cst_68 {dimension_numbers = #tpu.dot_dimension_numbers<[1], [0], [0], [1], [0, 0, 1, 1], [], []>} : vector<6x192xf32>, vector<192x96xf32>, vector<6x96xf32> -> vector<6x96xf32>
    %92 = arith.addf %87, %91 : vector<6x96xf32>
    %93 = vector.extract_strided_slice %83 {offsets = [12, 0], sizes = [6, 192], strides = [1, 1]} : vector<18x192xf32> to vector<6x192xf32>
    %c2_69 = arith.constant 2 : index
    %c0_70 = arith.constant 0 : index
    %c0_71 = arith.constant 0 : index
    %94 = vector.load %arg13[%c2_69, %c0_70, %c0_71] : memref<3x192x96xf32, #tpu.memory_space<vmem>>, vector<1x192x96xf32>
    %95 = vector.shape_cast %94 : vector<1x192x96xf32> to vector<192x96xf32>
    %cst_72 = arith.constant dense<0.000000e+00> : vector<6x96xf32>
    %96 = tpu.matmul %93, %95, %cst_72 {dimension_numbers = #tpu.dot_dimension_numbers<[1], [0], [0], [1], [0, 0, 1, 1], [], []>} : vector<6x192xf32>, vector<192x96xf32>, vector<6x96xf32> -> vector<6x96xf32>
    %97 = arith.addf %92, %96 : vector<6x96xf32>
    %c0_73 = arith.constant 0 : index
    %c0_74 = arith.constant 0 : index
    %98 = vector.load %arg14[%c0_73, %c0_74] : memref<1x96xf32, #tpu.memory_space<vmem>>, vector<1x96xf32>
    %99 = vector.broadcast %98 : vector<1x96xf32> to vector<6x96xf32>
    %100 = arith.addf %97, %99 : vector<6x96xf32>
    %cst_75 = arith.constant 0.000000e+00 : f32
    %101 = vector.broadcast %cst_75 : f32 to vector<6x96xf32>
    %102 = arith.cmpf ogt, %100, %101 : vector<6x96xf32>
    %cst_76 = arith.constant 0.000000e+00 : f32
    %103 = vector.broadcast %cst_76 : f32 to vector<6x96xf32>
    %104 = arith.minimumf %100, %103 : vector<6x96xf32>
    %105 = math.exp %104 : vector<6x96xf32>
    %cst_77 = arith.constant 1.000000e+00 : f32
    %106 = vector.broadcast %cst_77 : f32 to vector<6x96xf32>
    %107 = arith.subf %105, %106 : vector<6x96xf32>
    %108 = arith.select %102, %100, %107 : vector<6x96xi1>, vector<6x96xf32>
    %c0_78 = arith.constant 0 : index
    %c0_79 = arith.constant 0 : index
    %109 = vector.load %arg1[%c0_78, %c0_79] : memref<2x256xf32, #tpu.memory_space<vmem>>, vector<2x256xf32>
    %110 = vector.extract_strided_slice %108 {offsets = [0, 0], sizes = [1, 96], strides = [1, 1]} : vector<6x96xf32> to vector<1x96xf32>
    %111 = vector.extract_strided_slice %108 {offsets = [1, 0], sizes = [1, 96], strides = [1, 1]} : vector<6x96xf32> to vector<1x96xf32>
    %112 = vector.extract_strided_slice %108 {offsets = [2, 0], sizes = [1, 96], strides = [1, 1]} : vector<6x96xf32> to vector<1x96xf32>
    %113 = vector.extract_strided_slice %109 {offsets = [0, 0], sizes = [1, 256], strides = [1, 1]} : vector<2x256xf32> to vector<1x256xf32>
    %114 = tpu.concatenate %110, %111, %112, %113 in 1 : vector<1x96xf32>, vector<1x96xf32>, vector<1x96xf32>, vector<1x256xf32> -> vector<1x544xf32>
    %115 = vector.extract_strided_slice %108 {offsets = [3, 0], sizes = [1, 96], strides = [1, 1]} : vector<6x96xf32> to vector<1x96xf32>
    %116 = vector.extract_strided_slice %108 {offsets = [4, 0], sizes = [1, 96], strides = [1, 1]} : vector<6x96xf32> to vector<1x96xf32>
    %117 = vector.extract_strided_slice %108 {offsets = [5, 0], sizes = [1, 96], strides = [1, 1]} : vector<6x96xf32> to vector<1x96xf32>
    %118 = vector.extract_strided_slice %109 {offsets = [1, 0], sizes = [1, 256], strides = [1, 1]} : vector<2x256xf32> to vector<1x256xf32>
    %119 = tpu.concatenate %115, %116, %117, %118 in 1 : vector<1x96xf32>, vector<1x96xf32>, vector<1x96xf32>, vector<1x256xf32> -> vector<1x544xf32>
    %120 = tpu.concatenate %114, %119 in 0 : vector<1x544xf32>, vector<1x544xf32> -> vector<2x544xf32>
    tpu.wait_dma2 semaphore(%arg24 : memref<!tpu.dma_semaphore, #tpu.memory_space<semaphore_mem>>) src(%arg15 : memref<544x1024xf32, #tpu.memory_space<any>>) dst(%arg23 : memref<544x1024xf32, #tpu.memory_space<vmem>>)
    %c0_80 = arith.constant 0 : index
    %c0_81 = arith.constant 0 : index
    %121 = vector.load %arg23[%c0_80, %c0_81] : memref<544x1024xf32, #tpu.memory_space<vmem>>, vector<544x1024xf32>
    %cst_82 = arith.constant dense<0.000000e+00> : vector<2x1024xf32>
    %122 = tpu.matmul %120, %121, %cst_82 {dimension_numbers = #tpu.dot_dimension_numbers<[1], [0], [0], [1], [0, 0, 1, 1], [], []>} : vector<2x544xf32>, vector<544x1024xf32>, vector<2x1024xf32> -> vector<2x1024xf32>
    %c0_83 = arith.constant 0 : index
    %c0_84 = arith.constant 0 : index
    %123 = vector.load %arg16[%c0_83, %c0_84] : memref<1x1024xf32, #tpu.memory_space<vmem>>, vector<1x1024xf32>
    %124 = vector.broadcast %123 : vector<1x1024xf32> to vector<2x1024xf32>
    %125 = arith.addf %122, %124 : vector<2x1024xf32>
    %126 = vector.extract_strided_slice %125 {offsets = [0, 0], sizes = [2, 256], strides = [1, 1]} : vector<2x1024xf32> to vector<2x256xf32>
    %127 = arith.negf %126 : vector<2x256xf32>
    %128 = math.exp %127 : vector<2x256xf32>
    %cst_85 = arith.constant 1.000000e+00 : f32
    %129 = vector.broadcast %cst_85 : f32 to vector<2x256xf32>
    %130 = arith.addf %129, %128 : vector<2x256xf32>
    %131 = arith.divf %129, %130 : vector<2x256xf32>
    %132 = vector.extract_strided_slice %125 {offsets = [0, 256], sizes = [2, 256], strides = [1, 1]} : vector<2x1024xf32> to vector<2x256xf32>
    %133 = arith.negf %132 : vector<2x256xf32>
    %134 = math.exp %133 : vector<2x256xf32>
    %cst_86 = arith.constant 1.000000e+00 : f32
    %135 = vector.broadcast %cst_86 : f32 to vector<2x256xf32>
    %136 = arith.addf %135, %134 : vector<2x256xf32>
    %137 = arith.divf %135, %136 : vector<2x256xf32>
    %138 = vector.extract_strided_slice %125 {offsets = [0, 512], sizes = [2, 256], strides = [1, 1]} : vector<2x1024xf32> to vector<2x256xf32>
    %139 = math.tanh %138 : vector<2x256xf32>
    %140 = vector.extract_strided_slice %125 {offsets = [0, 768], sizes = [2, 256], strides = [1, 1]} : vector<2x1024xf32> to vector<2x256xf32>
    %141 = arith.negf %140 : vector<2x256xf32>
    %142 = math.exp %141 : vector<2x256xf32>
    %cst_87 = arith.constant 1.000000e+00 : f32
    %143 = vector.broadcast %cst_87 : f32 to vector<2x256xf32>
    %144 = arith.addf %143, %142 : vector<2x256xf32>
    %145 = arith.divf %143, %144 : vector<2x256xf32>
    %c0_88 = arith.constant 0 : index
    %c0_89 = arith.constant 0 : index
    %146 = vector.load %arg2[%c0_88, %c0_89] : memref<2x256xf32, #tpu.memory_space<vmem>>, vector<2x256xf32>
    %147 = arith.mulf %137, %146 : vector<2x256xf32>
    %148 = arith.mulf %131, %139 : vector<2x256xf32>
    %149 = arith.addf %147, %148 : vector<2x256xf32>
    %150 = math.tanh %149 : vector<2x256xf32>
    %151 = arith.mulf %145, %150 : vector<2x256xf32>
    %c0_90 = arith.constant 0 : index
    %c0_91 = arith.constant 0 : index
    %152 = vector.load %arg22[%c0_90, %c0_91] : memref<2x256xf32, #tpu.memory_space<vmem>>, vector<2x256xf32>
    tpu.vector_store %arg22[%c0_90, %c0_91], %149 {strides = array<i32>} : memref<2x256xf32, #tpu.memory_space<vmem>>, vector<2x256xf32>,
    %c0_92 = arith.constant 0 : index
    %c0_93 = arith.constant 0 : index
    %153 = vector.load %arg21[%c0_92, %c0_93] : memref<2x256xf32, #tpu.memory_space<vmem>>, vector<2x256xf32>
    tpu.vector_store %arg21[%c0_92, %c0_93], %151 {strides = array<i32>} : memref<2x256xf32, #tpu.memory_space<vmem>>, vector<2x256xf32>,
    %c0_94 = arith.constant 0 : index
    %c0_95 = arith.constant 0 : index
    %154 = vector.load %arg17[%c0_94, %c0_95] : memref<256x7xf32, #tpu.memory_space<vmem>>, vector<256x7xf32>
    %cst_96 = arith.constant dense<0.000000e+00> : vector<2x7xf32>
    %155 = tpu.matmul %151, %154, %cst_96 {dimension_numbers = #tpu.dot_dimension_numbers<[1], [0], [0], [1], [0, 0, 1, 1], [], []>} : vector<2x256xf32>, vector<256x7xf32>, vector<2x7xf32> -> vector<2x7xf32>
    %c0_97 = arith.constant 0 : index
    %c0_98 = arith.constant 0 : index
    %156 = vector.load %arg18[%c0_97, %c0_98] : memref<1x7xf32, #tpu.memory_space<vmem>>, vector<1x7xf32>
    %157 = vector.broadcast %156 : vector<1x7xf32> to vector<2x7xf32>
    %158 = arith.addf %155, %157 : vector<2x7xf32>
    %159 = vector.extract_strided_slice %158 {offsets = [0, 0], sizes = [2, 1], strides = [1, 1]} : vector<2x7xf32> to vector<2x1xf32>
    %c0_99 = arith.constant 0 : index
    %c0_100 = arith.constant 0 : index
    %160 = vector.load %arg19[%c0_99, %c0_100] : memref<2x1xf32, #tpu.memory_space<vmem>>, vector<2x1xf32>
    tpu.vector_store %arg19[%c0_99, %c0_100], %159 {strides = array<i32>} : memref<2x1xf32, #tpu.memory_space<vmem>>, vector<2x1xf32>,
    %161 = vector.extract_strided_slice %158 {offsets = [0, 1], sizes = [2, 6], strides = [1, 1]} : vector<2x7xf32> to vector<2x6xf32>
    %cst_101 = arith.constant dense<0xFF800000> : vector<2xf32>
    %162 = vector.multi_reduction <maximumf>, %161, %cst_101 [1] : vector<2x6xf32> to vector<2xf32>
    %163 = vector.shape_cast %162 : vector<2xf32> to vector<2x1xf32>
    %164 = vector.broadcast %163 : vector<2x1xf32> to vector<2x6xf32>
    %165 = arith.subf %161, %164 : vector<2x6xf32>
    %166 = math.exp %165 : vector<2x6xf32>
    %cst_102 = arith.constant dense<0.000000e+00> : vector<2xf32>
    %167 = vector.multi_reduction <add>, %166, %cst_102 [1] : vector<2x6xf32> to vector<2xf32>
    %168 = vector.shape_cast %167 : vector<2xf32> to vector<2x1xf32>
    %169 = vector.broadcast %168 : vector<2x1xf32> to vector<2x6xf32>
    %170 = arith.divf %166, %169 : vector<2x6xf32>
    %c0_103 = arith.constant 0 : index
    %c0_104 = arith.constant 0 : index
    %171 = vector.load %arg20[%c0_103, %c0_104] : memref<2x6xf32, #tpu.memory_space<vmem>>, vector<2x6xf32>
    tpu.vector_store %arg20[%c0_103, %c0_104], %170 {strides = array<i32>} : memref<2x6xf32, #tpu.memory_space<vmem>>, vector<2x6xf32>,
    return
  }
}

</mosaic_0001>

<llo_original>
// kernel: actor_critic_forward.1
$region0: #{actor_critic_forward.1}
  #allocation0 [shape = 'u32[]', space=smem, size = 0x4, offset = 0x4, fixed_abs, tag = 'smem constant byte address 0x4 - core index']
  #allocation1 [shape = 'u32[144,128]{1,0:T(1,128)}', space=vmem, size = 0x12000, scoped, tag = 'internal scratch']
  #allocation2 [shape = 'f32[544,1024]{1,0:T(8,128)}', space=vmem, size = 0x220000, scoped, tag = 'scratch operand']
  #allocation3 [shape = 's32[1]{0}', space=sflag, size = 0x4, scoped, tag = 'scratch operand']
  #allocation13 [shape = 's32[]', space=sflag, size = 0x4, offset = 0, fixed_abs, tag = 'sflag constant byte address 0x0 - dummy sync flag']
  #allocation14 [shape = 's32[]', space=sflag, size = 0x4, offset = 0, fixed_abs, tag = 'sflag constant byte address 0x0 - dummy sync flag']
  #allocation15 [shape = 'u32[]', space=smem, size = 0x4, offset = 0x44, fixed_abs, tag = 'smem constant byte address 0x44 - assertion arg 0']
  #allocation16 [shape = 'u32[]', space=smem, size = 0x4, offset = 0x48, fixed_abs, tag = 'smem constant byte address 0x48 - assertion arg 1']
  %s0 = inlined_call_operand.vmem [shape: f32[84,168], index: 0, kind: input, shape index: {}]
  %s1 = inlined_call_operand.vmem [shape: f32[2,256], index: 1, kind: input, shape index: {}]
  %s2 = inlined_call_operand.vmem [shape: f32[2,256], index: 2, kind: input, shape index: {}]
  %s3 = inlined_call_operand.vmem [shape: f32[126,84], index: 3, kind: input, shape index: {}]
  %s4 = inlined_call_operand.hbm [shape: f32[3,168,672], index: 4, kind: input, shape index: {}]
  %s5 = inlined_call_operand.vmem [shape: f32[1,672], index: 5, kind: input, shape index: {}]
  %s6 = inlined_call_operand.vmem [shape: f32[66,42], index: 6, kind: input, shape index: {}]
  %s7 = inlined_call_operand.vmem [shape: f32[3,672,352], index: 7, kind: input, shape index: {}]
  %s8 = inlined_call_operand.vmem [shape: f32[1,352], index: 8, kind: input, shape index: {}]
  %s9 = inlined_call_operand.vmem [shape: f32[36,22], index: 9, kind: input, shape index: {}]
  %s10 = inlined_call_operand.vmem [shape: f32[3,352,192], index: 10, kind: input, shape index: {}]
  %s11 = inlined_call_operand.vmem [shape: f32[1,192], index: 11, kind: input, shape index: {}]
  %s12 = inlined_call_operand.vmem [shape: f32[18,12], index: 12, kind: input, shape index: {}]
  %s13 = inlined_call_operand.hbm [shape: f32[3,192,96], index: 13, kind: input, shape index: {}]
  %s14 = inlined_call_operand.vmem [shape: f32[1,96], index: 14, kind: input, shape index: {}]
  %s15 = inlined_call_operand.hbm [shape: f32[544,1024], index: 15, kind: input, shape index: {}]
  %s16 = inlined_call_operand.vmem [shape: f32[1,1024], index: 16, kind: input, shape index: {}]
  %s17 = inlined_call_operand.vmem [shape: f32[256,7], index: 17, kind: input, shape index: {}]
  %s18 = inlined_call_operand.vmem [shape: f32[1,7], index: 18, kind: input, shape index: {}]
  %s19 = inlined_call_operand.vmem [shape: f32[2,1], index: 19, kind: output, shape index: {0}]
  %s20 = inlined_call_operand.hbm [shape: f32[2,6], index: 20, kind: output, shape index: {1}]
  %s21 = inlined_call_operand.hbm [shape: f32[2,256], index: 21, kind: output, shape index: {2}]
  %s22 = inlined_call_operand.hbm [shape: f32[2,256], index: 22, kind: output, shape index: {3}]
  %23 = xla_tuple %s19, %s20, %s21, %s22
  %s24 = sld [smem:[#allocation0]]
  $region118: #{actor_critic_forward.1} parent=0
    _
  %s26 = ssub.s32 1, %s24
  %s27 = scalar_select 0, %s26, %s24
  $region1: #{actor_critic_forward.1} parent=0
    #allocation4 [shape = 'u8[1548288]{0}', space=vmem, size = 0x17a000, scoped, tag = 'input window, operand 4, single buffered']
    #allocation5 [shape = 's32[1]{0}', space=sflag, size = 0x4, scoped, tag = 'scoped memory for actor_critic_forward.1']
    #allocation6 [shape = 's32[1]{0}', space=sflag, size = 0x4, scoped, tag = 'scoped memory for actor_critic_forward.1']
    #allocation7 [shape = 'u8[294912]{0}', space=vmem, size = 0x48000, scoped, tag = 'input window, operand 13, single buffered']
    #allocation8 [shape = 's32[1]{0}', space=sflag, size = 0x4, scoped, tag = 'scoped memory for actor_critic_forward.1']
    #allocation9 [shape = 'u8[1024]{0}', space=vmem, size = 0x400, scoped, tag = 'output window, operand 1, single buffered']
    #allocation10 [shape = 'u8[2048]{0}', space=vmem, size = 0x800, scoped, tag = 'output window, operand 2, single buffered']
    #allocation11 [shape = 's32[1]{0}', space=sflag, size = 0x4, scoped, tag = 'scoped memory for actor_critic_forward.1']
    #allocation12 [shape = 'u8[2048]{0}', space=vmem, size = 0x800, scoped, tag = 'output window, operand 3, single buffered']
    %28 = vsyncpa [#allocation5], 0
    %29 = vsyncpa [#allocation8], 0
    %30 = vsyncpa [#allocation6], 0
    %31 = vsyncpa [#allocation11], 0
    // Predicated region
    $region2: #{actor_critic_forward.1} parent=1 // pred_check
      _
    $region3: #{actor_critic_forward.1} parent=1 // pred_check_branch
      %33 = sbr.rel (0) target = $region5
    $region4: #{actor_critic_forward.1} parent=1 // pred_region
      _
    $region5: #{actor_critic_forward.1} parent=1 // pred_fallthru
      _
    // Predicated region
    $region6: #{actor_critic_forward.1} parent=1 // pred_check
      _
    $region7: #{actor_critic_forward.1} parent=1 // pred_check_branch
      %35 = sbr.rel (0) target = $region9
    $region8: #{actor_critic_forward.1} parent=1 // pred_region
      _
    $region9: #{actor_critic_forward.1} parent=1 // pred_fallthru
      _
    // Predicated region
    $region10: #{actor_critic_forward.1} parent=1 // pred_check
      _
    $region11: #{actor_critic_forward.1} parent=1 // pred_check_branch
      %37 = sbr.rel (0) target = $region13
    $region12: #{actor_critic_forward.1} parent=1 // pred_region
      _
    $region13: #{actor_critic_forward.1} parent=1 // pred_fallthru
      _
    // Predicated region
    $region14: #{actor_critic_forward.1} parent=1 // pred_check
      _
    $region15: #{actor_critic_forward.1} parent=1 // pred_check_branch
      %39 = sbr.rel (0) target = $region17
    $region16: #{actor_critic_forward.1} parent=1 // pred_region
      _
    $region17: #{actor_critic_forward.1} parent=1 // pred_fallthru
      _
    // Predicated region
    $region18: #{actor_critic_forward.1} parent=1 // pred_check
      _
    $region19: #{actor_critic_forward.1} parent=1 // pred_check_branch
      %41 = sbr.rel (0) target = $region21
    $region20: #{actor_critic_forward.1} parent=1 // pred_region
      %s43 = ssub.s32 48384, 48384
      %44 = vsyncadd [#allocation5], %s43
      %s45 = sshll.u32 [#allocation4], 4
      %s46 = int_to_ptr.vmem [resolvable:$true] %s45
      %51 = dma.hbm_to_vmem [thread:$0]  %s4, 48384, %s46, [#allocation5], 768, 768, 48
    $region21: #{actor_critic_forward.1} parent=1 // pred_fallthru
      _
    // Predicated region
    $region22: #{actor_critic_forward.1} parent=1 // pred_check
      _
    $region23: #{actor_critic_forward.1} parent=1 // pred_check_branch
      %53 = sbr.rel (0) target = $region25
    $region24: #{actor_critic_forward.1} parent=1 // pred_region
      _
    $region25: #{actor_critic_forward.1} parent=1 // pred_fallthru
      _
    // Predicated region
    $region26: #{actor_critic_forward.1} parent=1 // pred_check
      _
    $region27: #{actor_critic_forward.1} parent=1 // pred_check_branch
      %55 = sbr.rel (0) target = $region29
    $region28: #{actor_critic_forward.1} parent=1 // pred_region
      _
    $region29: #{actor_critic_forward.1} parent=1 // pred_fallthru
      _
    // Predicated region
    $region30: #{actor_critic_forward.1} parent=1 // pred_check
      _
    $region31: #{actor_critic_forward.1} parent=1 // pred_check_branch
      %57 = sbr.rel (0) target = $region33
    $region32: #{actor_critic_forward.1} parent=1 // pred_region
      _
    $region33: #{actor_critic_forward.1} parent=1 // pred_fallthru
      _
    // Predicated region
    $region34: #{actor_critic_forward.1} parent=1 // pred_check
      _
    $region35: #{actor_critic_forward.1} parent=1 // pred_check_branch
      %59 = sbr.rel (0) target = $region37
    $region36: #{actor_critic_forward.1} parent=1 // pred_region
      _
    $region37: #{actor_critic_forward.1} parent=1 // pred_fallthru
      _
    // Predicated region
    $region38: #{actor_critic_forward.1} parent=1 // pred_check
      _
    $region39: #{actor_critic_forward.1} parent=1 // pred_check_branch
      %61 = sbr.rel (0) target = $region41
    $region40: #{actor_critic_forward.1} parent=1 // pred_region
      _
    $region41: #{actor_critic_forward.1} parent=1 // pred_fallthru
      _
    // Predicated region
    $region42: #{actor_critic_forward.1} parent=1 // pred_check
      _
    $region43: #{actor_critic_forward.1} parent=1 // pred_check_branch
      %63 = sbr.rel (0) target = $region45
    $region44: #{actor_critic_forward.1} parent=1 // pred_region
      _
    $region45: #{actor_critic_forward.1} parent=1 // pred_fallthru
      _
    // Predicated region
    $region46: #{actor_critic_forward.1} parent=1 // pred_check
      _
    $region47: #{actor_critic_forward.1} parent=1 // pred_check_branch
      %65 = sbr.rel (0) target = $region49
    $region48: #{actor_critic_forward.1} parent=1 // pred_region
      _
    $region49: #{actor_critic_forward.1} parent=1 // pred_fallthru
      _
    // Predicated region
    $region50: #{actor_critic_forward.1} parent=1 // pred_check
      _
    $region51: #{actor_critic_forward.1} parent=1 // pred_check_branch
      %67 = sbr.rel (0) target = $region53
    $region52: #{actor_critic_forward.1} parent=1 // pred_region
      _
    $region53: #{actor_critic_forward.1} parent=1 // pred_fallthru
      _
    // Predicated region
    $region54: #{actor_critic_forward.1} parent=1 // pred_check
      _
    $region55: #{actor_critic_forward.1} parent=1 // pred_check_branch
      %69 = sbr.rel (0) target = $region57
    $region56: #{actor_critic_forward.1} parent=1 // pred_region
      %s71 = ssub.s32 9216, 9216
      %72 = vsyncadd [#allocation8], %s71
      %s73 = sshll.u32 [#allocation7], 4
      %s74 = int_to_ptr.vmem [resolvable:$true] %s73
      %79 = dma.hbm_to_vmem [thread:$0]  %s13, 9216, %s74, [#allocation8], 128, 128, 8
    $region57: #{actor_critic_forward.1} parent=1 // pred_fallthru
      _
    // Predicated region
    $region58: #{actor_critic_forward.1} parent=1 // pred_check
      _
    $region59: #{actor_critic_forward.1} parent=1 // pred_check_branch
      %81 = sbr.rel (0) target = $region61
    $region60: #{actor_critic_forward.1} parent=1 // pred_region
      _
    $region61: #{actor_critic_forward.1} parent=1 // pred_fallthru
      _
    // Predicated region
    $region62: #{actor_critic_forward.1} parent=1 // pred_check
      _
    $region63: #{actor_critic_forward.1} parent=1 // pred_check_branch
      %83 = sbr.rel (0) target = $region65
    $region64: #{actor_critic_forward.1} parent=1 // pred_region
      _
    $region65: #{actor_critic_forward.1} parent=1 // pred_fallthru
      _
    // Predicated region
    $region66: #{actor_critic_forward.1} parent=1 // pred_check
      _
    $region67: #{actor_critic_forward.1} parent=1 // pred_check_branch
      %85 = sbr.rel (0) target = $region69
    $region68: #{actor_critic_forward.1} parent=1 // pred_region
      _
    $region69: #{actor_critic_forward.1} parent=1 // pred_fallthru
      _
    // Predicated region
    $region70: #{actor_critic_forward.1} parent=1 // pred_check
      _
    $region71: #{actor_critic_forward.1} parent=1 // pred_check_branch
      %87 = sbr.rel (0) target = $region73
    $region72: #{actor_critic_forward.1} parent=1 // pred_region
      _
    $region73: #{actor_critic_forward.1} parent=1 // pred_fallthru
      _
    // Predicated region
    $region74: #{actor_critic_forward.1} parent=1 // pred_check
      _
    $region75: #{actor_critic_forward.1} parent=1 // pred_check_branch
      %89 = sbr.rel (0) target = $region77
    $region76: #{actor_critic_forward.1} parent=1 // pred_region
      %90 = dma.done [#allocation5], 48384
    $region77: #{actor_critic_forward.1} parent=1 // pred_fallthru
      _
    // Predicated region
    $region78: #{actor_critic_forward.1} parent=1 // pred_check
      _
    $region79: #{actor_critic_forward.1} parent=1 // pred_check_branch
      %92 = sbr.rel (0) target = $region81
    $region80: #{actor_critic_forward.1} parent=1 // pred_region
      %93 = dma.done [#allocation8], 9216
    $region81: #{actor_critic_forward.1} parent=1 // pred_fallthru
      _
    // Predicated region
    $region82: #{actor_critic_forward.1} parent=1 // pred_check
      _
    $region83: #{actor_critic_forward.1} parent=1 // pred_check_branch
      %95 = sbr.rel target = $region85
    $region84: #{actor_critic_forward.1} parent=1 // pred_region
      %96 = sst [smem:[#allocation15]] [#allocation14]
      %97 = sst [smem:[#allocation16]] [#allocation13]
    $region85: #{actor_critic_forward.1} parent=1 // pred_fallthru
      _
    %99 = shalt.err (0)
    %s101 = sshll.u32 [#allocation2], 4
    %s102 = int_to_ptr.vmem [resolvable:$true] %s101
    %104 = dma.hbm_to_vmem [thread:$0]  %s15, 69632, %s102, [#allocation3]
    %v105 = vld [vmem:[%s0] sm:$0xff]
    %v106 = vld [vmem:[%s0 + $0x8] sm:$0xff]
    %v107 = vld [vmem:[%s0 + $0x10] sm:$0xff]
    %v108 = vld [vmem:[%s0 + $0x18] sm:$0xff]
    %v109 = vld [vmem:[%s0 + $0x20] sm:$0xff]
    %v110 = vld [vmem:[%s0 + $0x28] sm:$0xff]
    %v111 = vld [vmem:[%s0 + $0x30] sm:$0xff]
    %v112 = vld [vmem:[%s0 + $0x38] sm:$0xff]
    %v113 = vld [vmem:[%s0 + $0x40] sm:$0xff]
    %v114 = vld [vmem:[%s0 + $0x48] sm:$0xff]
    %v115 = vld [vmem:[%s0 + $0x50] sm:$0xff]
    %v116 = vld [vmem:[%s0 + $0x58] sm:$0xff]
    %v117 = vld [vmem:[%s0 + $0x60] sm:$0xff]
    %v118 = vld [vmem:[%s0 + $0x68] sm:$0xff]
    %v119 = vld [vmem:[%s0 + $0x70] sm:$0xff]
    %v120 = vld [vmem:[%s0 + $0x78] sm:$0xff]
    %v121 = vld [vmem:[%s0 + $0x80] sm:$0xff]
    %v122 = vld [vmem:[%s0 + $0x88] sm:$0xff]
    %v123 = vld [vmem:[%s0 + $0x90] sm:$0xff]
    %v124 = vld [vmem:[%s0 + $0x98] sm:$0xff]
    %v125 = vld [vmem:[%s0 + $0xa0] sm:$0xf]
    %v126 = vld [vmem:[%s0 + $0xa8] sm:$0xf]
    %v127 = vld [vmem:[%s3] sm:$0xff]
    %v128 = vld [vmem:[%s3 + $0x8] sm:$0xff]
    %v129 = vld [vmem:[%s3 + $0x10] sm:$0xff]
    %v130 = vld [vmem:[%s3 + $0x18] sm:$0xff]
    %v131 = vld [vmem:[%s3 + $0x20] sm:$0xff]
    %v132 = vld [vmem:[%s3 + $0x28] sm:$0xff]
    %v133 = vld [vmem:[%s3 + $0x30] sm:$0xff]
    %v134 = vld [vmem:[%s3 + $0x38] sm:$0xff]
    %v135 = vld [vmem:[%s3 + $0x40] sm:$0xff]
    %v136 = vld [vmem:[%s3 + $0x48] sm:$0xff]
    %v137 = vld [vmem:[%s3 + $0x50] sm:$0xff]
    %v138 = vld [vmem:[%s3 + $0x58] sm:$0xff]
    %v139 = vld [vmem:[%s3 + $0x60] sm:$0xff]
    %v140 = vld [vmem:[%s3 + $0x68] sm:$0xff]
    %v141 = vld [vmem:[%s3 + $0x70] sm:$0xff]
    %v142 = vld [vmem:[%s3 + $0x78] sm:$0x3f]
    %vm143 = vcmask 687104
    %v145 = vsel %vm143, %v127, 0
    %v148 = vsel %vm143, %v128, 0
    %v151 = vsel %vm143, %v129, 0
    %v154 = vsel %vm143, %v130, 0
    %v157 = vsel %vm143, %v131, 0
    %v160 = vsel %vm143, %v132, 0
    %v163 = vsel %vm143, %v133, 0
    %v166 = vsel %vm143, %v134, 0
    %v169 = vsel %vm143, %v135, 0
    %v172 = vsel %vm143, %v136, 0
    %v175 = vsel %vm143, %v137, 0
    %v178 = vsel %vm143, %v138, 0
    %v181 = vsel %vm143, %v139, 0
    %v184 = vsel %vm143, %v140, 0
    %v187 = vsel %vm143, %v141, 0
    %v190 = vsel %vm143, %v142, 0
    %vm192 = vcmask 1043456
    %v194 = vsel %vm192, %v125, 0
    %v197 = vsel %vm192, %v126, 0
    %199 = vmatprep.subr.mxu0 0.0
    %200 = vmatpush1.msra.mxu0 0.0
    %201 = vmatprep.subr.mxu0 0.0
    %202 = vmatpush1.msra.mxu0 0.0
    %203 = vmatprep.subr.mxu0 0.0
    %204 = vmatpush1.msra.mxu0 0.0
    %205 = vmatprep.subr.mxu0 0.0
    %206 = vmatpush1.msra.mxu0 0.0
    %207 = vmatprep.subr.mxu0 0.0
    %208 = vmatpush1.msra.mxu0 0.0
    %209 = vmatprep.subr.mxu0 %v197
    %210 = vmatpush1.msra.mxu0 %v194
    %211 = vmatprep.subr.mxu0 %v124
    %212 = vmatpush1.msra.mxu0 %v123
    %213 = vmatprep.subr.mxu0 %v122
    %214 = vmatpush1.msra.mxu0 %v121
    %215 = vmatprep.subr.mxu0 %v120
    %216 = vmatpush1.msra.mxu0 %v119
    %217 = vmatprep.subr.mxu0 %v118
    %218 = vmatpush1.msra.mxu0 %v117
    %219 = vmatprep.subr.mxu0 %v116
    %220 = vmatpush1.msra.mxu0 %v115
    %221 = vmatprep.subr.mxu0 %v114
    %222 = vmatpush1.msra.mxu0 %v113
    %223 = vmatprep.subr.mxu0 %v112
    %224 = vmatpush1.msra.mxu0 %v111
    %225 = vmatprep.subr.mxu0 %v110
    %226 = vmatpush1.msra.mxu0 %v109
    %227 = vmatprep.subr.mxu0 %v108
    %228 = vmatpush1.msra.mxu0 %v107
    %229 = vmatprep.subr.mxu0 %v106
    %230 = vmatpush1.msra.mxu0 %v105
    %231 = vmatprep.subr.mxu0 0.0
    %232 = vmatpush2.msra.mxu0 0.0
    %233 = vmatprep.subr.mxu0 0.0
    %234 = vmatpush2.msra.mxu0 0.0
    %235 = vmatprep.subr.mxu0 0.0
    %236 = vmatpush2.msra.mxu0 0.0
    %237 = vmatprep.subr.mxu0 0.0
    %238 = vmatpush2.msra.mxu0 0.0
    %239 = vmatprep.subr.mxu0 0.0
    %240 = vmatpush2.msra.mxu0 0.0
    %241 = vmatprep.subr.mxu0 0.0
    %242 = vmatpush2.msra.mxu0 0.0
    %243 = vmatprep.subr.mxu0 0.0
    %244 = vmatpush2.msra.mxu0 0.0
    %245 = vmatprep.subr.mxu0 0.0
    %246 = vmatpush2.msra.mxu0 0.0
    %247 = vmatprep.subr.mxu0 0.0
    %248 = vmatpush2.msra.mxu0 0.0
    %249 = vmatprep.subr.mxu0 0.0
    %250 = vmatpush2.msra.mxu0 0.0
    %251 = vmatprep.subr.mxu0 0.0
    %252 = vmatpush2.msra.mxu0 0.0
    %253 = vmatprep.subr.mxu0 0.0
    %254 = vmatpush2.msra.mxu0 0.0
    %255 = vmatprep.subr.mxu0 0.0
    %256 = vmatpush2.msra.mxu0 0.0
    %257 = vmatprep.subr.mxu0 0.0
    %258 = vmatpush2.msra.mxu0 0.0
    %259 = vmatprep.subr.mxu0 0.0
    %260 = vmatpush2.msra.mxu0 0.0
    %261 = vmatprep.subr.mxu0 0.0
    %262 = vmatpush2.msra.mxu0 0.0
    %263 = vmatprep.mubr.f32.mxu0 0.0
    %264 = vmatmul.mubr.f32.gmra.mxu0 %v145
    %v265 = vpop.f32.mrf.mxu0
    %v266 = vadd.f32 0.0, %v265
    %v267 = vpop.f32.mrf.mxu0
    %v268 = vadd.f32 0.0, %v267
    %269 = vmatprep.mubr.f32.mxu0 0.0
    %270 = vmatmul.mubr.f32.gmra.mxu0 %v148
    %v271 = vpop.f32.mrf.mxu0
    %v272 = vadd.f32 0.0, %v271
    %v273 = vpop.f32.mrf.mxu0
    %v274 = vadd.f32 0.0, %v273
    %275 = vmatprep.mubr.f32.mxu0 0.0
    %276 = vmatmul.mubr.f32.gmra.mxu0 %v151
    %v277 = vpop.f32.mrf.mxu0
    %v278 = vadd.f32 0.0, %v277
    %v279 = vpop.f32.mrf.mxu0
    %v280 = vadd.f32 0.0, %v279
    %281 = vmatprep.mubr.f32.mxu0 0.0
    %282 = vmatmul.mubr.f32.gmra.mxu0 %v154
    %v283 = vpop.f32.mrf.mxu0
    %v284 = vadd.f32 0.0, %v283
    %v285 = vpop.f32.mrf.mxu0
    %v286 = vadd.f32 0.0, %v285
    %287 = vmatprep.mubr.f32.mxu0 0.0
    %288 = vmatmul.mubr.f32.gmra.mxu0 %v157
    %v289 = vpop.f32.mrf.mxu0
    %v290 = vadd.f32 0.0, %v289
    %v291 = vpop.f32.mrf.mxu0
    %v292 = vadd.f32 0.0, %v291
    %293 = vmatprep.mubr.f32.mxu0 0.0
    %294 = vmatmul.mubr.f32.gmra.mxu0 %v160
    %v295 = vpop.f32.mrf.mxu0
    %v296 = vadd.f32 0.0, %v295
    %v297 = vpop.f32.mrf.mxu0
    %v298 = vadd.f32 0.0, %v297
    %299 = vmatprep.mubr.f32.mxu0 0.0
    %300 = vmatmul.mubr.f32.gmra.mxu0 %v163
    %v301 = vpop.f32.mrf.mxu0
    %v302 = vadd.f32 0.0, %v301
    %v303 = vpop.f32.mrf.mxu0
    %v304 = vadd.f32 0.0, %v303
    %305 = vmatprep.mubr.f32.mxu0 0.0
    %306 = vmatmul.mubr.f32.gmra.mxu0 %v166
    %v307 = vpop.f32.mrf.mxu0
    %v308 = vadd.f32 0.0, %v307
    %v309 = vpop.f32.mrf.mxu0
    %v310 = vadd.f32 0.0, %v309
    %311 = vmatprep.mubr.f32.mxu0 0.0
    %312 = vmatmul.mubr.f32.gmra.mxu0 %v169
    %v313 = vpop.f32.mrf.mxu0
    %v314 = vadd.f32 0.0, %v313
    %v315 = vpop.f32.mrf.mxu0
    %v316 = vadd.f32 0.0, %v315
    %317 = vmatprep.mubr.f32.mxu0 0.0
    %318 = vmatmul.mubr.f32.gmra.mxu0 %v172
    %v319 = vpop.f32.mrf.mxu0
    %v320 = vadd.f32 0.0, %v319
    %v321 = vpop.f32.mrf.mxu0
    %v322 = vadd.f32 0.0, %v321
    %323 = vmatprep.mubr.f32.mxu0 0.0
    %324 = vmatmul.mubr.f32.gmra.mxu0 %v175
    %v325 = vpop.f32.mrf.mxu0
    %v326 = vadd.f32 0.0, %v325
    %v327 = vpop.f32.mrf.mxu0
    %v328 = vadd.f32 0.0, %v327
    %329 = vmatprep.mubr.f32.mxu0 0.0
    %330 = vmatmul.mubr.f32.gmra.mxu0 %v178
    %v331 = vpop.f32.mrf.mxu0
    %v332 = vadd.f32 0.0, %v331
    %v333 = vpop.f32.mrf.mxu0
    %v334 = vadd.f32 0.0, %v333
    %335 = vmatprep.mubr.f32.mxu0 0.0
    %336 = vmatmul.mubr.f32.gmra.mxu0 %v181
    %v337 = vpop.f32.mrf.mxu0
    %v338 = vadd.f32 0.0, %v337
    %v339 = vpop.f32.mrf.mxu0
    %v340 = vadd.f32 0.0, %v339
    %341 = vmatprep.mubr.f32.mxu0 0.0
    %342 = vmatmul.mubr.f32.gmra.mxu0 %v184
    %v343 = vpop.f32.mrf.mxu0
    %v344 = vadd.f32 0.0, %v343
    %v345 = vpop.f32.mrf.mxu0
    %v346 = vadd.f32 0.0, %v345
    %347 = vmatprep.mubr.f32.mxu0 0.0
    %348 = vmatmul.mubr.f32.gmra.mxu0 %v187
    %v349 = vpop.f32.mrf.mxu0
    %v350 = vadd.f32 0.0, %v349
    %v351 = vpop.f32.mrf.mxu0
    %v352 = vadd.f32 0.0, %v351
    %353 = vmatprep.mubr.f32.mxu0 0.0
    %354 = vmatmul.mubr.f32.gmra.mxu0 %v190
    %v355 = vpop.f32.mrf.mxu0
    %v356 = vadd.f32 0.0, %v355
    %v357 = vpop.f32.mrf.mxu0
    %v358 = vadd.f32 0.0, %v357
    %359 = vdwg.mxu0
    %v360 = vld [vmem:[#allocation4] sm:$0xff]
    %v361 = vld [vmem:[#allocation4 + $0x8] sm:$0xff]
    %v362 = vld [vmem:[#allocation4 + $0x10] sm:$0xff]
    %v363 = vld [vmem:[#allocation4 + $0x18] sm:$0xff]
    %v364 = vld [vmem:[#allocation4 + $0x20] sm:$0xff]
    %v365 = vld [vmem:[#allocation4 + $0x28] sm:$0xff]
    %v366 = vld [vmem:[#allocation4 + $0x30] sm:$0xff]
    %v367 = vld [vmem:[#allocation4 + $0x38] sm:$0xff]
    %v368 = vld [vmem:[#allocation4 + $0x40] sm:$0xff]
    %v369 = vld [vmem:[#allocation4 + $0x48] sm:$0xff]
    %v370 = vld [vmem:[#allocation4 + $0x50] sm:$0xff]
    %v371 = vld [vmem:[#allocation4 + $0x58] sm:$0xff]
    %v372 = vld [vmem:[#allocation4 + $0x60] sm:$0xff]
    %v373 = vld [vmem:[#allocation4 + $0x68] sm:$0xff]
    %v374 = vld [vmem:[#allocation4 + $0x70] sm:$0xff]
    %v375 = vld [vmem:[#allocation4 + $0x78] sm:$0xff]
    %v376 = vld [vmem:[#allocation4 + $0x80] sm:$0xff]
    %v377 = vld [vmem:[#allocation4 + $0x88] sm:$0xff]
    %v378 = vld [vmem:[#allocation4 + $0x90] sm:$0xff]
    %v379 = vld [vmem:[#allocation4 + $0x98] sm:$0xff]
    %v380 = vld [vmem:[#allocation4 + $0xa0] sm:$0xff]
    %v381 = vld [vmem:[#allocation4 + $0xa8] sm:$0xff]
    %v382 = vld [vmem:[#allocation4 + $0xb0] sm:$0xff]
    %v383 = vld [vmem:[#allocation4 + $0xb8] sm:$0xff]
    %v384 = vld [vmem:[#allocation4 + $0xc0] sm:$0xff]
    %v385 = vld [vmem:[#allocation4 + $0xc8] sm:$0xff]
    %v386 = vld [vmem:[#allocation4 + $0xd0] sm:$0xff]
    %v387 = vld [vmem:[#allocation4 + $0xd8] sm:$0xff]
    %v388 = vld [vmem:[#allocation4 + $0xe0] sm:$0xff]
    %v389 = vld [vmem:[#allocation4 + $0xe8] sm:$0xff]
    %v390 = vld [vmem:[#allocation4 + $0xf0] sm:$0xff]
    %v391 = vld [vmem:[#allocation4 + $0xf8] sm:$0xff]
    %v392 = vld [vmem:[#allocation4 + $0x100] sm:$0xff]
    %v393 = vld [vmem:[#allocation4 + $0x108] sm:$0xff]
    %v394 = vld [vmem:[#allocation4 + $0x110] sm:$0xff]
    %v395 = vld [vmem:[#allocation4 + $0x118] sm:$0xff]
    %v396 = vld [vmem:[#allocation4 + $0x120] sm:$0xff]
    %v397 = vld [vmem:[#allocation4 + $0x128] sm:$0xff]
    %v398 = vld [vmem:[#allocation4 + $0x130] sm:$0xff]
    %v399 = vld [vmem:[#allocation4 + $0x138] sm:$0xff]
    %v400 = vld [vmem:[#allocation4 + $0x140] sm:$0xff]
    %v401 = vld [vmem:[#allocation4 + $0x148] sm:$0xff]
    %v402 = vld [vmem:[#allocation4 + $0x150] sm:$0xff]
    %v403 = vld [vmem:[#allocation4 + $0x158] sm:$0xff]
    %v404 = vld [vmem:[#allocation4 + $0x160] sm:$0xff]
    %v405 = vld [vmem:[#allocation4 + $0x168] sm:$0xff]
    %v406 = vld [vmem:[#allocation4 + $0x170] sm:$0xff]
    %v407 = vld [vmem:[#allocation4 + $0x178] sm:$0xff]
    %v408 = vld [vmem:[#allocation4 + $0x180] sm:$0xff]
    %v409 = vld [vmem:[#allocation4 + $0x188] sm:$0xff]
    %v410 = vld [vmem:[#allocation4 + $0x190] sm:$0xff]
    %v411 = vld [vmem:[#allocation4 + $0x198] sm:$0xff]
    %v412 = vld [vmem:[#allocation4 + $0x1a0] sm:$0xff]
    %v413 = vld [vmem:[#allocation4 + $0x1a8] sm:$0xff]
    %v414 = vld [vmem:[#allocation4 + $0x1b0] sm:$0xff]
    %v415 = vld [vmem:[#allocation4 + $0x1b8] sm:$0xff]
    %v416 = vld [vmem:[#allocation4 + $0x1c0] sm:$0xff]
    %v417 = vld [vmem:[#allocation4 + $0x1c8] sm:$0xff]
    %v418 = vld [vmem:[#allocation4 + $0x1d0] sm:$0xff]
    %v419 = vld [vmem:[#allocation4 + $0x1d8] sm:$0xff]
    %v420 = vld [vmem:[#allocation4 + $0x1e0] sm:$0xff]
    %v421 = vld [vmem:[#allocation4 + $0x1e8] sm:$0xff]
    %v422 = vld [vmem:[#allocation4 + $0x1f0] sm:$0xff]
    %v423 = vld [vmem:[#allocation4 + $0x1f8] sm:$0xff]
    %v424 = vld [vmem:[#allocation4 + $0x200] sm:$0xff]
    %v425 = vld [vmem:[#allocation4 + $0x208] sm:$0xff]
    %v426 = vld [vmem:[#allocation4 + $0x210] sm:$0xff]
    %v427 = vld [vmem:[#allocation4 + $0x218] sm:$0xff]
    %v428 = vld [vmem:[#allocation4 + $0x220] sm:$0xff]
    %v429 = vld [vmem:[#allocation4 + $0x228] sm:$0xff]
    %v430 = vld [vmem:[#allocation4 + $0x230] sm:$0xff]
    %v431 = vld [vmem:[#allocation4 + $0x238] sm:$0xff]
    %v432 = vld [vmem:[#allocation4 + $0x240] sm:$0xff]
    %v433 = vld [vmem:[#allocation4 + $0x248] sm:$0xff]
    %v434 = vld [vmem:[#allocation4 + $0x250] sm:$0xff]
    %v435 = vld [vmem:[#allocation4 + $0x258] sm:$0xff]
    %v436 = vld [vmem:[#allocation4 + $0x260] sm:$0xff]
    %v437 = vld [vmem:[#allocation4 + $0x268] sm:$0xff]
    %v438 = vld [vmem:[#allocation4 + $0x270] sm:$0xff]
    %v439 = vld [vmem:[#allocation4 + $0x278] sm:$0xff]
    %v440 = vld [vmem:[#allocation4 + $0x280] sm:$0xff]
    %v441 = vld [vmem:[#allocation4 + $0x288] sm:$0xff]
    %v442 = vld [vmem:[#allocation4 + $0x290] sm:$0xff]
    %v443 = vld [vmem:[#allocation4 + $0x298] sm:$0xff]
    %v444 = vld [vmem:[#allocation4 + $0x2a0] sm:$0xff]
    %v445 = vld [vmem:[#allocation4 + $0x2a8] sm:$0xff]
    %v446 = vld [vmem:[#allocation4 + $0x2b0] sm:$0xff]
    %v447 = vld [vmem:[#allocation4 + $0x2b8] sm:$0xff]
    %v448 = vld [vmem:[#allocation4 + $0x2c0] sm:$0xff]
    %v449 = vld [vmem:[#allocation4 + $0x2c8] sm:$0xff]
    %v450 = vld [vmem:[#allocation4 + $0x2d0] sm:$0xff]
    %v451 = vld [vmem:[#allocation4 + $0x2d8] sm:$0xff]
    %v452 = vld [vmem:[#allocation4 + $0x2e0] sm:$0xff]
    %v453 = vld [vmem:[#allocation4 + $0x2e8] sm:$0xff]
    %v454 = vld [vmem:[#allocation4 + $0x2f0] sm:$0xff]
    %v455 = vld [vmem:[#allocation4 + $0x2f8] sm:$0xff]
    %v456 = vld [vmem:[#allocation4 + $0x300] sm:$0xff]
    %v457 = vld [vmem:[#allocation4 + $0x308] sm:$0xff]
    %v458 = vld [vmem:[#allocation4 + $0x310] sm:$0xff]
    %v459 = vld [vmem:[#allocation4 + $0x318] sm:$0xff]
    %v460 = vld [vmem:[#allocation4 + $0x320] sm:$0xff]
    %v461 = vld [vmem:[#allocation4 + $0x328] sm:$0xff]
    %v462 = vld [vmem:[#allocation4 + $0x330] sm:$0xff]
    %v463 = vld [vmem:[#allocation4 + $0x338] sm:$0xff]
    %v464 = vld [vmem:[#allocation4 + $0x340] sm:$0xff]
    %v465 = vld [vmem:[#allocation4 + $0x348] sm:$0xff]
    %v466 = vld [vmem:[#allocation4 + $0x350] sm:$0xff]
    %v467 = vld [vmem:[#allocation4 + $0x358] sm:$0xff]
    %v468 = vld [vmem:[#allocation4 + $0x360] sm:$0xff]
    %v469 = vld [vmem:[#allocation4 + $0x368] sm:$0xff]
    %v470 = vld [vmem:[#allocation4 + $0x370] sm:$0xff]
    %v471 = vld [vmem:[#allocation4 + $0x378] sm:$0xff]
    %v472 = vld [vmem:[#allocation4 + $0x380] sm:$0xff]
    %v473 = vld [vmem:[#allocation4 + $0x388] sm:$0xff]
    %v474 = vld [vmem:[#allocation4 + $0x390] sm:$0xff]
    %v475 = vld [vmem:[#allocation4 + $0x398] sm:$0xff]
    %v476 = vld [vmem:[#allocation4 + $0x3a0] sm:$0xff]
    %v477 = vld [vmem:[#allocation4 + $0x3a8] sm:$0xff]
    %v478 = vld [vmem:[#allocation4 + $0x3b0] sm:$0xff]
    %v479 = vld [vmem:[#allocation4 + $0x3b8] sm:$0xff]
    %v480 = vld [vmem:[#allocation4 + $0x3c0] sm:$0xff]
    %v481 = vld [vmem:[#allocation4 + $0x3c8] sm:$0xff]
    %v482 = vld [vmem:[#allocation4 + $0x3d0] sm:$0xff]
    %v483 = vld [vmem:[#allocation4 + $0x3d8] sm:$0xff]
    %v484 = vld [vmem:[#allocation4 + $0x3e0] sm:$0xff]
    %v485 = vld [vmem:[#allocation4 + $0x3e8] sm:$0xff]
    %s486 = scalar_lea.vmem [#allocation4], 1008
    %v487 = vld [vmem:[%s486] sm:$0xff]
    %v488 = vld [vmem:[%s486 + $0x8] sm:$0xff]
    %v489 = vld [vmem:[%s486 + $0x10] sm:$0xff]
    %v490 = vld [vmem:[%s486 + $0x18] sm:$0xff]
    %v491 = vld [vmem:[%s486 + $0x20] sm:$0xff]
    %v492 = vld [vmem:[%s486 + $0x28] sm:$0xff]
    %v493 = vld [vmem:[%s486 + $0x30] sm:$0xff]
    %v494 = vld [vmem:[%s486 + $0x38] sm:$0xff]
    %v495 = vld [vmem:[%s486 + $0x40] sm:$0xff]
    %v496 = vld [vmem:[%s486 + $0x48] sm:$0xff]
    %v497 = vld [vmem:[%s486 + $0x50] sm:$0xff]
    %v498 = vld [vmem:[%s486 + $0x58] sm:$0xff]
    %v499 = vld [vmem:[%s486 + $0x60] sm:$0xff]
    %v500 = vld [vmem:[%s486 + $0x68] sm:$0xff]
    %v501 = vld [vmem:[%s486 + $0x70] sm:$0xff]
    %v502 = vld [vmem:[%s486 + $0x78] sm:$0xff]
    %v503 = vld [vmem:[%s486 + $0x80] sm:$0xff]
    %v504 = vld [vmem:[%s486 + $0x88] sm:$0xff]
    %v505 = vld [vmem:[%s486 + $0x90] sm:$0xff]
    %v506 = vld [vmem:[%s486 + $0x98] sm:$0xff]
    %v507 = vld [vmem:[%s486 + $0xa0] sm:$0xff]
    %v508 = vld [vmem:[%s486 + $0xa8] sm:$0xff]
    %v509 = vld [vmem:[%s486 + $0xb0] sm:$0xff]
    %v510 = vld [vmem:[%s486 + $0xb8] sm:$0xff]
    %v511 = vld [vmem:[%s486 + $0xc0] sm:$0xff]
    %v512 = vld [vmem:[%s486 + $0xc8] sm:$0xff]
    %v513 = vld [vmem:[%s486 + $0xd0] sm:$0xff]
    %v514 = vld [vmem:[%s486 + $0xd8] sm:$0xff]
    %v515 = vld [vmem:[%s486 + $0xe0] sm:$0xff]
    %v516 = vld [vmem:[%s486 + $0xe8] sm:$0xff]
    %v517 = vld [vmem:[%s486 + $0xf0] sm:$0xff]
    %v518 = vld [vmem:[%s486 + $0xf8] sm:$0xff]
    %v519 = vld [vmem:[%s486 + $0x100] sm:$0xff]
    %v520 = vld [vmem:[%s486 + $0x108] sm:$0xff]
    %v521 = vld [vmem:[%s486 + $0x110] sm:$0xff]
    %v522 = vld [vmem:[%s486 + $0x118] sm:$0xff]
    %v523 = vld [vmem:[%s486 + $0x120] sm:$0xff]
    %v524 = vld [vmem:[%s486 + $0x128] sm:$0xff]
    %v525 = vld [vmem:[%s486 + $0x130] sm:$0xff]
    %v526 = vld [vmem:[%s486 + $0x138] sm:$0xff]
    %v527 = vld [vmem:[%s486 + $0x140] sm:$0xff]
    %v528 = vld [vmem:[%s486 + $0x148] sm:$0xff]
    %v529 = vld [vmem:[%s486 + $0x150] sm:$0xff]
    %v530 = vld [vmem:[%s486 + $0x158] sm:$0xff]
    %v531 = vld [vmem:[%s486 + $0x160] sm:$0xff]
    %v532 = vld [vmem:[%s486 + $0x168] sm:$0xff]
    %v533 = vld [vmem:[%s486 + $0x170] sm:$0xff]
    %v534 = vld [vmem:[%s486 + $0x178] sm:$0xff]
    %v535 = vld [vmem:[%s486 + $0x180] sm:$0xff]
    %v536 = vld [vmem:[%s486 + $0x188] sm:$0xff]
    %v537 = vld [vmem:[%s486 + $0x190] sm:$0xff]
    %v538 = vld [vmem:[%s486 + $0x198] sm:$0xff]
    %v539 = vld [vmem:[%s486 + $0x1a0] sm:$0xff]
    %v540 = vld [vmem:[%s486 + $0x1a8] sm:$0xff]
    %v541 = vld [vmem:[%s486 + $0x1b0] sm:$0xff]
    %v542 = vld [vmem:[%s486 + $0x1b8] sm:$0xff]
    %v543 = vld [vmem:[%s486 + $0x1c0] sm:$0xff]
    %v544 = vld [vmem:[%s486 + $0x1c8] sm:$0xff]
    %v545 = vld [vmem:[%s486 + $0x1d0] sm:$0xff]
    %v546 = vld [vmem:[%s486 + $0x1d8] sm:$0xff]
    %v547 = vld [vmem:[%s486 + $0x1e0] sm:$0xff]
    %v548 = vld [vmem:[%s486 + $0x1e8] sm:$0xff]
    %v549 = vld [vmem:[%s486 + $0x1f0] sm:$0xff]
    %v550 = vld [vmem:[%s486 + $0x1f8] sm:$0xff]
    %v551 = vld [vmem:[%s486 + $0x200] sm:$0xff]
    %v552 = vld [vmem:[%s486 + $0x208] sm:$0xff]
    %v553 = vld [vmem:[%s486 + $0x210] sm:$0xff]
    %v554 = vld [vmem:[%s486 + $0x218] sm:$0xff]
    %v555 = vld [vmem:[%s486 + $0x220] sm:$0xff]
    %v556 = vld [vmem:[%s486 + $0x228] sm:$0xff]
    %v557 = vld [vmem:[%s486 + $0x230] sm:$0xff]
    %v558 = vld [vmem:[%s486 + $0x238] sm:$0xff]
    %v559 = vld [vmem:[%s486 + $0x240] sm:$0xff]
    %v560 = vld [vmem:[%s486 + $0x248] sm:$0xff]
    %v561 = vld [vmem:[%s486 + $0x250] sm:$0xff]
    %v562 = vld [vmem:[%s486 + $0x258] sm:$0xff]
    %v563 = vld [vmem:[%s486 + $0x260] sm:$0xff]
    %v564 = vld [vmem:[%s486 + $0x268] sm:$0xff]
    %v565 = vld [vmem:[%s486 + $0x270] sm:$0xff]
    %v566 = vld [vmem:[%s486 + $0x278] sm:$0xff]
    %v567 = vld [vmem:[%s486 + $0x280] sm:$0xff]
    %v568 = vld [vmem:[%s486 + $0x288] sm:$0xff]
    %v569 = vld [vmem:[%s486 + $0x290] sm:$0xff]
    %v570 = vld [vmem:[%s486 + $0x298] sm:$0xff]
    %v571 = vld [vmem:[%s486 + $0x2a0] sm:$0xff]
    %v572 = vld [vmem:[%s486 + $0x2a8] sm:$0xff]
    %v573 = vld [vmem:[%s486 + $0x2b0] sm:$0xff]
    %v574 = vld [vmem:[%s486 + $0x2b8] sm:$0xff]
    %v575 = vld [vmem:[%s486 + $0x2c0] sm:$0xff]
    %v576 = vld [vmem:[%s486 + $0x2c8] sm:$0xff]
    %v577 = vld [vmem:[%s486 + $0x2d0] sm:$0xff]
    %v578 = vld [vmem:[%s486 + $0x2d8] sm:$0xff]
    %v579 = vld [vmem:[%s486 + $0x2e0] sm:$0xff]
    %v580 = vld [vmem:[%s486 + $0x2e8] sm:$0xff]
    %v581 = vld [vmem:[%s486 + $0x2f0] sm:$0xff]
    %v582 = vld [vmem:[%s486 + $0x2f8] sm:$0xff]
    %v583 = vld [vmem:[%s486 + $0x300] sm:$0xff]
    %v584 = vld [vmem:[%s486 + $0x308] sm:$0xff]
    %v585 = vld [vmem:[%s486 + $0x310] sm:$0xff]
    %v586 = vld [vmem:[%s486 + $0x318] sm:$0xff]
    %v587 = vld [vmem:[%s486 + $0x320] sm:$0xff]
    %v588 = vld [vmem:[%s486 + $0x328] sm:$0xff]
    %v589 = vld [vmem:[%s486 + $0x330] sm:$0xff]
    %v590 = vld [vmem:[%s486 + $0x338] sm:$0xff]
    %v591 = vld [vmem:[%s486 + $0x340] sm:$0xff]
    %v592 = vld [vmem:[%s486 + $0x348] sm:$0xff]
    %v593 = vld [vmem:[%s486 + $0x350] sm:$0xff]
    %v594 = vld [vmem:[%s486 + $0x358] sm:$0xff]
    %v595 = vld [vmem:[%s486 + $0x360] sm:$0xff]
    %v596 = vld [vmem:[%s486 + $0x368] sm:$0xff]
    %v597 = vld [vmem:[%s486 + $0x370] sm:$0xff]
    %v598 = vld [vmem:[%s486 + $0x378] sm:$0xff]
    %v599 = vld [vmem:[%s486 + $0x380] sm:$0xff]
    %v600 = vld [vmem:[%s486 + $0x388] sm:$0xff]
    %v601 = vld [vmem:[%s486 + $0x390] sm:$0xff]
    %v602 = vld [vmem:[%s486 + $0x398] sm:$0xff]
    %v603 = vld [vmem:[%s486 + $0x3a0] sm:$0xff]
    %v604 = vld [vmem:[%s486 + $0x3a8] sm:$0xff]
    %v605 = vld [vmem:[%s486 + $0x3b0] sm:$0xff]
    %v606 = vld [vmem:[%s486 + $0x3b8] sm:$0xff]
    %v607 = vld [vmem:[%s486 + $0x3c0] sm:$0xff]
    %v608 = vld [vmem:[%s486 + $0x3c8] sm:$0xff]
    %v609 = vld [vmem:[%s486 + $0x3d0] sm:$0xff]
    %v610 = vld [vmem:[%s486 + $0x3d8] sm:$0xff]
    %v611 = vld [vmem:[%s486 + $0x3e0] sm:$0xff]
    %v612 = vld [vmem:[%s486 + $0x3e8] sm:$0xff]
    %vm625 = vcmask 1045504
    %v626 = vrot.slane %v296, 2
    %v627 = vrot.slane %v302, 2
    %v628 = vsel %vm625, %v626, %v627
    %v629 = vrot.slane %v298, 2
    %v630 = vrot.slane %v304, 2
    %v631 = vsel %vm625, %v629, %v630
    %v632 = vrot.slane %v308, 2
    %v633 = vsel %vm625, %v627, %v632
    %v634 = vrot.slane %v310, 2
    %v635 = vsel %vm625, %v630, %v634
    %v636 = vrot.slane %v314, 2
    %v637 = vsel %vm625, %v632, %v636
    %v638 = vrot.slane %v316, 2
    %v639 = vsel %vm625, %v634, %v638
    %v640 = vrot.slane %v320, 2
    %v641 = vsel %vm625, %v636, %v640
    %v642 = vrot.slane %v322, 2
    %v643 = vsel %vm625, %v638, %v642
    %v644 = vrot.slane %v326, 2
    %v645 = vsel %vm625, %v640, %v644
    %v646 = vrot.slane %v328, 2
    %v647 = vsel %vm625, %v642, %v646
    %vm654 = vcmask 326656
    %v655 = vsel %vm654, %v631, 0
    %v657 = vsel %vm654, %v635, 0
    %v659 = vsel %vm654, %v639, 0
    %v661 = vsel %vm654, %v643, 0
    %v663 = vsel %vm654, %v647, 0
    %v665 = vsel %vm654, %v646, 0
    %667 = vmatprep.subr.mxu0 %v578
    %668 = vmatpush1.msra.mxu0 %v577
    %669 = vmatprep.subr.mxu0 %v572
    %670 = vmatpush1.msra.mxu0 %v571
    %671 = vmatprep.subr.mxu0 %v566
    %672 = vmatpush1.msra.mxu0 %v565
    %673 = vmatprep.subr.mxu0 %v560
    %674 = vmatpush1.msra.mxu0 %v559
    %675 = vmatprep.subr.mxu0 %v554
    %676 = vmatpush1.msra.mxu0 %v553
    %677 = vmatprep.subr.mxu0 %v548
    %678 = vmatpush1.msra.mxu0 %v547
    %679 = vmatprep.subr.mxu0 %v542
    %680 = vmatpush1.msra.mxu0 %v541
    %681 = vmatprep.subr.mxu0 %v536
    %682 = vmatpush1.msra.mxu0 %v535
    %683 = vmatprep.subr.mxu0 %v530
    %684 = vmatpush1.msra.mxu0 %v529
    %685 = vmatprep.subr.mxu0 %v524
    %686 = vmatpush1.msra.mxu0 %v523
    %687 = vmatprep.subr.mxu0 %v518
    %688 = vmatpush1.msra.mxu0 %v517
    %689 = vmatprep.subr.mxu0 %v512
    %690 = vmatpush1.msra.mxu0 %v511
    %691 = vmatprep.subr.mxu0 %v506
    %692 = vmatpush1.msra.mxu0 %v505
    %693 = vmatprep.subr.mxu0 %v500
    %694 = vmatpush1.msra.mxu0 %v499
    %695 = vmatprep.subr.mxu0 %v494
    %696 = vmatpush1.msra.mxu0 %v493
    %697 = vmatprep.subr.mxu0 %v488
    %698 = vmatpush1.msra.mxu0 %v487
    %699 = vmatprep.subr.mxu0 0.0
    %700 = vmatpush2.msra.mxu0 0.0
    %701 = vmatprep.subr.mxu0 0.0
    %702 = vmatpush2.msra.mxu0 0.0
    %703 = vmatprep.subr.mxu0 0.0
    %704 = vmatpush2.msra.mxu0 0.0
    %705 = vmatprep.subr.mxu0 0.0
    %706 = vmatpush2.msra.mxu0 0.0
    %707 = vmatprep.subr.mxu0 0.0
    %708 = vmatpush2.msra.mxu0 0.0
    %709 = vmatprep.subr.mxu0 0.0
    %710 = vmatpush2.msra.mxu0 0.0
    %711 = vmatprep.subr.mxu0 0.0
    %712 = vmatpush2.msra.mxu0 0.0
    %713 = vmatprep.subr.mxu0 0.0
    %714 = vmatpush2.msra.mxu0 0.0
    %715 = vmatprep.subr.mxu0 0.0
    %716 = vmatpush2.msra.mxu0 0.0
    %717 = vmatprep.subr.mxu0 0.0
    %718 = vmatpush2.msra.mxu0 0.0
    %719 = vmatprep.subr.mxu0 0.0
    %720 = vmatpush2.msra.mxu0 0.0
    %721 = vmatprep.subr.mxu0 %v608
    %722 = vmatpush2.msra.mxu0 %v607
    %723 = vmatprep.subr.mxu0 %v602
    %724 = vmatpush2.msra.mxu0 %v601
    %725 = vmatprep.subr.mxu0 %v596
    %726 = vmatpush2.msra.mxu0 %v595
    %727 = vmatprep.subr.mxu0 %v590
    %728 = vmatpush2.msra.mxu0 %v589
    %729 = vmatprep.subr.mxu0 %v584
    %730 = vmatpush2.msra.mxu0 %v583
    %731 = vmatprep.mubr.f32.mxu0 %v655
    %732 = vmatmul.mubr.f32.gmra.mxu0 %v628
    %v733 = vpop.f32.mrf.mxu0
    %v734 = vadd.f32 0.0, %v733
    %v735 = vpop.f32.mrf.mxu0
    %v736 = vadd.f32 0.0, %v735
    %737 = vmatprep.mubr.f32.mxu0 %v657
    %738 = vmatmul.mubr.f32.gmra.mxu0 %v633
    %v739 = vpop.f32.mrf.mxu0
    %v740 = vadd.f32 0.0, %v739
    %v741 = vpop.f32.mrf.mxu0
    %v742 = vadd.f32 0.0, %v741
    %743 = vmatprep.mubr.f32.mxu0 %v659
    %744 = vmatmul.mubr.f32.gmra.mxu0 %v637
    %v745 = vpop.f32.mrf.mxu0
    %v746 = vadd.f32 0.0, %v745
    %v747 = vpop.f32.mrf.mxu0
    %v748 = vadd.f32 0.0, %v747
    %749 = vmatprep.mubr.f32.mxu0 %v661
    %750 = vmatmul.mubr.f32.gmra.mxu0 %v641
    %v751 = vpop.f32.mrf.mxu0
    %v752 = vadd.f32 0.0, %v751
    %v753 = vpop.f32.mrf.mxu0
    %v754 = vadd.f32 0.0, %v753
    %755 = vmatprep.mubr.f32.mxu0 %v663
    %756 = vmatmul.mubr.f32.gmra.mxu0 %v645
    %v757 = vpop.f32.mrf.mxu0
    %v758 = vadd.f32 0.0, %v757
    %v759 = vpop.f32.mrf.mxu0
    %v760 = vadd.f32 0.0, %v759
    %761 = vmatprep.mubr.f32.mxu0 %v665
    %762 = vmatmul.mubr.f32.gmra.mxu0 %v644
    %v763 = vpop.f32.mrf.mxu0
    %v764 = vadd.f32 0.0, %v763
    %v765 = vpop.f32.mrf.mxu0
    %v766 = vadd.f32 0.0, %v765
    %767 = vdwg.mxu0
    %768 = vmatprep.subr.mxu0 %v580
    %769 = vmatpush1.msra.mxu0 %v579
    %770 = vmatprep.subr.mxu0 %v574
    %771 = vmatpush1.msra.mxu0 %v573
    %772 = vmatprep.subr.mxu0 %v568
    %773 = vmatpush1.msra.mxu0 %v567
    %774 = vmatprep.subr.mxu0 %v562
    %775 = vmatpush1.msra.mxu0 %v561
    %776 = vmatprep.subr.mxu0 %v556
    %777 = vmatpush1.msra.mxu0 %v555
    %778 = vmatprep.subr.mxu0 %v550
    %779 = vmatpush1.msra.mxu0 %v549
    %780 = vmatprep.subr.mxu0 %v544
    %781 = vmatpush1.msra.mxu0 %v543
    %782 = vmatprep.subr.mxu0 %v538
    %783 = vmatpush1.msra.mxu0 %v537
    %784 = vmatprep.subr.mxu0 %v532
    %785 = vmatpush1.msra.mxu0 %v531
    %786 = vmatprep.subr.mxu0 %v526
    %787 = vmatpush1.msra.mxu0 %v525
    %788 = vmatprep.subr.mxu0 %v520
    %789 = vmatpush1.msra.mxu0 %v519
    %790 = vmatprep.subr.mxu0 %v514
    %791 = vmatpush1.msra.mxu0 %v513
    %792 = vmatprep.subr.mxu0 %v508
    %793 = vmatpush1.msra.mxu0 %v507
    %794 = vmatprep.subr.mxu0 %v502
    %795 = vmatpush1.msra.mxu0 %v501
    %796 = vmatprep.subr.mxu0 %v496
    %797 = vmatpush1.msra.mxu0 %v495
    %798 = vmatprep.subr.mxu0 %v490
    %799 = vmatpush1.msra.mxu0 %v489
    %800 = vmatprep.subr.mxu0 0.0
    %801 = vmatpush2.msra.mxu0 0.0
    %802 = vmatprep.subr.mxu0 0.0
    %803 = vmatpush2.msra.mxu0 0.0
    %804 = vmatprep.subr.mxu0 0.0
    %805 = vmatpush2.msra.mxu0 0.0
    %806 = vmatprep.subr.mxu0 0.0
    %807 = vmatpush2.msra.mxu0 0.0
    %808 = vmatprep.subr.mxu0 0.0
    %809 = vmatpush2.msra.mxu0 0.0
    %810 = vmatprep.subr.mxu0 0.0
    %811 = vmatpush2.msra.mxu0 0.0
    %812 = vmatprep.subr.mxu0 0.0
    %813 = vmatpush2.msra.mxu0 0.0
    %814 = vmatprep.subr.mxu0 0.0
    %815 = vmatpush2.msra.mxu0 0.0
    %816 = vmatprep.subr.mxu0 0.0
    %817 = vmatpush2.msra.mxu0 0.0
    %818 = vmatprep.subr.mxu0 0.0
    %819 = vmatpush2.msra.mxu0 0.0
    %820 = vmatprep.subr.mxu0 0.0
    %821 = vmatpush2.msra.mxu0 0.0
    %822 = vmatprep.subr.mxu0 %v610
    %823 = vmatpush2.msra.mxu0 %v609
    %824 = vmatprep.subr.mxu0 %v604
    %825 = vmatpush2.msra.mxu0 %v603
    %826 = vmatprep.subr.mxu0 %v598
    %827 = vmatpush2.msra.mxu0 %v597
    %828 = vmatprep.subr.mxu0 %v592
    %829 = vmatpush2.msra.mxu0 %v591
    %830 = vmatprep.subr.mxu0 %v586
    %831 = vmatpush2.msra.mxu0 %v585
    %832 = vmatprep.mubr.f32.mxu0 %v655
    %833 = vmatmul.mubr.f32.gmra.mxu0 %v628
    %v834 = vpop.f32.mrf.mxu0
    %v835 = vadd.f32 0.0, %v834
    %v836 = vpop.f32.mrf.mxu0
    %v837 = vadd.f32 0.0, %v836
    %838 = vmatprep.mubr.f32.mxu0 %v657
    %839 = vmatmul.mubr.f32.gmra.mxu0 %v633
    %v840 = vpop.f32.mrf.mxu0
    %v841 = vadd.f32 0.0, %v840
    %v842 = vpop.f32.mrf.mxu0
    %v843 = vadd.f32 0.0, %v842
    %844 = vmatprep.mubr.f32.mxu0 %v659
    %845 = vmatmul.mubr.f32.gmra.mxu0 %v637
    %v846 = vpop.f32.mrf.mxu0
    %v847 = vadd.f32 0.0, %v846
    %v848 = vpop.f32.mrf.mxu0
    %v849 = vadd.f32 0.0, %v848
    %850 = vmatprep.mubr.f32.mxu0 %v661
    %851 = vmatmul.mubr.f32.gmra.mxu0 %v641
    %v852 = vpop.f32.mrf.mxu0
    %v853 = vadd.f32 0.0, %v852
    %v854 = vpop.f32.mrf.mxu0
    %v855 = vadd.f32 0.0, %v854
    %856 = vmatprep.mubr.f32.mxu0 %v663
    %857 = vmatmul.mubr.f32.gmra.mxu0 %v645
    %v858 = vpop.f32.mrf.mxu0
    %v859 = vadd.f32 0.0, %v858
    %v860 = vpop.f32.mrf.mxu0
    %v861 = vadd.f32 0.0, %v860
    %862 = vmatprep.mubr.f32.mxu0 %v665
    %863 = vmatmul.mubr.f32.gmra.mxu0 %v644
    %v864 = vpop.f32.mrf.mxu0
    %v865 = vadd.f32 0.0, %v864
    %v866 = vpop.f32.mrf.mxu0
    %v867 = vadd.f32 0.0, %v866
    %868 = vdwg.mxu0
    %869 = vmatprep.subr.mxu0 %v582
    %870 = vmatpush1.msra.mxu0 %v581
    %871 = vmatprep.subr.mxu0 %v576
    %872 = vmatpush1.msra.mxu0 %v575
    %873 = vmatprep.subr.mxu0 %v570
    %874 = vmatpush1.msra.mxu0 %v569
    %875 = vmatprep.subr.mxu0 %v564
    %876 = vmatpush1.msra.mxu0 %v563
    %877 = vmatprep.subr.mxu0 %v558
    %878 = vmatpush1.msra.mxu0 %v557
    %879 = vmatprep.subr.mxu0 %v552
    %880 = vmatpush1.msra.mxu0 %v551
    %881 = vmatprep.subr.mxu0 %v546
    %882 = vmatpush1.msra.mxu0 %v545
    %883 = vmatprep.subr.mxu0 %v540
    %884 = vmatpush1.msra.mxu0 %v539
    %885 = vmatprep.subr.mxu0 %v534
    %886 = vmatpush1.msra.mxu0 %v533
    %887 = vmatprep.subr.mxu0 %v528
    %888 = vmatpush1.msra.mxu0 %v527
    %889 = vmatprep.subr.mxu0 %v522
    %890 = vmatpush1.msra.mxu0 %v521
    %891 = vmatprep.subr.mxu0 %v516
    %892 = vmatpush1.msra.mxu0 %v515
    %893 = vmatprep.subr.mxu0 %v510
    %894 = vmatpush1.msra.mxu0 %v509
    %895 = vmatprep.subr.mxu0 %v504
    %896 = vmatpush1.msra.mxu0 %v503
    %897 = vmatprep.subr.mxu0 %v498
    %898 = vmatpush1.msra.mxu0 %v497
    %899 = vmatprep.subr.mxu0 %v492
    %900 = vmatpush1.msra.mxu0 %v491
    %901 = vmatprep.subr.mxu0 0.0
    %902 = vmatpush2.msra.mxu0 0.0
    %903 = vmatprep.subr.mxu0 0.0
    %904 = vmatpush2.msra.mxu0 0.0
    %905 = vmatprep.subr.mxu0 0.0
    %906 = vmatpush2.msra.mxu0 0.0
    %907 = vmatprep.subr.mxu0 0.0
    %908 = vmatpush2.msra.mxu0 0.0
    %909 = vmatprep.subr.mxu0 0.0
    %910 = vmatpush2.msra.mxu0 0.0
    %911 = vmatprep.subr.mxu0 0.0
    %912 = vmatpush2.msra.mxu0 0.0
    %913 = vmatprep.subr.mxu0 0.0
    %914 = vmatpush2.msra.mxu0 0.0
    %915 = vmatprep.subr.mxu0 0.0
    %916 = vmatpush2.msra.mxu0 0.0
    %917 = vmatprep.subr.mxu0 0.0
    %918 = vmatpush2.msra.mxu0 0.0
    %919 = vmatprep.subr.mxu0 0.0
    %920 = vmatpush2.msra.mxu0 0.0
    %921 = vmatprep.subr.mxu0 0.0
    %922 = vmatpush2.msra.mxu0 0.0
    %923 = vmatprep.subr.mxu0 %v612
    %924 = vmatpush2.msra.mxu0 %v611
    %925 = vmatprep.subr.mxu0 %v606
    %926 = vmatpush2.msra.mxu0 %v605
    %927 = vmatprep.subr.mxu0 %v600
    %928 = vmatpush2.msra.mxu0 %v599
    %929 = vmatprep.subr.mxu0 %v594
    %930 = vmatpush2.msra.mxu0 %v593
    %931 = vmatprep.subr.mxu0 %v588
    %932 = vmatpush2.msra.mxu0 %v587
    %933 = vmatprep.mubr.f32.mxu0 %v655
    %934 = vmatmul.mubr.f32.gmra.mxu0 %v628
    %v935 = vpop.f32.mrf.mxu0
    %v936 = vadd.f32 0.0, %v935
    %v937 = vpop.f32.mrf.mxu0
    %v938 = vadd.f32 0.0, %v937
    %939 = vmatprep.mubr.f32.mxu0 %v657
    %940 = vmatmul.mubr.f32.gmra.mxu0 %v633
    %v941 = vpop.f32.mrf.mxu0
    %v942 = vadd.f32 0.0, %v941
    %v943 = vpop.f32.mrf.mxu0
    %v944 = vadd.f32 0.0, %v943
    %945 = vmatprep.mubr.f32.mxu0 %v659
    %946 = vmatmul.mubr.f32.gmra.mxu0 %v637
    %v947 = vpop.f32.mrf.mxu0
    %v948 = vadd.f32 0.0, %v947
    %v949 = vpop.f32.mrf.mxu0
    %v950 = vadd.f32 0.0, %v949
    %951 = vmatprep.mubr.f32.mxu0 %v661
    %952 = vmatmul.mubr.f32.gmra.mxu0 %v641
    %v953 = vpop.f32.mrf.mxu0
    %v954 = vadd.f32 0.0, %v953
    %v955 = vpop.f32.mrf.mxu0
    %v956 = vadd.f32 0.0, %v955
    %957 = vmatprep.mubr.f32.mxu0 %v663
    %958 = vmatmul.mubr.f32.gmra.mxu0 %v645
    %v959 = vpop.f32.mrf.mxu0
    %v960 = vadd.f32 0.0, %v959
    %v961 = vpop.f32.mrf.mxu0
    %v962 = vadd.f32 0.0, %v961
    %963 = vmatprep.mubr.f32.mxu0 %v665
    %964 = vmatmul.mubr.f32.gmra.mxu0 %v644
    %v965 = vpop.f32.mrf.mxu0
    %v966 = vadd.f32 0.0, %v965
    %v967 = vpop.f32.mrf.mxu0
    %v968 = vadd.f32 0.0, %v967
    %969 = vdwg.mxu0
    %v971 = vsel %vm654, %v268, 0
    %v974 = vsel %vm654, %v274, 0
    %v977 = vsel %vm654, %v280, 0
    %v980 = vsel %vm654, %v286, 0
    %v983 = vsel %vm654, %v292, 0
    %v985 = vsel %vm654, %v298, 0
    %987 = vmatprep.subr.mxu0 %v451
    %988 = vmatpush1.msra.mxu0 %v450
    %989 = vmatprep.subr.mxu0 %v445
    %990 = vmatpush1.msra.mxu0 %v444
    %991 = vmatprep.subr.mxu0 %v439
    %992 = vmatpush1.msra.mxu0 %v438
    %993 = vmatprep.subr.mxu0 %v433
    %994 = vmatpush1.msra.mxu0 %v432
    %995 = vmatprep.subr.mxu0 %v427
    %996 = vmatpush1.msra.mxu0 %v426
    %997 = vmatprep.subr.mxu0 %v421
    %998 = vmatpush1.msra.mxu0 %v420
    %999 = vmatprep.subr.mxu0 %v415
    %1000 = vmatpush1.msra.mxu0 %v414
    %1001 = vmatprep.subr.mxu0 %v409
    %1002 = vmatpush1.msra.mxu0 %v408
    %1003 = vmatprep.subr.mxu0 %v403
    %1004 = vmatpush1.msra.mxu0 %v402
    %1005 = vmatprep.subr.mxu0 %v397
    %1006 = vmatpush1.msra.mxu0 %v396
    %1007 = vmatprep.subr.mxu0 %v391
    %1008 = vmatpush1.msra.mxu0 %v390
    %1009 = vmatprep.subr.mxu0 %v385
    %1010 = vmatpush1.msra.mxu0 %v384
    %1011 = vmatprep.subr.mxu0 %v379
    %1012 = vmatpush1.msra.mxu0 %v378
    %1013 = vmatprep.subr.mxu0 %v373
    %1014 = vmatpush1.msra.mxu0 %v372
    %1015 = vmatprep.subr.mxu0 %v367
    %1016 = vmatpush1.msra.mxu0 %v366
    %1017 = vmatprep.subr.mxu0 %v361
    %1018 = vmatpush1.msra.mxu0 %v360
    %1019 = vmatprep.subr.mxu0 0.0
    %1020 = vmatpush2.msra.mxu0 0.0
    %1021 = vmatprep.subr.mxu0 0.0
    %1022 = vmatpush2.msra.mxu0 0.0
    %1023 = vmatprep.subr.mxu0 0.0
    %1024 = vmatpush2.msra.mxu0 0.0
    %1025 = vmatprep.subr.mxu0 0.0
    %1026 = vmatpush2.msra.mxu0 0.0
    %1027 = vmatprep.subr.mxu0 0.0
    %1028 = vmatpush2.msra.mxu0 0.0
    %1029 = vmatprep.subr.mxu0 0.0
    %1030 = vmatpush2.msra.mxu0 0.0
    %1031 = vmatprep.subr.mxu0 0.0
    %1032 = vmatpush2.msra.mxu0 0.0
    %1033 = vmatprep.subr.mxu0 0.0
    %1034 = vmatpush2.msra.mxu0 0.0
    %1035 = vmatprep.subr.mxu0 0.0
    %1036 = vmatpush2.msra.mxu0 0.0
    %1037 = vmatprep.subr.mxu0 0.0
    %1038 = vmatpush2.msra.mxu0 0.0
    %1039 = vmatprep.subr.mxu0 0.0
    %1040 = vmatpush2.msra.mxu0 0.0
    %1041 = vmatprep.subr.mxu0 %v481
    %1042 = vmatpush2.msra.mxu0 %v480
    %1043 = vmatprep.subr.mxu0 %v475
    %1044 = vmatpush2.msra.mxu0 %v474
    %1045 = vmatprep.subr.mxu0 %v469
    %1046 = vmatpush2.msra.mxu0 %v468
    %1047 = vmatprep.subr.mxu0 %v463
    %1048 = vmatpush2.msra.mxu0 %v462
    %1049 = vmatprep.subr.mxu0 %v457
    %1050 = vmatpush2.msra.mxu0 %v456
    %1051 = vmatprep.mubr.f32.mxu0 %v971
    %1052 = vmatmul.mubr.f32.gmra.mxu0 %v266
    %v1053 = vpop.f32.mrf.mxu0
    %v1054 = vadd.f32 %v734, %v1053
    %v1055 = vpop.f32.mrf.mxu0
    %v1056 = vadd.f32 %v736, %v1055
    %1057 = vmatprep.mubr.f32.mxu0 %v974
    %1058 = vmatmul.mubr.f32.gmra.mxu0 %v272
    %v1059 = vpop.f32.mrf.mxu0
    %v1060 = vadd.f32 %v740, %v1059
    %v1061 = vpop.f32.mrf.mxu0
    %v1062 = vadd.f32 %v742, %v1061
    %1063 = vmatprep.mubr.f32.mxu0 %v977
    %1064 = vmatmul.mubr.f32.gmra.mxu0 %v278
    %v1065 = vpop.f32.mrf.mxu0
    %v1066 = vadd.f32 %v746, %v1065
    %v1067 = vpop.f32.mrf.mxu0
    %v1068 = vadd.f32 %v748, %v1067
    %1069 = vmatprep.mubr.f32.mxu0 %v980
    %1070 = vmatmul.mubr.f32.gmra.mxu0 %v284
    %v1071 = vpop.f32.mrf.mxu0
    %v1072 = vadd.f32 %v752, %v1071
    %v1073 = vpop.f32.mrf.mxu0
    %v1074 = vadd.f32 %v754, %v1073
    %1075 = vmatprep.mubr.f32.mxu0 %v983
    %1076 = vmatmul.mubr.f32.gmra.mxu0 %v290
    %v1077 = vpop.f32.mrf.mxu0
    %v1078 = vadd.f32 %v758, %v1077
    %v1079 = vpop.f32.mrf.mxu0
    %v1080 = vadd.f32 %v760, %v1079
    %1081 = vmatprep.mubr.f32.mxu0 %v985
    %1082 = vmatmul.mubr.f32.gmra.mxu0 %v296
    %v1083 = vpop.f32.mrf.mxu0
    %v1084 = vadd.f32 %v764, %v1083
    %v1085 = vpop.f32.mrf.mxu0
    %v1086 = vadd.f32 %v766, %v1085
    %1087 = vdwg.mxu0
    %1088 = vmatprep.subr.mxu0 %v453
    %1089 = vmatpush1.msra.mxu0 %v452
    %1090 = vmatprep.subr.mxu0 %v447
    %1091 = vmatpush1.msra.mxu0 %v446
    %1092 = vmatprep.subr.mxu0 %v441
    %1093 = vmatpush1.msra.mxu0 %v440
    %1094 = vmatprep.subr.mxu0 %v435
    %1095 = vmatpush1.msra.mxu0 %v434
    %1096 = vmatprep.subr.mxu0 %v429
    %1097 = vmatpush1.msra.mxu0 %v428
    %1098 = vmatprep.subr.mxu0 %v423
    %1099 = vmatpush1.msra.mxu0 %v422
    %1100 = vmatprep.subr.mxu0 %v417
    %1101 = vmatpush1.msra.mxu0 %v416
    %1102 = vmatprep.subr.mxu0 %v411
    %1103 = vmatpush1.msra.mxu0 %v410
    %1104 = vmatprep.subr.mxu0 %v405
    %1105 = vmatpush1.msra.mxu0 %v404
    %1106 = vmatprep.subr.mxu0 %v399
    %1107 = vmatpush1.msra.mxu0 %v398
    %1108 = vmatprep.subr.mxu0 %v393
    %1109 = vmatpush1.msra.mxu0 %v392
    %1110 = vmatprep.subr.mxu0 %v387
    %1111 = vmatpush1.msra.mxu0 %v386
    %1112 = vmatprep.subr.mxu0 %v381
    %1113 = vmatpush1.msra.mxu0 %v380
    %1114 = vmatprep.subr.mxu0 %v375
    %1115 = vmatpush1.msra.mxu0 %v374
    %1116 = vmatprep.subr.mxu0 %v369
    %1117 = vmatpush1.msra.mxu0 %v368
    %1118 = vmatprep.subr.mxu0 %v363
    %1119 = vmatpush1.msra.mxu0 %v362
    %1120 = vmatprep.subr.mxu0 0.0
    %1121 = vmatpush2.msra.mxu0 0.0
    %1122 = vmatprep.subr.mxu0 0.0
    %1123 = vmatpush2.msra.mxu0 0.0
    %1124 = vmatprep.subr.mxu0 0.0
    %1125 = vmatpush2.msra.mxu0 0.0
    %1126 = vmatprep.subr.mxu0 0.0
    %1127 = vmatpush2.msra.mxu0 0.0
    %1128 = vmatprep.subr.mxu0 0.0
    %1129 = vmatpush2.msra.mxu0 0.0
    %1130 = vmatprep.subr.mxu0 0.0
    %1131 = vmatpush2.msra.mxu0 0.0
    %1132 = vmatprep.subr.mxu0 0.0
    %1133 = vmatpush2.msra.mxu0 0.0
    %1134 = vmatprep.subr.mxu0 0.0
    %1135 = vmatpush2.msra.mxu0 0.0
    %1136 = vmatprep.subr.mxu0 0.0
    %1137 = vmatpush2.msra.mxu0 0.0
    %1138 = vmatprep.subr.mxu0 0.0
    %1139 = vmatpush2.msra.mxu0 0.0
    %1140 = vmatprep.subr.mxu0 0.0
    %1141 = vmatpush2.msra.mxu0 0.0
    %1142 = vmatprep.subr.mxu0 %v483
    %1143 = vmatpush2.msra.mxu0 %v482
    %1144 = vmatprep.subr.mxu0 %v477
    %1145 = vmatpush2.msra.mxu0 %v476
    %1146 = vmatprep.subr.mxu0 %v471
    %1147 = vmatpush2.msra.mxu0 %v470
    %1148 = vmatprep.subr.mxu0 %v465
    %1149 = vmatpush2.msra.mxu0 %v464
    %1150 = vmatprep.subr.mxu0 %v459
    %1151 = vmatpush2.msra.mxu0 %v458
    %1152 = vmatprep.mubr.f32.mxu0 %v971
    %1153 = vmatmul.mubr.f32.gmra.mxu0 %v266
    %v1154 = vpop.f32.mrf.mxu0
    %v1155 = vadd.f32 %v835, %v1154
    %v1156 = vpop.f32.mrf.mxu0
    %v1157 = vadd.f32 %v837, %v1156
    %1158 = vmatprep.mubr.f32.mxu0 %v974
    %1159 = vmatmul.mubr.f32.gmra.mxu0 %v272
    %v1160 = vpop.f32.mrf.mxu0
    %v1161 = vadd.f32 %v841, %v1160
    %v1162 = vpop.f32.mrf.mxu0
    %v1163 = vadd.f32 %v843, %v1162
    %1164 = vmatprep.mubr.f32.mxu0 %v977
    %1165 = vmatmul.mubr.f32.gmra.mxu0 %v278
    %v1166 = vpop.f32.mrf.mxu0
    %v1167 = vadd.f32 %v847, %v1166
    %v1168 = vpop.f32.mrf.mxu0
    %v1169 = vadd.f32 %v849, %v1168
    %1170 = vmatprep.mubr.f32.mxu0 %v980
    %1171 = vmatmul.mubr.f32.gmra.mxu0 %v284
    %v1172 = vpop.f32.mrf.mxu0
    %v1173 = vadd.f32 %v853, %v1172
    %v1174 = vpop.f32.mrf.mxu0
    %v1175 = vadd.f32 %v855, %v1174
    %1176 = vmatprep.mubr.f32.mxu0 %v983
    %1177 = vmatmul.mubr.f32.gmra.mxu0 %v290
    %v1178 = vpop.f32.mrf.mxu0
    %v1179 = vadd.f32 %v859, %v1178
    %v1180 = vpop.f32.mrf.mxu0
    %v1181 = vadd.f32 %v861, %v1180
    %1182 = vmatprep.mubr.f32.mxu0 %v985
    %1183 = vmatmul.mubr.f32.gmra.mxu0 %v296
    %v1184 = vpop.f32.mrf.mxu0
    %v1185 = vadd.f32 %v865, %v1184
    %v1186 = vpop.f32.mrf.mxu0
    %v1187 = vadd.f32 %v867, %v1186
    %1188 = vdwg.mxu0
    %1189 = vmatprep.subr.mxu0 %v455
    %1190 = vmatpush1.msra.mxu0 %v454
    %1191 = vmatprep.subr.mxu0 %v449
    %1192 = vmatpush1.msra.mxu0 %v448
    %1193 = vmatprep.subr.mxu0 %v443
    %1194 = vmatpush1.msra.mxu0 %v442
    %1195 = vmatprep.subr.mxu0 %v437
    %1196 = vmatpush1.msra.mxu0 %v436
    %1197 = vmatprep.subr.mxu0 %v431
    %1198 = vmatpush1.msra.mxu0 %v430
    %1199 = vmatprep.subr.mxu0 %v425
    %1200 = vmatpush1.msra.mxu0 %v424
    %1201 = vmatprep.subr.mxu0 %v419
    %1202 = vmatpush1.msra.mxu0 %v418
    %1203 = vmatprep.subr.mxu0 %v413
    %1204 = vmatpush1.msra.mxu0 %v412
    %1205 = vmatprep.subr.mxu0 %v407
    %1206 = vmatpush1.msra.mxu0 %v406
    %1207 = vmatprep.subr.mxu0 %v401
    %1208 = vmatpush1.msra.mxu0 %v400
    %1209 = vmatprep.subr.mxu0 %v395
    %1210 = vmatpush1.msra.mxu0 %v394
    %1211 = vmatprep.subr.mxu0 %v389
    %1212 = vmatpush1.msra.mxu0 %v388
    %1213 = vmatprep.subr.mxu0 %v383
    %1214 = vmatpush1.msra.mxu0 %v382
    %1215 = vmatprep.subr.mxu0 %v377
    %1216 = vmatpush1.msra.mxu0 %v376
    %1217 = vmatprep.subr.mxu0 %v371
    %1218 = vmatpush1.msra.mxu0 %v370
    %1219 = vmatprep.subr.mxu0 %v365
    %1220 = vmatpush1.msra.mxu0 %v364
    %1221 = vmatprep.subr.mxu0 0.0
    %1222 = vmatpush2.msra.mxu0 0.0
    %1223 = vmatprep.subr.mxu0 0.0
    %1224 = vmatpush2.msra.mxu0 0.0
    %1225 = vmatprep.subr.mxu0 0.0
    %1226 = vmatpush2.msra.mxu0 0.0
    %1227 = vmatprep.subr.mxu0 0.0
    %1228 = vmatpush2.msra.mxu0 0.0
    %1229 = vmatprep.subr.mxu0 0.0
    %1230 = vmatpush2.msra.mxu0 0.0
    %1231 = vmatprep.subr.mxu0 0.0
    %1232 = vmatpush2.msra.mxu0 0.0
    %1233 = vmatprep.subr.mxu0 0.0
    %1234 = vmatpush2.msra.mxu0 0.0
    %1235 = vmatprep.subr.mxu0 0.0
    %1236 = vmatpush2.msra.mxu0 0.0
    %1237 = vmatprep.subr.mxu0 0.0
    %1238 = vmatpush2.msra.mxu0 0.0
    %1239 = vmatprep.subr.mxu0 0.0
    %1240 = vmatpush2.msra.mxu0 0.0
    %1241 = vmatprep.subr.mxu0 0.0
    %1242 = vmatpush2.msra.mxu0 0.0
    %1243 = vmatprep.subr.mxu0 %v485
    %1244 = vmatpush2.msra.mxu0 %v484
    %1245 = vmatprep.subr.mxu0 %v479
    %1246 = vmatpush2.msra.mxu0 %v478
    %1247 = vmatprep.subr.mxu0 %v473
    %1248 = vmatpush2.msra.mxu0 %v472
    %1249 = vmatprep.subr.mxu0 %v467
    %1250 = vmatpush2.msra.mxu0 %v466
    %1251 = vmatprep.subr.mxu0 %v461
    %1252 = vmatpush2.msra.mxu0 %v460
    %1253 = vmatprep.mubr.f32.mxu0 %v971
    %1254 = vmatmul.mubr.f32.gmra.mxu0 %v266
    %v1255 = vpop.f32.mrf.mxu0
    %v1256 = vadd.f32 %v936, %v1255
    %v1257 = vpop.f32.mrf.mxu0
    %v1258 = vadd.f32 %v938, %v1257
    %1259 = vmatprep.mubr.f32.mxu0 %v974
    %1260 = vmatmul.mubr.f32.gmra.mxu0 %v272
    %v1261 = vpop.f32.mrf.mxu0
    %v1262 = vadd.f32 %v942, %v1261
    %v1263 = vpop.f32.mrf.mxu0
    %v1264 = vadd.f32 %v944, %v1263
    %1265 = vmatprep.mubr.f32.mxu0 %v977
    %1266 = vmatmul.mubr.f32.gmra.mxu0 %v278
    %v1267 = vpop.f32.mrf.mxu0
    %v1268 = vadd.f32 %v948, %v1267
    %v1269 = vpop.f32.mrf.mxu0
    %v1270 = vadd.f32 %v950, %v1269
    %1271 = vmatprep.mubr.f32.mxu0 %v980
    %1272 = vmatmul.mubr.f32.gmra.mxu0 %v284
    %v1273 = vpop.f32.mrf.mxu0
    %v1274 = vadd.f32 %v954, %v1273
    %v1275 = vpop.f32.mrf.mxu0
    %v1276 = vadd.f32 %v956, %v1275
    %1277 = vmatprep.mubr.f32.mxu0 %v983
    %1278 = vmatmul.mubr.f32.gmra.mxu0 %v290
    %v1279 = vpop.f32.mrf.mxu0
    %v1280 = vadd.f32 %v960, %v1279
    %v1281 = vpop.f32.mrf.mxu0
    %v1282 = vadd.f32 %v962, %v1281
    %1283 = vmatprep.mubr.f32.mxu0 %v985
    %1284 = vmatmul.mubr.f32.gmra.mxu0 %v296
    %v1285 = vpop.f32.mrf.mxu0
    %v1286 = vadd.f32 %v966, %v1285
    %v1287 = vpop.f32.mrf.mxu0
    %v1288 = vadd.f32 %v968, %v1287
    %1289 = vdwg.mxu0
    %s1290 = scalar_lea.vmem [#allocation4], 2016
    %v1291 = vld [vmem:[%s1290] sm:$0xff]
    %v1292 = vld [vmem:[%s1290 + $0x8] sm:$0xff]
    %v1293 = vld [vmem:[%s1290 + $0x10] sm:$0xff]
    %v1294 = vld [vmem:[%s1290 + $0x18] sm:$0xff]
    %v1295 = vld [vmem:[%s1290 + $0x20] sm:$0xff]
    %v1296 = vld [vmem:[%s1290 + $0x28] sm:$0xff]
    %v1297 = vld [vmem:[%s1290 + $0x30] sm:$0xff]
    %v1298 = vld [vmem:[%s1290 + $0x38] sm:$0xff]
    %v1299 = vld [vmem:[%s1290 + $0x40] sm:$0xff]
    %v1300 = vld [vmem:[%s1290 + $0x48] sm:$0xff]
    %v1301 = vld [vmem:[%s1290 + $0x50] sm:$0xff]
    %v1302 = vld [vmem:[%s1290 + $0x58] sm:$0xff]
    %v1303 = vld [vmem:[%s1290 + $0x60] sm:$0xff]
    %v1304 = vld [vmem:[%s1290 + $0x68] sm:$0xff]
    %v1305 = vld [vmem:[%s1290 + $0x70] sm:$0xff]
    %v1306 = vld [vmem:[%s1290 + $0x78] sm:$0xff]
    %v1307 = vld [vmem:[%s1290 + $0x80] sm:$0xff]
    %v1308 = vld [vmem:[%s1290 + $0x88] sm:$0xff]
    %v1309 = vld [vmem:[%s1290 + $0x90] sm:$0xff]
    %v1310 = vld [vmem:[%s1290 + $0x98] sm:$0xff]
    %v1311 = vld [vmem:[%s1290 + $0xa0] sm:$0xff]
    %v1312 = vld [vmem:[%s1290 + $0xa8] sm:$0xff]
    %v1313 = vld [vmem:[%s1290 + $0xb0] sm:$0xff]
    %v1314 = vld [vmem:[%s1290 + $0xb8] sm:$0xff]
    %v1315 = vld [vmem:[%s1290 + $0xc0] sm:$0xff]
    %v1316 = vld [vmem:[%s1290 + $0xc8] sm:$0xff]
    %v1317 = vld [vmem:[%s1290 + $0xd0] sm:$0xff]
    %v1318 = vld [vmem:[%s1290 + $0xd8] sm:$0xff]
    %v1319 = vld [vmem:[%s1290 + $0xe0] sm:$0xff]
    %v1320 = vld [vmem:[%s1290 + $0xe8] sm:$0xff]
    %v1321 = vld [vmem:[%s1290 + $0xf0] sm:$0xff]
    %v1322 = vld [vmem:[%s1290 + $0xf8] sm:$0xff]
    %v1323 = vld [vmem:[%s1290 + $0x100] sm:$0xff]
    %v1324 = vld [vmem:[%s1290 + $0x108] sm:$0xff]
    %v1325 = vld [vmem:[%s1290 + $0x110] sm:$0xff]
    %v1326 = vld [vmem:[%s1290 + $0x118] sm:$0xff]
    %v1327 = vld [vmem:[%s1290 + $0x120] sm:$0xff]
    %v1328 = vld [vmem:[%s1290 + $0x128] sm:$0xff]
    %v1329 = vld [vmem:[%s1290 + $0x130] sm:$0xff]
    %v1330 = vld [vmem:[%s1290 + $0x138] sm:$0xff]
    %v1331 = vld [vmem:[%s1290 + $0x140] sm:$0xff]
    %v1332 = vld [vmem:[%s1290 + $0x148] sm:$0xff]
    %v1333 = vld [vmem:[%s1290 + $0x150] sm:$0xff]
    %v1334 = vld [vmem:[%s1290 + $0x158] sm:$0xff]
    %v1335 = vld [vmem:[%s1290 + $0x160] sm:$0xff]
    %v1336 = vld [vmem:[%s1290 + $0x168] sm:$0xff]
    %v1337 = vld [vmem:[%s1290 + $0x170] sm:$0xff]
    %v1338 = vld [vmem:[%s1290 + $0x178] sm:$0xff]
    %v1339 = vld [vmem:[%s1290 + $0x180] sm:$0xff]
    %v1340 = vld [vmem:[%s1290 + $0x188] sm:$0xff]
    %v1341 = vld [vmem:[%s1290 + $0x190] sm:$0xff]
    %v1342 = vld [vmem:[%s1290 + $0x198] sm:$0xff]
    %v1343 = vld [vmem:[%s1290 + $0x1a0] sm:$0xff]
    %v1344 = vld [vmem:[%s1290 + $0x1a8] sm:$0xff]
    %v1345 = vld [vmem:[%s1290 + $0x1b0] sm:$0xff]
    %v1346 = vld [vmem:[%s1290 + $0x1b8] sm:$0xff]
    %v1347 = vld [vmem:[%s1290 + $0x1c0] sm:$0xff]
    %v1348 = vld [vmem:[%s1290 + $0x1c8] sm:$0xff]
    %v1349 = vld [vmem:[%s1290 + $0x1d0] sm:$0xff]
    %v1350 = vld [vmem:[%s1290 + $0x1d8] sm:$0xff]
    %v1351 = vld [vmem:[%s1290 + $0x1e0] sm:$0xff]
    %v1352 = vld [vmem:[%s1290 + $0x1e8] sm:$0xff]
    %v1353 = vld [vmem:[%s1290 + $0x1f0] sm:$0xff]
    %v1354 = vld [vmem:[%s1290 + $0x1f8] sm:$0xff]
    %v1355 = vld [vmem:[%s1290 + $0x200] sm:$0xff]
    %v1356 = vld [vmem:[%s1290 + $0x208] sm:$0xff]
    %v1357 = vld [vmem:[%s1290 + $0x210] sm:$0xff]
    %v1358 = vld [vmem:[%s1290 + $0x218] sm:$0xff]
    %v1359 = vld [vmem:[%s1290 + $0x220] sm:$0xff]
    %v1360 = vld [vmem:[%s1290 + $0x228] sm:$0xff]
    %v1361 = vld [vmem:[%s1290 + $0x230] sm:$0xff]
    %v1362 = vld [vmem:[%s1290 + $0x238] sm:$0xff]
    %v1363 = vld [vmem:[%s1290 + $0x240] sm:$0xff]
    %v1364 = vld [vmem:[%s1290 + $0x248] sm:$0xff]
    %v1365 = vld [vmem:[%s1290 + $0x250] sm:$0xff]
    %v1366 = vld [vmem:[%s1290 + $0x258] sm:$0xff]
    %v1367 = vld [vmem:[%s1290 + $0x260] sm:$0xff]
    %v1368 = vld [vmem:[%s1290 + $0x268] sm:$0xff]
    %v1369 = vld [vmem:[%s1290 + $0x270] sm:$0xff]
    %v1370 = vld [vmem:[%s1290 + $0x278] sm:$0xff]
    %v1371 = vld [vmem:[%s1290 + $0x280] sm:$0xff]
    %v1372 = vld [vmem:[%s1290 + $0x288] sm:$0xff]
    %v1373 = vld [vmem:[%s1290 + $0x290] sm:$0xff]
    %v1374 = vld [vmem:[%s1290 + $0x298] sm:$0xff]
    %v1375 = vld [vmem:[%s1290 + $0x2a0] sm:$0xff]
    %v1376 = vld [vmem:[%s1290 + $0x2a8] sm:$0xff]
    %v1377 = vld [vmem:[%s1290 + $0x2b0] sm:$0xff]
    %v1378 = vld [vmem:[%s1290 + $0x2b8] sm:$0xff]
    %v1379 = vld [vmem:[%s1290 + $0x2c0] sm:$0xff]
    %v1380 = vld [vmem:[%s1290 + $0x2c8] sm:$0xff]
    %v1381 = vld [vmem:[%s1290 + $0x2d0] sm:$0xff]
    %v1382 = vld [vmem:[%s1290 + $0x2d8] sm:$0xff]
    %v1383 = vld [vmem:[%s1290 + $0x2e0] sm:$0xff]
    %v1384 = vld [vmem:[%s1290 + $0x2e8] sm:$0xff]
    %v1385 = vld [vmem:[%s1290 + $0x2f0] sm:$0xff]
    %v1386 = vld [vmem:[%s1290 + $0x2f8] sm:$0xff]
    %v1387 = vld [vmem:[%s1290 + $0x300] sm:$0xff]
    %v1388 = vld [vmem:[%s1290 + $0x308] sm:$0xff]
    %v1389 = vld [vmem:[%s1290 + $0x310] sm:$0xff]
    %v1390 = vld [vmem:[%s1290 + $0x318] sm:$0xff]
    %v1391 = vld [vmem:[%s1290 + $0x320] sm:$0xff]
    %v1392 = vld [vmem:[%s1290 + $0x328] sm:$0xff]
    %v1393 = vld [vmem:[%s1290 + $0x330] sm:$0xff]
    %v1394 = vld [vmem:[%s1290 + $0x338] sm:$0xff]
    %v1395 = vld [vmem:[%s1290 + $0x340] sm:$0xff]
    %v1396 = vld [vmem:[%s1290 + $0x348] sm:$0xff]
    %v1397 = vld [vmem:[%s1290 + $0x350] sm:$0xff]
    %v1398 = vld [vmem:[%s1290 + $0x358] sm:$0xff]
    %v1399 = vld [vmem:[%s1290 + $0x360] sm:$0xff]
    %v1400 = vld [vmem:[%s1290 + $0x368] sm:$0xff]
    %v1401 = vld [vmem:[%s1290 + $0x370] sm:$0xff]
    %v1402 = vld [vmem:[%s1290 + $0x378] sm:$0xff]
    %v1403 = vld [vmem:[%s1290 + $0x380] sm:$0xff]
    %v1404 = vld [vmem:[%s1290 + $0x388] sm:$0xff]
    %v1405 = vld [vmem:[%s1290 + $0x390] sm:$0xff]
    %v1406 = vld [vmem:[%s1290 + $0x398] sm:$0xff]
    %v1407 = vld [vmem:[%s1290 + $0x3a0] sm:$0xff]
    %v1408 = vld [vmem:[%s1290 + $0x3a8] sm:$0xff]
    %v1409 = vld [vmem:[%s1290 + $0x3b0] sm:$0xff]
    %v1410 = vld [vmem:[%s1290 + $0x3b8] sm:$0xff]
    %v1411 = vld [vmem:[%s1290 + $0x3c0] sm:$0xff]
    %v1412 = vld [vmem:[%s1290 + $0x3c8] sm:$0xff]
    %v1413 = vld [vmem:[%s1290 + $0x3d0] sm:$0xff]
    %v1414 = vld [vmem:[%s1290 + $0x3d8] sm:$0xff]
    %v1415 = vld [vmem:[%s1290 + $0x3e0] sm:$0xff]
    %v1416 = vld [vmem:[%s1290 + $0x3e8] sm:$0xff]
    %v1427 = vrot.slane %v326, 4
    %v1428 = vrot.slane %v332, 4
    %v1429 = vsel %vm192, %v1427, %v1428
    %v1430 = vrot.slane %v328, 4
    %v1431 = vrot.slane %v334, 4
    %v1432 = vsel %vm192, %v1430, %v1431
    %v1433 = vrot.slane %v338, 4
    %v1434 = vsel %vm192, %v1428, %v1433
    %v1435 = vrot.slane %v340, 4
    %v1436 = vsel %vm192, %v1431, %v1435
    %v1437 = vrot.slane %v344, 4
    %v1438 = vsel %vm192, %v1433, %v1437
    %v1439 = vrot.slane %v346, 4
    %v1440 = vsel %vm192, %v1435, %v1439
    %v1441 = vrot.slane %v350, 4
    %v1442 = vsel %vm192, %v1437, %v1441
    %v1443 = vrot.slane %v352, 4
    %v1444 = vsel %vm192, %v1439, %v1443
    %v1445 = vrot.slane %v356, 4
    %v1446 = vsel %vm192, %v1441, %v1445
    %v1447 = vrot.slane %v358, 4
    %v1448 = vsel %vm192, %v1443, %v1447
    %v1455 = vsel %vm654, %v1432, 0
    %v1457 = vsel %vm654, %v1436, 0
    %v1459 = vsel %vm654, %v1440, 0
    %v1461 = vsel %vm654, %v1444, 0
    %v1463 = vsel %vm654, %v1448, 0
    %v1465 = vsel %vm654, %v1447, 0
    %1467 = vmatprep.subr.mxu0 %v1382
    %1468 = vmatpush1.msra.mxu0 %v1381
    %1469 = vmatprep.subr.mxu0 %v1376
    %1470 = vmatpush1.msra.mxu0 %v1375
    %1471 = vmatprep.subr.mxu0 %v1370
    %1472 = vmatpush1.msra.mxu0 %v1369
    %1473 = vmatprep.subr.mxu0 %v1364
    %1474 = vmatpush1.msra.mxu0 %v1363
    %1475 = vmatprep.subr.mxu0 %v1358
    %1476 = vmatpush1.msra.mxu0 %v1357
    %1477 = vmatprep.subr.mxu0 %v1352
    %1478 = vmatpush1.msra.mxu0 %v1351
    %1479 = vmatprep.subr.mxu0 %v1346
    %1480 = vmatpush1.msra.mxu0 %v1345
    %1481 = vmatprep.subr.mxu0 %v1340
    %1482 = vmatpush1.msra.mxu0 %v1339
    %1483 = vmatprep.subr.mxu0 %v1334
    %1484 = vmatpush1.msra.mxu0 %v1333
    %1485 = vmatprep.subr.mxu0 %v1328
    %1486 = vmatpush1.msra.mxu0 %v1327
    %1487 = vmatprep.subr.mxu0 %v1322
    %1488 = vmatpush1.msra.mxu0 %v1321
    %1489 = vmatprep.subr.mxu0 %v1316
    %1490 = vmatpush1.msra.mxu0 %v1315
    %1491 = vmatprep.subr.mxu0 %v1310
    %1492 = vmatpush1.msra.mxu0 %v1309
    %1493 = vmatprep.subr.mxu0 %v1304
    %1494 = vmatpush1.msra.mxu0 %v1303
    %1495 = vmatprep.subr.mxu0 %v1298
    %1496 = vmatpush1.msra.mxu0 %v1297
    %1497 = vmatprep.subr.mxu0 %v1292
    %1498 = vmatpush1.msra.mxu0 %v1291
    %1499 = vmatprep.subr.mxu0 0.0
    %1500 = vmatpush2.msra.mxu0 0.0
    %1501 = vmatprep.subr.mxu0 0.0
    %1502 = vmatpush2.msra.mxu0 0.0
    %1503 = vmatprep.subr.mxu0 0.0
    %1504 = vmatpush2.msra.mxu0 0.0
    %1505 = vmatprep.subr.mxu0 0.0
    %1506 = vmatpush2.msra.mxu0 0.0
    %1507 = vmatprep.subr.mxu0 0.0
    %1508 = vmatpush2.msra.mxu0 0.0
    %1509 = vmatprep.subr.mxu0 0.0
    %1510 = vmatpush2.msra.mxu0 0.0
    %1511 = vmatprep.subr.mxu0 0.0
    %1512 = vmatpush2.msra.mxu0 0.0
    %1513 = vmatprep.subr.mxu0 0.0
    %1514 = vmatpush2.msra.mxu0 0.0
    %1515 = vmatprep.subr.mxu0 0.0
    %1516 = vmatpush2.msra.mxu0 0.0
    %1517 = vmatprep.subr.mxu0 0.0
    %1518 = vmatpush2.msra.mxu0 0.0
    %1519 = vmatprep.subr.mxu0 0.0
    %1520 = vmatpush2.msra.mxu0 0.0
    %1521 = vmatprep.subr.mxu0 %v1412
    %1522 = vmatpush2.msra.mxu0 %v1411
    %1523 = vmatprep.subr.mxu0 %v1406
    %1524 = vmatpush2.msra.mxu0 %v1405
    %1525 = vmatprep.subr.mxu0 %v1400
    %1526 = vmatpush2.msra.mxu0 %v1399
    %1527 = vmatprep.subr.mxu0 %v1394
    %1528 = vmatpush2.msra.mxu0 %v1393
    %1529 = vmatprep.subr.mxu0 %v1388
    %1530 = vmatpush2.msra.mxu0 %v1387
    %1531 = vmatprep.mubr.f32.mxu0 %v1455
    %1532 = vmatmul.mubr.f32.gmra.mxu0 %v1429
    %v1533 = vpop.f32.mrf.mxu0
    %v1534 = vadd.f32 0.0, %v1533
    %v1535 = vpop.f32.mrf.mxu0
    %v1536 = vadd.f32 0.0, %v1535
    %1537 = vmatprep.mubr.f32.mxu0 %v1457
    %1538 = vmatmul.mubr.f32.gmra.mxu0 %v1434
    %v1539 = vpop.f32.mrf.mxu0
    %v1540 = vadd.f32 0.0, %v1539
    %v1541 = vpop.f32.mrf.mxu0
    %v1542 = vadd.f32 0.0, %v1541
    %1543 = vmatprep.mubr.f32.mxu0 %v1459
    %1544 = vmatmul.mubr.f32.gmra.mxu0 %v1438
    %v1545 = vpop.f32.mrf.mxu0
    %v1546 = vadd.f32 0.0, %v1545
    %v1547 = vpop.f32.mrf.mxu0
    %v1548 = vadd.f32 0.0, %v1547
    %1549 = vmatprep.mubr.f32.mxu0 %v1461
    %1550 = vmatmul.mubr.f32.gmra.mxu0 %v1442
    %v1551 = vpop.f32.mrf.mxu0
    %v1552 = vadd.f32 0.0, %v1551
    %v1553 = vpop.f32.mrf.mxu0
    %v1554 = vadd.f32 0.0, %v1553
    %1555 = vmatprep.mubr.f32.mxu0 %v1463
    %1556 = vmatmul.mubr.f32.gmra.mxu0 %v1446
    %v1557 = vpop.f32.mrf.mxu0
    %v1558 = vadd.f32 0.0, %v1557
    %v1559 = vpop.f32.mrf.mxu0
    %v1560 = vadd.f32 0.0, %v1559
    %1561 = vmatprep.mubr.f32.mxu0 %v1465
    %1562 = vmatmul.mubr.f32.gmra.mxu0 %v1445
    %v1563 = vpop.f32.mrf.mxu0
    %v1564 = vadd.f32 0.0, %v1563
    %v1565 = vpop.f32.mrf.mxu0
    %v1566 = vadd.f32 0.0, %v1565
    %1567 = vdwg.mxu0
    %1568 = vmatprep.subr.mxu0 %v1384
    %1569 = vmatpush1.msra.mxu0 %v1383
    %1570 = vmatprep.subr.mxu0 %v1378
    %1571 = vmatpush1.msra.mxu0 %v1377
    %1572 = vmatprep.subr.mxu0 %v1372
    %1573 = vmatpush1.msra.mxu0 %v1371
    %1574 = vmatprep.subr.mxu0 %v1366
    %1575 = vmatpush1.msra.mxu0 %v1365
    %1576 = vmatprep.subr.mxu0 %v1360
    %1577 = vmatpush1.msra.mxu0 %v1359
    %1578 = vmatprep.subr.mxu0 %v1354
    %1579 = vmatpush1.msra.mxu0 %v1353
    %1580 = vmatprep.subr.mxu0 %v1348
    %1581 = vmatpush1.msra.mxu0 %v1347
    %1582 = vmatprep.subr.mxu0 %v1342
    %1583 = vmatpush1.msra.mxu0 %v1341
    %1584 = vmatprep.subr.mxu0 %v1336
    %1585 = vmatpush1.msra.mxu0 %v1335
    %1586 = vmatprep.subr.mxu0 %v1330
    %1587 = vmatpush1.msra.mxu0 %v1329
    %1588 = vmatprep.subr.mxu0 %v1324
    %1589 = vmatpush1.msra.mxu0 %v1323
    %1590 = vmatprep.subr.mxu0 %v1318
    %1591 = vmatpush1.msra.mxu0 %v1317
    %1592 = vmatprep.subr.mxu0 %v1312
    %1593 = vmatpush1.msra.mxu0 %v1311
    %1594 = vmatprep.subr.mxu0 %v1306
    %1595 = vmatpush1.msra.mxu0 %v1305
    %1596 = vmatprep.subr.mxu0 %v1300
    %1597 = vmatpush1.msra.mxu0 %v1299
    %1598 = vmatprep.subr.mxu0 %v1294
    %1599 = vmatpush1.msra.mxu0 %v1293
    %1600 = vmatprep.subr.mxu0 0.0
    %1601 = vmatpush2.msra.mxu0 0.0
    %1602 = vmatprep.subr.mxu0 0.0
    %1603 = vmatpush2.msra.mxu0 0.0
    %1604 = vmatprep.subr.mxu0 0.0
    %1605 = vmatpush2.msra.mxu0 0.0
    %1606 = vmatprep.subr.mxu0 0.0
    %1607 = vmatpush2.msra.mxu0 0.0
    %1608 = vmatprep.subr.mxu0 0.0
    %1609 = vmatpush2.msra.mxu0 0.0
    %1610 = vmatprep.subr.mxu0 0.0
    %1611 = vmatpush2.msra.mxu0 0.0
    %1612 = vmatprep.subr.mxu0 0.0
    %1613 = vmatpush2.msra.mxu0 0.0
    %1614 = vmatprep.subr.mxu0 0.0
    %1615 = vmatpush2.msra.mxu0 0.0
    %1616 = vmatprep.subr.mxu0 0.0
    %1617 = vmatpush2.msra.mxu0 0.0
    %1618 = vmatprep.subr.mxu0 0.0
    %1619 = vmatpush2.msra.mxu0 0.0
    %1620 = vmatprep.subr.mxu0 0.0
    %1621 = vmatpush2.msra.mxu0 0.0
    %1622 = vmatprep.subr.mxu0 %v1414
    %1623 = vmatpush2.msra.mxu0 %v1413
    %1624 = vmatprep.subr.mxu0 %v1408
    %1625 = vmatpush2.msra.mxu0 %v1407
    %1626 = vmatprep.subr.mxu0 %v1402
    %1627 = vmatpush2.msra.mxu0 %v1401
    %1628 = vmatprep.subr.mxu0 %v1396
    %1629 = vmatpush2.msra.mxu0 %v1395
    %1630 = vmatprep.subr.mxu0 %v1390
    %1631 = vmatpush2.msra.mxu0 %v1389
    %1632 = vmatprep.mubr.f32.mxu0 %v1455
    %1633 = vmatmul.mubr.f32.gmra.mxu0 %v1429
    %v1634 = vpop.f32.mrf.mxu0
    %v1635 = vadd.f32 0.0, %v1634
    %v1636 = vpop.f32.mrf.mxu0
    %v1637 = vadd.f32 0.0, %v1636
    %1638 = vmatprep.mubr.f32.mxu0 %v1457
    %1639 = vmatmul.mubr.f32.gmra.mxu0 %v1434
    %v1640 = vpop.f32.mrf.mxu0
    %v1641 = vadd.f32 0.0, %v1640
    %v1642 = vpop.f32.mrf.mxu0
    %v1643 = vadd.f32 0.0, %v1642
    %1644 = vmatprep.mubr.f32.mxu0 %v1459
    %1645 = vmatmul.mubr.f32.gmra.mxu0 %v1438
    %v1646 = vpop.f32.mrf.mxu0
    %v1647 = vadd.f32 0.0, %v1646
    %v1648 = vpop.f32.mrf.mxu0
    %v1649 = vadd.f32 0.0, %v1648
    %1650 = vmatprep.mubr.f32.mxu0 %v1461
    %1651 = vmatmul.mubr.f32.gmra.mxu0 %v1442
    %v1652 = vpop.f32.mrf.mxu0
    %v1653 = vadd.f32 0.0, %v1652
    %v1654 = vpop.f32.mrf.mxu0
    %v1655 = vadd.f32 0.0, %v1654
    %1656 = vmatprep.mubr.f32.mxu0 %v1463
    %1657 = vmatmul.mubr.f32.gmra.mxu0 %v1446
    %v1658 = vpop.f32.mrf.mxu0
    %v1659 = vadd.f32 0.0, %v1658
    %v1660 = vpop.f32.mrf.mxu0
    %v1661 = vadd.f32 0.0, %v1660
    %1662 = vmatprep.mubr.f32.mxu0 %v1465
    %1663 = vmatmul.mubr.f32.gmra.mxu0 %v1445
    %v1664 = vpop.f32.mrf.mxu0
    %v1665 = vadd.f32 0.0, %v1664
    %v1666 = vpop.f32.mrf.mxu0
    %v1667 = vadd.f32 0.0, %v1666
    %1668 = vdwg.mxu0
    %1669 = vmatprep.subr.mxu0 %v1386
    %1670 = vmatpush1.msra.mxu0 %v1385
    %1671 = vmatprep.subr.mxu0 %v1380
    %1672 = vmatpush1.msra.mxu0 %v1379
    %1673 = vmatprep.subr.mxu0 %v1374
    %1674 = vmatpush1.msra.mxu0 %v1373
    %1675 = vmatprep.subr.mxu0 %v1368
    %1676 = vmatpush1.msra.mxu0 %v1367
    %1677 = vmatprep.subr.mxu0 %v1362
    %1678 = vmatpush1.msra.mxu0 %v1361
    %1679 = vmatprep.subr.mxu0 %v1356
    %1680 = vmatpush1.msra.mxu0 %v1355
    %1681 = vmatprep.subr.mxu0 %v1350
    %1682 = vmatpush1.msra.mxu0 %v1349
    %1683 = vmatprep.subr.mxu0 %v1344
    %1684 = vmatpush1.msra.mxu0 %v1343
    %1685 = vmatprep.subr.mxu0 %v1338
    %1686 = vmatpush1.msra.mxu0 %v1337
    %1687 = vmatprep.subr.mxu0 %v1332
    %1688 = vmatpush1.msra.mxu0 %v1331
    %1689 = vmatprep.subr.mxu0 %v1326
    %1690 = vmatpush1.msra.mxu0 %v1325
    %1691 = vmatprep.subr.mxu0 %v1320
    %1692 = vmatpush1.msra.mxu0 %v1319
    %1693 = vmatprep.subr.mxu0 %v1314
    %1694 = vmatpush1.msra.mxu0 %v1313
    %1695 = vmatprep.subr.mxu0 %v1308
    %1696 = vmatpush1.msra.mxu0 %v1307
    %1697 = vmatprep.subr.mxu0 %v1302
    %1698 = vmatpush1.msra.mxu0 %v1301
    %1699 = vmatprep.subr.mxu0 %v1296
    %1700 = vmatpush1.msra.mxu0 %v1295
    %1701 = vmatprep.subr.mxu0 0.0
    %1702 = vmatpush2.msra.mxu0 0.0
    %1703 = vmatprep.subr.mxu0 0.0
    %1704 = vmatpush2.msra.mxu0 0.0
    %1705 = vmatprep.subr.mxu0 0.0
    %1706 = vmatpush2.msra.mxu0 0.0
    %1707 = vmatprep.subr.mxu0 0.0
    %1708 = vmatpush2.msra.mxu0 0.0
    %1709 = vmatprep.subr.mxu0 0.0
    %1710 = vmatpush2.msra.mxu0 0.0
    %1711 = vmatprep.subr.mxu0 0.0
    %1712 = vmatpush2.msra.mxu0 0.0
    %1713 = vmatprep.subr.mxu0 0.0
    %1714 = vmatpush2.msra.mxu0 0.0
    %1715 = vmatprep.subr.mxu0 0.0
    %1716 = vmatpush2.msra.mxu0 0.0
    %1717 = vmatprep.subr.mxu0 0.0
    %1718 = vmatpush2.msra.mxu0 0.0
    %1719 = vmatprep.subr.mxu0 0.0
    %1720 = vmatpush2.msra.mxu0 0.0
    %1721 = vmatprep.subr.mxu0 0.0
    %1722 = vmatpush2.msra.mxu0 0.0
    %1723 = vmatprep.subr.mxu0 %v1416
    %1724 = vmatpush2.msra.mxu0 %v1415
    %1725 = vmatprep.subr.mxu0 %v1410
    %1726 = vmatpush2.msra.mxu0 %v1409
    %1727 = vmatprep.subr.mxu0 %v1404
    %1728 = vmatpush2.msra.mxu0 %v1403
    %1729 = vmatprep.subr.mxu0 %v1398
    %1730 = vmatpush2.msra.mxu0 %v1397
    %1731 = vmatprep.subr.mxu0 %v1392
    %1732 = vmatpush2.msra.mxu0 %v1391
    %1733 = vmatprep.mubr.f32.mxu0 %v1455
    %1734 = vmatmul.mubr.f32.gmra.mxu0 %v1429
    %v1735 = vpop.f32.mrf.mxu0
    %v1736 = vadd.f32 0.0, %v1735
    %v1737 = vpop.f32.mrf.mxu0
    %v1738 = vadd.f32 0.0, %v1737
    %1739 = vmatprep.mubr.f32.mxu0 %v1457
    %1740 = vmatmul.mubr.f32.gmra.mxu0 %v1434
    %v1741 = vpop.f32.mrf.mxu0
    %v1742 = vadd.f32 0.0, %v1741
    %v1743 = vpop.f32.mrf.mxu0
    %v1744 = vadd.f32 0.0, %v1743
    %1745 = vmatprep.mubr.f32.mxu0 %v1459
    %1746 = vmatmul.mubr.f32.gmra.mxu0 %v1438
    %v1747 = vpop.f32.mrf.mxu0
    %v1748 = vadd.f32 0.0, %v1747
    %v1749 = vpop.f32.mrf.mxu0
    %v1750 = vadd.f32 0.0, %v1749
    %1751 = vmatprep.mubr.f32.mxu0 %v1461
    %1752 = vmatmul.mubr.f32.gmra.mxu0 %v1442
    %v1753 = vpop.f32.mrf.mxu0
    %v1754 = vadd.f32 0.0, %v1753
    %v1755 = vpop.f32.mrf.mxu0
    %v1756 = vadd.f32 0.0, %v1755
    %1757 = vmatprep.mubr.f32.mxu0 %v1463
    %1758 = vmatmul.mubr.f32.gmra.mxu0 %v1446
    %v1759 = vpop.f32.mrf.mxu0
    %v1760 = vadd.f32 0.0, %v1759
    %v1761 = vpop.f32.mrf.mxu0
    %v1762 = vadd.f32 0.0, %v1761
    %1763 = vmatprep.mubr.f32.mxu0 %v1465
    %1764 = vmatmul.mubr.f32.gmra.mxu0 %v1445
    %v1765 = vpop.f32.mrf.mxu0
    %v1766 = vadd.f32 0.0, %v1765
    %v1767 = vpop.f32.mrf.mxu0
    %v1768 = vadd.f32 0.0, %v1767
    %1769 = vdwg.mxu0
    %v1770 = vadd.f32 %v1054, %v1534
    %v1771 = vadd.f32 %v1056, %v1536
    %v1772 = vadd.f32 %v1155, %v1635
    %v1773 = vadd.f32 %v1157, %v1637
    %v1774 = vadd.f32 %v1256, %v1736
    %v1775 = vadd.f32 %v1258, %v1738
    %v1776 = vadd.f32 %v1060, %v1540
    %v1777 = vadd.f32 %v1062, %v1542
    %v1778 = vadd.f32 %v1161, %v1641
    %v1779 = vadd.f32 %v1163, %v1643
    %v1780 = vadd.f32 %v1262, %v1742
    %v1781 = vadd.f32 %v1264, %v1744
    %v1782 = vadd.f32 %v1066, %v1546
    %v1783 = vadd.f32 %v1068, %v1548
    %v1784 = vadd.f32 %v1167, %v1647
    %v1785 = vadd.f32 %v1169, %v1649
    %v1786 = vadd.f32 %v1268, %v1748
    %v1787 = vadd.f32 %v1270, %v1750
    %v1788 = vadd.f32 %v1072, %v1552
    %v1789 = vadd.f32 %v1074, %v1554
    %v1790 = vadd.f32 %v1173, %v1653
    %v1791 = vadd.f32 %v1175, %v1655
    %v1792 = vadd.f32 %v1274, %v1754
    %v1793 = vadd.f32 %v1276, %v1756
    %v1794 = vadd.f32 %v1078, %v1558
    %v1795 = vadd.f32 %v1080, %v1560
    %v1796 = vadd.f32 %v1179, %v1659
    %v1797 = vadd.f32 %v1181, %v1661
    %v1798 = vadd.f32 %v1280, %v1760
    %v1799 = vadd.f32 %v1282, %v1762
    %v1800 = vadd.f32 %v1084, %v1564
    %v1801 = vadd.f32 %v1086, %v1566
    %v1802 = vadd.f32 %v1185, %v1665
    %v1803 = vadd.f32 %v1187, %v1667
    %v1804 = vadd.f32 %v1286, %v1766
    %v1805 = vadd.f32 %v1288, %v1768
    %v1806 = vld [vmem:[%s5] sm:$0x3f]
    %v1808 = vlaneseq
    %v1809 = vshrl.u32 %v1808, 7
    %v1810 = vsub.s32 0, %v1809
    %v1811 = vrot.slane %v1806, %v1810
    %v1812 = vlaneseq
    %v1813 = vshrl.u32 %v1812, 7
    %v1814 = vsub.s32 1, %v1813
    %v1815 = vrot.slane %v1806, %v1814
    %v1816 = vlaneseq
    %v1817 = vshrl.u32 %v1816, 7
    %v1818 = vsub.s32 2, %v1817
    %v1819 = vrot.slane %v1806, %v1818
    %v1820 = vlaneseq
    %v1821 = vshrl.u32 %v1820, 7
    %v1822 = vsub.s32 3, %v1821
    %v1823 = vrot.slane %v1806, %v1822
    %v1824 = vlaneseq
    %v1825 = vshrl.u32 %v1824, 7
    %v1826 = vsub.s32 4, %v1825
    %v1827 = vrot.slane %v1806, %v1826
    %v1828 = vlaneseq
    %v1829 = vshrl.u32 %v1828, 7
    %v1830 = vsub.s32 5, %v1829
    %v1831 = vrot.slane %v1806, %v1830
    %v1838 = vadd.f32 %v1770, %v1811
    %v1839 = vadd.f32 %v1771, %v1815
    %v1840 = vadd.f32 %v1772, %v1819
    %v1841 = vadd.f32 %v1773, %v1823
    %v1842 = vadd.f32 %v1774, %v1827
    %v1843 = vadd.f32 %v1775, %v1831
    %v1844 = vadd.f32 %v1776, %v1811
    %v1845 = vadd.f32 %v1777, %v1815
    %v1846 = vadd.f32 %v1778, %v1819
    %v1847 = vadd.f32 %v1779, %v1823
    %v1848 = vadd.f32 %v1780, %v1827
    %v1849 = vadd.f32 %v1781, %v1831
    %v1850 = vadd.f32 %v1782, %v1811
    %v1851 = vadd.f32 %v1783, %v1815
    %v1852 = vadd.f32 %v1784, %v1819
    %v1853 = vadd.f32 %v1785, %v1823
    %v1854 = vadd.f32 %v1786, %v1827
    %v1855 = vadd.f32 %v1787, %v1831
    %v1856 = vadd.f32 %v1788, %v1811
    %v1857 = vadd.f32 %v1789, %v1815
    %v1858 = vadd.f32 %v1790, %v1819
    %v1859 = vadd.f32 %v1791, %v1823
    %v1860 = vadd.f32 %v1792, %v1827
    %v1861 = vadd.f32 %v1793, %v1831
    %v1862 = vadd.f32 %v1794, %v1811
    %v1863 = vadd.f32 %v1795, %v1815
    %v1864 = vadd.f32 %v1796, %v1819
    %v1865 = vadd.f32 %v1797, %v1823
    %v1866 = vadd.f32 %v1798, %v1827
    %v1867 = vadd.f32 %v1799, %v1831
    %v1868 = vadd.f32 %v1800, %v1811
    %v1869 = vadd.f32 %v1801, %v1815
    %v1870 = vadd.f32 %v1802, %v1819
    %v1871 = vadd.f32 %v1803, %v1823
    %v1872 = vadd.f32 %v1804, %v1827
    %v1873 = vadd.f32 %v1805, %v1831
    %vm1874 = vcmp.gt.f32.partialorder %v1838, 0.0
    %vm1875 = vcmp.gt.f32.partialorder %v1839, 0.0
    %vm1876 = vcmp.gt.f32.partialorder %v1840, 0.0
    %vm1877 = vcmp.gt.f32.partialorder %v1841, 0.0
    %vm1878 = vcmp.gt.f32.partialorder %v1842, 0.0
    %vm1879 = vcmp.gt.f32.partialorder %v1843, 0.0
    %vm1880 = vcmp.gt.f32.partialorder %v1844, 0.0
    %vm1881 = vcmp.gt.f32.partialorder %v1845, 0.0
    %vm1882 = vcmp.gt.f32.partialorder %v1846, 0.0
    %vm1883 = vcmp.gt.f32.partialorder %v1847, 0.0
    %vm1884 = vcmp.gt.f32.partialorder %v1848, 0.0
    %vm1885 = vcmp.gt.f32.partialorder %v1849, 0.0
    %vm1886 = vcmp.gt.f32.partialorder %v1850, 0.0
    %vm1887 = vcmp.gt.f32.partialorder %v1851, 0.0
    %vm1888 = vcmp.gt.f32.partialorder %v1852, 0.0
    %vm1889 = vcmp.gt.f32.partialorder %v1853, 0.0
    %vm1890 = vcmp.gt.f32.partialorder %v1854, 0.0
    %vm1891 = vcmp.gt.f32.partialorder %v1855, 0.0
    %vm1892 = vcmp.gt.f32.partialorder %v1856, 0.0
    %vm1893 = vcmp.gt.f32.partialorder %v1857, 0.0
    %vm1894 = vcmp.gt.f32.partialorder %v1858, 0.0
    %vm1895 = vcmp.gt.f32.partialorder %v1859, 0.0
    %vm1896 = vcmp.gt.f32.partialorder %v1860, 0.0
    %vm1897 = vcmp.gt.f32.partialorder %v1861, 0.0
    %vm1898 = vcmp.gt.f32.partialorder %v1862, 0.0
    %vm1899 = vcmp.gt.f32.partialorder %v1863, 0.0
    %vm1900 = vcmp.gt.f32.partialorder %v1864, 0.0
    %vm1901 = vcmp.gt.f32.partialorder %v1865, 0.0
    %vm1902 = vcmp.gt.f32.partialorder %v1866, 0.0
    %vm1903 = vcmp.gt.f32.partialorder %v1867, 0.0
    %vm1904 = vcmp.gt.f32.partialorder %v1868, 0.0
    %vm1905 = vcmp.gt.f32.partialorder %v1869, 0.0
    %vm1906 = vcmp.gt.f32.partialorder %v1870, 0.0
    %vm1907 = vcmp.gt.f32.partialorder %v1871, 0.0
    %vm1908 = vcmp.gt.f32.partialorder %v1872, 0.0
    %vm1909 = vcmp.gt.f32.partialorder %v1873, 0.0
    %v1910 = vmin.f32 %v1838, 0.0
    %v1911 = vmin.f32 %v1839, 0.0
    %v1912 = vmin.f32 %v1840, 0.0
    %v1913 = vmin.f32 %v1841, 0.0
    %v1914 = vmin.f32 %v1842, 0.0
    %v1915 = vmin.f32 %v1843, 0.0
    %v1916 = vmin.f32 %v1844, 0.0
    %v1917 = vmin.f32 %v1845, 0.0
    %v1918 = vmin.f32 %v1846, 0.0
    %v1919 = vmin.f32 %v1847, 0.0
    %v1920 = vmin.f32 %v1848, 0.0
    %v1921 = vmin.f32 %v1849, 0.0
    %v1922 = vmin.f32 %v1850, 0.0
    %v1923 = vmin.f32 %v1851, 0.0
    %v1924 = vmin.f32 %v1852, 0.0
    %v1925 = vmin.f32 %v1853, 0.0
    %v1926 = vmin.f32 %v1854, 0.0
    %v1927 = vmin.f32 %v1855, 0.0
    %v1928 = vmin.f32 %v1856, 0.0
    %v1929 = vmin.f32 %v1857, 0.0
    %v1930 = vmin.f32 %v1858, 0.0
    %v1931 = vmin.f32 %v1859, 0.0
    %v1932 = vmin.f32 %v1860, 0.0
    %v1933 = vmin.f32 %v1861, 0.0
    %v1934 = vmin.f32 %v1862, 0.0
    %v1935 = vmin.f32 %v1863, 0.0
    %v1936 = vmin.f32 %v1864, 0.0
    %v1937 = vmin.f32 %v1865, 0.0
    %v1938 = vmin.f32 %v1866, 0.0
    %v1939 = vmin.f32 %v1867, 0.0
    %v1940 = vmin.f32 %v1868, 0.0
    %v1941 = vmin.f32 %v1869, 0.0
    %v1942 = vmin.f32 %v1870, 0.0
    %v1943 = vmin.f32 %v1871, 0.0
    %v1944 = vmin.f32 %v1872, 0.0
    %v1945 = vmin.f32 %v1873, 0.0
    %v1946 = vmul.f32 %v1910, 1.442695
    %v1947 = vpow.pop %v1946
    %v1948 = vmul.f32 %v1911, 1.442695
    %v1949 = vpow.pop %v1948
    %v1950 = vmul.f32 %v1912, 1.442695
    %v1951 = vpow.pop %v1950
    %v1952 = vmul.f32 %v1913, 1.442695
    %v1953 = vpow.pop %v1952
    %v1954 = vmul.f32 %v1914, 1.442695
    %v1955 = vpow.pop %v1954
    %v1956 = vmul.f32 %v1915, 1.442695
    %v1957 = vpow.pop %v1956
    %v1958 = vmul.f32 %v1916, 1.442695
    %v1959 = vpow.pop %v1958
    %v1960 = vmul.f32 %v1917, 1.442695
    %v1961 = vpow.pop %v1960
    %v1962 = vmul.f32 %v1918, 1.442695
    %v1963 = vpow.pop %v1962
    %v1964 = vmul.f32 %v1919, 1.442695
    %v1965 = vpow.pop %v1964
    %v1966 = vmul.f32 %v1920, 1.442695
    %v1967 = vpow.pop %v1966
    %v1968 = vmul.f32 %v1921, 1.442695
    %v1969 = vpow.pop %v1968
    %v1970 = vmul.f32 %v1922, 1.442695
    %v1971 = vpow.pop %v1970
    %v1972 = vmul.f32 %v1923, 1.442695
    %v1973 = vpow.pop %v1972
    %v1974 = vmul.f32 %v1924, 1.442695
    %v1975 = vpow.pop %v1974
    %v1976 = vmul.f32 %v1925, 1.442695
    %v1977 = vpow.pop %v1976
    %v1978 = vmul.f32 %v1926, 1.442695
    %v1979 = vpow.pop %v1978
    %v1980 = vmul.f32 %v1927, 1.442695
    %v1981 = vpow.pop %v1980
    %v1982 = vmul.f32 %v1928, 1.442695
    %v1983 = vpow.pop %v1982
    %v1984 = vmul.f32 %v1929, 1.442695
    %v1985 = vpow.pop %v1984
    %v1986 = vmul.f32 %v1930, 1.442695
    %v1987 = vpow.pop %v1986
    %v1988 = vmul.f32 %v1931, 1.442695
    %v1989 = vpow.pop %v1988
    %v1990 = vmul.f32 %v1932, 1.442695
    %v1991 = vpow.pop %v1990
    %v1992 = vmul.f32 %v1933, 1.442695
    %v1993 = vpow.pop %v1992
    %v1994 = vmul.f32 %v1934, 1.442695
    %v1995 = vpow.pop %v1994
    %v1996 = vmul.f32 %v1935, 1.442695
    %v1997 = vpow.pop %v1996
    %v1998 = vmul.f32 %v1936, 1.442695
    %v1999 = vpow.pop %v1998
    %v2000 = vmul.f32 %v1937, 1.442695
    %v2001 = vpow.pop %v2000
    %v2002 = vmul.f32 %v1938, 1.442695
    %v2003 = vpow.pop %v2002
    %v2004 = vmul.f32 %v1939, 1.442695
    %v2005 = vpow.pop %v2004
    %v2006 = vmul.f32 %v1940, 1.442695
    %v2007 = vpow.pop %v2006
    %v2008 = vmul.f32 %v1941, 1.442695
    %v2009 = vpow.pop %v2008
    %v2010 = vmul.f32 %v1942, 1.442695
    %v2011 = vpow.pop %v2010
    %v2012 = vmul.f32 %v1943, 1.442695
    %v2013 = vpow.pop %v2012
    %v2014 = vmul.f32 %v1944, 1.442695
    %v2015 = vpow.pop %v2014
    %v2016 = vmul.f32 %v1945, 1.442695
    %v2017 = vpow.pop %v2016
    %v2018 = vsub.f32 %v1947, 1.0
    %v2019 = vsub.f32 %v1949, 1.0
    %v2020 = vsub.f32 %v1951, 1.0
    %v2021 = vsub.f32 %v1953, 1.0
    %v2022 = vsub.f32 %v1955, 1.0
    %v2023 = vsub.f32 %v1957, 1.0
    %v2024 = vsub.f32 %v1959, 1.0
    %v2025 = vsub.f32 %v1961, 1.0
    %v2026 = vsub.f32 %v1963, 1.0
    %v2027 = vsub.f32 %v1965, 1.0
    %v2028 = vsub.f32 %v1967, 1.0
    %v2029 = vsub.f32 %v1969, 1.0
    %v2030 = vsub.f32 %v1971, 1.0
    %v2031 = vsub.f32 %v1973, 1.0
    %v2032 = vsub.f32 %v1975, 1.0
    %v2033 = vsub.f32 %v1977, 1.0
    %v2034 = vsub.f32 %v1979, 1.0
    %v2035 = vsub.f32 %v1981, 1.0
    %v2036 = vsub.f32 %v1983, 1.0
    %v2037 = vsub.f32 %v1985, 1.0
    %v2038 = vsub.f32 %v1987, 1.0
    %v2039 = vsub.f32 %v1989, 1.0
    %v2040 = vsub.f32 %v1991, 1.0
    %v2041 = vsub.f32 %v1993, 1.0
    %v2042 = vsub.f32 %v1995, 1.0
    %v2043 = vsub.f32 %v1997, 1.0
    %v2044 = vsub.f32 %v1999, 1.0
    %v2045 = vsub.f32 %v2001, 1.0
    %v2046 = vsub.f32 %v2003, 1.0
    %v2047 = vsub.f32 %v2005, 1.0
    %v2048 = vsub.f32 %v2007, 1.0
    %v2049 = vsub.f32 %v2009, 1.0
    %v2050 = vsub.f32 %v2011, 1.0
    %v2051 = vsub.f32 %v2013, 1.0
    %v2052 = vsub.f32 %v2015, 1.0
    %v2053 = vsub.f32 %v2017, 1.0
    %v2054 = vsel %vm1874, %v1838, %v2018
    %v2055 = vsel %vm1875, %v1839, %v2019
    %v2056 = vsel %vm1876, %v1840, %v2020
    %v2057 = vsel %vm1877, %v1841, %v2021
    %v2058 = vsel %vm1878, %v1842, %v2022
    %v2059 = vsel %vm1879, %v1843, %v2023
    %v2060 = vsel %vm1880, %v1844, %v2024
    %v2061 = vsel %vm1881, %v1845, %v2025
    %v2062 = vsel %vm1882, %v1846, %v2026
    %v2063 = vsel %vm1883, %v1847, %v2027
    %v2064 = vsel %vm1884, %v1848, %v2028
    %v2065 = vsel %vm1885, %v1849, %v2029
    %v2066 = vsel %vm1886, %v1850, %v2030
    %v2067 = vsel %vm1887, %v1851, %v2031
    %v2068 = vsel %vm1888, %v1852, %v2032
    %v2069 = vsel %vm1889, %v1853, %v2033
    %v2070 = vsel %vm1890, %v1854, %v2034
    %v2071 = vsel %vm1891, %v1855, %v2035
    %v2072 = vsel %vm1892, %v1856, %v2036
    %v2073 = vsel %vm1893, %v1857, %v2037
    %v2074 = vsel %vm1894, %v1858, %v2038
    %v2075 = vsel %vm1895, %v1859, %v2039
    %v2076 = vsel %vm1896, %v1860, %v2040
    %v2077 = vsel %vm1897, %v1861, %v2041
    %v2078 = vsel %vm1898, %v1862, %v2042
    %v2079 = vsel %vm1899, %v1863, %v2043
    %v2080 = vsel %vm1900, %v1864, %v2044
    %v2081 = vsel %vm1901, %v1865, %v2045
    %v2082 = vsel %vm1902, %v1866, %v2046
    %v2083 = vsel %vm1903, %v1867, %v2047
    %v2084 = vsel %vm1904, %v1868, %v2048
    %v2085 = vsel %vm1905, %v1869, %v2049
    %v2086 = vsel %vm1906, %v1870, %v2050
    %v2087 = vsel %vm1907, %v1871, %v2051
    %v2088 = vsel %vm1908, %v1872, %v2052
    %v2089 = vsel %vm1909, %v1873, %v2053
    %v2090 = vld [vmem:[%s6] sm:$0xff]
    %v2091 = vld [vmem:[%s6 + $0x8] sm:$0xff]
    %v2092 = vld [vmem:[%s6 + $0x10] sm:$0xff]
    %v2093 = vld [vmem:[%s6 + $0x18] sm:$0xff]
    %v2094 = vld [vmem:[%s6 + $0x20] sm:$0xff]
    %v2095 = vld [vmem:[%s6 + $0x28] sm:$0xff]
    %v2096 = vld [vmem:[%s6 + $0x30] sm:$0xff]
    %v2097 = vld [vmem:[%s6 + $0x38] sm:$0xff]
    %v2098 = vld [vmem:[%s6 + $0x40] sm:$0x3]
    %vm2099 = vcmask 343040
    %v2101 = vsel %vm2099, %v2090, 0
    %v2104 = vsel %vm2099, %v2091, 0
    %v2107 = vsel %vm2099, %v2092, 0
    %v2110 = vsel %vm2099, %v2093, 0
    %v2113 = vsel %vm2099, %v2094, 0
    %v2116 = vsel %vm2099, %v2095, 0
    %v2119 = vsel %vm2099, %v2096, 0
    %v2122 = vsel %vm2099, %v2097, 0
    %v2125 = vsel %vm2099, %v2098, 0
    %vm2127 = vcmask 1041408
    %v2129 = vsel %vm2127, %v2084, 0
    %v2132 = vsel %vm2127, %v2085, 0
    %v2135 = vsel %vm2127, %v2086, 0
    %v2138 = vsel %vm2127, %v2087, 0
    %v2141 = vsel %vm2127, %v2088, 0
    %v2144 = vsel %vm2127, %v2089, 0
    %2146 = vmatprep.subr.mxu0 0.0
    %2147 = vmatpush1.msra.mxu0 0.0
    %2148 = vmatprep.subr.mxu0 0.0
    %2149 = vmatpush1.msra.mxu0 0.0
    %2150 = vmatprep.subr.mxu0 0.0
    %2151 = vmatpush1.msra.mxu0 0.0
    %2152 = vmatprep.subr.mxu0 0.0
    %2153 = vmatpush1.msra.mxu0 0.0
    %2154 = vmatprep.subr.mxu0 0.0
    %2155 = vmatpush1.msra.mxu0 0.0
    %2156 = vmatprep.subr.mxu0 0.0
    %2157 = vmatpush1.msra.mxu0 0.0
    %2158 = vmatprep.subr.mxu0 0.0
    %2159 = vmatpush1.msra.mxu0 0.0
    %2160 = vmatprep.subr.mxu0 0.0
    %2161 = vmatpush1.msra.mxu0 0.0
    %2162 = vmatprep.subr.mxu0 0.0
    %2163 = vmatpush1.msra.mxu0 0.0
    %2164 = vmatprep.subr.mxu0 0.0
    %2165 = vmatpush1.msra.mxu0 0.0
    %2166 = vmatprep.subr.mxu0 %v2132
    %2167 = vmatpush1.msra.mxu0 %v2129
    %2168 = vmatprep.subr.mxu0 %v2079
    %2169 = vmatpush1.msra.mxu0 %v2078
    %2170 = vmatprep.subr.mxu0 %v2073
    %2171 = vmatpush1.msra.mxu0 %v2072
    %2172 = vmatprep.subr.mxu0 %v2067
    %2173 = vmatpush1.msra.mxu0 %v2066
    %2174 = vmatprep.subr.mxu0 %v2061
    %2175 = vmatpush1.msra.mxu0 %v2060
    %2176 = vmatprep.subr.mxu0 %v2055
    %2177 = vmatpush1.msra.mxu0 %v2054
    %2178 = vmatprep.subr.mxu0 0.0
    %2179 = vmatpush2.msra.mxu0 0.0
    %2180 = vmatprep.subr.mxu0 0.0
    %2181 = vmatpush2.msra.mxu0 0.0
    %2182 = vmatprep.subr.mxu0 0.0
    %2183 = vmatpush2.msra.mxu0 0.0
    %2184 = vmatprep.subr.mxu0 0.0
    %2185 = vmatpush2.msra.mxu0 0.0
    %2186 = vmatprep.subr.mxu0 0.0
    %2187 = vmatpush2.msra.mxu0 0.0
    %2188 = vmatprep.subr.mxu0 0.0
    %2189 = vmatpush2.msra.mxu0 0.0
    %2190 = vmatprep.subr.mxu0 0.0
    %2191 = vmatpush2.msra.mxu0 0.0
    %2192 = vmatprep.subr.mxu0 0.0
    %2193 = vmatpush2.msra.mxu0 0.0
    %2194 = vmatprep.subr.mxu0 0.0
    %2195 = vmatpush2.msra.mxu0 0.0
    %2196 = vmatprep.subr.mxu0 0.0
    %2197 = vmatpush2.msra.mxu0 0.0
    %2198 = vmatprep.subr.mxu0 0.0
    %2199 = vmatpush2.msra.mxu0 0.0
    %2200 = vmatprep.subr.mxu0 0.0
    %2201 = vmatpush2.msra.mxu0 0.0
    %2202 = vmatprep.subr.mxu0 0.0
    %2203 = vmatpush2.msra.mxu0 0.0
    %2204 = vmatprep.subr.mxu0 0.0
    %2205 = vmatpush2.msra.mxu0 0.0
    %2206 = vmatprep.subr.mxu0 0.0
    %2207 = vmatpush2.msra.mxu0 0.0
    %2208 = vmatprep.subr.mxu0 0.0
    %2209 = vmatpush2.msra.mxu0 0.0
    %2210 = vmatprep.mubr.f32.mxu0 0.0
    %2211 = vmatmul.mubr.f32.gmra.mxu0 %v2101
    %v2212 = vpop.f32.mrf.mxu0
    %v2213 = vadd.f32 0.0, %v2212
    %v2214 = vpop.f32.mrf.mxu0
    %v2215 = vadd.f32 0.0, %v2214
    %2216 = vmatprep.mubr.f32.mxu0 0.0
    %2217 = vmatmul.mubr.f32.gmra.mxu0 %v2104
    %v2218 = vpop.f32.mrf.mxu0
    %v2219 = vadd.f32 0.0, %v2218
    %v2220 = vpop.f32.mrf.mxu0
    %v2221 = vadd.f32 0.0, %v2220
    %2222 = vmatprep.mubr.f32.mxu0 0.0
    %2223 = vmatmul.mubr.f32.gmra.mxu0 %v2107
    %v2224 = vpop.f32.mrf.mxu0
    %v2225 = vadd.f32 0.0, %v2224
    %v2226 = vpop.f32.mrf.mxu0
    %v2227 = vadd.f32 0.0, %v2226
    %2228 = vmatprep.mubr.f32.mxu0 0.0
    %2229 = vmatmul.mubr.f32.gmra.mxu0 %v2110
    %v2230 = vpop.f32.mrf.mxu0
    %v2231 = vadd.f32 0.0, %v2230
    %v2232 = vpop.f32.mrf.mxu0
    %v2233 = vadd.f32 0.0, %v2232
    %2234 = vmatprep.mubr.f32.mxu0 0.0
    %2235 = vmatmul.mubr.f32.gmra.mxu0 %v2113
    %v2236 = vpop.f32.mrf.mxu0
    %v2237 = vadd.f32 0.0, %v2236
    %v2238 = vpop.f32.mrf.mxu0
    %v2239 = vadd.f32 0.0, %v2238
    %2240 = vmatprep.mubr.f32.mxu0 0.0
    %2241 = vmatmul.mubr.f32.gmra.mxu0 %v2116
    %v2242 = vpop.f32.mrf.mxu0
    %v2243 = vadd.f32 0.0, %v2242
    %v2244 = vpop.f32.mrf.mxu0
    %v2245 = vadd.f32 0.0, %v2244
    %2246 = vmatprep.mubr.f32.mxu0 0.0
    %2247 = vmatmul.mubr.f32.gmra.mxu0 %v2119
    %v2248 = vpop.f32.mrf.mxu0
    %v2249 = vadd.f32 0.0, %v2248
    %v2250 = vpop.f32.mrf.mxu0
    %v2251 = vadd.f32 0.0, %v2250
    %2252 = vmatprep.mubr.f32.mxu0 0.0
    %2253 = vmatmul.mubr.f32.gmra.mxu0 %v2122
    %v2254 = vpop.f32.mrf.mxu0
    %v2255 = vadd.f32 0.0, %v2254
    %v2256 = vpop.f32.mrf.mxu0
    %v2257 = vadd.f32 0.0, %v2256
    %2258 = vmatprep.mubr.f32.mxu0 0.0
    %2259 = vmatmul.mubr.f32.gmra.mxu0 %v2125
    %v2260 = vpop.f32.mrf.mxu0
    %v2261 = vadd.f32 0.0, %v2260
    %v2262 = vpop.f32.mrf.mxu0
    %v2263 = vadd.f32 0.0, %v2262
    %2264 = vdwg.mxu0
    %2265 = vmatprep.subr.mxu0 0.0
    %2266 = vmatpush1.msra.mxu0 0.0
    %2267 = vmatprep.subr.mxu0 0.0
    %2268 = vmatpush1.msra.mxu0 0.0
    %2269 = vmatprep.subr.mxu0 0.0
    %2270 = vmatpush1.msra.mxu0 0.0
    %2271 = vmatprep.subr.mxu0 0.0
    %2272 = vmatpush1.msra.mxu0 0.0
    %2273 = vmatprep.subr.mxu0 0.0
    %2274 = vmatpush1.msra.mxu0 0.0
    %2275 = vmatprep.subr.mxu0 0.0
    %2276 = vmatpush1.msra.mxu0 0.0
    %2277 = vmatprep.subr.mxu0 0.0
    %2278 = vmatpush1.msra.mxu0 0.0
    %2279 = vmatprep.subr.mxu0 0.0
    %2280 = vmatpush1.msra.mxu0 0.0
    %2281 = vmatprep.subr.mxu0 0.0
    %2282 = vmatpush1.msra.mxu0 0.0
    %2283 = vmatprep.subr.mxu0 0.0
    %2284 = vmatpush1.msra.mxu0 0.0
    %2285 = vmatprep.subr.mxu0 %v2138
    %2286 = vmatpush1.msra.mxu0 %v2135
    %2287 = vmatprep.subr.mxu0 %v2081
    %2288 = vmatpush1.msra.mxu0 %v2080
    %2289 = vmatprep.subr.mxu0 %v2075
    %2290 = vmatpush1.msra.mxu0 %v2074
    %2291 = vmatprep.subr.mxu0 %v2069
    %2292 = vmatpush1.msra.mxu0 %v2068
    %2293 = vmatprep.subr.mxu0 %v2063
    %2294 = vmatpush1.msra.mxu0 %v2062
    %2295 = vmatprep.subr.mxu0 %v2057
    %2296 = vmatpush1.msra.mxu0 %v2056
    %2297 = vmatprep.subr.mxu0 0.0
    %2298 = vmatpush2.msra.mxu0 0.0
    %2299 = vmatprep.subr.mxu0 0.0
    %2300 = vmatpush2.msra.mxu0 0.0
    %2301 = vmatprep.subr.mxu0 0.0
    %2302 = vmatpush2.msra.mxu0 0.0
    %2303 = vmatprep.subr.mxu0 0.0
    %2304 = vmatpush2.msra.mxu0 0.0
    %2305 = vmatprep.subr.mxu0 0.0
    %2306 = vmatpush2.msra.mxu0 0.0
    %2307 = vmatprep.subr.mxu0 0.0
    %2308 = vmatpush2.msra.mxu0 0.0
    %2309 = vmatprep.subr.mxu0 0.0
    %2310 = vmatpush2.msra.mxu0 0.0
    %2311 = vmatprep.subr.mxu0 0.0
    %2312 = vmatpush2.msra.mxu0 0.0
    %2313 = vmatprep.subr.mxu0 0.0
    %2314 = vmatpush2.msra.mxu0 0.0
    %2315 = vmatprep.subr.mxu0 0.0
    %2316 = vmatpush2.msra.mxu0 0.0
    %2317 = vmatprep.subr.mxu0 0.0
    %2318 = vmatpush2.msra.mxu0 0.0
    %2319 = vmatprep.subr.mxu0 0.0
    %2320 = vmatpush2.msra.mxu0 0.0
    %2321 = vmatprep.subr.mxu0 0.0
    %2322 = vmatpush2.msra.mxu0 0.0
    %2323 = vmatprep.subr.mxu0 0.0
    %2324 = vmatpush2.msra.mxu0 0.0
    %2325 = vmatprep.subr.mxu0 0.0
    %2326 = vmatpush2.msra.mxu0 0.0
    %2327 = vmatprep.subr.mxu0 0.0
    %2328 = vmatpush2.msra.mxu0 0.0
    %2329 = vmatprep.mubr.f32.mxu0 0.0
    %2330 = vmatmul.mubr.f32.gmra.mxu0 %v2101
    %v2331 = vpop.f32.mrf.mxu0
    %v2332 = vadd.f32 0.0, %v2331
    %v2333 = vpop.f32.mrf.mxu0
    %v2334 = vadd.f32 0.0, %v2333
    %2335 = vmatprep.mubr.f32.mxu0 0.0
    %2336 = vmatmul.mubr.f32.gmra.mxu0 %v2104
    %v2337 = vpop.f32.mrf.mxu0
    %v2338 = vadd.f32 0.0, %v2337
    %v2339 = vpop.f32.mrf.mxu0
    %v2340 = vadd.f32 0.0, %v2339
    %2341 = vmatprep.mubr.f32.mxu0 0.0
    %2342 = vmatmul.mubr.f32.gmra.mxu0 %v2107
    %v2343 = vpop.f32.mrf.mxu0
    %v2344 = vadd.f32 0.0, %v2343
    %v2345 = vpop.f32.mrf.mxu0
    %v2346 = vadd.f32 0.0, %v2345
    %2347 = vmatprep.mubr.f32.mxu0 0.0
    %2348 = vmatmul.mubr.f32.gmra.mxu0 %v2110
    %v2349 = vpop.f32.mrf.mxu0
    %v2350 = vadd.f32 0.0, %v2349
    %v2351 = vpop.f32.mrf.mxu0
    %v2352 = vadd.f32 0.0, %v2351
    %2353 = vmatprep.mubr.f32.mxu0 0.0
    %2354 = vmatmul.mubr.f32.gmra.mxu0 %v2113
    %v2355 = vpop.f32.mrf.mxu0
    %v2356 = vadd.f32 0.0, %v2355
    %v2357 = vpop.f32.mrf.mxu0
    %v2358 = vadd.f32 0.0, %v2357
    %2359 = vmatprep.mubr.f32.mxu0 0.0
    %2360 = vmatmul.mubr.f32.gmra.mxu0 %v2116
    %v2361 = vpop.f32.mrf.mxu0
    %v2362 = vadd.f32 0.0, %v2361
    %v2363 = vpop.f32.mrf.mxu0
    %v2364 = vadd.f32 0.0, %v2363
    %2365 = vmatprep.mubr.f32.mxu0 0.0
    %2366 = vmatmul.mubr.f32.gmra.mxu0 %v2119
    %v2367 = vpop.f32.mrf.mxu0
    %v2368 = vadd.f32 0.0, %v2367
    %v2369 = vpop.f32.mrf.mxu0
    %v2370 = vadd.f32 0.0, %v2369
    %2371 = vmatprep.mubr.f32.mxu0 0.0
    %2372 = vmatmul.mubr.f32.gmra.mxu0 %v2122
    %v2373 = vpop.f32.mrf.mxu0
    %v2374 = vadd.f32 0.0, %v2373
    %v2375 = vpop.f32.mrf.mxu0
    %v2376 = vadd.f32 0.0, %v2375
    %2377 = vmatprep.mubr.f32.mxu0 0.0
    %2378 = vmatmul.mubr.f32.gmra.mxu0 %v2125
    %v2379 = vpop.f32.mrf.mxu0
    %v2380 = vadd.f32 0.0, %v2379
    %v2381 = vpop.f32.mrf.mxu0
    %v2382 = vadd.f32 0.0, %v2381
    %2383 = vdwg.mxu0
    %2384 = vmatprep.subr.mxu0 0.0
    %2385 = vmatpush1.msra.mxu0 0.0
    %2386 = vmatprep.subr.mxu0 0.0
    %2387 = vmatpush1.msra.mxu0 0.0
    %2388 = vmatprep.subr.mxu0 0.0
    %2389 = vmatpush1.msra.mxu0 0.0
    %2390 = vmatprep.subr.mxu0 0.0
    %2391 = vmatpush1.msra.mxu0 0.0
    %2392 = vmatprep.subr.mxu0 0.0
    %2393 = vmatpush1.msra.mxu0 0.0
    %2394 = vmatprep.subr.mxu0 0.0
    %2395 = vmatpush1.msra.mxu0 0.0
    %2396 = vmatprep.subr.mxu0 0.0
    %2397 = vmatpush1.msra.mxu0 0.0
    %2398 = vmatprep.subr.mxu0 0.0
    %2399 = vmatpush1.msra.mxu0 0.0
    %2400 = vmatprep.subr.mxu0 0.0
    %2401 = vmatpush1.msra.mxu0 0.0
    %2402 = vmatprep.subr.mxu0 0.0
    %2403 = vmatpush1.msra.mxu0 0.0
    %2404 = vmatprep.subr.mxu0 %v2144
    %2405 = vmatpush1.msra.mxu0 %v2141
    %2406 = vmatprep.subr.mxu0 %v2083
    %2407 = vmatpush1.msra.mxu0 %v2082
    %2408 = vmatprep.subr.mxu0 %v2077
    %2409 = vmatpush1.msra.mxu0 %v2076
    %2410 = vmatprep.subr.mxu0 %v2071
    %2411 = vmatpush1.msra.mxu0 %v2070
    %2412 = vmatprep.subr.mxu0 %v2065
    %2413 = vmatpush1.msra.mxu0 %v2064
    %2414 = vmatprep.subr.mxu0 %v2059
    %2415 = vmatpush1.msra.mxu0 %v2058
    %2416 = vmatprep.subr.mxu0 0.0
    %2417 = vmatpush2.msra.mxu0 0.0
    %2418 = vmatprep.subr.mxu0 0.0
    %2419 = vmatpush2.msra.mxu0 0.0
    %2420 = vmatprep.subr.mxu0 0.0
    %2421 = vmatpush2.msra.mxu0 0.0
    %2422 = vmatprep.subr.mxu0 0.0
    %2423 = vmatpush2.msra.mxu0 0.0
    %2424 = vmatprep.subr.mxu0 0.0
    %2425 = vmatpush2.msra.mxu0 0.0
    %2426 = vmatprep.subr.mxu0 0.0
    %2427 = vmatpush2.msra.mxu0 0.0
    %2428 = vmatprep.subr.mxu0 0.0
    %2429 = vmatpush2.msra.mxu0 0.0
    %2430 = vmatprep.subr.mxu0 0.0
    %2431 = vmatpush2.msra.mxu0 0.0
    %2432 = vmatprep.subr.mxu0 0.0
    %2433 = vmatpush2.msra.mxu0 0.0
    %2434 = vmatprep.subr.mxu0 0.0
    %2435 = vmatpush2.msra.mxu0 0.0
    %2436 = vmatprep.subr.mxu0 0.0
    %2437 = vmatpush2.msra.mxu0 0.0
    %2438 = vmatprep.subr.mxu0 0.0
    %2439 = vmatpush2.msra.mxu0 0.0
    %2440 = vmatprep.subr.mxu0 0.0
    %2441 = vmatpush2.msra.mxu0 0.0
    %2442 = vmatprep.subr.mxu0 0.0
    %2443 = vmatpush2.msra.mxu0 0.0
    %2444 = vmatprep.subr.mxu0 0.0
    %2445 = vmatpush2.msra.mxu0 0.0
    %2446 = vmatprep.subr.mxu0 0.0
    %2447 = vmatpush2.msra.mxu0 0.0
    %2448 = vmatprep.mubr.f32.mxu0 0.0
    %2449 = vmatmul.mubr.f32.gmra.mxu0 %v2101
    %v2450 = vpop.f32.mrf.mxu0
    %v2451 = vadd.f32 0.0, %v2450
    %v2452 = vpop.f32.mrf.mxu0
    %v2453 = vadd.f32 0.0, %v2452
    %2454 = vmatprep.mubr.f32.mxu0 0.0
    %2455 = vmatmul.mubr.f32.gmra.mxu0 %v2104
    %v2456 = vpop.f32.mrf.mxu0
    %v2457 = vadd.f32 0.0, %v2456
    %v2458 = vpop.f32.mrf.mxu0
    %v2459 = vadd.f32 0.0, %v2458
    %2460 = vmatprep.mubr.f32.mxu0 0.0
    %2461 = vmatmul.mubr.f32.gmra.mxu0 %v2107
    %v2462 = vpop.f32.mrf.mxu0
    %v2463 = vadd.f32 0.0, %v2462
    %v2464 = vpop.f32.mrf.mxu0
    %v2465 = vadd.f32 0.0, %v2464
    %2466 = vmatprep.mubr.f32.mxu0 0.0
    %2467 = vmatmul.mubr.f32.gmra.mxu0 %v2110
    %v2468 = vpop.f32.mrf.mxu0
    %v2469 = vadd.f32 0.0, %v2468
    %v2470 = vpop.f32.mrf.mxu0
    %v2471 = vadd.f32 0.0, %v2470
    %2472 = vmatprep.mubr.f32.mxu0 0.0
    %2473 = vmatmul.mubr.f32.gmra.mxu0 %v2113
    %v2474 = vpop.f32.mrf.mxu0
    %v2475 = vadd.f32 0.0, %v2474
    %v2476 = vpop.f32.mrf.mxu0
    %v2477 = vadd.f32 0.0, %v2476
    %2478 = vmatprep.mubr.f32.mxu0 0.0
    %2479 = vmatmul.mubr.f32.gmra.mxu0 %v2116
    %v2480 = vpop.f32.mrf.mxu0
    %v2481 = vadd.f32 0.0, %v2480
    %v2482 = vpop.f32.mrf.mxu0
    %v2483 = vadd.f32 0.0, %v2482
    %2484 = vmatprep.mubr.f32.mxu0 0.0
    %2485 = vmatmul.mubr.f32.gmra.mxu0 %v2119
    %v2486 = vpop.f32.mrf.mxu0
    %v2487 = vadd.f32 0.0, %v2486
    %v2488 = vpop.f32.mrf.mxu0
    %v2489 = vadd.f32 0.0, %v2488
    %2490 = vmatprep.mubr.f32.mxu0 0.0
    %2491 = vmatmul.mubr.f32.gmra.mxu0 %v2122
    %v2492 = vpop.f32.mrf.mxu0
    %v2493 = vadd.f32 0.0, %v2492
    %v2494 = vpop.f32.mrf.mxu0
    %v2495 = vadd.f32 0.0, %v2494
    %2496 = vmatprep.mubr.f32.mxu0 0.0
    %2497 = vmatmul.mubr.f32.gmra.mxu0 %v2125
    %v2498 = vpop.f32.mrf.mxu0
    %v2499 = vadd.f32 0.0, %v2498
    %v2500 = vpop.f32.mrf.mxu0
    %v2501 = vadd.f32 0.0, %v2500
    %2502 = vdwg.mxu0
    %v2503 = vld [vmem:[%s7] sm:$0xff]
    %v2504 = vld [vmem:[%s7 + $0x8] sm:$0xff]
    %v2505 = vld [vmem:[%s7 + $0x10] sm:$0xff]
    %v2506 = vld [vmem:[%s7 + $0x18] sm:$0xff]
    %v2507 = vld [vmem:[%s7 + $0x20] sm:$0xff]
    %v2508 = vld [vmem:[%s7 + $0x28] sm:$0xff]
    %v2509 = vld [vmem:[%s7 + $0x30] sm:$0xff]
    %v2510 = vld [vmem:[%s7 + $0x38] sm:$0xff]
    %v2511 = vld [vmem:[%s7 + $0x40] sm:$0xff]
    %v2512 = vld [vmem:[%s7 + $0x48] sm:$0xff]
    %v2513 = vld [vmem:[%s7 + $0x50] sm:$0xff]
    %v2514 = vld [vmem:[%s7 + $0x58] sm:$0xff]
    %v2515 = vld [vmem:[%s7 + $0x60] sm:$0xff]
    %v2516 = vld [vmem:[%s7 + $0x68] sm:$0xff]
    %v2517 = vld [vmem:[%s7 + $0x70] sm:$0xff]
    %v2518 = vld [vmem:[%s7 + $0x78] sm:$0xff]
    %v2519 = vld [vmem:[%s7 + $0x80] sm:$0xff]
    %v2520 = vld [vmem:[%s7 + $0x88] sm:$0xff]
    %v2521 = vld [vmem:[%s7 + $0x90] sm:$0xff]
    %v2522 = vld [vmem:[%s7 + $0x98] sm:$0xff]
    %v2523 = vld [vmem:[%s7 + $0xa0] sm:$0xff]
    %v2524 = vld [vmem:[%s7 + $0xa8] sm:$0xff]
    %v2525 = vld [vmem:[%s7 + $0xb0] sm:$0xff]
    %v2526 = vld [vmem:[%s7 + $0xb8] sm:$0xff]
    %v2527 = vld [vmem:[%s7 + $0xc0] sm:$0xff]
    %v2528 = vld [vmem:[%s7 + $0xc8] sm:$0xff]
    %v2529 = vld [vmem:[%s7 + $0xd0] sm:$0xff]
    %v2530 = vld [vmem:[%s7 + $0xd8] sm:$0xff]
    %v2531 = vld [vmem:[%s7 + $0xe0] sm:$0xff]
    %v2532 = vld [vmem:[%s7 + $0xe8] sm:$0xff]
    %v2533 = vld [vmem:[%s7 + $0xf0] sm:$0xff]
    %v2534 = vld [vmem:[%s7 + $0xf8] sm:$0xff]
    %v2535 = vld [vmem:[%s7 + $0x100] sm:$0xff]
    %v2536 = vld [vmem:[%s7 + $0x108] sm:$0xff]
    %v2537 = vld [vmem:[%s7 + $0x110] sm:$0xff]
    %v2538 = vld [vmem:[%s7 + $0x118] sm:$0xff]
    %v2539 = vld [vmem:[%s7 + $0x120] sm:$0xff]
    %v2540 = vld [vmem:[%s7 + $0x128] sm:$0xff]
    %v2541 = vld [vmem:[%s7 + $0x130] sm:$0xff]
    %v2542 = vld [vmem:[%s7 + $0x138] sm:$0xff]
    %v2543 = vld [vmem:[%s7 + $0x140] sm:$0xff]
    %v2544 = vld [vmem:[%s7 + $0x148] sm:$0xff]
    %v2545 = vld [vmem:[%s7 + $0x150] sm:$0xff]
    %v2546 = vld [vmem:[%s7 + $0x158] sm:$0xff]
    %v2547 = vld [vmem:[%s7 + $0x160] sm:$0xff]
    %v2548 = vld [vmem:[%s7 + $0x168] sm:$0xff]
    %v2549 = vld [vmem:[%s7 + $0x170] sm:$0xff]
    %v2550 = vld [vmem:[%s7 + $0x178] sm:$0xff]
    %v2551 = vld [vmem:[%s7 + $0x180] sm:$0xff]
    %v2552 = vld [vmem:[%s7 + $0x188] sm:$0xff]
    %v2553 = vld [vmem:[%s7 + $0x190] sm:$0xff]
    %v2554 = vld [vmem:[%s7 + $0x198] sm:$0xff]
    %v2555 = vld [vmem:[%s7 + $0x1a0] sm:$0xff]
    %v2556 = vld [vmem:[%s7 + $0x1a8] sm:$0xff]
    %v2557 = vld [vmem:[%s7 + $0x1b0] sm:$0xff]
    %v2558 = vld [vmem:[%s7 + $0x1b8] sm:$0xff]
    %v2559 = vld [vmem:[%s7 + $0x1c0] sm:$0xff]
    %v2560 = vld [vmem:[%s7 + $0x1c8] sm:$0xff]
    %v2561 = vld [vmem:[%s7 + $0x1d0] sm:$0xff]
    %v2562 = vld [vmem:[%s7 + $0x1d8] sm:$0xff]
    %v2563 = vld [vmem:[%s7 + $0x1e0] sm:$0xff]
    %v2564 = vld [vmem:[%s7 + $0x1e8] sm:$0xff]
    %v2565 = vld [vmem:[%s7 + $0x1f0] sm:$0xff]
    %v2566 = vld [vmem:[%s7 + $0x1f8] sm:$0xff]
    %v2567 = vld [vmem:[%s7 + $0x200] sm:$0xff]
    %v2568 = vld [vmem:[%s7 + $0x208] sm:$0xff]
    %v2569 = vld [vmem:[%s7 + $0x210] sm:$0xff]
    %v2570 = vld [vmem:[%s7 + $0x218] sm:$0xff]
    %v2571 = vld [vmem:[%s7 + $0x220] sm:$0xff]
    %v2572 = vld [vmem:[%s7 + $0x228] sm:$0xff]
    %v2573 = vld [vmem:[%s7 + $0x230] sm:$0xff]
    %v2574 = vld [vmem:[%s7 + $0x238] sm:$0xff]
    %v2575 = vld [vmem:[%s7 + $0x240] sm:$0xff]
    %v2576 = vld [vmem:[%s7 + $0x248] sm:$0xff]
    %v2577 = vld [vmem:[%s7 + $0x250] sm:$0xff]
    %v2578 = vld [vmem:[%s7 + $0x258] sm:$0xff]
    %v2579 = vld [vmem:[%s7 + $0x260] sm:$0xff]
    %v2580 = vld [vmem:[%s7 + $0x268] sm:$0xff]
    %v2581 = vld [vmem:[%s7 + $0x270] sm:$0xff]
    %v2582 = vld [vmem:[%s7 + $0x278] sm:$0xff]
    %v2583 = vld [vmem:[%s7 + $0x280] sm:$0xff]
    %v2584 = vld [vmem:[%s7 + $0x288] sm:$0xff]
    %v2585 = vld [vmem:[%s7 + $0x290] sm:$0xff]
    %v2586 = vld [vmem:[%s7 + $0x298] sm:$0xff]
    %v2587 = vld [vmem:[%s7 + $0x2a0] sm:$0xff]
    %v2588 = vld [vmem:[%s7 + $0x2a8] sm:$0xff]
    %v2589 = vld [vmem:[%s7 + $0x2b0] sm:$0xff]
    %v2590 = vld [vmem:[%s7 + $0x2b8] sm:$0xff]
    %v2591 = vld [vmem:[%s7 + $0x2c0] sm:$0xff]
    %v2592 = vld [vmem:[%s7 + $0x2c8] sm:$0xff]
    %v2593 = vld [vmem:[%s7 + $0x2d0] sm:$0xff]
    %v2594 = vld [vmem:[%s7 + $0x2d8] sm:$0xff]
    %v2595 = vld [vmem:[%s7 + $0x2e0] sm:$0xff]
    %v2596 = vld [vmem:[%s7 + $0x2e8] sm:$0xff]
    %v2597 = vld [vmem:[%s7 + $0x2f0] sm:$0xff]
    %v2598 = vld [vmem:[%s7 + $0x2f8] sm:$0xff]
    %v2599 = vld [vmem:[%s7 + $0x300] sm:$0xff]
    %v2600 = vld [vmem:[%s7 + $0x308] sm:$0xff]
    %v2601 = vld [vmem:[%s7 + $0x310] sm:$0xff]
    %v2602 = vld [vmem:[%s7 + $0x318] sm:$0xff]
    %v2603 = vld [vmem:[%s7 + $0x320] sm:$0xff]
    %v2604 = vld [vmem:[%s7 + $0x328] sm:$0xff]
    %v2605 = vld [vmem:[%s7 + $0x330] sm:$0xff]
    %v2606 = vld [vmem:[%s7 + $0x338] sm:$0xff]
    %v2607 = vld [vmem:[%s7 + $0x340] sm:$0xff]
    %v2608 = vld [vmem:[%s7 + $0x348] sm:$0xff]
    %v2609 = vld [vmem:[%s7 + $0x350] sm:$0xff]
    %v2610 = vld [vmem:[%s7 + $0x358] sm:$0xff]
    %v2611 = vld [vmem:[%s7 + $0x360] sm:$0xff]
    %v2612 = vld [vmem:[%s7 + $0x368] sm:$0xff]
    %v2613 = vld [vmem:[%s7 + $0x370] sm:$0xff]
    %v2614 = vld [vmem:[%s7 + $0x378] sm:$0xff]
    %v2615 = vld [vmem:[%s7 + $0x380] sm:$0xff]
    %v2616 = vld [vmem:[%s7 + $0x388] sm:$0xff]
    %v2617 = vld [vmem:[%s7 + $0x390] sm:$0xff]
    %v2618 = vld [vmem:[%s7 + $0x398] sm:$0xff]
    %v2619 = vld [vmem:[%s7 + $0x3a0] sm:$0xff]
    %v2620 = vld [vmem:[%s7 + $0x3a8] sm:$0xff]
    %v2621 = vld [vmem:[%s7 + $0x3b0] sm:$0xff]
    %v2622 = vld [vmem:[%s7 + $0x3b8] sm:$0xff]
    %v2623 = vld [vmem:[%s7 + $0x3c0] sm:$0xff]
    %v2624 = vld [vmem:[%s7 + $0x3c8] sm:$0xff]
    %v2625 = vld [vmem:[%s7 + $0x3d0] sm:$0xff]
    %v2626 = vld [vmem:[%s7 + $0x3d8] sm:$0xff]
    %v2627 = vld [vmem:[%s7 + $0x3e0] sm:$0xff]
    %v2628 = vld [vmem:[%s7 + $0x3e8] sm:$0xff]
    %v2629 = vld [vmem:[%s7 + $0x3f0] sm:$0xff]
    %v2630 = vld [vmem:[%s7 + $0x3f8] sm:$0xff]
    %v2631 = vld [vmem:[%s7 + $0x400] sm:$0xff]
    %v2632 = vld [vmem:[%s7 + $0x408] sm:$0xff]
    %v2633 = vld [vmem:[%s7 + $0x410] sm:$0xff]
    %v2634 = vld [vmem:[%s7 + $0x418] sm:$0xff]
    %v2635 = vld [vmem:[%s7 + $0x420] sm:$0xff]
    %v2636 = vld [vmem:[%s7 + $0x428] sm:$0xff]
    %v2637 = vld [vmem:[%s7 + $0x430] sm:$0xff]
    %v2638 = vld [vmem:[%s7 + $0x438] sm:$0xff]
    %v2639 = vld [vmem:[%s7 + $0x440] sm:$0xff]
    %v2640 = vld [vmem:[%s7 + $0x448] sm:$0xff]
    %v2641 = vld [vmem:[%s7 + $0x450] sm:$0xff]
    %v2642 = vld [vmem:[%s7 + $0x458] sm:$0xff]
    %v2643 = vld [vmem:[%s7 + $0x460] sm:$0xff]
    %v2644 = vld [vmem:[%s7 + $0x468] sm:$0xff]
    %v2645 = vld [vmem:[%s7 + $0x470] sm:$0xff]
    %v2646 = vld [vmem:[%s7 + $0x478] sm:$0xff]
    %v2647 = vld [vmem:[%s7 + $0x480] sm:$0xff]
    %v2648 = vld [vmem:[%s7 + $0x488] sm:$0xff]
    %v2649 = vld [vmem:[%s7 + $0x490] sm:$0xff]
    %v2650 = vld [vmem:[%s7 + $0x498] sm:$0xff]
    %v2651 = vld [vmem:[%s7 + $0x4a0] sm:$0xff]
    %v2652 = vld [vmem:[%s7 + $0x4a8] sm:$0xff]
    %v2653 = vld [vmem:[%s7 + $0x4b0] sm:$0xff]
    %v2654 = vld [vmem:[%s7 + $0x4b8] sm:$0xff]
    %v2655 = vld [vmem:[%s7 + $0x4c0] sm:$0xff]
    %v2656 = vld [vmem:[%s7 + $0x4c8] sm:$0xff]
    %v2657 = vld [vmem:[%s7 + $0x4d0] sm:$0xff]
    %v2658 = vld [vmem:[%s7 + $0x4d8] sm:$0xff]
    %v2659 = vld [vmem:[%s7 + $0x4e0] sm:$0xff]
    %v2660 = vld [vmem:[%s7 + $0x4e8] sm:$0xff]
    %v2661 = vld [vmem:[%s7 + $0x4f0] sm:$0xff]
    %v2662 = vld [vmem:[%s7 + $0x4f8] sm:$0xff]
    %v2663 = vld [vmem:[%s7 + $0x500] sm:$0xff]
    %v2664 = vld [vmem:[%s7 + $0x508] sm:$0xff]
    %v2665 = vld [vmem:[%s7 + $0x510] sm:$0xff]
    %v2666 = vld [vmem:[%s7 + $0x518] sm:$0xff]
    %v2667 = vld [vmem:[%s7 + $0x520] sm:$0xff]
    %v2668 = vld [vmem:[%s7 + $0x528] sm:$0xff]
    %v2669 = vld [vmem:[%s7 + $0x530] sm:$0xff]
    %v2670 = vld [vmem:[%s7 + $0x538] sm:$0xff]
    %v2671 = vld [vmem:[%s7 + $0x540] sm:$0xff]
    %v2672 = vld [vmem:[%s7 + $0x548] sm:$0xff]
    %v2673 = vld [vmem:[%s7 + $0x550] sm:$0xff]
    %v2674 = vld [vmem:[%s7 + $0x558] sm:$0xff]
    %v2675 = vld [vmem:[%s7 + $0x560] sm:$0xff]
    %v2676 = vld [vmem:[%s7 + $0x568] sm:$0xff]
    %v2677 = vld [vmem:[%s7 + $0x570] sm:$0xff]
    %v2678 = vld [vmem:[%s7 + $0x578] sm:$0xff]
    %v2679 = vld [vmem:[%s7 + $0x580] sm:$0xff]
    %v2680 = vld [vmem:[%s7 + $0x588] sm:$0xff]
    %v2681 = vld [vmem:[%s7 + $0x590] sm:$0xff]
    %v2682 = vld [vmem:[%s7 + $0x598] sm:$0xff]
    %v2683 = vld [vmem:[%s7 + $0x5a0] sm:$0xff]
    %v2684 = vld [vmem:[%s7 + $0x5a8] sm:$0xff]
    %v2685 = vld [vmem:[%s7 + $0x5b0] sm:$0xff]
    %v2686 = vld [vmem:[%s7 + $0x5b8] sm:$0xff]
    %v2687 = vld [vmem:[%s7 + $0x5c0] sm:$0xff]
    %v2688 = vld [vmem:[%s7 + $0x5c8] sm:$0xff]
    %v2689 = vld [vmem:[%s7 + $0x5d0] sm:$0xff]
    %v2690 = vld [vmem:[%s7 + $0x5d8] sm:$0xff]
    %v2691 = vld [vmem:[%s7 + $0x5e0] sm:$0xff]
    %v2692 = vld [vmem:[%s7 + $0x5e8] sm:$0xff]
    %v2693 = vld [vmem:[%s7 + $0x5f0] sm:$0xff]
    %v2694 = vld [vmem:[%s7 + $0x5f8] sm:$0xff]
    %v2695 = vld [vmem:[%s7 + $0x600] sm:$0xff]
    %v2696 = vld [vmem:[%s7 + $0x608] sm:$0xff]
    %v2697 = vld [vmem:[%s7 + $0x610] sm:$0xff]
    %v2698 = vld [vmem:[%s7 + $0x618] sm:$0xff]
    %v2699 = vld [vmem:[%s7 + $0x620] sm:$0xff]
    %v2700 = vld [vmem:[%s7 + $0x628] sm:$0xff]
    %v2701 = vld [vmem:[%s7 + $0x630] sm:$0xff]
    %v2702 = vld [vmem:[%s7 + $0x638] sm:$0xff]
    %v2703 = vld [vmem:[%s7 + $0x640] sm:$0xff]
    %v2704 = vld [vmem:[%s7 + $0x648] sm:$0xff]
    %v2705 = vld [vmem:[%s7 + $0x650] sm:$0xff]
    %v2706 = vld [vmem:[%s7 + $0x658] sm:$0xff]
    %v2707 = vld [vmem:[%s7 + $0x660] sm:$0xff]
    %v2708 = vld [vmem:[%s7 + $0x668] sm:$0xff]
    %v2709 = vld [vmem:[%s7 + $0x670] sm:$0xff]
    %v2710 = vld [vmem:[%s7 + $0x678] sm:$0xff]
    %v2711 = vld [vmem:[%s7 + $0x680] sm:$0xff]
    %v2712 = vld [vmem:[%s7 + $0x688] sm:$0xff]
    %v2713 = vld [vmem:[%s7 + $0x690] sm:$0xff]
    %v2714 = vld [vmem:[%s7 + $0x698] sm:$0xff]
    %v2715 = vld [vmem:[%s7 + $0x6a0] sm:$0xff]
    %v2716 = vld [vmem:[%s7 + $0x6a8] sm:$0xff]
    %v2717 = vld [vmem:[%s7 + $0x6b0] sm:$0xff]
    %v2718 = vld [vmem:[%s7 + $0x6b8] sm:$0xff]
    %v2719 = vld [vmem:[%s7 + $0x6c0] sm:$0xff]
    %v2720 = vld [vmem:[%s7 + $0x6c8] sm:$0xff]
    %v2721 = vld [vmem:[%s7 + $0x6d0] sm:$0xff]
    %v2722 = vld [vmem:[%s7 + $0x6d8] sm:$0xff]
    %v2723 = vld [vmem:[%s7 + $0x6e0] sm:$0xff]
    %v2724 = vld [vmem:[%s7 + $0x6e8] sm:$0xff]
    %v2725 = vld [vmem:[%s7 + $0x6f0] sm:$0xff]
    %v2726 = vld [vmem:[%s7 + $0x6f8] sm:$0xff]
    %v2727 = vld [vmem:[%s7 + $0x700] sm:$0xff]
    %v2728 = vld [vmem:[%s7 + $0x708] sm:$0xff]
    %v2729 = vld [vmem:[%s7 + $0x710] sm:$0xff]
    %v2730 = vld [vmem:[%s7 + $0x718] sm:$0xff]
    %v2731 = vld [vmem:[%s7 + $0x720] sm:$0xff]
    %v2732 = vld [vmem:[%s7 + $0x728] sm:$0xff]
    %v2733 = vld [vmem:[%s7 + $0x730] sm:$0xff]
    %v2734 = vld [vmem:[%s7 + $0x738] sm:$0xff]
    %v2735 = vld [vmem:[%s7 + $0x740] sm:$0xff]
    %v2736 = vld [vmem:[%s7 + $0x748] sm:$0xff]
    %v2737 = vld [vmem:[%s7 + $0x750] sm:$0xff]
    %v2738 = vld [vmem:[%s7 + $0x758] sm:$0xff]
    %v2739 = vld [vmem:[%s7 + $0x760] sm:$0xff]
    %v2740 = vld [vmem:[%s7 + $0x768] sm:$0xff]
    %v2741 = vld [vmem:[%s7 + $0x770] sm:$0xff]
    %v2742 = vld [vmem:[%s7 + $0x778] sm:$0xff]
    %v2743 = vld [vmem:[%s7 + $0x780] sm:$0xff]
    %v2744 = vld [vmem:[%s7 + $0x788] sm:$0xff]
    %v2745 = vld [vmem:[%s7 + $0x790] sm:$0xff]
    %v2746 = vld [vmem:[%s7 + $0x798] sm:$0xff]
    %v2747 = vld [vmem:[%s7 + $0x7a0] sm:$0xff]
    %v2748 = vld [vmem:[%s7 + $0x7a8] sm:$0xff]
    %v2749 = vld [vmem:[%s7 + $0x7b0] sm:$0xff]
    %v2750 = vld [vmem:[%s7 + $0x7b8] sm:$0xff]
    %v2751 = vld [vmem:[%s7 + $0x7c0] sm:$0xff]
    %v2752 = vld [vmem:[%s7 + $0x7c8] sm:$0xff]
    %v2753 = vld [vmem:[%s7 + $0x7d0] sm:$0xff]
    %v2754 = vld [vmem:[%s7 + $0x7d8] sm:$0xff]
    %s2755 = scalar_lea.vmem %s7, 2016
    %v2756 = vld [vmem:[%s2755] sm:$0xff]
    %v2757 = vld [vmem:[%s2755 + $0x8] sm:$0xff]
    %v2758 = vld [vmem:[%s2755 + $0x10] sm:$0xff]
    %v2759 = vld [vmem:[%s2755 + $0x18] sm:$0xff]
    %v2760 = vld [vmem:[%s2755 + $0x20] sm:$0xff]
    %v2761 = vld [vmem:[%s2755 + $0x28] sm:$0xff]
    %v2762 = vld [vmem:[%s2755 + $0x30] sm:$0xff]
    %v2763 = vld [vmem:[%s2755 + $0x38] sm:$0xff]
    %v2764 = vld [vmem:[%s2755 + $0x40] sm:$0xff]
    %v2765 = vld [vmem:[%s2755 + $0x48] sm:$0xff]
    %v2766 = vld [vmem:[%s2755 + $0x50] sm:$0xff]
    %v2767 = vld [vmem:[%s2755 + $0x58] sm:$0xff]
    %v2768 = vld [vmem:[%s2755 + $0x60] sm:$0xff]
    %v2769 = vld [vmem:[%s2755 + $0x68] sm:$0xff]
    %v2770 = vld [vmem:[%s2755 + $0x70] sm:$0xff]
    %v2771 = vld [vmem:[%s2755 + $0x78] sm:$0xff]
    %v2772 = vld [vmem:[%s2755 + $0x80] sm:$0xff]
    %v2773 = vld [vmem:[%s2755 + $0x88] sm:$0xff]
    %v2774 = vld [vmem:[%s2755 + $0x90] sm:$0xff]
    %v2775 = vld [vmem:[%s2755 + $0x98] sm:$0xff]
    %v2776 = vld [vmem:[%s2755 + $0xa0] sm:$0xff]
    %v2777 = vld [vmem:[%s2755 + $0xa8] sm:$0xff]
    %v2778 = vld [vmem:[%s2755 + $0xb0] sm:$0xff]
    %v2779 = vld [vmem:[%s2755 + $0xb8] sm:$0xff]
    %v2780 = vld [vmem:[%s2755 + $0xc0] sm:$0xff]
    %v2781 = vld [vmem:[%s2755 + $0xc8] sm:$0xff]
    %v2782 = vld [vmem:[%s2755 + $0xd0] sm:$0xff]
    %v2783 = vld [vmem:[%s2755 + $0xd8] sm:$0xff]
    %v2784 = vld [vmem:[%s2755 + $0xe0] sm:$0xff]
    %v2785 = vld [vmem:[%s2755 + $0xe8] sm:$0xff]
    %v2786 = vld [vmem:[%s2755 + $0xf0] sm:$0xff]
    %v2787 = vld [vmem:[%s2755 + $0xf8] sm:$0xff]
    %v2788 = vld [vmem:[%s2755 + $0x100] sm:$0xff]
    %v2789 = vld [vmem:[%s2755 + $0x108] sm:$0xff]
    %v2790 = vld [vmem:[%s2755 + $0x110] sm:$0xff]
    %v2791 = vld [vmem:[%s2755 + $0x118] sm:$0xff]
    %v2792 = vld [vmem:[%s2755 + $0x120] sm:$0xff]
    %v2793 = vld [vmem:[%s2755 + $0x128] sm:$0xff]
    %v2794 = vld [vmem:[%s2755 + $0x130] sm:$0xff]
    %v2795 = vld [vmem:[%s2755 + $0x138] sm:$0xff]
    %v2796 = vld [vmem:[%s2755 + $0x140] sm:$0xff]
    %v2797 = vld [vmem:[%s2755 + $0x148] sm:$0xff]
    %v2798 = vld [vmem:[%s2755 + $0x150] sm:$0xff]
    %v2799 = vld [vmem:[%s2755 + $0x158] sm:$0xff]
    %v2800 = vld [vmem:[%s2755 + $0x160] sm:$0xff]
    %v2801 = vld [vmem:[%s2755 + $0x168] sm:$0xff]
    %v2802 = vld [vmem:[%s2755 + $0x170] sm:$0xff]
    %v2803 = vld [vmem:[%s2755 + $0x178] sm:$0xff]
    %v2804 = vld [vmem:[%s2755 + $0x180] sm:$0xff]
    %v2805 = vld [vmem:[%s2755 + $0x188] sm:$0xff]
    %v2806 = vld [vmem:[%s2755 + $0x190] sm:$0xff]
    %v2807 = vld [vmem:[%s2755 + $0x198] sm:$0xff]
    %v2808 = vld [vmem:[%s2755 + $0x1a0] sm:$0xff]
    %v2809 = vld [vmem:[%s2755 + $0x1a8] sm:$0xff]
    %v2810 = vld [vmem:[%s2755 + $0x1b0] sm:$0xff]
    %v2811 = vld [vmem:[%s2755 + $0x1b8] sm:$0xff]
    %v2812 = vld [vmem:[%s2755 + $0x1c0] sm:$0xff]
    %v2813 = vld [vmem:[%s2755 + $0x1c8] sm:$0xff]
    %v2814 = vld [vmem:[%s2755 + $0x1d0] sm:$0xff]
    %v2815 = vld [vmem:[%s2755 + $0x1d8] sm:$0xff]
    %v2816 = vld [vmem:[%s2755 + $0x1e0] sm:$0xff]
    %v2817 = vld [vmem:[%s2755 + $0x1e8] sm:$0xff]
    %v2818 = vld [vmem:[%s2755 + $0x1f0] sm:$0xff]
    %v2819 = vld [vmem:[%s2755 + $0x1f8] sm:$0xff]
    %v2820 = vld [vmem:[%s2755 + $0x200] sm:$0xff]
    %v2821 = vld [vmem:[%s2755 + $0x208] sm:$0xff]
    %v2822 = vld [vmem:[%s2755 + $0x210] sm:$0xff]
    %v2823 = vld [vmem:[%s2755 + $0x218] sm:$0xff]
    %v2824 = vld [vmem:[%s2755 + $0x220] sm:$0xff]
    %v2825 = vld [vmem:[%s2755 + $0x228] sm:$0xff]
    %v2826 = vld [vmem:[%s2755 + $0x230] sm:$0xff]
    %v2827 = vld [vmem:[%s2755 + $0x238] sm:$0xff]
    %v2828 = vld [vmem:[%s2755 + $0x240] sm:$0xff]
    %v2829 = vld [vmem:[%s2755 + $0x248] sm:$0xff]
    %v2830 = vld [vmem:[%s2755 + $0x250] sm:$0xff]
    %v2831 = vld [vmem:[%s2755 + $0x258] sm:$0xff]
    %v2832 = vld [vmem:[%s2755 + $0x260] sm:$0xff]
    %v2833 = vld [vmem:[%s2755 + $0x268] sm:$0xff]
    %v2834 = vld [vmem:[%s2755 + $0x270] sm:$0xff]
    %v2835 = vld [vmem:[%s2755 + $0x278] sm:$0xff]
    %v2836 = vld [vmem:[%s2755 + $0x280] sm:$0xff]
    %v2837 = vld [vmem:[%s2755 + $0x288] sm:$0xff]
    %v2838 = vld [vmem:[%s2755 + $0x290] sm:$0xff]
    %v2839 = vld [vmem:[%s2755 + $0x298] sm:$0xff]
    %v2840 = vld [vmem:[%s2755 + $0x2a0] sm:$0xff]
    %v2841 = vld [vmem:[%s2755 + $0x2a8] sm:$0xff]
    %v2842 = vld [vmem:[%s2755 + $0x2b0] sm:$0xff]
    %v2843 = vld [vmem:[%s2755 + $0x2b8] sm:$0xff]
    %v2844 = vld [vmem:[%s2755 + $0x2c0] sm:$0xff]
    %v2845 = vld [vmem:[%s2755 + $0x2c8] sm:$0xff]
    %v2846 = vld [vmem:[%s2755 + $0x2d0] sm:$0xff]
    %v2847 = vld [vmem:[%s2755 + $0x2d8] sm:$0xff]
    %v2848 = vld [vmem:[%s2755 + $0x2e0] sm:$0xff]
    %v2849 = vld [vmem:[%s2755 + $0x2e8] sm:$0xff]
    %v2850 = vld [vmem:[%s2755 + $0x2f0] sm:$0xff]
    %v2851 = vld [vmem:[%s2755 + $0x2f8] sm:$0xff]
    %v2852 = vld [vmem:[%s2755 + $0x300] sm:$0xff]
    %v2853 = vld [vmem:[%s2755 + $0x308] sm:$0xff]
    %v2854 = vld [vmem:[%s2755 + $0x310] sm:$0xff]
    %v2855 = vld [vmem:[%s2755 + $0x318] sm:$0xff]
    %v2856 = vld [vmem:[%s2755 + $0x320] sm:$0xff]
    %v2857 = vld [vmem:[%s2755 + $0x328] sm:$0xff]
    %v2858 = vld [vmem:[%s2755 + $0x330] sm:$0xff]
    %v2859 = vld [vmem:[%s2755 + $0x338] sm:$0xff]
    %v2860 = vld [vmem:[%s2755 + $0x340] sm:$0xff]
    %v2861 = vld [vmem:[%s2755 + $0x348] sm:$0xff]
    %v2862 = vld [vmem:[%s2755 + $0x350] sm:$0xff]
    %v2863 = vld [vmem:[%s2755 + $0x358] sm:$0xff]
    %v2864 = vld [vmem:[%s2755 + $0x360] sm:$0xff]
    %v2865 = vld [vmem:[%s2755 + $0x368] sm:$0xff]
    %v2866 = vld [vmem:[%s2755 + $0x370] sm:$0xff]
    %v2867 = vld [vmem:[%s2755 + $0x378] sm:$0xff]
    %v2868 = vld [vmem:[%s2755 + $0x380] sm:$0xff]
    %v2869 = vld [vmem:[%s2755 + $0x388] sm:$0xff]
    %v2870 = vld [vmem:[%s2755 + $0x390] sm:$0xff]
    %v2871 = vld [vmem:[%s2755 + $0x398] sm:$0xff]
    %v2872 = vld [vmem:[%s2755 + $0x3a0] sm:$0xff]
    %v2873 = vld [vmem:[%s2755 + $0x3a8] sm:$0xff]
    %v2874 = vld [vmem:[%s2755 + $0x3b0] sm:$0xff]
    %v2875 = vld [vmem:[%s2755 + $0x3b8] sm:$0xff]
    %v2876 = vld [vmem:[%s2755 + $0x3c0] sm:$0xff]
    %v2877 = vld [vmem:[%s2755 + $0x3c8] sm:$0xff]
    %v2878 = vld [vmem:[%s2755 + $0x3d0] sm:$0xff]
    %v2879 = vld [vmem:[%s2755 + $0x3d8] sm:$0xff]
    %v2880 = vld [vmem:[%s2755 + $0x3e0] sm:$0xff]
    %v2881 = vld [vmem:[%s2755 + $0x3e8] sm:$0xff]
    %v2882 = vld [vmem:[%s2755 + $0x3f0] sm:$0xff]
    %v2883 = vld [vmem:[%s2755 + $0x3f8] sm:$0xff]
    %v2884 = vld [vmem:[%s2755 + $0x400] sm:$0xff]
    %v2885 = vld [vmem:[%s2755 + $0x408] sm:$0xff]
    %v2886 = vld [vmem:[%s2755 + $0x410] sm:$0xff]
    %v2887 = vld [vmem:[%s2755 + $0x418] sm:$0xff]
    %v2888 = vld [vmem:[%s2755 + $0x420] sm:$0xff]
    %v2889 = vld [vmem:[%s2755 + $0x428] sm:$0xff]
    %v2890 = vld [vmem:[%s2755 + $0x430] sm:$0xff]
    %v2891 = vld [vmem:[%s2755 + $0x438] sm:$0xff]
    %v2892 = vld [vmem:[%s2755 + $0x440] sm:$0xff]
    %v2893 = vld [vmem:[%s2755 + $0x448] sm:$0xff]
    %v2894 = vld [vmem:[%s2755 + $0x450] sm:$0xff]
    %v2895 = vld [vmem:[%s2755 + $0x458] sm:$0xff]
    %v2896 = vld [vmem:[%s2755 + $0x460] sm:$0xff]
    %v2897 = vld [vmem:[%s2755 + $0x468] sm:$0xff]
    %v2898 = vld [vmem:[%s2755 + $0x470] sm:$0xff]
    %v2899 = vld [vmem:[%s2755 + $0x478] sm:$0xff]
    %v2900 = vld [vmem:[%s2755 + $0x480] sm:$0xff]
    %v2901 = vld [vmem:[%s2755 + $0x488] sm:$0xff]
    %v2902 = vld [vmem:[%s2755 + $0x490] sm:$0xff]
    %v2903 = vld [vmem:[%s2755 + $0x498] sm:$0xff]
    %v2904 = vld [vmem:[%s2755 + $0x4a0] sm:$0xff]
    %v2905 = vld [vmem:[%s2755 + $0x4a8] sm:$0xff]
    %v2906 = vld [vmem:[%s2755 + $0x4b0] sm:$0xff]
    %v2907 = vld [vmem:[%s2755 + $0x4b8] sm:$0xff]
    %v2908 = vld [vmem:[%s2755 + $0x4c0] sm:$0xff]
    %v2909 = vld [vmem:[%s2755 + $0x4c8] sm:$0xff]
    %v2910 = vld [vmem:[%s2755 + $0x4d0] sm:$0xff]
    %v2911 = vld [vmem:[%s2755 + $0x4d8] sm:$0xff]
    %v2912 = vld [vmem:[%s2755 + $0x4e0] sm:$0xff]
    %v2913 = vld [vmem:[%s2755 + $0x4e8] sm:$0xff]
    %v2914 = vld [vmem:[%s2755 + $0x4f0] sm:$0xff]
    %v2915 = vld [vmem:[%s2755 + $0x4f8] sm:$0xff]
    %v2916 = vld [vmem:[%s2755 + $0x500] sm:$0xff]
    %v2917 = vld [vmem:[%s2755 + $0x508] sm:$0xff]
    %v2918 = vld [vmem:[%s2755 + $0x510] sm:$0xff]
    %v2919 = vld [vmem:[%s2755 + $0x518] sm:$0xff]
    %v2920 = vld [vmem:[%s2755 + $0x520] sm:$0xff]
    %v2921 = vld [vmem:[%s2755 + $0x528] sm:$0xff]
    %v2922 = vld [vmem:[%s2755 + $0x530] sm:$0xff]
    %v2923 = vld [vmem:[%s2755 + $0x538] sm:$0xff]
    %v2924 = vld [vmem:[%s2755 + $0x540] sm:$0xff]
    %v2925 = vld [vmem:[%s2755 + $0x548] sm:$0xff]
    %v2926 = vld [vmem:[%s2755 + $0x550] sm:$0xff]
    %v2927 = vld [vmem:[%s2755 + $0x558] sm:$0xff]
    %v2928 = vld [vmem:[%s2755 + $0x560] sm:$0xff]
    %v2929 = vld [vmem:[%s2755 + $0x568] sm:$0xff]
    %v2930 = vld [vmem:[%s2755 + $0x570] sm:$0xff]
    %v2931 = vld [vmem:[%s2755 + $0x578] sm:$0xff]
    %v2932 = vld [vmem:[%s2755 + $0x580] sm:$0xff]
    %v2933 = vld [vmem:[%s2755 + $0x588] sm:$0xff]
    %v2934 = vld [vmem:[%s2755 + $0x590] sm:$0xff]
    %v2935 = vld [vmem:[%s2755 + $0x598] sm:$0xff]
    %v2936 = vld [vmem:[%s2755 + $0x5a0] sm:$0xff]
    %v2937 = vld [vmem:[%s2755 + $0x5a8] sm:$0xff]
    %v2938 = vld [vmem:[%s2755 + $0x5b0] sm:$0xff]
    %v2939 = vld [vmem:[%s2755 + $0x5b8] sm:$0xff]
    %v2940 = vld [vmem:[%s2755 + $0x5c0] sm:$0xff]
    %v2941 = vld [vmem:[%s2755 + $0x5c8] sm:$0xff]
    %v2942 = vld [vmem:[%s2755 + $0x5d0] sm:$0xff]
    %v2943 = vld [vmem:[%s2755 + $0x5d8] sm:$0xff]
    %v2944 = vld [vmem:[%s2755 + $0x5e0] sm:$0xff]
    %v2945 = vld [vmem:[%s2755 + $0x5e8] sm:$0xff]
    %v2946 = vld [vmem:[%s2755 + $0x5f0] sm:$0xff]
    %v2947 = vld [vmem:[%s2755 + $0x5f8] sm:$0xff]
    %v2948 = vld [vmem:[%s2755 + $0x600] sm:$0xff]
    %v2949 = vld [vmem:[%s2755 + $0x608] sm:$0xff]
    %v2950 = vld [vmem:[%s2755 + $0x610] sm:$0xff]
    %v2951 = vld [vmem:[%s2755 + $0x618] sm:$0xff]
    %v2952 = vld [vmem:[%s2755 + $0x620] sm:$0xff]
    %v2953 = vld [vmem:[%s2755 + $0x628] sm:$0xff]
    %v2954 = vld [vmem:[%s2755 + $0x630] sm:$0xff]
    %v2955 = vld [vmem:[%s2755 + $0x638] sm:$0xff]
    %v2956 = vld [vmem:[%s2755 + $0x640] sm:$0xff]
    %v2957 = vld [vmem:[%s2755 + $0x648] sm:$0xff]
    %v2958 = vld [vmem:[%s2755 + $0x650] sm:$0xff]
    %v2959 = vld [vmem:[%s2755 + $0x658] sm:$0xff]
    %v2960 = vld [vmem:[%s2755 + $0x660] sm:$0xff]
    %v2961 = vld [vmem:[%s2755 + $0x668] sm:$0xff]
    %v2962 = vld [vmem:[%s2755 + $0x670] sm:$0xff]
    %v2963 = vld [vmem:[%s2755 + $0x678] sm:$0xff]
    %v2964 = vld [vmem:[%s2755 + $0x680] sm:$0xff]
    %v2965 = vld [vmem:[%s2755 + $0x688] sm:$0xff]
    %v2966 = vld [vmem:[%s2755 + $0x690] sm:$0xff]
    %v2967 = vld [vmem:[%s2755 + $0x698] sm:$0xff]
    %v2968 = vld [vmem:[%s2755 + $0x6a0] sm:$0xff]
    %v2969 = vld [vmem:[%s2755 + $0x6a8] sm:$0xff]
    %v2970 = vld [vmem:[%s2755 + $0x6b0] sm:$0xff]
    %v2971 = vld [vmem:[%s2755 + $0x6b8] sm:$0xff]
    %v2972 = vld [vmem:[%s2755 + $0x6c0] sm:$0xff]
    %v2973 = vld [vmem:[%s2755 + $0x6c8] sm:$0xff]
    %v2974 = vld [vmem:[%s2755 + $0x6d0] sm:$0xff]
    %v2975 = vld [vmem:[%s2755 + $0x6d8] sm:$0xff]
    %v2976 = vld [vmem:[%s2755 + $0x6e0] sm:$0xff]
    %v2977 = vld [vmem:[%s2755 + $0x6e8] sm:$0xff]
    %v2978 = vld [vmem:[%s2755 + $0x6f0] sm:$0xff]
    %v2979 = vld [vmem:[%s2755 + $0x6f8] sm:$0xff]
    %v2980 = vld [vmem:[%s2755 + $0x700] sm:$0xff]
    %v2981 = vld [vmem:[%s2755 + $0x708] sm:$0xff]
    %v2982 = vld [vmem:[%s2755 + $0x710] sm:$0xff]
    %v2983 = vld [vmem:[%s2755 + $0x718] sm:$0xff]
    %v2984 = vld [vmem:[%s2755 + $0x720] sm:$0xff]
    %v2985 = vld [vmem:[%s2755 + $0x728] sm:$0xff]
    %v2986 = vld [vmem:[%s2755 + $0x730] sm:$0xff]
    %v2987 = vld [vmem:[%s2755 + $0x738] sm:$0xff]
    %v2988 = vld [vmem:[%s2755 + $0x740] sm:$0xff]
    %v2989 = vld [vmem:[%s2755 + $0x748] sm:$0xff]
    %v2990 = vld [vmem:[%s2755 + $0x750] sm:$0xff]
    %v2991 = vld [vmem:[%s2755 + $0x758] sm:$0xff]
    %v2992 = vld [vmem:[%s2755 + $0x760] sm:$0xff]
    %v2993 = vld [vmem:[%s2755 + $0x768] sm:$0xff]
    %v2994 = vld [vmem:[%s2755 + $0x770] sm:$0xff]
    %v2995 = vld [vmem:[%s2755 + $0x778] sm:$0xff]
    %v2996 = vld [vmem:[%s2755 + $0x780] sm:$0xff]
    %v2997 = vld [vmem:[%s2755 + $0x788] sm:$0xff]
    %v2998 = vld [vmem:[%s2755 + $0x790] sm:$0xff]
    %v2999 = vld [vmem:[%s2755 + $0x798] sm:$0xff]
    %v3000 = vld [vmem:[%s2755 + $0x7a0] sm:$0xff]
    %v3001 = vld [vmem:[%s2755 + $0x7a8] sm:$0xff]
    %v3002 = vld [vmem:[%s2755 + $0x7b0] sm:$0xff]
    %v3003 = vld [vmem:[%s2755 + $0x7b8] sm:$0xff]
    %v3004 = vld [vmem:[%s2755 + $0x7c0] sm:$0xff]
    %v3005 = vld [vmem:[%s2755 + $0x7c8] sm:$0xff]
    %v3006 = vld [vmem:[%s2755 + $0x7d0] sm:$0xff]
    %v3007 = vld [vmem:[%s2755 + $0x7d8] sm:$0xff]
    %v3032 = vrot.slane %v2225, 6
    %v3033 = vrot.slane %v2231, 6
    %v3034 = vsel %vm2127, %v3032, %v3033
    %v3035 = vrot.slane %v2227, 6
    %v3036 = vrot.slane %v2233, 6
    %v3037 = vsel %vm2127, %v3035, %v3036
    %v3038 = vrot.slane %v2344, 6
    %v3039 = vrot.slane %v2350, 6
    %v3040 = vsel %vm2127, %v3038, %v3039
    %v3041 = vrot.slane %v2346, 6
    %v3042 = vrot.slane %v2352, 6
    %v3043 = vsel %vm2127, %v3041, %v3042
    %v3044 = vrot.slane %v2463, 6
    %v3045 = vrot.slane %v2469, 6
    %v3046 = vsel %vm2127, %v3044, %v3045
    %v3047 = vrot.slane %v2465, 6
    %v3048 = vrot.slane %v2471, 6
    %v3049 = vsel %vm2127, %v3047, %v3048
    %v3050 = vrot.slane %v2237, 6
    %v3051 = vsel %vm2127, %v3033, %v3050
    %v3052 = vrot.slane %v2239, 6
    %v3053 = vsel %vm2127, %v3036, %v3052
    %v3054 = vrot.slane %v2356, 6
    %v3055 = vsel %vm2127, %v3039, %v3054
    %v3056 = vrot.slane %v2358, 6
    %v3057 = vsel %vm2127, %v3042, %v3056
    %v3058 = vrot.slane %v2475, 6
    %v3059 = vsel %vm2127, %v3045, %v3058
    %v3060 = vrot.slane %v2477, 6
    %v3061 = vsel %vm2127, %v3048, %v3060
    %v3062 = vrot.slane %v2243, 6
    %v3063 = vsel %vm2127, %v3050, %v3062
    %v3064 = vrot.slane %v2245, 6
    %v3065 = vsel %vm2127, %v3052, %v3064
    %v3066 = vrot.slane %v2362, 6
    %v3067 = vsel %vm2127, %v3054, %v3066
    %v3068 = vrot.slane %v2364, 6
    %v3069 = vsel %vm2127, %v3056, %v3068
    %v3070 = vrot.slane %v2481, 6
    %v3071 = vsel %vm2127, %v3058, %v3070
    %v3072 = vrot.slane %v2483, 6
    %v3073 = vsel %vm2127, %v3060, %v3072
    %vm3089 = vcmask 261120
    %v3090 = vsel %vm3089, %v3049, 0
    %v3092 = vsel %vm3089, %v3061, 0
    %v3094 = vsel %vm3089, %v3073, 0
    %3096 = vmatprep.subr.mxu0 %v2802
    %3097 = vmatpush1.msra.mxu0 %v2801
    %3098 = vmatprep.subr.mxu0 %v2799
    %3099 = vmatpush1.msra.mxu0 %v2798
    %3100 = vmatprep.subr.mxu0 %v2796
    %3101 = vmatpush1.msra.mxu0 %v2795
    %3102 = vmatprep.subr.mxu0 %v2793
    %3103 = vmatpush1.msra.mxu0 %v2792
    %3104 = vmatprep.subr.mxu0 %v2790
    %3105 = vmatpush1.msra.mxu0 %v2789
    %3106 = vmatprep.subr.mxu0 %v2787
    %3107 = vmatpush1.msra.mxu0 %v2786
    %3108 = vmatprep.subr.mxu0 %v2784
    %3109 = vmatpush1.msra.mxu0 %v2783
    %3110 = vmatprep.subr.mxu0 %v2781
    %3111 = vmatpush1.msra.mxu0 %v2780
    %3112 = vmatprep.subr.mxu0 %v2778
    %3113 = vmatpush1.msra.mxu0 %v2777
    %3114 = vmatprep.subr.mxu0 %v2775
    %3115 = vmatpush1.msra.mxu0 %v2774
    %3116 = vmatprep.subr.mxu0 %v2772
    %3117 = vmatpush1.msra.mxu0 %v2771
    %3118 = vmatprep.subr.mxu0 %v2769
    %3119 = vmatpush1.msra.mxu0 %v2768
    %3120 = vmatprep.subr.mxu0 %v2766
    %3121 = vmatpush1.msra.mxu0 %v2765
    %3122 = vmatprep.subr.mxu0 %v2763
    %3123 = vmatpush1.msra.mxu0 %v2762
    %3124 = vmatprep.subr.mxu0 %v2760
    %3125 = vmatpush1.msra.mxu0 %v2759
    %3126 = vmatprep.subr.mxu0 %v2757
    %3127 = vmatpush1.msra.mxu0 %v2756
    %3128 = vmatprep.subr.mxu0 %v2850
    %3129 = vmatpush2.msra.mxu0 %v2849
    %3130 = vmatprep.subr.mxu0 %v2847
    %3131 = vmatpush2.msra.mxu0 %v2846
    %3132 = vmatprep.subr.mxu0 %v2844
    %3133 = vmatpush2.msra.mxu0 %v2843
    %3134 = vmatprep.subr.mxu0 %v2841
    %3135 = vmatpush2.msra.mxu0 %v2840
    %3136 = vmatprep.subr.mxu0 %v2838
    %3137 = vmatpush2.msra.mxu0 %v2837
    %3138 = vmatprep.subr.mxu0 %v2835
    %3139 = vmatpush2.msra.mxu0 %v2834
    %3140 = vmatprep.subr.mxu0 %v2832
    %3141 = vmatpush2.msra.mxu0 %v2831
    %3142 = vmatprep.subr.mxu0 %v2829
    %3143 = vmatpush2.msra.mxu0 %v2828
    %3144 = vmatprep.subr.mxu0 %v2826
    %3145 = vmatpush2.msra.mxu0 %v2825
    %3146 = vmatprep.subr.mxu0 %v2823
    %3147 = vmatpush2.msra.mxu0 %v2822
    %3148 = vmatprep.subr.mxu0 %v2820
    %3149 = vmatpush2.msra.mxu0 %v2819
    %3150 = vmatprep.subr.mxu0 %v2817
    %3151 = vmatpush2.msra.mxu0 %v2816
    %3152 = vmatprep.subr.mxu0 %v2814
    %3153 = vmatpush2.msra.mxu0 %v2813
    %3154 = vmatprep.subr.mxu0 %v2811
    %3155 = vmatpush2.msra.mxu0 %v2810
    %3156 = vmatprep.subr.mxu0 %v2808
    %3157 = vmatpush2.msra.mxu0 %v2807
    %3158 = vmatprep.subr.mxu0 %v2805
    %3159 = vmatpush2.msra.mxu0 %v2804
    %3160 = vmatprep.mubr.f32.mxu0 %v3037
    %3161 = vmatmul.mubr.f32.gmra.mxu0 %v3034
    %v3162 = vpop.f32.mrf.mxu0
    %v3163 = vadd.f32 0.0, %v3162
    %v3164 = vpop.f32.mrf.mxu0
    %v3165 = vadd.f32 0.0, %v3164
    %3166 = vmatprep.mubr.f32.mxu0 %v3053
    %3167 = vmatmul.mubr.f32.gmra.mxu0 %v3051
    %v3168 = vpop.f32.mrf.mxu0
    %v3169 = vadd.f32 0.0, %v3168
    %v3170 = vpop.f32.mrf.mxu0
    %v3171 = vadd.f32 0.0, %v3170
    %3172 = vmatprep.mubr.f32.mxu0 %v3065
    %3173 = vmatmul.mubr.f32.gmra.mxu0 %v3063
    %v3174 = vpop.f32.mrf.mxu0
    %v3175 = vadd.f32 0.0, %v3174
    %v3176 = vpop.f32.mrf.mxu0
    %v3177 = vadd.f32 0.0, %v3176
    %3178 = vdwg.mxu0
    %3179 = vmatprep.subr.mxu0 %v2898
    %3180 = vmatpush1.msra.mxu0 %v2897
    %3181 = vmatprep.subr.mxu0 %v2895
    %3182 = vmatpush1.msra.mxu0 %v2894
    %3183 = vmatprep.subr.mxu0 %v2892
    %3184 = vmatpush1.msra.mxu0 %v2891
    %3185 = vmatprep.subr.mxu0 %v2889
    %3186 = vmatpush1.msra.mxu0 %v2888
    %3187 = vmatprep.subr.mxu0 %v2886
    %3188 = vmatpush1.msra.mxu0 %v2885
    %3189 = vmatprep.subr.mxu0 %v2883
    %3190 = vmatpush1.msra.mxu0 %v2882
    %3191 = vmatprep.subr.mxu0 %v2880
    %3192 = vmatpush1.msra.mxu0 %v2879
    %3193 = vmatprep.subr.mxu0 %v2877
    %3194 = vmatpush1.msra.mxu0 %v2876
    %3195 = vmatprep.subr.mxu0 %v2874
    %3196 = vmatpush1.msra.mxu0 %v2873
    %3197 = vmatprep.subr.mxu0 %v2871
    %3198 = vmatpush1.msra.mxu0 %v2870
    %3199 = vmatprep.subr.mxu0 %v2868
    %3200 = vmatpush1.msra.mxu0 %v2867
    %3201 = vmatprep.subr.mxu0 %v2865
    %3202 = vmatpush1.msra.mxu0 %v2864
    %3203 = vmatprep.subr.mxu0 %v2862
    %3204 = vmatpush1.msra.mxu0 %v2861
    %3205 = vmatprep.subr.mxu0 %v2859
    %3206 = vmatpush1.msra.mxu0 %v2858
    %3207 = vmatprep.subr.mxu0 %v2856
    %3208 = vmatpush1.msra.mxu0 %v2855
    %3209 = vmatprep.subr.mxu0 %v2853
    %3210 = vmatpush1.msra.mxu0 %v2852
    %3211 = vmatprep.subr.mxu0 %v2946
    %3212 = vmatpush2.msra.mxu0 %v2945
    %3213 = vmatprep.subr.mxu0 %v2943
    %3214 = vmatpush2.msra.mxu0 %v2942
    %3215 = vmatprep.subr.mxu0 %v2940
    %3216 = vmatpush2.msra.mxu0 %v2939
    %3217 = vmatprep.subr.mxu0 %v2937
    %3218 = vmatpush2.msra.mxu0 %v2936
    %3219 = vmatprep.subr.mxu0 %v2934
    %3220 = vmatpush2.msra.mxu0 %v2933
    %3221 = vmatprep.subr.mxu0 %v2931
    %3222 = vmatpush2.msra.mxu0 %v2930
    %3223 = vmatprep.subr.mxu0 %v2928
    %3224 = vmatpush2.msra.mxu0 %v2927
    %3225 = vmatprep.subr.mxu0 %v2925
    %3226 = vmatpush2.msra.mxu0 %v2924
    %3227 = vmatprep.subr.mxu0 %v2922
    %3228 = vmatpush2.msra.mxu0 %v2921
    %3229 = vmatprep.subr.mxu0 %v2919
    %3230 = vmatpush2.msra.mxu0 %v2918
    %3231 = vmatprep.subr.mxu0 %v2916
    %3232 = vmatpush2.msra.mxu0 %v2915
    %3233 = vmatprep.subr.mxu0 %v2913
    %3234 = vmatpush2.msra.mxu0 %v2912
    %3235 = vmatprep.subr.mxu0 %v2910
    %3236 = vmatpush2.msra.mxu0 %v2909
    %3237 = vmatprep.subr.mxu0 %v2907
    %3238 = vmatpush2.msra.mxu0 %v2906
    %3239 = vmatprep.subr.mxu0 %v2904
    %3240 = vmatpush2.msra.mxu0 %v2903
    %3241 = vmatprep.subr.mxu0 %v2901
    %3242 = vmatpush2.msra.mxu0 %v2900
    %3243 = vmatprep.mubr.f32.mxu0 %v3043
    %3244 = vmatmul.mubr.f32.gmra.mxu0 %v3040
    %v3245 = vpop.f32.mrf.mxu0
    %v3246 = vadd.f32 %v3163, %v3245
    %v3247 = vpop.f32.mrf.mxu0
    %v3248 = vadd.f32 %v3165, %v3247
    %3249 = vmatprep.mubr.f32.mxu0 %v3057
    %3250 = vmatmul.mubr.f32.gmra.mxu0 %v3055
    %v3251 = vpop.f32.mrf.mxu0
    %v3252 = vadd.f32 %v3169, %v3251
    %v3253 = vpop.f32.mrf.mxu0
    %v3254 = vadd.f32 %v3171, %v3253
    %3255 = vmatprep.mubr.f32.mxu0 %v3069
    %3256 = vmatmul.mubr.f32.gmra.mxu0 %v3067
    %v3257 = vpop.f32.mrf.mxu0
    %v3258 = vadd.f32 %v3175, %v3257
    %v3259 = vpop.f32.mrf.mxu0
    %v3260 = vadd.f32 %v3177, %v3259
    %3261 = vdwg.mxu0
    %3262 = vmatprep.subr.mxu0 %v2994
    %3263 = vmatpush1.msra.mxu0 %v2993
    %3264 = vmatprep.subr.mxu0 %v2991
    %3265 = vmatpush1.msra.mxu0 %v2990
    %3266 = vmatprep.subr.mxu0 %v2988
    %3267 = vmatpush1.msra.mxu0 %v2987
    %3268 = vmatprep.subr.mxu0 %v2985
    %3269 = vmatpush1.msra.mxu0 %v2984
    %3270 = vmatprep.subr.mxu0 %v2982
    %3271 = vmatpush1.msra.mxu0 %v2981
    %3272 = vmatprep.subr.mxu0 %v2979
    %3273 = vmatpush1.msra.mxu0 %v2978
    %3274 = vmatprep.subr.mxu0 %v2976
    %3275 = vmatpush1.msra.mxu0 %v2975
    %3276 = vmatprep.subr.mxu0 %v2973
    %3277 = vmatpush1.msra.mxu0 %v2972
    %3278 = vmatprep.subr.mxu0 %v2970
    %3279 = vmatpush1.msra.mxu0 %v2969
    %3280 = vmatprep.subr.mxu0 %v2967
    %3281 = vmatpush1.msra.mxu0 %v2966
    %3282 = vmatprep.subr.mxu0 %v2964
    %3283 = vmatpush1.msra.mxu0 %v2963
    %3284 = vmatprep.subr.mxu0 %v2961
    %3285 = vmatpush1.msra.mxu0 %v2960
    %3286 = vmatprep.subr.mxu0 %v2958
    %3287 = vmatpush1.msra.mxu0 %v2957
    %3288 = vmatprep.subr.mxu0 %v2955
    %3289 = vmatpush1.msra.mxu0 %v2954
    %3290 = vmatprep.subr.mxu0 %v2952
    %3291 = vmatpush1.msra.mxu0 %v2951
    %3292 = vmatprep.subr.mxu0 %v2949
    %3293 = vmatpush1.msra.mxu0 %v2948
    %3294 = vmatprep.subr.mxu0 0.0
    %3295 = vmatpush2.msra.mxu0 0.0
    %3296 = vmatprep.subr.mxu0 0.0
    %3297 = vmatpush2.msra.mxu0 0.0
    %3298 = vmatprep.subr.mxu0 0.0
    %3299 = vmatpush2.msra.mxu0 0.0
    %3300 = vmatprep.subr.mxu0 0.0
    %3301 = vmatpush2.msra.mxu0 0.0
    %3302 = vmatprep.subr.mxu0 0.0
    %3303 = vmatpush2.msra.mxu0 0.0
    %3304 = vmatprep.subr.mxu0 0.0
    %3305 = vmatpush2.msra.mxu0 0.0
    %3306 = vmatprep.subr.mxu0 0.0
    %3307 = vmatpush2.msra.mxu0 0.0
    %3308 = vmatprep.subr.mxu0 0.0
    %3309 = vmatpush2.msra.mxu0 0.0
    %3310 = vmatprep.subr.mxu0 0.0
    %3311 = vmatpush2.msra.mxu0 0.0
    %3312 = vmatprep.subr.mxu0 0.0
    %3313 = vmatpush2.msra.mxu0 0.0
    %3314 = vmatprep.subr.mxu0 0.0
    %3315 = vmatpush2.msra.mxu0 0.0
    %3316 = vmatprep.subr.mxu0 0.0
    %3317 = vmatpush2.msra.mxu0 0.0
    %3318 = vmatprep.subr.mxu0 %v3006
    %3319 = vmatpush2.msra.mxu0 %v3005
    %3320 = vmatprep.subr.mxu0 %v3003
    %3321 = vmatpush2.msra.mxu0 %v3002
    %3322 = vmatprep.subr.mxu0 %v3000
    %3323 = vmatpush2.msra.mxu0 %v2999
    %3324 = vmatprep.subr.mxu0 %v2997
    %3325 = vmatpush2.msra.mxu0 %v2996
    %3326 = vmatprep.mubr.f32.mxu0 %v3090
    %3327 = vmatmul.mubr.f32.gmra.mxu0 %v3046
    %v3328 = vpop.f32.mrf.mxu0
    %v3329 = vadd.f32 %v3246, %v3328
    %v3330 = vpop.f32.mrf.mxu0
    %v3331 = vadd.f32 %v3248, %v3330
    %3332 = vmatprep.mubr.f32.mxu0 %v3092
    %3333 = vmatmul.mubr.f32.gmra.mxu0 %v3059
    %v3334 = vpop.f32.mrf.mxu0
    %v3335 = vadd.f32 %v3252, %v3334
    %v3336 = vpop.f32.mrf.mxu0
    %v3337 = vadd.f32 %v3254, %v3336
    %3338 = vmatprep.mubr.f32.mxu0 %v3094
    %3339 = vmatmul.mubr.f32.gmra.mxu0 %v3071
    %v3340 = vpop.f32.mrf.mxu0
    %v3341 = vadd.f32 %v3258, %v3340
    %v3342 = vpop.f32.mrf.mxu0
    %v3343 = vadd.f32 %v3260, %v3342
    %3344 = vdwg.mxu0
    %3345 = vmatprep.subr.mxu0 0.0
    %3346 = vmatpush1.msra.mxu0 %v2803
    %3347 = vmatprep.subr.mxu0 0.0
    %3348 = vmatpush1.msra.mxu0 %v2800
    %3349 = vmatprep.subr.mxu0 0.0
    %3350 = vmatpush1.msra.mxu0 %v2797
    %3351 = vmatprep.subr.mxu0 0.0
    %3352 = vmatpush1.msra.mxu0 %v2794
    %3353 = vmatprep.subr.mxu0 0.0
    %3354 = vmatpush1.msra.mxu0 %v2791
    %3355 = vmatprep.subr.mxu0 0.0
    %3356 = vmatpush1.msra.mxu0 %v2788
    %3357 = vmatprep.subr.mxu0 0.0
    %3358 = vmatpush1.msra.mxu0 %v2785
    %3359 = vmatprep.subr.mxu0 0.0
    %3360 = vmatpush1.msra.mxu0 %v2782
    %3361 = vmatprep.subr.mxu0 0.0
    %3362 = vmatpush1.msra.mxu0 %v2779
    %3363 = vmatprep.subr.mxu0 0.0
    %3364 = vmatpush1.msra.mxu0 %v2776
    %3365 = vmatprep.subr.mxu0 0.0
    %3366 = vmatpush1.msra.mxu0 %v2773
    %3367 = vmatprep.subr.mxu0 0.0
    %3368 = vmatpush1.msra.mxu0 %v2770
    %3369 = vmatprep.subr.mxu0 0.0
    %3370 = vmatpush1.msra.mxu0 %v2767
    %3371 = vmatprep.subr.mxu0 0.0
    %3372 = vmatpush1.msra.mxu0 %v2764
    %3373 = vmatprep.subr.mxu0 0.0
    %3374 = vmatpush1.msra.mxu0 %v2761
    %3375 = vmatprep.subr.mxu0 0.0
    %3376 = vmatpush1.msra.mxu0 %v2758
    %3377 = vmatprep.subr.mxu0 0.0
    %3378 = vmatpush2.msra.mxu0 %v2851
    %3379 = vmatprep.subr.mxu0 0.0
    %3380 = vmatpush2.msra.mxu0 %v2848
    %3381 = vmatprep.subr.mxu0 0.0
    %3382 = vmatpush2.msra.mxu0 %v2845
    %3383 = vmatprep.subr.mxu0 0.0
    %3384 = vmatpush2.msra.mxu0 %v2842
    %3385 = vmatprep.subr.mxu0 0.0
    %3386 = vmatpush2.msra.mxu0 %v2839
    %3387 = vmatprep.subr.mxu0 0.0
    %3388 = vmatpush2.msra.mxu0 %v2836
    %3389 = vmatprep.subr.mxu0 0.0
    %3390 = vmatpush2.msra.mxu0 %v2833
    %3391 = vmatprep.subr.mxu0 0.0
    %3392 = vmatpush2.msra.mxu0 %v2830
    %3393 = vmatprep.subr.mxu0 0.0
    %3394 = vmatpush2.msra.mxu0 %v2827
    %3395 = vmatprep.subr.mxu0 0.0
    %3396 = vmatpush2.msra.mxu0 %v2824
    %3397 = vmatprep.subr.mxu0 0.0
    %3398 = vmatpush2.msra.mxu0 %v2821
    %3399 = vmatprep.subr.mxu0 0.0
    %3400 = vmatpush2.msra.mxu0 %v2818
    %3401 = vmatprep.subr.mxu0 0.0
    %3402 = vmatpush2.msra.mxu0 %v2815
    %3403 = vmatprep.subr.mxu0 0.0
    %3404 = vmatpush2.msra.mxu0 %v2812
    %3405 = vmatprep.subr.mxu0 0.0
    %3406 = vmatpush2.msra.mxu0 %v2809
    %3407 = vmatprep.subr.mxu0 0.0
    %3408 = vmatpush2.msra.mxu0 %v2806
    %3409 = vmatprep.mubr.f32.mxu0 %v3037
    %3410 = vmatmul.mubr.f32.gmra.mxu0 %v3034
    %v3411 = vpop.f32.mrf.mxu0
    %v3412 = vadd.f32 0.0, %v3411
    %v3413 = vpop.f32.mrf.mxu0
    %3414 = vmatprep.mubr.f32.mxu0 %v3053
    %3415 = vmatmul.mubr.f32.gmra.mxu0 %v3051
    %v3416 = vpop.f32.mrf.mxu0
    %v3417 = vadd.f32 0.0, %v3416
    %v3418 = vpop.f32.mrf.mxu0
    %3419 = vmatprep.mubr.f32.mxu0 %v3065
    %3420 = vmatmul.mubr.f32.gmra.mxu0 %v3063
    %v3421 = vpop.f32.mrf.mxu0
    %v3422 = vadd.f32 0.0, %v3421
    %v3423 = vpop.f32.mrf.mxu0
    %3424 = vdwg.mxu0
    %3425 = vmatprep.subr.mxu0 0.0
    %3426 = vmatpush1.msra.mxu0 %v2899
    %3427 = vmatprep.subr.mxu0 0.0
    %3428 = vmatpush1.msra.mxu0 %v2896
    %3429 = vmatprep.subr.mxu0 0.0
    %3430 = vmatpush1.msra.mxu0 %v2893
    %3431 = vmatprep.subr.mxu0 0.0
    %3432 = vmatpush1.msra.mxu0 %v2890
    %3433 = vmatprep.subr.mxu0 0.0
    %3434 = vmatpush1.msra.mxu0 %v2887
    %3435 = vmatprep.subr.mxu0 0.0
    %3436 = vmatpush1.msra.mxu0 %v2884
    %3437 = vmatprep.subr.mxu0 0.0
    %3438 = vmatpush1.msra.mxu0 %v2881
    %3439 = vmatprep.subr.mxu0 0.0
    %3440 = vmatpush1.msra.mxu0 %v2878
    %3441 = vmatprep.subr.mxu0 0.0
    %3442 = vmatpush1.msra.mxu0 %v2875
    %3443 = vmatprep.subr.mxu0 0.0
    %3444 = vmatpush1.msra.mxu0 %v2872
    %3445 = vmatprep.subr.mxu0 0.0
    %3446 = vmatpush1.msra.mxu0 %v2869
    %3447 = vmatprep.subr.mxu0 0.0
    %3448 = vmatpush1.msra.mxu0 %v2866
    %3449 = vmatprep.subr.mxu0 0.0
    %3450 = vmatpush1.msra.mxu0 %v2863
    %3451 = vmatprep.subr.mxu0 0.0
    %3452 = vmatpush1.msra.mxu0 %v2860
    %3453 = vmatprep.subr.mxu0 0.0
    %3454 = vmatpush1.msra.mxu0 %v2857
    %3455 = vmatprep.subr.mxu0 0.0
    %3456 = vmatpush1.msra.mxu0 %v2854
    %3457 = vmatprep.subr.mxu0 0.0
    %3458 = vmatpush2.msra.mxu0 %v2947
    %3459 = vmatprep.subr.mxu0 0.0
    %3460 = vmatpush2.msra.mxu0 %v2944
    %3461 = vmatprep.subr.mxu0 0.0
    %3462 = vmatpush2.msra.mxu0 %v2941
    %3463 = vmatprep.subr.mxu0 0.0
    %3464 = vmatpush2.msra.mxu0 %v2938
    %3465 = vmatprep.subr.mxu0 0.0
    %3466 = vmatpush2.msra.mxu0 %v2935
    %3467 = vmatprep.subr.mxu0 0.0
    %3468 = vmatpush2.msra.mxu0 %v2932
    %3469 = vmatprep.subr.mxu0 0.0
    %3470 = vmatpush2.msra.mxu0 %v2929
    %3471 = vmatprep.subr.mxu0 0.0
    %3472 = vmatpush2.msra.mxu0 %v2926
    %3473 = vmatprep.subr.mxu0 0.0
    %3474 = vmatpush2.msra.mxu0 %v2923
    %3475 = vmatprep.subr.mxu0 0.0
    %3476 = vmatpush2.msra.mxu0 %v2920
    %3477 = vmatprep.subr.mxu0 0.0
    %3478 = vmatpush2.msra.mxu0 %v2917
    %3479 = vmatprep.subr.mxu0 0.0
    %3480 = vmatpush2.msra.mxu0 %v2914
    %3481 = vmatprep.subr.mxu0 0.0
    %3482 = vmatpush2.msra.mxu0 %v2911
    %3483 = vmatprep.subr.mxu0 0.0
    %3484 = vmatpush2.msra.mxu0 %v2908
    %3485 = vmatprep.subr.mxu0 0.0
    %3486 = vmatpush2.msra.mxu0 %v2905
    %3487 = vmatprep.subr.mxu0 0.0
    %3488 = vmatpush2.msra.mxu0 %v2902
    %3489 = vmatprep.mubr.f32.mxu0 %v3043
    %3490 = vmatmul.mubr.f32.gmra.mxu0 %v3040
    %v3491 = vpop.f32.mrf.mxu0
    %v3492 = vadd.f32 %v3412, %v3491
    %v3493 = vpop.f32.mrf.mxu0
    %3494 = vmatprep.mubr.f32.mxu0 %v3057
    %3495 = vmatmul.mubr.f32.gmra.mxu0 %v3055
    %v3496 = vpop.f32.mrf.mxu0
    %v3497 = vadd.f32 %v3417, %v3496
    %v3498 = vpop.f32.mrf.mxu0
    %3499 = vmatprep.mubr.f32.mxu0 %v3069
    %3500 = vmatmul.mubr.f32.gmra.mxu0 %v3067
    %v3501 = vpop.f32.mrf.mxu0
    %v3502 = vadd.f32 %v3422, %v3501
    %v3503 = vpop.f32.mrf.mxu0
    %3504 = vdwg.mxu0
    %3505 = vmatprep.subr.mxu0 0.0
    %3506 = vmatpush1.msra.mxu0 %v2995
    %3507 = vmatprep.subr.mxu0 0.0
    %3508 = vmatpush1.msra.mxu0 %v2992
    %3509 = vmatprep.subr.mxu0 0.0
    %3510 = vmatpush1.msra.mxu0 %v2989
    %3511 = vmatprep.subr.mxu0 0.0
    %3512 = vmatpush1.msra.mxu0 %v2986
    %3513 = vmatprep.subr.mxu0 0.0
    %3514 = vmatpush1.msra.mxu0 %v2983
    %3515 = vmatprep.subr.mxu0 0.0
    %3516 = vmatpush1.msra.mxu0 %v2980
    %3517 = vmatprep.subr.mxu0 0.0
    %3518 = vmatpush1.msra.mxu0 %v2977
    %3519 = vmatprep.subr.mxu0 0.0
    %3520 = vmatpush1.msra.mxu0 %v2974
    %3521 = vmatprep.subr.mxu0 0.0
    %3522 = vmatpush1.msra.mxu0 %v2971
    %3523 = vmatprep.subr.mxu0 0.0
    %3524 = vmatpush1.msra.mxu0 %v2968
    %3525 = vmatprep.subr.mxu0 0.0
    %3526 = vmatpush1.msra.mxu0 %v2965
    %3527 = vmatprep.subr.mxu0 0.0
    %3528 = vmatpush1.msra.mxu0 %v2962
    %3529 = vmatprep.subr.mxu0 0.0
    %3530 = vmatpush1.msra.mxu0 %v2959
    %3531 = vmatprep.subr.mxu0 0.0
    %3532 = vmatpush1.msra.mxu0 %v2956
    %3533 = vmatprep.subr.mxu0 0.0
    %3534 = vmatpush1.msra.mxu0 %v2953
    %3535 = vmatprep.subr.mxu0 0.0
    %3536 = vmatpush1.msra.mxu0 %v2950
    %3537 = vmatprep.subr.mxu0 0.0
    %3538 = vmatpush2.msra.mxu0 0.0
    %3539 = vmatprep.subr.mxu0 0.0
    %3540 = vmatpush2.msra.mxu0 0.0
    %3541 = vmatprep.subr.mxu0 0.0
    %3542 = vmatpush2.msra.mxu0 0.0
    %3543 = vmatprep.subr.mxu0 0.0
    %3544 = vmatpush2.msra.mxu0 0.0
    %3545 = vmatprep.subr.mxu0 0.0
    %3546 = vmatpush2.msra.mxu0 0.0
    %3547 = vmatprep.subr.mxu0 0.0
    %3548 = vmatpush2.msra.mxu0 0.0
    %3549 = vmatprep.subr.mxu0 0.0
    %3550 = vmatpush2.msra.mxu0 0.0
    %3551 = vmatprep.subr.mxu0 0.0
    %3552 = vmatpush2.msra.mxu0 0.0
    %3553 = vmatprep.subr.mxu0 0.0
    %3554 = vmatpush2.msra.mxu0 0.0
    %3555 = vmatprep.subr.mxu0 0.0
    %3556 = vmatpush2.msra.mxu0 0.0
    %3557 = vmatprep.subr.mxu0 0.0
    %3558 = vmatpush2.msra.mxu0 0.0
    %3559 = vmatprep.subr.mxu0 0.0
    %3560 = vmatpush2.msra.mxu0 0.0
    %3561 = vmatprep.subr.mxu0 0.0
    %3562 = vmatpush2.msra.mxu0 %v3007
    %3563 = vmatprep.subr.mxu0 0.0
    %3564 = vmatpush2.msra.mxu0 %v3004
    %3565 = vmatprep.subr.mxu0 0.0
    %3566 = vmatpush2.msra.mxu0 %v3001
    %3567 = vmatprep.subr.mxu0 0.0
    %3568 = vmatpush2.msra.mxu0 %v2998
    %3569 = vmatprep.mubr.f32.mxu0 %v3090
    %3570 = vmatmul.mubr.f32.gmra.mxu0 %v3046
    %v3571 = vpop.f32.mrf.mxu0
    %v3572 = vadd.f32 %v3492, %v3571
    %v3573 = vpop.f32.mrf.mxu0
    %3574 = vmatprep.mubr.f32.mxu0 %v3092
    %3575 = vmatmul.mubr.f32.gmra.mxu0 %v3059
    %v3576 = vpop.f32.mrf.mxu0
    %v3577 = vadd.f32 %v3497, %v3576
    %v3578 = vpop.f32.mrf.mxu0
    %3579 = vmatprep.mubr.f32.mxu0 %v3094
    %3580 = vmatmul.mubr.f32.gmra.mxu0 %v3071
    %v3581 = vpop.f32.mrf.mxu0
    %v3582 = vadd.f32 %v3502, %v3581
    %v3583 = vpop.f32.mrf.mxu0
    %3584 = vdwg.mxu0
    %v3586 = vsel %vm3089, %v2453, 0
    %v3589 = vsel %vm3089, %v2459, 0
    %v3591 = vsel %vm3089, %v2465, 0
    %3593 = vmatprep.subr.mxu0 %v2549
    %3594 = vmatpush1.msra.mxu0 %v2548
    %3595 = vmatprep.subr.mxu0 %v2546
    %3596 = vmatpush1.msra.mxu0 %v2545
    %3597 = vmatprep.subr.mxu0 %v2543
    %3598 = vmatpush1.msra.mxu0 %v2542
    %3599 = vmatprep.subr.mxu0 %v2540
    %3600 = vmatpush1.msra.mxu0 %v2539
    %3601 = vmatprep.subr.mxu0 %v2537
    %3602 = vmatpush1.msra.mxu0 %v2536
    %3603 = vmatprep.subr.mxu0 %v2534
    %3604 = vmatpush1.msra.mxu0 %v2533
    %3605 = vmatprep.subr.mxu0 %v2531
    %3606 = vmatpush1.msra.mxu0 %v2530
    %3607 = vmatprep.subr.mxu0 %v2528
    %3608 = vmatpush1.msra.mxu0 %v2527
    %3609 = vmatprep.subr.mxu0 %v2525
    %3610 = vmatpush1.msra.mxu0 %v2524
    %3611 = vmatprep.subr.mxu0 %v2522
    %3612 = vmatpush1.msra.mxu0 %v2521
    %3613 = vmatprep.subr.mxu0 %v2519
    %3614 = vmatpush1.msra.mxu0 %v2518
    %3615 = vmatprep.subr.mxu0 %v2516
    %3616 = vmatpush1.msra.mxu0 %v2515
    %3617 = vmatprep.subr.mxu0 %v2513
    %3618 = vmatpush1.msra.mxu0 %v2512
    %3619 = vmatprep.subr.mxu0 %v2510
    %3620 = vmatpush1.msra.mxu0 %v2509
    %3621 = vmatprep.subr.mxu0 %v2507
    %3622 = vmatpush1.msra.mxu0 %v2506
    %3623 = vmatprep.subr.mxu0 %v2504
    %3624 = vmatpush1.msra.mxu0 %v2503
    %3625 = vmatprep.subr.mxu0 %v2597
    %3626 = vmatpush2.msra.mxu0 %v2596
    %3627 = vmatprep.subr.mxu0 %v2594
    %3628 = vmatpush2.msra.mxu0 %v2593
    %3629 = vmatprep.subr.mxu0 %v2591
    %3630 = vmatpush2.msra.mxu0 %v2590
    %3631 = vmatprep.subr.mxu0 %v2588
    %3632 = vmatpush2.msra.mxu0 %v2587
    %3633 = vmatprep.subr.mxu0 %v2585
    %3634 = vmatpush2.msra.mxu0 %v2584
    %3635 = vmatprep.subr.mxu0 %v2582
    %3636 = vmatpush2.msra.mxu0 %v2581
    %3637 = vmatprep.subr.mxu0 %v2579
    %3638 = vmatpush2.msra.mxu0 %v2578
    %3639 = vmatprep.subr.mxu0 %v2576
    %3640 = vmatpush2.msra.mxu0 %v2575
    %3641 = vmatprep.subr.mxu0 %v2573
    %3642 = vmatpush2.msra.mxu0 %v2572
    %3643 = vmatprep.subr.mxu0 %v2570
    %3644 = vmatpush2.msra.mxu0 %v2569
    %3645 = vmatprep.subr.mxu0 %v2567
    %3646 = vmatpush2.msra.mxu0 %v2566
    %3647 = vmatprep.subr.mxu0 %v2564
    %3648 = vmatpush2.msra.mxu0 %v2563
    %3649 = vmatprep.subr.mxu0 %v2561
    %3650 = vmatpush2.msra.mxu0 %v2560
    %3651 = vmatprep.subr.mxu0 %v2558
    %3652 = vmatpush2.msra.mxu0 %v2557
    %3653 = vmatprep.subr.mxu0 %v2555
    %3654 = vmatpush2.msra.mxu0 %v2554
    %3655 = vmatprep.subr.mxu0 %v2552
    %3656 = vmatpush2.msra.mxu0 %v2551
    %3657 = vmatprep.mubr.f32.mxu0 %v2215
    %3658 = vmatmul.mubr.f32.gmra.mxu0 %v2213
    %v3659 = vpop.f32.mrf.mxu0
    %v3660 = vadd.f32 %v3329, %v3659
    %v3661 = vpop.f32.mrf.mxu0
    %v3662 = vadd.f32 %v3331, %v3661
    %3663 = vmatprep.mubr.f32.mxu0 %v2221
    %3664 = vmatmul.mubr.f32.gmra.mxu0 %v2219
    %v3665 = vpop.f32.mrf.mxu0
    %v3666 = vadd.f32 %v3335, %v3665
    %v3667 = vpop.f32.mrf.mxu0
    %v3668 = vadd.f32 %v3337, %v3667
    %3669 = vmatprep.mubr.f32.mxu0 %v2227
    %3670 = vmatmul.mubr.f32.gmra.mxu0 %v2225
    %v3671 = vpop.f32.mrf.mxu0
    %v3672 = vadd.f32 %v3341, %v3671
    %v3673 = vpop.f32.mrf.mxu0
    %v3674 = vadd.f32 %v3343, %v3673
    %3675 = vdwg.mxu0
    %3676 = vmatprep.subr.mxu0 %v2645
    %3677 = vmatpush1.msra.mxu0 %v2644
    %3678 = vmatprep.subr.mxu0 %v2642
    %3679 = vmatpush1.msra.mxu0 %v2641
    %3680 = vmatprep.subr.mxu0 %v2639
    %3681 = vmatpush1.msra.mxu0 %v2638
    %3682 = vmatprep.subr.mxu0 %v2636
    %3683 = vmatpush1.msra.mxu0 %v2635
    %3684 = vmatprep.subr.mxu0 %v2633
    %3685 = vmatpush1.msra.mxu0 %v2632
    %3686 = vmatprep.subr.mxu0 %v2630
    %3687 = vmatpush1.msra.mxu0 %v2629
    %3688 = vmatprep.subr.mxu0 %v2627
    %3689 = vmatpush1.msra.mxu0 %v2626
    %3690 = vmatprep.subr.mxu0 %v2624
    %3691 = vmatpush1.msra.mxu0 %v2623
    %3692 = vmatprep.subr.mxu0 %v2621
    %3693 = vmatpush1.msra.mxu0 %v2620
    %3694 = vmatprep.subr.mxu0 %v2618
    %3695 = vmatpush1.msra.mxu0 %v2617
    %3696 = vmatprep.subr.mxu0 %v2615
    %3697 = vmatpush1.msra.mxu0 %v2614
    %3698 = vmatprep.subr.mxu0 %v2612
    %3699 = vmatpush1.msra.mxu0 %v2611
    %3700 = vmatprep.subr.mxu0 %v2609
    %3701 = vmatpush1.msra.mxu0 %v2608
    %3702 = vmatprep.subr.mxu0 %v2606
    %3703 = vmatpush1.msra.mxu0 %v2605
    %3704 = vmatprep.subr.mxu0 %v2603
    %3705 = vmatpush1.msra.mxu0 %v2602
    %3706 = vmatprep.subr.mxu0 %v2600
    %3707 = vmatpush1.msra.mxu0 %v2599
    %3708 = vmatprep.subr.mxu0 %v2693
    %3709 = vmatpush2.msra.mxu0 %v2692
    %3710 = vmatprep.subr.mxu0 %v2690
    %3711 = vmatpush2.msra.mxu0 %v2689
    %3712 = vmatprep.subr.mxu0 %v2687
    %3713 = vmatpush2.msra.mxu0 %v2686
    %3714 = vmatprep.subr.mxu0 %v2684
    %3715 = vmatpush2.msra.mxu0 %v2683
    %3716 = vmatprep.subr.mxu0 %v2681
    %3717 = vmatpush2.msra.mxu0 %v2680
    %3718 = vmatprep.subr.mxu0 %v2678
    %3719 = vmatpush2.msra.mxu0 %v2677
    %3720 = vmatprep.subr.mxu0 %v2675
    %3721 = vmatpush2.msra.mxu0 %v2674
    %3722 = vmatprep.subr.mxu0 %v2672
    %3723 = vmatpush2.msra.mxu0 %v2671
    %3724 = vmatprep.subr.mxu0 %v2669
    %3725 = vmatpush2.msra.mxu0 %v2668
    %3726 = vmatprep.subr.mxu0 %v2666
    %3727 = vmatpush2.msra.mxu0 %v2665
    %3728 = vmatprep.subr.mxu0 %v2663
    %3729 = vmatpush2.msra.mxu0 %v2662
    %3730 = vmatprep.subr.mxu0 %v2660
    %3731 = vmatpush2.msra.mxu0 %v2659
    %3732 = vmatprep.subr.mxu0 %v2657
    %3733 = vmatpush2.msra.mxu0 %v2656
    %3734 = vmatprep.subr.mxu0 %v2654
    %3735 = vmatpush2.msra.mxu0 %v2653
    %3736 = vmatprep.subr.mxu0 %v2651
    %3737 = vmatpush2.msra.mxu0 %v2650
    %3738 = vmatprep.subr.mxu0 %v2648
    %3739 = vmatpush2.msra.mxu0 %v2647
    %3740 = vmatprep.mubr.f32.mxu0 %v2334
    %3741 = vmatmul.mubr.f32.gmra.mxu0 %v2332
    %v3742 = vpop.f32.mrf.mxu0
    %v3743 = vadd.f32 %v3660, %v3742
    %v3744 = vpop.f32.mrf.mxu0
    %v3745 = vadd.f32 %v3662, %v3744
    %3746 = vmatprep.mubr.f32.mxu0 %v2340
    %3747 = vmatmul.mubr.f32.gmra.mxu0 %v2338
    %v3748 = vpop.f32.mrf.mxu0
    %v3749 = vadd.f32 %v3666, %v3748
    %v3750 = vpop.f32.mrf.mxu0
    %v3751 = vadd.f32 %v3668, %v3750
    %3752 = vmatprep.mubr.f32.mxu0 %v2346
    %3753 = vmatmul.mubr.f32.gmra.mxu0 %v2344
    %v3754 = vpop.f32.mrf.mxu0
    %v3755 = vadd.f32 %v3672, %v3754
    %v3756 = vpop.f32.mrf.mxu0
    %v3757 = vadd.f32 %v3674, %v3756
    %3758 = vdwg.mxu0
    %3759 = vmatprep.subr.mxu0 %v2741
    %3760 = vmatpush1.msra.mxu0 %v2740
    %3761 = vmatprep.subr.mxu0 %v2738
    %3762 = vmatpush1.msra.mxu0 %v2737
    %3763 = vmatprep.subr.mxu0 %v2735
    %3764 = vmatpush1.msra.mxu0 %v2734
    %3765 = vmatprep.subr.mxu0 %v2732
    %3766 = vmatpush1.msra.mxu0 %v2731
    %3767 = vmatprep.subr.mxu0 %v2729
    %3768 = vmatpush1.msra.mxu0 %v2728
    %3769 = vmatprep.subr.mxu0 %v2726
    %3770 = vmatpush1.msra.mxu0 %v2725
    %3771 = vmatprep.subr.mxu0 %v2723
    %3772 = vmatpush1.msra.mxu0 %v2722
    %3773 = vmatprep.subr.mxu0 %v2720
    %3774 = vmatpush1.msra.mxu0 %v2719
    %3775 = vmatprep.subr.mxu0 %v2717
    %3776 = vmatpush1.msra.mxu0 %v2716
    %3777 = vmatprep.subr.mxu0 %v2714
    %3778 = vmatpush1.msra.mxu0 %v2713
    %3779 = vmatprep.subr.mxu0 %v2711
    %3780 = vmatpush1.msra.mxu0 %v2710
    %3781 = vmatprep.subr.mxu0 %v2708
    %3782 = vmatpush1.msra.mxu0 %v2707
    %3783 = vmatprep.subr.mxu0 %v2705
    %3784 = vmatpush1.msra.mxu0 %v2704
    %3785 = vmatprep.subr.mxu0 %v2702
    %3786 = vmatpush1.msra.mxu0 %v2701
    %3787 = vmatprep.subr.mxu0 %v2699
    %3788 = vmatpush1.msra.mxu0 %v2698
    %3789 = vmatprep.subr.mxu0 %v2696
    %3790 = vmatpush1.msra.mxu0 %v2695
    %3791 = vmatprep.subr.mxu0 0.0
    %3792 = vmatpush2.msra.mxu0 0.0
    %3793 = vmatprep.subr.mxu0 0.0
    %3794 = vmatpush2.msra.mxu0 0.0
    %3795 = vmatprep.subr.mxu0 0.0
    %3796 = vmatpush2.msra.mxu0 0.0
    %3797 = vmatprep.subr.mxu0 0.0
    %3798 = vmatpush2.msra.mxu0 0.0
    %3799 = vmatprep.subr.mxu0 0.0
    %3800 = vmatpush2.msra.mxu0 0.0
    %3801 = vmatprep.subr.mxu0 0.0
    %3802 = vmatpush2.msra.mxu0 0.0
    %3803 = vmatprep.subr.mxu0 0.0
    %3804 = vmatpush2.msra.mxu0 0.0
    %3805 = vmatprep.subr.mxu0 0.0
    %3806 = vmatpush2.msra.mxu0 0.0
    %3807 = vmatprep.subr.mxu0 0.0
    %3808 = vmatpush2.msra.mxu0 0.0
    %3809 = vmatprep.subr.mxu0 0.0
    %3810 = vmatpush2.msra.mxu0 0.0
    %3811 = vmatprep.subr.mxu0 0.0
    %3812 = vmatpush2.msra.mxu0 0.0
    %3813 = vmatprep.subr.mxu0 0.0
    %3814 = vmatpush2.msra.mxu0 0.0
    %3815 = vmatprep.subr.mxu0 %v2753
    %3816 = vmatpush2.msra.mxu0 %v2752
    %3817 = vmatprep.subr.mxu0 %v2750
    %3818 = vmatpush2.msra.mxu0 %v2749
    %3819 = vmatprep.subr.mxu0 %v2747
    %3820 = vmatpush2.msra.mxu0 %v2746
    %3821 = vmatprep.subr.mxu0 %v2744
    %3822 = vmatpush2.msra.mxu0 %v2743
    %3823 = vmatprep.mubr.f32.mxu0 %v3586
    %3824 = vmatmul.mubr.f32.gmra.mxu0 %v2451
    %v3825 = vpop.f32.mrf.mxu0
    %v3826 = vadd.f32 %v3743, %v3825
    %v3827 = vpop.f32.mrf.mxu0
    %v3828 = vadd.f32 %v3745, %v3827
    %3829 = vmatprep.mubr.f32.mxu0 %v3589
    %3830 = vmatmul.mubr.f32.gmra.mxu0 %v2457
    %v3831 = vpop.f32.mrf.mxu0
    %v3832 = vadd.f32 %v3749, %v3831
    %v3833 = vpop.f32.mrf.mxu0
    %v3834 = vadd.f32 %v3751, %v3833
    %3835 = vmatprep.mubr.f32.mxu0 %v3591
    %3836 = vmatmul.mubr.f32.gmra.mxu0 %v2463
    %v3837 = vpop.f32.mrf.mxu0
    %v3838 = vadd.f32 %v3755, %v3837
    %v3839 = vpop.f32.mrf.mxu0
    %v3840 = vadd.f32 %v3757, %v3839
    %3841 = vdwg.mxu0
    %3842 = vmatprep.subr.mxu0 0.0
    %3843 = vmatpush1.msra.mxu0 %v2550
    %3844 = vmatprep.subr.mxu0 0.0
    %3845 = vmatpush1.msra.mxu0 %v2547
    %3846 = vmatprep.subr.mxu0 0.0
    %3847 = vmatpush1.msra.mxu0 %v2544
    %3848 = vmatprep.subr.mxu0 0.0
    %3849 = vmatpush1.msra.mxu0 %v2541
    %3850 = vmatprep.subr.mxu0 0.0
    %3851 = vmatpush1.msra.mxu0 %v2538
    %3852 = vmatprep.subr.mxu0 0.0
    %3853 = vmatpush1.msra.mxu0 %v2535
    %3854 = vmatprep.subr.mxu0 0.0
    %3855 = vmatpush1.msra.mxu0 %v2532
    %3856 = vmatprep.subr.mxu0 0.0
    %3857 = vmatpush1.msra.mxu0 %v2529
    %3858 = vmatprep.subr.mxu0 0.0
    %3859 = vmatpush1.msra.mxu0 %v2526
    %3860 = vmatprep.subr.mxu0 0.0
    %3861 = vmatpush1.msra.mxu0 %v2523
    %3862 = vmatprep.subr.mxu0 0.0
    %3863 = vmatpush1.msra.mxu0 %v2520
    %3864 = vmatprep.subr.mxu0 0.0
    %3865 = vmatpush1.msra.mxu0 %v2517
    %3866 = vmatprep.subr.mxu0 0.0
    %3867 = vmatpush1.msra.mxu0 %v2514
    %3868 = vmatprep.subr.mxu0 0.0
    %3869 = vmatpush1.msra.mxu0 %v2511
    %3870 = vmatprep.subr.mxu0 0.0
    %3871 = vmatpush1.msra.mxu0 %v2508
    %3872 = vmatprep.subr.mxu0 0.0
    %3873 = vmatpush1.msra.mxu0 %v2505
    %3874 = vmatprep.subr.mxu0 0.0
    %3875 = vmatpush2.msra.mxu0 %v2598
    %3876 = vmatprep.subr.mxu0 0.0
    %3877 = vmatpush2.msra.mxu0 %v2595
    %3878 = vmatprep.subr.mxu0 0.0
    %3879 = vmatpush2.msra.mxu0 %v2592
    %3880 = vmatprep.subr.mxu0 0.0
    %3881 = vmatpush2.msra.mxu0 %v2589
    %3882 = vmatprep.subr.mxu0 0.0
    %3883 = vmatpush2.msra.mxu0 %v2586
    %3884 = vmatprep.subr.mxu0 0.0
    %3885 = vmatpush2.msra.mxu0 %v2583
    %3886 = vmatprep.subr.mxu0 0.0
    %3887 = vmatpush2.msra.mxu0 %v2580
    %3888 = vmatprep.subr.mxu0 0.0
    %3889 = vmatpush2.msra.mxu0 %v2577
    %3890 = vmatprep.subr.mxu0 0.0
    %3891 = vmatpush2.msra.mxu0 %v2574
    %3892 = vmatprep.subr.mxu0 0.0
    %3893 = vmatpush2.msra.mxu0 %v2571
    %3894 = vmatprep.subr.mxu0 0.0
    %3895 = vmatpush2.msra.mxu0 %v2568
    %3896 = vmatprep.subr.mxu0 0.0
    %3897 = vmatpush2.msra.mxu0 %v2565
    %3898 = vmatprep.subr.mxu0 0.0
    %3899 = vmatpush2.msra.mxu0 %v2562
    %3900 = vmatprep.subr.mxu0 0.0
    %3901 = vmatpush2.msra.mxu0 %v2559
    %3902 = vmatprep.subr.mxu0 0.0
    %3903 = vmatpush2.msra.mxu0 %v2556
    %3904 = vmatprep.subr.mxu0 0.0
    %3905 = vmatpush2.msra.mxu0 %v2553
    %3906 = vmatprep.mubr.f32.mxu0 %v2215
    %3907 = vmatmul.mubr.f32.gmra.mxu0 %v2213
    %v3908 = vpop.f32.mrf.mxu0
    %v3909 = vadd.f32 %v3572, %v3908
    %v3910 = vpop.f32.mrf.mxu0
    %3911 = vmatprep.mubr.f32.mxu0 %v2221
    %3912 = vmatmul.mubr.f32.gmra.mxu0 %v2219
    %v3913 = vpop.f32.mrf.mxu0
    %v3914 = vadd.f32 %v3577, %v3913
    %v3915 = vpop.f32.mrf.mxu0
    %3916 = vmatprep.mubr.f32.mxu0 %v2227
    %3917 = vmatmul.mubr.f32.gmra.mxu0 %v2225
    %v3918 = vpop.f32.mrf.mxu0
    %v3919 = vadd.f32 %v3582, %v3918
    %v3920 = vpop.f32.mrf.mxu0
    %3921 = vdwg.mxu0
    %3922 = vmatprep.subr.mxu0 0.0
    %3923 = vmatpush1.msra.mxu0 %v2646
    %3924 = vmatprep.subr.mxu0 0.0
    %3925 = vmatpush1.msra.mxu0 %v2643
    %3926 = vmatprep.subr.mxu0 0.0
    %3927 = vmatpush1.msra.mxu0 %v2640
    %3928 = vmatprep.subr.mxu0 0.0
    %3929 = vmatpush1.msra.mxu0 %v2637
    %3930 = vmatprep.subr.mxu0 0.0
    %3931 = vmatpush1.msra.mxu0 %v2634
    %3932 = vmatprep.subr.mxu0 0.0
    %3933 = vmatpush1.msra.mxu0 %v2631
    %3934 = vmatprep.subr.mxu0 0.0
    %3935 = vmatpush1.msra.mxu0 %v2628
    %3936 = vmatprep.subr.mxu0 0.0
    %3937 = vmatpush1.msra.mxu0 %v2625
    %3938 = vmatprep.subr.mxu0 0.0
    %3939 = vmatpush1.msra.mxu0 %v2622
    %3940 = vmatprep.subr.mxu0 0.0
    %3941 = vmatpush1.msra.mxu0 %v2619
    %3942 = vmatprep.subr.mxu0 0.0
    %3943 = vmatpush1.msra.mxu0 %v2616
    %3944 = vmatprep.subr.mxu0 0.0
    %3945 = vmatpush1.msra.mxu0 %v2613
    %3946 = vmatprep.subr.mxu0 0.0
    %3947 = vmatpush1.msra.mxu0 %v2610
    %3948 = vmatprep.subr.mxu0 0.0
    %3949 = vmatpush1.msra.mxu0 %v2607
    %3950 = vmatprep.subr.mxu0 0.0
    %3951 = vmatpush1.msra.mxu0 %v2604
    %3952 = vmatprep.subr.mxu0 0.0
    %3953 = vmatpush1.msra.mxu0 %v2601
    %3954 = vmatprep.subr.mxu0 0.0
    %3955 = vmatpush2.msra.mxu0 %v2694
    %3956 = vmatprep.subr.mxu0 0.0
    %3957 = vmatpush2.msra.mxu0 %v2691
    %3958 = vmatprep.subr.mxu0 0.0
    %3959 = vmatpush2.msra.mxu0 %v2688
    %3960 = vmatprep.subr.mxu0 0.0
    %3961 = vmatpush2.msra.mxu0 %v2685
    %3962 = vmatprep.subr.mxu0 0.0
    %3963 = vmatpush2.msra.mxu0 %v2682
    %3964 = vmatprep.subr.mxu0 0.0
    %3965 = vmatpush2.msra.mxu0 %v2679
    %3966 = vmatprep.subr.mxu0 0.0
    %3967 = vmatpush2.msra.mxu0 %v2676
    %3968 = vmatprep.subr.mxu0 0.0
    %3969 = vmatpush2.msra.mxu0 %v2673
    %3970 = vmatprep.subr.mxu0 0.0
    %3971 = vmatpush2.msra.mxu0 %v2670
    %3972 = vmatprep.subr.mxu0 0.0
    %3973 = vmatpush2.msra.mxu0 %v2667
    %3974 = vmatprep.subr.mxu0 0.0
    %3975 = vmatpush2.msra.mxu0 %v2664
    %3976 = vmatprep.subr.mxu0 0.0
    %3977 = vmatpush2.msra.mxu0 %v2661
    %3978 = vmatprep.subr.mxu0 0.0
    %3979 = vmatpush2.msra.mxu0 %v2658
    %3980 = vmatprep.subr.mxu0 0.0
    %3981 = vmatpush2.msra.mxu0 %v2655
    %3982 = vmatprep.subr.mxu0 0.0
    %3983 = vmatpush2.msra.mxu0 %v2652
    %3984 = vmatprep.subr.mxu0 0.0
    %3985 = vmatpush2.msra.mxu0 %v2649
    %3986 = vmatprep.mubr.f32.mxu0 %v2334
    %3987 = vmatmul.mubr.f32.gmra.mxu0 %v2332
    %v3988 = vpop.f32.mrf.mxu0
    %v3989 = vadd.f32 %v3909, %v3988
    %v3990 = vpop.f32.mrf.mxu0
    %3991 = vmatprep.mubr.f32.mxu0 %v2340
    %3992 = vmatmul.mubr.f32.gmra.mxu0 %v2338
    %v3993 = vpop.f32.mrf.mxu0
    %v3994 = vadd.f32 %v3914, %v3993
    %v3995 = vpop.f32.mrf.mxu0
    %3996 = vmatprep.mubr.f32.mxu0 %v2346
    %3997 = vmatmul.mubr.f32.gmra.mxu0 %v2344
    %v3998 = vpop.f32.mrf.mxu0
    %v3999 = vadd.f32 %v3919, %v3998
    %v4000 = vpop.f32.mrf.mxu0
    %4001 = vdwg.mxu0
    %4002 = vmatprep.subr.mxu0 0.0
    %4003 = vmatpush1.msra.mxu0 %v2742
    %4004 = vmatprep.subr.mxu0 0.0
    %4005 = vmatpush1.msra.mxu0 %v2739
    %4006 = vmatprep.subr.mxu0 0.0
    %4007 = vmatpush1.msra.mxu0 %v2736
    %4008 = vmatprep.subr.mxu0 0.0
    %4009 = vmatpush1.msra.mxu0 %v2733
    %4010 = vmatprep.subr.mxu0 0.0
    %4011 = vmatpush1.msra.mxu0 %v2730
    %4012 = vmatprep.subr.mxu0 0.0
    %4013 = vmatpush1.msra.mxu0 %v2727
    %4014 = vmatprep.subr.mxu0 0.0
    %4015 = vmatpush1.msra.mxu0 %v2724
    %4016 = vmatprep.subr.mxu0 0.0
    %4017 = vmatpush1.msra.mxu0 %v2721
    %4018 = vmatprep.subr.mxu0 0.0
    %4019 = vmatpush1.msra.mxu0 %v2718
    %4020 = vmatprep.subr.mxu0 0.0
    %4021 = vmatpush1.msra.mxu0 %v2715
    %4022 = vmatprep.subr.mxu0 0.0
    %4023 = vmatpush1.msra.mxu0 %v2712
    %4024 = vmatprep.subr.mxu0 0.0
    %4025 = vmatpush1.msra.mxu0 %v2709
    %4026 = vmatprep.subr.mxu0 0.0
    %4027 = vmatpush1.msra.mxu0 %v2706
    %4028 = vmatprep.subr.mxu0 0.0
    %4029 = vmatpush1.msra.mxu0 %v2703
    %4030 = vmatprep.subr.mxu0 0.0
    %4031 = vmatpush1.msra.mxu0 %v2700
    %4032 = vmatprep.subr.mxu0 0.0
    %4033 = vmatpush1.msra.mxu0 %v2697
    %4034 = vmatprep.subr.mxu0 0.0
    %4035 = vmatpush2.msra.mxu0 0.0
    %4036 = vmatprep.subr.mxu0 0.0
    %4037 = vmatpush2.msra.mxu0 0.0
    %4038 = vmatprep.subr.mxu0 0.0
    %4039 = vmatpush2.msra.mxu0 0.0
    %4040 = vmatprep.subr.mxu0 0.0
    %4041 = vmatpush2.msra.mxu0 0.0
    %4042 = vmatprep.subr.mxu0 0.0
    %4043 = vmatpush2.msra.mxu0 0.0
    %4044 = vmatprep.subr.mxu0 0.0
    %4045 = vmatpush2.msra.mxu0 0.0
    %4046 = vmatprep.subr.mxu0 0.0
    %4047 = vmatpush2.msra.mxu0 0.0
    %4048 = vmatprep.subr.mxu0 0.0
    %4049 = vmatpush2.msra.mxu0 0.0
    %4050 = vmatprep.subr.mxu0 0.0
    %4051 = vmatpush2.msra.mxu0 0.0
    %4052 = vmatprep.subr.mxu0 0.0
    %4053 = vmatpush2.msra.mxu0 0.0
    %4054 = vmatprep.subr.mxu0 0.0
    %4055 = vmatpush2.msra.mxu0 0.0
    %4056 = vmatprep.subr.mxu0 0.0
    %4057 = vmatpush2.msra.mxu0 0.0
    %4058 = vmatprep.subr.mxu0 0.0
    %4059 = vmatpush2.msra.mxu0 %v2754
    %4060 = vmatprep.subr.mxu0 0.0
    %4061 = vmatpush2.msra.mxu0 %v2751
    %4062 = vmatprep.subr.mxu0 0.0
    %4063 = vmatpush2.msra.mxu0 %v2748
    %4064 = vmatprep.subr.mxu0 0.0
    %4065 = vmatpush2.msra.mxu0 %v2745
    %4066 = vmatprep.mubr.f32.mxu0 %v3586
    %4067 = vmatmul.mubr.f32.gmra.mxu0 %v2451
    %v4068 = vpop.f32.mrf.mxu0
    %v4069 = vadd.f32 %v3989, %v4068
    %v4070 = vpop.f32.mrf.mxu0
    %4071 = vmatprep.mubr.f32.mxu0 %v3589
    %4072 = vmatmul.mubr.f32.gmra.mxu0 %v2457
    %v4073 = vpop.f32.mrf.mxu0
    %v4074 = vadd.f32 %v3994, %v4073
    %v4075 = vpop.f32.mrf.mxu0
    %4076 = vmatprep.mubr.f32.mxu0 %v3591
    %4077 = vmatmul.mubr.f32.gmra.mxu0 %v2463
    %v4078 = vpop.f32.mrf.mxu0
    %v4079 = vadd.f32 %v3999, %v4078
    %v4080 = vpop.f32.mrf.mxu0
    %4081 = vdwg.mxu0
    %s4082 = scalar_lea.vmem %s7, 4032
    %v4083 = vld [vmem:[%s4082] sm:$0xff]
    %v4084 = vld [vmem:[%s4082 + $0x8] sm:$0xff]
    %v4085 = vld [vmem:[%s4082 + $0x10] sm:$0xff]
    %v4086 = vld [vmem:[%s4082 + $0x18] sm:$0xff]
    %v4087 = vld [vmem:[%s4082 + $0x20] sm:$0xff]
    %v4088 = vld [vmem:[%s4082 + $0x28] sm:$0xff]
    %v4089 = vld [vmem:[%s4082 + $0x30] sm:$0xff]
    %v4090 = vld [vmem:[%s4082 + $0x38] sm:$0xff]
    %v4091 = vld [vmem:[%s4082 + $0x40] sm:$0xff]
    %v4092 = vld [vmem:[%s4082 + $0x48] sm:$0xff]
    %v4093 = vld [vmem:[%s4082 + $0x50] sm:$0xff]
    %v4094 = vld [vmem:[%s4082 + $0x58] sm:$0xff]
    %v4095 = vld [vmem:[%s4082 + $0x60] sm:$0xff]
    %v4096 = vld [vmem:[%s4082 + $0x68] sm:$0xff]
    %v4097 = vld [vmem:[%s4082 + $0x70] sm:$0xff]
    %v4098 = vld [vmem:[%s4082 + $0x78] sm:$0xff]
    %v4099 = vld [vmem:[%s4082 + $0x80] sm:$0xff]
    %v4100 = vld [vmem:[%s4082 + $0x88] sm:$0xff]
    %v4101 = vld [vmem:[%s4082 + $0x90] sm:$0xff]
    %v4102 = vld [vmem:[%s4082 + $0x98] sm:$0xff]
    %v4103 = vld [vmem:[%s4082 + $0xa0] sm:$0xff]
    %v4104 = vld [vmem:[%s4082 + $0xa8] sm:$0xff]
    %v4105 = vld [vmem:[%s4082 + $0xb0] sm:$0xff]
    %v4106 = vld [vmem:[%s4082 + $0xb8] sm:$0xff]
    %v4107 = vld [vmem:[%s4082 + $0xc0] sm:$0xff]
    %v4108 = vld [vmem:[%s4082 + $0xc8] sm:$0xff]
    %v4109 = vld [vmem:[%s4082 + $0xd0] sm:$0xff]
    %v4110 = vld [vmem:[%s4082 + $0xd8] sm:$0xff]
    %v4111 = vld [vmem:[%s4082 + $0xe0] sm:$0xff]
    %v4112 = vld [vmem:[%s4082 + $0xe8] sm:$0xff]
    %v4113 = vld [vmem:[%s4082 + $0xf0] sm:$0xff]
    %v4114 = vld [vmem:[%s4082 + $0xf8] sm:$0xff]
    %v4115 = vld [vmem:[%s4082 + $0x100] sm:$0xff]
    %v4116 = vld [vmem:[%s4082 + $0x108] sm:$0xff]
    %v4117 = vld [vmem:[%s4082 + $0x110] sm:$0xff]
    %v4118 = vld [vmem:[%s4082 + $0x118] sm:$0xff]
    %v4119 = vld [vmem:[%s4082 + $0x120] sm:$0xff]
    %v4120 = vld [vmem:[%s4082 + $0x128] sm:$0xff]
    %v4121 = vld [vmem:[%s4082 + $0x130] sm:$0xff]
    %v4122 = vld [vmem:[%s4082 + $0x138] sm:$0xff]
    %v4123 = vld [vmem:[%s4082 + $0x140] sm:$0xff]
    %v4124 = vld [vmem:[%s4082 + $0x148] sm:$0xff]
    %v4125 = vld [vmem:[%s4082 + $0x150] sm:$0xff]
    %v4126 = vld [vmem:[%s4082 + $0x158] sm:$0xff]
    %v4127 = vld [vmem:[%s4082 + $0x160] sm:$0xff]
    %v4128 = vld [vmem:[%s4082 + $0x168] sm:$0xff]
    %v4129 = vld [vmem:[%s4082 + $0x170] sm:$0xff]
    %v4130 = vld [vmem:[%s4082 + $0x178] sm:$0xff]
    %v4131 = vld [vmem:[%s4082 + $0x180] sm:$0xff]
    %v4132 = vld [vmem:[%s4082 + $0x188] sm:$0xff]
    %v4133 = vld [vmem:[%s4082 + $0x190] sm:$0xff]
    %v4134 = vld [vmem:[%s4082 + $0x198] sm:$0xff]
    %v4135 = vld [vmem:[%s4082 + $0x1a0] sm:$0xff]
    %v4136 = vld [vmem:[%s4082 + $0x1a8] sm:$0xff]
    %v4137 = vld [vmem:[%s4082 + $0x1b0] sm:$0xff]
    %v4138 = vld [vmem:[%s4082 + $0x1b8] sm:$0xff]
    %v4139 = vld [vmem:[%s4082 + $0x1c0] sm:$0xff]
    %v4140 = vld [vmem:[%s4082 + $0x1c8] sm:$0xff]
    %v4141 = vld [vmem:[%s4082 + $0x1d0] sm:$0xff]
    %v4142 = vld [vmem:[%s4082 + $0x1d8] sm:$0xff]
    %v4143 = vld [vmem:[%s4082 + $0x1e0] sm:$0xff]
    %v4144 = vld [vmem:[%s4082 + $0x1e8] sm:$0xff]
    %v4145 = vld [vmem:[%s4082 + $0x1f0] sm:$0xff]
    %v4146 = vld [vmem:[%s4082 + $0x1f8] sm:$0xff]
    %v4147 = vld [vmem:[%s4082 + $0x200] sm:$0xff]
    %v4148 = vld [vmem:[%s4082 + $0x208] sm:$0xff]
    %v4149 = vld [vmem:[%s4082 + $0x210] sm:$0xff]
    %v4150 = vld [vmem:[%s4082 + $0x218] sm:$0xff]
    %v4151 = vld [vmem:[%s4082 + $0x220] sm:$0xff]
    %v4152 = vld [vmem:[%s4082 + $0x228] sm:$0xff]
    %v4153 = vld [vmem:[%s4082 + $0x230] sm:$0xff]
    %v4154 = vld [vmem:[%s4082 + $0x238] sm:$0xff]
    %v4155 = vld [vmem:[%s4082 + $0x240] sm:$0xff]
    %v4156 = vld [vmem:[%s4082 + $0x248] sm:$0xff]
    %v4157 = vld [vmem:[%s4082 + $0x250] sm:$0xff]
    %v4158 = vld [vmem:[%s4082 + $0x258] sm:$0xff]
    %v4159 = vld [vmem:[%s4082 + $0x260] sm:$0xff]
    %v4160 = vld [vmem:[%s4082 + $0x268] sm:$0xff]
    %v4161 = vld [vmem:[%s4082 + $0x270] sm:$0xff]
    %v4162 = vld [vmem:[%s4082 + $0x278] sm:$0xff]
    %v4163 = vld [vmem:[%s4082 + $0x280] sm:$0xff]
    %v4164 = vld [vmem:[%s4082 + $0x288] sm:$0xff]
    %v4165 = vld [vmem:[%s4082 + $0x290] sm:$0xff]
    %v4166 = vld [vmem:[%s4082 + $0x298] sm:$0xff]
    %v4167 = vld [vmem:[%s4082 + $0x2a0] sm:$0xff]
    %v4168 = vld [vmem:[%s4082 + $0x2a8] sm:$0xff]
    %v4169 = vld [vmem:[%s4082 + $0x2b0] sm:$0xff]
    %v4170 = vld [vmem:[%s4082 + $0x2b8] sm:$0xff]
    %v4171 = vld [vmem:[%s4082 + $0x2c0] sm:$0xff]
    %v4172 = vld [vmem:[%s4082 + $0x2c8] sm:$0xff]
    %v4173 = vld [vmem:[%s4082 + $0x2d0] sm:$0xff]
    %v4174 = vld [vmem:[%s4082 + $0x2d8] sm:$0xff]
    %v4175 = vld [vmem:[%s4082 + $0x2e0] sm:$0xff]
    %v4176 = vld [vmem:[%s4082 + $0x2e8] sm:$0xff]
    %v4177 = vld [vmem:[%s4082 + $0x2f0] sm:$0xff]
    %v4178 = vld [vmem:[%s4082 + $0x2f8] sm:$0xff]
    %v4179 = vld [vmem:[%s4082 + $0x300] sm:$0xff]
    %v4180 = vld [vmem:[%s4082 + $0x308] sm:$0xff]
    %v4181 = vld [vmem:[%s4082 + $0x310] sm:$0xff]
    %v4182 = vld [vmem:[%s4082 + $0x318] sm:$0xff]
    %v4183 = vld [vmem:[%s4082 + $0x320] sm:$0xff]
    %v4184 = vld [vmem:[%s4082 + $0x328] sm:$0xff]
    %v4185 = vld [vmem:[%s4082 + $0x330] sm:$0xff]
    %v4186 = vld [vmem:[%s4082 + $0x338] sm:$0xff]
    %v4187 = vld [vmem:[%s4082 + $0x340] sm:$0xff]
    %v4188 = vld [vmem:[%s4082 + $0x348] sm:$0xff]
    %v4189 = vld [vmem:[%s4082 + $0x350] sm:$0xff]
    %v4190 = vld [vmem:[%s4082 + $0x358] sm:$0xff]
    %v4191 = vld [vmem:[%s4082 + $0x360] sm:$0xff]
    %v4192 = vld [vmem:[%s4082 + $0x368] sm:$0xff]
    %v4193 = vld [vmem:[%s4082 + $0x370] sm:$0xff]
    %v4194 = vld [vmem:[%s4082 + $0x378] sm:$0xff]
    %v4195 = vld [vmem:[%s4082 + $0x380] sm:$0xff]
    %v4196 = vld [vmem:[%s4082 + $0x388] sm:$0xff]
    %v4197 = vld [vmem:[%s4082 + $0x390] sm:$0xff]
    %v4198 = vld [vmem:[%s4082 + $0x398] sm:$0xff]
    %v4199 = vld [vmem:[%s4082 + $0x3a0] sm:$0xff]
    %v4200 = vld [vmem:[%s4082 + $0x3a8] sm:$0xff]
    %v4201 = vld [vmem:[%s4082 + $0x3b0] sm:$0xff]
    %v4202 = vld [vmem:[%s4082 + $0x3b8] sm:$0xff]
    %v4203 = vld [vmem:[%s4082 + $0x3c0] sm:$0xff]
    %v4204 = vld [vmem:[%s4082 + $0x3c8] sm:$0xff]
    %v4205 = vld [vmem:[%s4082 + $0x3d0] sm:$0xff]
    %v4206 = vld [vmem:[%s4082 + $0x3d8] sm:$0xff]
    %v4207 = vld [vmem:[%s4082 + $0x3e0] sm:$0xff]
    %v4208 = vld [vmem:[%s4082 + $0x3e8] sm:$0xff]
    %v4209 = vld [vmem:[%s4082 + $0x3f0] sm:$0xff]
    %v4210 = vld [vmem:[%s4082 + $0x3f8] sm:$0xff]
    %v4211 = vld [vmem:[%s4082 + $0x400] sm:$0xff]
    %v4212 = vld [vmem:[%s4082 + $0x408] sm:$0xff]
    %v4213 = vld [vmem:[%s4082 + $0x410] sm:$0xff]
    %v4214 = vld [vmem:[%s4082 + $0x418] sm:$0xff]
    %v4215 = vld [vmem:[%s4082 + $0x420] sm:$0xff]
    %v4216 = vld [vmem:[%s4082 + $0x428] sm:$0xff]
    %v4217 = vld [vmem:[%s4082 + $0x430] sm:$0xff]
    %v4218 = vld [vmem:[%s4082 + $0x438] sm:$0xff]
    %v4219 = vld [vmem:[%s4082 + $0x440] sm:$0xff]
    %v4220 = vld [vmem:[%s4082 + $0x448] sm:$0xff]
    %v4221 = vld [vmem:[%s4082 + $0x450] sm:$0xff]
    %v4222 = vld [vmem:[%s4082 + $0x458] sm:$0xff]
    %v4223 = vld [vmem:[%s4082 + $0x460] sm:$0xff]
    %v4224 = vld [vmem:[%s4082 + $0x468] sm:$0xff]
    %v4225 = vld [vmem:[%s4082 + $0x470] sm:$0xff]
    %v4226 = vld [vmem:[%s4082 + $0x478] sm:$0xff]
    %v4227 = vld [vmem:[%s4082 + $0x480] sm:$0xff]
    %v4228 = vld [vmem:[%s4082 + $0x488] sm:$0xff]
    %v4229 = vld [vmem:[%s4082 + $0x490] sm:$0xff]
    %v4230 = vld [vmem:[%s4082 + $0x498] sm:$0xff]
    %v4231 = vld [vmem:[%s4082 + $0x4a0] sm:$0xff]
    %v4232 = vld [vmem:[%s4082 + $0x4a8] sm:$0xff]
    %v4233 = vld [vmem:[%s4082 + $0x4b0] sm:$0xff]
    %v4234 = vld [vmem:[%s4082 + $0x4b8] sm:$0xff]
    %v4235 = vld [vmem:[%s4082 + $0x4c0] sm:$0xff]
    %v4236 = vld [vmem:[%s4082 + $0x4c8] sm:$0xff]
    %v4237 = vld [vmem:[%s4082 + $0x4d0] sm:$0xff]
    %v4238 = vld [vmem:[%s4082 + $0x4d8] sm:$0xff]
    %v4239 = vld [vmem:[%s4082 + $0x4e0] sm:$0xff]
    %v4240 = vld [vmem:[%s4082 + $0x4e8] sm:$0xff]
    %v4241 = vld [vmem:[%s4082 + $0x4f0] sm:$0xff]
    %v4242 = vld [vmem:[%s4082 + $0x4f8] sm:$0xff]
    %v4243 = vld [vmem:[%s4082 + $0x500] sm:$0xff]
    %v4244 = vld [vmem:[%s4082 + $0x508] sm:$0xff]
    %v4245 = vld [vmem:[%s4082 + $0x510] sm:$0xff]
    %v4246 = vld [vmem:[%s4082 + $0x518] sm:$0xff]
    %v4247 = vld [vmem:[%s4082 + $0x520] sm:$0xff]
    %v4248 = vld [vmem:[%s4082 + $0x528] sm:$0xff]
    %v4249 = vld [vmem:[%s4082 + $0x530] sm:$0xff]
    %v4250 = vld [vmem:[%s4082 + $0x538] sm:$0xff]
    %v4251 = vld [vmem:[%s4082 + $0x540] sm:$0xff]
    %v4252 = vld [vmem:[%s4082 + $0x548] sm:$0xff]
    %v4253 = vld [vmem:[%s4082 + $0x550] sm:$0xff]
    %v4254 = vld [vmem:[%s4082 + $0x558] sm:$0xff]
    %v4255 = vld [vmem:[%s4082 + $0x560] sm:$0xff]
    %v4256 = vld [vmem:[%s4082 + $0x568] sm:$0xff]
    %v4257 = vld [vmem:[%s4082 + $0x570] sm:$0xff]
    %v4258 = vld [vmem:[%s4082 + $0x578] sm:$0xff]
    %v4259 = vld [vmem:[%s4082 + $0x580] sm:$0xff]
    %v4260 = vld [vmem:[%s4082 + $0x588] sm:$0xff]
    %v4261 = vld [vmem:[%s4082 + $0x590] sm:$0xff]
    %v4262 = vld [vmem:[%s4082 + $0x598] sm:$0xff]
    %v4263 = vld [vmem:[%s4082 + $0x5a0] sm:$0xff]
    %v4264 = vld [vmem:[%s4082 + $0x5a8] sm:$0xff]
    %v4265 = vld [vmem:[%s4082 + $0x5b0] sm:$0xff]
    %v4266 = vld [vmem:[%s4082 + $0x5b8] sm:$0xff]
    %v4267 = vld [vmem:[%s4082 + $0x5c0] sm:$0xff]
    %v4268 = vld [vmem:[%s4082 + $0x5c8] sm:$0xff]
    %v4269 = vld [vmem:[%s4082 + $0x5d0] sm:$0xff]
    %v4270 = vld [vmem:[%s4082 + $0x5d8] sm:$0xff]
    %v4271 = vld [vmem:[%s4082 + $0x5e0] sm:$0xff]
    %v4272 = vld [vmem:[%s4082 + $0x5e8] sm:$0xff]
    %v4273 = vld [vmem:[%s4082 + $0x5f0] sm:$0xff]
    %v4274 = vld [vmem:[%s4082 + $0x5f8] sm:$0xff]
    %v4275 = vld [vmem:[%s4082 + $0x600] sm:$0xff]
    %v4276 = vld [vmem:[%s4082 + $0x608] sm:$0xff]
    %v4277 = vld [vmem:[%s4082 + $0x610] sm:$0xff]
    %v4278 = vld [vmem:[%s4082 + $0x618] sm:$0xff]
    %v4279 = vld [vmem:[%s4082 + $0x620] sm:$0xff]
    %v4280 = vld [vmem:[%s4082 + $0x628] sm:$0xff]
    %v4281 = vld [vmem:[%s4082 + $0x630] sm:$0xff]
    %v4282 = vld [vmem:[%s4082 + $0x638] sm:$0xff]
    %v4283 = vld [vmem:[%s4082 + $0x640] sm:$0xff]
    %v4284 = vld [vmem:[%s4082 + $0x648] sm:$0xff]
    %v4285 = vld [vmem:[%s4082 + $0x650] sm:$0xff]
    %v4286 = vld [vmem:[%s4082 + $0x658] sm:$0xff]
    %v4287 = vld [vmem:[%s4082 + $0x660] sm:$0xff]
    %v4288 = vld [vmem:[%s4082 + $0x668] sm:$0xff]
    %v4289 = vld [vmem:[%s4082 + $0x670] sm:$0xff]
    %v4290 = vld [vmem:[%s4082 + $0x678] sm:$0xff]
    %v4291 = vld [vmem:[%s4082 + $0x680] sm:$0xff]
    %v4292 = vld [vmem:[%s4082 + $0x688] sm:$0xff]
    %v4293 = vld [vmem:[%s4082 + $0x690] sm:$0xff]
    %v4294 = vld [vmem:[%s4082 + $0x698] sm:$0xff]
    %v4295 = vld [vmem:[%s4082 + $0x6a0] sm:$0xff]
    %v4296 = vld [vmem:[%s4082 + $0x6a8] sm:$0xff]
    %v4297 = vld [vmem:[%s4082 + $0x6b0] sm:$0xff]
    %v4298 = vld [vmem:[%s4082 + $0x6b8] sm:$0xff]
    %v4299 = vld [vmem:[%s4082 + $0x6c0] sm:$0xff]
    %v4300 = vld [vmem:[%s4082 + $0x6c8] sm:$0xff]
    %v4301 = vld [vmem:[%s4082 + $0x6d0] sm:$0xff]
    %v4302 = vld [vmem:[%s4082 + $0x6d8] sm:$0xff]
    %v4303 = vld [vmem:[%s4082 + $0x6e0] sm:$0xff]
    %v4304 = vld [vmem:[%s4082 + $0x6e8] sm:$0xff]
    %v4305 = vld [vmem:[%s4082 + $0x6f0] sm:$0xff]
    %v4306 = vld [vmem:[%s4082 + $0x6f8] sm:$0xff]
    %v4307 = vld [vmem:[%s4082 + $0x700] sm:$0xff]
    %v4308 = vld [vmem:[%s4082 + $0x708] sm:$0xff]
    %v4309 = vld [vmem:[%s4082 + $0x710] sm:$0xff]
    %v4310 = vld [vmem:[%s4082 + $0x718] sm:$0xff]
    %v4311 = vld [vmem:[%s4082 + $0x720] sm:$0xff]
    %v4312 = vld [vmem:[%s4082 + $0x728] sm:$0xff]
    %v4313 = vld [vmem:[%s4082 + $0x730] sm:$0xff]
    %v4314 = vld [vmem:[%s4082 + $0x738] sm:$0xff]
    %v4315 = vld [vmem:[%s4082 + $0x740] sm:$0xff]
    %v4316 = vld [vmem:[%s4082 + $0x748] sm:$0xff]
    %v4317 = vld [vmem:[%s4082 + $0x750] sm:$0xff]
    %v4318 = vld [vmem:[%s4082 + $0x758] sm:$0xff]
    %v4319 = vld [vmem:[%s4082 + $0x760] sm:$0xff]
    %v4320 = vld [vmem:[%s4082 + $0x768] sm:$0xff]
    %v4321 = vld [vmem:[%s4082 + $0x770] sm:$0xff]
    %v4322 = vld [vmem:[%s4082 + $0x778] sm:$0xff]
    %v4323 = vld [vmem:[%s4082 + $0x780] sm:$0xff]
    %v4324 = vld [vmem:[%s4082 + $0x788] sm:$0xff]
    %v4325 = vld [vmem:[%s4082 + $0x790] sm:$0xff]
    %v4326 = vld [vmem:[%s4082 + $0x798] sm:$0xff]
    %v4327 = vld [vmem:[%s4082 + $0x7a0] sm:$0xff]
    %v4328 = vld [vmem:[%s4082 + $0x7a8] sm:$0xff]
    %v4329 = vld [vmem:[%s4082 + $0x7b0] sm:$0xff]
    %v4330 = vld [vmem:[%s4082 + $0x7b8] sm:$0xff]
    %v4331 = vld [vmem:[%s4082 + $0x7c0] sm:$0xff]
    %v4332 = vld [vmem:[%s4082 + $0x7c8] sm:$0xff]
    %v4333 = vld [vmem:[%s4082 + $0x7d0] sm:$0xff]
    %v4334 = vld [vmem:[%s4082 + $0x7d8] sm:$0xff]
    %v4353 = vrot.slane %v2243, 4
    %v4354 = vrot.slane %v2249, 4
    %v4355 = vsel %vm192, %v4353, %v4354
    %v4356 = vrot.slane %v2245, 4
    %v4357 = vrot.slane %v2251, 4
    %v4358 = vsel %vm192, %v4356, %v4357
    %v4359 = vrot.slane %v2362, 4
    %v4360 = vrot.slane %v2368, 4
    %v4361 = vsel %vm192, %v4359, %v4360
    %v4362 = vrot.slane %v2364, 4
    %v4363 = vrot.slane %v2370, 4
    %v4364 = vsel %vm192, %v4362, %v4363
    %v4365 = vrot.slane %v2481, 4
    %v4366 = vrot.slane %v2487, 4
    %v4367 = vsel %vm192, %v4365, %v4366
    %v4368 = vrot.slane %v2483, 4
    %v4369 = vrot.slane %v2489, 4
    %v4370 = vsel %vm192, %v4368, %v4369
    %v4371 = vrot.slane %v2255, 4
    %v4372 = vsel %vm192, %v4354, %v4371
    %v4373 = vrot.slane %v2257, 4
    %v4374 = vsel %vm192, %v4357, %v4373
    %v4375 = vrot.slane %v2374, 4
    %v4376 = vsel %vm192, %v4360, %v4375
    %v4377 = vrot.slane %v2376, 4
    %v4378 = vsel %vm192, %v4363, %v4377
    %v4379 = vrot.slane %v2493, 4
    %v4380 = vsel %vm192, %v4366, %v4379
    %v4381 = vrot.slane %v2495, 4
    %v4382 = vsel %vm192, %v4369, %v4381
    %v4383 = vrot.slane %v2261, 4
    %v4384 = vsel %vm192, %v4371, %v4383
    %v4385 = vrot.slane %v2263, 4
    %v4386 = vsel %vm192, %v4373, %v4385
    %v4387 = vrot.slane %v2380, 4
    %v4388 = vsel %vm192, %v4375, %v4387
    %v4389 = vrot.slane %v2382, 4
    %v4390 = vsel %vm192, %v4377, %v4389
    %v4391 = vrot.slane %v2499, 4
    %v4392 = vsel %vm192, %v4379, %v4391
    %v4393 = vrot.slane %v2501, 4
    %v4394 = vsel %vm192, %v4381, %v4393
    %v4410 = vsel %vm3089, %v4370, 0
    %v4412 = vsel %vm3089, %v4382, 0
    %v4414 = vsel %vm3089, %v4394, 0
    %4416 = vmatprep.subr.mxu0 %v4129
    %4417 = vmatpush1.msra.mxu0 %v4128
    %4418 = vmatprep.subr.mxu0 %v4126
    %4419 = vmatpush1.msra.mxu0 %v4125
    %4420 = vmatprep.subr.mxu0 %v4123
    %4421 = vmatpush1.msra.mxu0 %v4122
    %4422 = vmatprep.subr.mxu0 %v4120
    %4423 = vmatpush1.msra.mxu0 %v4119
    %4424 = vmatprep.subr.mxu0 %v4117
    %4425 = vmatpush1.msra.mxu0 %v4116
    %4426 = vmatprep.subr.mxu0 %v4114
    %4427 = vmatpush1.msra.mxu0 %v4113
    %4428 = vmatprep.subr.mxu0 %v4111
    %4429 = vmatpush1.msra.mxu0 %v4110
    %4430 = vmatprep.subr.mxu0 %v4108
    %4431 = vmatpush1.msra.mxu0 %v4107
    %4432 = vmatprep.subr.mxu0 %v4105
    %4433 = vmatpush1.msra.mxu0 %v4104
    %4434 = vmatprep.subr.mxu0 %v4102
    %4435 = vmatpush1.msra.mxu0 %v4101
    %4436 = vmatprep.subr.mxu0 %v4099
    %4437 = vmatpush1.msra.mxu0 %v4098
    %4438 = vmatprep.subr.mxu0 %v4096
    %4439 = vmatpush1.msra.mxu0 %v4095
    %4440 = vmatprep.subr.mxu0 %v4093
    %4441 = vmatpush1.msra.mxu0 %v4092
    %4442 = vmatprep.subr.mxu0 %v4090
    %4443 = vmatpush1.msra.mxu0 %v4089
    %4444 = vmatprep.subr.mxu0 %v4087
    %4445 = vmatpush1.msra.mxu0 %v4086
    %4446 = vmatprep.subr.mxu0 %v4084
    %4447 = vmatpush1.msra.mxu0 %v4083
    %4448 = vmatprep.subr.mxu0 %v4177
    %4449 = vmatpush2.msra.mxu0 %v4176
    %4450 = vmatprep.subr.mxu0 %v4174
    %4451 = vmatpush2.msra.mxu0 %v4173
    %4452 = vmatprep.subr.mxu0 %v4171
    %4453 = vmatpush2.msra.mxu0 %v4170
    %4454 = vmatprep.subr.mxu0 %v4168
    %4455 = vmatpush2.msra.mxu0 %v4167
    %4456 = vmatprep.subr.mxu0 %v4165
    %4457 = vmatpush2.msra.mxu0 %v4164
    %4458 = vmatprep.subr.mxu0 %v4162
    %4459 = vmatpush2.msra.mxu0 %v4161
    %4460 = vmatprep.subr.mxu0 %v4159
    %4461 = vmatpush2.msra.mxu0 %v4158
    %4462 = vmatprep.subr.mxu0 %v4156
    %4463 = vmatpush2.msra.mxu0 %v4155
    %4464 = vmatprep.subr.mxu0 %v4153
    %4465 = vmatpush2.msra.mxu0 %v4152
    %4466 = vmatprep.subr.mxu0 %v4150
    %4467 = vmatpush2.msra.mxu0 %v4149
    %4468 = vmatprep.subr.mxu0 %v4147
    %4469 = vmatpush2.msra.mxu0 %v4146
    %4470 = vmatprep.subr.mxu0 %v4144
    %4471 = vmatpush2.msra.mxu0 %v4143
    %4472 = vmatprep.subr.mxu0 %v4141
    %4473 = vmatpush2.msra.mxu0 %v4140
    %4474 = vmatprep.subr.mxu0 %v4138
    %4475 = vmatpush2.msra.mxu0 %v4137
    %4476 = vmatprep.subr.mxu0 %v4135
    %4477 = vmatpush2.msra.mxu0 %v4134
    %4478 = vmatprep.subr.mxu0 %v4132
    %4479 = vmatpush2.msra.mxu0 %v4131
    %4480 = vmatprep.mubr.f32.mxu0 %v4358
    %4481 = vmatmul.mubr.f32.gmra.mxu0 %v4355
    %v4482 = vpop.f32.mrf.mxu0
    %v4483 = vadd.f32 0.0, %v4482
    %v4484 = vpop.f32.mrf.mxu0
    %v4485 = vadd.f32 0.0, %v4484
    %4486 = vmatprep.mubr.f32.mxu0 %v4374
    %4487 = vmatmul.mubr.f32.gmra.mxu0 %v4372
    %v4488 = vpop.f32.mrf.mxu0
    %v4489 = vadd.f32 0.0, %v4488
    %v4490 = vpop.f32.mrf.mxu0
    %v4491 = vadd.f32 0.0, %v4490
    %4492 = vmatprep.mubr.f32.mxu0 %v4386
    %4493 = vmatmul.mubr.f32.gmra.mxu0 %v4384
    %v4494 = vpop.f32.mrf.mxu0
    %v4495 = vadd.f32 0.0, %v4494
    %v4496 = vpop.f32.mrf.mxu0
    %v4497 = vadd.f32 0.0, %v4496
    %4498 = vdwg.mxu0
    %4499 = vmatprep.subr.mxu0 %v4225
    %4500 = vmatpush1.msra.mxu0 %v4224
    %4501 = vmatprep.subr.mxu0 %v4222
    %4502 = vmatpush1.msra.mxu0 %v4221
    %4503 = vmatprep.subr.mxu0 %v4219
    %4504 = vmatpush1.msra.mxu0 %v4218
    %4505 = vmatprep.subr.mxu0 %v4216
    %4506 = vmatpush1.msra.mxu0 %v4215
    %4507 = vmatprep.subr.mxu0 %v4213
    %4508 = vmatpush1.msra.mxu0 %v4212
    %4509 = vmatprep.subr.mxu0 %v4210
    %4510 = vmatpush1.msra.mxu0 %v4209
    %4511 = vmatprep.subr.mxu0 %v4207
    %4512 = vmatpush1.msra.mxu0 %v4206
    %4513 = vmatprep.subr.mxu0 %v4204
    %4514 = vmatpush1.msra.mxu0 %v4203
    %4515 = vmatprep.subr.mxu0 %v4201
    %4516 = vmatpush1.msra.mxu0 %v4200
    %4517 = vmatprep.subr.mxu0 %v4198
    %4518 = vmatpush1.msra.mxu0 %v4197
    %4519 = vmatprep.subr.mxu0 %v4195
    %4520 = vmatpush1.msra.mxu0 %v4194
    %4521 = vmatprep.subr.mxu0 %v4192
    %4522 = vmatpush1.msra.mxu0 %v4191
    %4523 = vmatprep.subr.mxu0 %v4189
    %4524 = vmatpush1.msra.mxu0 %v4188
    %4525 = vmatprep.subr.mxu0 %v4186
    %4526 = vmatpush1.msra.mxu0 %v4185
    %4527 = vmatprep.subr.mxu0 %v4183
    %4528 = vmatpush1.msra.mxu0 %v4182
    %4529 = vmatprep.subr.mxu0 %v4180
    %4530 = vmatpush1.msra.mxu0 %v4179
    %4531 = vmatprep.subr.mxu0 %v4273
    %4532 = vmatpush2.msra.mxu0 %v4272
    %4533 = vmatprep.subr.mxu0 %v4270
    %4534 = vmatpush2.msra.mxu0 %v4269
    %4535 = vmatprep.subr.mxu0 %v4267
    %4536 = vmatpush2.msra.mxu0 %v4266
    %4537 = vmatprep.subr.mxu0 %v4264
    %4538 = vmatpush2.msra.mxu0 %v4263
    %4539 = vmatprep.subr.mxu0 %v4261
    %4540 = vmatpush2.msra.mxu0 %v4260
    %4541 = vmatprep.subr.mxu0 %v4258
    %4542 = vmatpush2.msra.mxu0 %v4257
    %4543 = vmatprep.subr.mxu0 %v4255
    %4544 = vmatpush2.msra.mxu0 %v4254
    %4545 = vmatprep.subr.mxu0 %v4252
    %4546 = vmatpush2.msra.mxu0 %v4251
    %4547 = vmatprep.subr.mxu0 %v4249
    %4548 = vmatpush2.msra.mxu0 %v4248
    %4549 = vmatprep.subr.mxu0 %v4246
    %4550 = vmatpush2.msra.mxu0 %v4245
    %4551 = vmatprep.subr.mxu0 %v4243
    %4552 = vmatpush2.msra.mxu0 %v4242
    %4553 = vmatprep.subr.mxu0 %v4240
    %4554 = vmatpush2.msra.mxu0 %v4239
    %4555 = vmatprep.subr.mxu0 %v4237
    %4556 = vmatpush2.msra.mxu0 %v4236
    %4557 = vmatprep.subr.mxu0 %v4234
    %4558 = vmatpush2.msra.mxu0 %v4233
    %4559 = vmatprep.subr.mxu0 %v4231
    %4560 = vmatpush2.msra.mxu0 %v4230
    %4561 = vmatprep.subr.mxu0 %v4228
    %4562 = vmatpush2.msra.mxu0 %v4227
    %4563 = vmatprep.mubr.f32.mxu0 %v4364
    %4564 = vmatmul.mubr.f32.gmra.mxu0 %v4361
    %v4565 = vpop.f32.mrf.mxu0
    %v4566 = vadd.f32 %v4483, %v4565
    %v4567 = vpop.f32.mrf.mxu0
    %v4568 = vadd.f32 %v4485, %v4567
    %4569 = vmatprep.mubr.f32.mxu0 %v4378
    %4570 = vmatmul.mubr.f32.gmra.mxu0 %v4376
    %v4571 = vpop.f32.mrf.mxu0
    %v4572 = vadd.f32 %v4489, %v4571
    %v4573 = vpop.f32.mrf.mxu0
    %v4574 = vadd.f32 %v4491, %v4573
    %4575 = vmatprep.mubr.f32.mxu0 %v4390
    %4576 = vmatmul.mubr.f32.gmra.mxu0 %v4388
    %v4577 = vpop.f32.mrf.mxu0
    %v4578 = vadd.f32 %v4495, %v4577
    %v4579 = vpop.f32.mrf.mxu0
    %v4580 = vadd.f32 %v4497, %v4579
    %4581 = vdwg.mxu0
    %4582 = vmatprep.subr.mxu0 %v4321
    %4583 = vmatpush1.msra.mxu0 %v4320
    %4584 = vmatprep.subr.mxu0 %v4318
    %4585 = vmatpush1.msra.mxu0 %v4317
    %4586 = vmatprep.subr.mxu0 %v4315
    %4587 = vmatpush1.msra.mxu0 %v4314
    %4588 = vmatprep.subr.mxu0 %v4312
    %4589 = vmatpush1.msra.mxu0 %v4311
    %4590 = vmatprep.subr.mxu0 %v4309
    %4591 = vmatpush1.msra.mxu0 %v4308
    %4592 = vmatprep.subr.mxu0 %v4306
    %4593 = vmatpush1.msra.mxu0 %v4305
    %4594 = vmatprep.subr.mxu0 %v4303
    %4595 = vmatpush1.msra.mxu0 %v4302
    %4596 = vmatprep.subr.mxu0 %v4300
    %4597 = vmatpush1.msra.mxu0 %v4299
    %4598 = vmatprep.subr.mxu0 %v4297
    %4599 = vmatpush1.msra.mxu0 %v4296
    %4600 = vmatprep.subr.mxu0 %v4294
    %4601 = vmatpush1.msra.mxu0 %v4293
    %4602 = vmatprep.subr.mxu0 %v4291
    %4603 = vmatpush1.msra.mxu0 %v4290
    %4604 = vmatprep.subr.mxu0 %v4288
    %4605 = vmatpush1.msra.mxu0 %v4287
    %4606 = vmatprep.subr.mxu0 %v4285
    %4607 = vmatpush1.msra.mxu0 %v4284
    %4608 = vmatprep.subr.mxu0 %v4282
    %4609 = vmatpush1.msra.mxu0 %v4281
    %4610 = vmatprep.subr.mxu0 %v4279
    %4611 = vmatpush1.msra.mxu0 %v4278
    %4612 = vmatprep.subr.mxu0 %v4276
    %4613 = vmatpush1.msra.mxu0 %v4275
    %4614 = vmatprep.subr.mxu0 0.0
    %4615 = vmatpush2.msra.mxu0 0.0
    %4616 = vmatprep.subr.mxu0 0.0
    %4617 = vmatpush2.msra.mxu0 0.0
    %4618 = vmatprep.subr.mxu0 0.0
    %4619 = vmatpush2.msra.mxu0 0.0
    %4620 = vmatprep.subr.mxu0 0.0
    %4621 = vmatpush2.msra.mxu0 0.0
    %4622 = vmatprep.subr.mxu0 0.0
    %4623 = vmatpush2.msra.mxu0 0.0
    %4624 = vmatprep.subr.mxu0 0.0
    %4625 = vmatpush2.msra.mxu0 0.0
    %4626 = vmatprep.subr.mxu0 0.0
    %4627 = vmatpush2.msra.mxu0 0.0
    %4628 = vmatprep.subr.mxu0 0.0
    %4629 = vmatpush2.msra.mxu0 0.0
    %4630 = vmatprep.subr.mxu0 0.0
    %4631 = vmatpush2.msra.mxu0 0.0
    %4632 = vmatprep.subr.mxu0 0.0
    %4633 = vmatpush2.msra.mxu0 0.0
    %4634 = vmatprep.subr.mxu0 0.0
    %4635 = vmatpush2.msra.mxu0 0.0
    %4636 = vmatprep.subr.mxu0 0.0
    %4637 = vmatpush2.msra.mxu0 0.0
    %4638 = vmatprep.subr.mxu0 %v4333
    %4639 = vmatpush2.msra.mxu0 %v4332
    %4640 = vmatprep.subr.mxu0 %v4330
    %4641 = vmatpush2.msra.mxu0 %v4329
    %4642 = vmatprep.subr.mxu0 %v4327
    %4643 = vmatpush2.msra.mxu0 %v4326
    %4644 = vmatprep.subr.mxu0 %v4324
    %4645 = vmatpush2.msra.mxu0 %v4323
    %4646 = vmatprep.mubr.f32.mxu0 %v4410
    %4647 = vmatmul.mubr.f32.gmra.mxu0 %v4367
    %v4648 = vpop.f32.mrf.mxu0
    %v4649 = vadd.f32 %v4566, %v4648
    %v4650 = vpop.f32.mrf.mxu0
    %v4651 = vadd.f32 %v4568, %v4650
    %4652 = vmatprep.mubr.f32.mxu0 %v4412
    %4653 = vmatmul.mubr.f32.gmra.mxu0 %v4380
    %v4654 = vpop.f32.mrf.mxu0
    %v4655 = vadd.f32 %v4572, %v4654
    %v4656 = vpop.f32.mrf.mxu0
    %v4657 = vadd.f32 %v4574, %v4656
    %4658 = vmatprep.mubr.f32.mxu0 %v4414
    %4659 = vmatmul.mubr.f32.gmra.mxu0 %v4392
    %v4660 = vpop.f32.mrf.mxu0
    %v4661 = vadd.f32 %v4578, %v4660
    %v4662 = vpop.f32.mrf.mxu0
    %v4663 = vadd.f32 %v4580, %v4662
    %4664 = vdwg.mxu0
    %4665 = vmatprep.subr.mxu0 0.0
    %4666 = vmatpush1.msra.mxu0 %v4130
    %4667 = vmatprep.subr.mxu0 0.0
    %4668 = vmatpush1.msra.mxu0 %v4127
    %4669 = vmatprep.subr.mxu0 0.0
    %4670 = vmatpush1.msra.mxu0 %v4124
    %4671 = vmatprep.subr.mxu0 0.0
    %4672 = vmatpush1.msra.mxu0 %v4121
    %4673 = vmatprep.subr.mxu0 0.0
    %4674 = vmatpush1.msra.mxu0 %v4118
    %4675 = vmatprep.subr.mxu0 0.0
    %4676 = vmatpush1.msra.mxu0 %v4115
    %4677 = vmatprep.subr.mxu0 0.0
    %4678 = vmatpush1.msra.mxu0 %v4112
    %4679 = vmatprep.subr.mxu0 0.0
    %4680 = vmatpush1.msra.mxu0 %v4109
    %4681 = vmatprep.subr.mxu0 0.0
    %4682 = vmatpush1.msra.mxu0 %v4106
    %4683 = vmatprep.subr.mxu0 0.0
    %4684 = vmatpush1.msra.mxu0 %v4103
    %4685 = vmatprep.subr.mxu0 0.0
    %4686 = vmatpush1.msra.mxu0 %v4100
    %4687 = vmatprep.subr.mxu0 0.0
    %4688 = vmatpush1.msra.mxu0 %v4097
    %4689 = vmatprep.subr.mxu0 0.0
    %4690 = vmatpush1.msra.mxu0 %v4094
    %4691 = vmatprep.subr.mxu0 0.0
    %4692 = vmatpush1.msra.mxu0 %v4091
    %4693 = vmatprep.subr.mxu0 0.0
    %4694 = vmatpush1.msra.mxu0 %v4088
    %4695 = vmatprep.subr.mxu0 0.0
    %4696 = vmatpush1.msra.mxu0 %v4085
    %4697 = vmatprep.subr.mxu0 0.0
    %4698 = vmatpush2.msra.mxu0 %v4178
    %4699 = vmatprep.subr.mxu0 0.0
    %4700 = vmatpush2.msra.mxu0 %v4175
    %4701 = vmatprep.subr.mxu0 0.0
    %4702 = vmatpush2.msra.mxu0 %v4172
    %4703 = vmatprep.subr.mxu0 0.0
    %4704 = vmatpush2.msra.mxu0 %v4169
    %4705 = vmatprep.subr.mxu0 0.0
    %4706 = vmatpush2.msra.mxu0 %v4166
    %4707 = vmatprep.subr.mxu0 0.0
    %4708 = vmatpush2.msra.mxu0 %v4163
    %4709 = vmatprep.subr.mxu0 0.0
    %4710 = vmatpush2.msra.mxu0 %v4160
    %4711 = vmatprep.subr.mxu0 0.0
    %4712 = vmatpush2.msra.mxu0 %v4157
    %4713 = vmatprep.subr.mxu0 0.0
    %4714 = vmatpush2.msra.mxu0 %v4154
    %4715 = vmatprep.subr.mxu0 0.0
    %4716 = vmatpush2.msra.mxu0 %v4151
    %4717 = vmatprep.subr.mxu0 0.0
    %4718 = vmatpush2.msra.mxu0 %v4148
    %4719 = vmatprep.subr.mxu0 0.0
    %4720 = vmatpush2.msra.mxu0 %v4145
    %4721 = vmatprep.subr.mxu0 0.0
    %4722 = vmatpush2.msra.mxu0 %v4142
    %4723 = vmatprep.subr.mxu0 0.0
    %4724 = vmatpush2.msra.mxu0 %v4139
    %4725 = vmatprep.subr.mxu0 0.0
    %4726 = vmatpush2.msra.mxu0 %v4136
    %4727 = vmatprep.subr.mxu0 0.0
    %4728 = vmatpush2.msra.mxu0 %v4133
    %4729 = vmatprep.mubr.f32.mxu0 %v4358
    %4730 = vmatmul.mubr.f32.gmra.mxu0 %v4355
    %v4731 = vpop.f32.mrf.mxu0
    %v4732 = vadd.f32 0.0, %v4731
    %v4733 = vpop.f32.mrf.mxu0
    %4734 = vmatprep.mubr.f32.mxu0 %v4374
    %4735 = vmatmul.mubr.f32.gmra.mxu0 %v4372
    %v4736 = vpop.f32.mrf.mxu0
    %v4737 = vadd.f32 0.0, %v4736
    %v4738 = vpop.f32.mrf.mxu0
    %4739 = vmatprep.mubr.f32.mxu0 %v4386
    %4740 = vmatmul.mubr.f32.gmra.mxu0 %v4384
    %v4741 = vpop.f32.mrf.mxu0
    %v4742 = vadd.f32 0.0, %v4741
    %v4743 = vpop.f32.mrf.mxu0
    %4744 = vdwg.mxu0
    %4745 = vmatprep.subr.mxu0 0.0
    %4746 = vmatpush1.msra.mxu0 %v4226
    %4747 = vmatprep.subr.mxu0 0.0
    %4748 = vmatpush1.msra.mxu0 %v4223
    %4749 = vmatprep.subr.mxu0 0.0
    %4750 = vmatpush1.msra.mxu0 %v4220
    %4751 = vmatprep.subr.mxu0 0.0
    %4752 = vmatpush1.msra.mxu0 %v4217
    %4753 = vmatprep.subr.mxu0 0.0
    %4754 = vmatpush1.msra.mxu0 %v4214
    %4755 = vmatprep.subr.mxu0 0.0
    %4756 = vmatpush1.msra.mxu0 %v4211
    %4757 = vmatprep.subr.mxu0 0.0
    %4758 = vmatpush1.msra.mxu0 %v4208
    %4759 = vmatprep.subr.mxu0 0.0
    %4760 = vmatpush1.msra.mxu0 %v4205
    %4761 = vmatprep.subr.mxu0 0.0
    %4762 = vmatpush1.msra.mxu0 %v4202
    %4763 = vmatprep.subr.mxu0 0.0
    %4764 = vmatpush1.msra.mxu0 %v4199
    %4765 = vmatprep.subr.mxu0 0.0
    %4766 = vmatpush1.msra.mxu0 %v4196
    %4767 = vmatprep.subr.mxu0 0.0
    %4768 = vmatpush1.msra.mxu0 %v4193
    %4769 = vmatprep.subr.mxu0 0.0
    %4770 = vmatpush1.msra.mxu0 %v4190
    %4771 = vmatprep.subr.mxu0 0.0
    %4772 = vmatpush1.msra.mxu0 %v4187
    %4773 = vmatprep.subr.mxu0 0.0
    %4774 = vmatpush1.msra.mxu0 %v4184
    %4775 = vmatprep.subr.mxu0 0.0
    %4776 = vmatpush1.msra.mxu0 %v4181
    %4777 = vmatprep.subr.mxu0 0.0
    %4778 = vmatpush2.msra.mxu0 %v4274
    %4779 = vmatprep.subr.mxu0 0.0
    %4780 = vmatpush2.msra.mxu0 %v4271
    %4781 = vmatprep.subr.mxu0 0.0
    %4782 = vmatpush2.msra.mxu0 %v4268
    %4783 = vmatprep.subr.mxu0 0.0
    %4784 = vmatpush2.msra.mxu0 %v4265
    %4785 = vmatprep.subr.mxu0 0.0
    %4786 = vmatpush2.msra.mxu0 %v4262
    %4787 = vmatprep.subr.mxu0 0.0
    %4788 = vmatpush2.msra.mxu0 %v4259
    %4789 = vmatprep.subr.mxu0 0.0
    %4790 = vmatpush2.msra.mxu0 %v4256
    %4791 = vmatprep.subr.mxu0 0.0
    %4792 = vmatpush2.msra.mxu0 %v4253
    %4793 = vmatprep.subr.mxu0 0.0
    %4794 = vmatpush2.msra.mxu0 %v4250
    %4795 = vmatprep.subr.mxu0 0.0
    %4796 = vmatpush2.msra.mxu0 %v4247
    %4797 = vmatprep.subr.mxu0 0.0
    %4798 = vmatpush2.msra.mxu0 %v4244
    %4799 = vmatprep.subr.mxu0 0.0
    %4800 = vmatpush2.msra.mxu0 %v4241
    %4801 = vmatprep.subr.mxu0 0.0
    %4802 = vmatpush2.msra.mxu0 %v4238
    %4803 = vmatprep.subr.mxu0 0.0
    %4804 = vmatpush2.msra.mxu0 %v4235
    %4805 = vmatprep.subr.mxu0 0.0
    %4806 = vmatpush2.msra.mxu0 %v4232
    %4807 = vmatprep.subr.mxu0 0.0
    %4808 = vmatpush2.msra.mxu0 %v4229
    %4809 = vmatprep.mubr.f32.mxu0 %v4364
    %4810 = vmatmul.mubr.f32.gmra.mxu0 %v4361
    %v4811 = vpop.f32.mrf.mxu0
    %v4812 = vadd.f32 %v4732, %v4811
    %v4813 = vpop.f32.mrf.mxu0
    %4814 = vmatprep.mubr.f32.mxu0 %v4378
    %4815 = vmatmul.mubr.f32.gmra.mxu0 %v4376
    %v4816 = vpop.f32.mrf.mxu0
    %v4817 = vadd.f32 %v4737, %v4816
    %v4818 = vpop.f32.mrf.mxu0
    %4819 = vmatprep.mubr.f32.mxu0 %v4390
    %4820 = vmatmul.mubr.f32.gmra.mxu0 %v4388
    %v4821 = vpop.f32.mrf.mxu0
    %v4822 = vadd.f32 %v4742, %v4821
    %v4823 = vpop.f32.mrf.mxu0
    %4824 = vdwg.mxu0
    %4825 = vmatprep.subr.mxu0 0.0
    %4826 = vmatpush1.msra.mxu0 %v4322
    %4827 = vmatprep.subr.mxu0 0.0
    %4828 = vmatpush1.msra.mxu0 %v4319
    %4829 = vmatprep.subr.mxu0 0.0
    %4830 = vmatpush1.msra.mxu0 %v4316
    %4831 = vmatprep.subr.mxu0 0.0
    %4832 = vmatpush1.msra.mxu0 %v4313
    %4833 = vmatprep.subr.mxu0 0.0
    %4834 = vmatpush1.msra.mxu0 %v4310
    %4835 = vmatprep.subr.mxu0 0.0
    %4836 = vmatpush1.msra.mxu0 %v4307
    %4837 = vmatprep.subr.mxu0 0.0
    %4838 = vmatpush1.msra.mxu0 %v4304
    %4839 = vmatprep.subr.mxu0 0.0
    %4840 = vmatpush1.msra.mxu0 %v4301
    %4841 = vmatprep.subr.mxu0 0.0
    %4842 = vmatpush1.msra.mxu0 %v4298
    %4843 = vmatprep.subr.mxu0 0.0
    %4844 = vmatpush1.msra.mxu0 %v4295
    %4845 = vmatprep.subr.mxu0 0.0
    %4846 = vmatpush1.msra.mxu0 %v4292
    %4847 = vmatprep.subr.mxu0 0.0
    %4848 = vmatpush1.msra.mxu0 %v4289
    %4849 = vmatprep.subr.mxu0 0.0
    %4850 = vmatpush1.msra.mxu0 %v4286
    %4851 = vmatprep.subr.mxu0 0.0
    %4852 = vmatpush1.msra.mxu0 %v4283
    %4853 = vmatprep.subr.mxu0 0.0
    %4854 = vmatpush1.msra.mxu0 %v4280
    %4855 = vmatprep.subr.mxu0 0.0
    %4856 = vmatpush1.msra.mxu0 %v4277
    %4857 = vmatprep.subr.mxu0 0.0
    %4858 = vmatpush2.msra.mxu0 0.0
    %4859 = vmatprep.subr.mxu0 0.0
    %4860 = vmatpush2.msra.mxu0 0.0
    %4861 = vmatprep.subr.mxu0 0.0
    %4862 = vmatpush2.msra.mxu0 0.0
    %4863 = vmatprep.subr.mxu0 0.0
    %4864 = vmatpush2.msra.mxu0 0.0
    %4865 = vmatprep.subr.mxu0 0.0
    %4866 = vmatpush2.msra.mxu0 0.0
    %4867 = vmatprep.subr.mxu0 0.0
    %4868 = vmatpush2.msra.mxu0 0.0
    %4869 = vmatprep.subr.mxu0 0.0
    %4870 = vmatpush2.msra.mxu0 0.0
    %4871 = vmatprep.subr.mxu0 0.0
    %4872 = vmatpush2.msra.mxu0 0.0
    %4873 = vmatprep.subr.mxu0 0.0
    %4874 = vmatpush2.msra.mxu0 0.0
    %4875 = vmatprep.subr.mxu0 0.0
    %4876 = vmatpush2.msra.mxu0 0.0
    %4877 = vmatprep.subr.mxu0 0.0
    %4878 = vmatpush2.msra.mxu0 0.0
    %4879 = vmatprep.subr.mxu0 0.0
    %4880 = vmatpush2.msra.mxu0 0.0
    %4881 = vmatprep.subr.mxu0 0.0
    %4882 = vmatpush2.msra.mxu0 %v4334
    %4883 = vmatprep.subr.mxu0 0.0
    %4884 = vmatpush2.msra.mxu0 %v4331
    %4885 = vmatprep.subr.mxu0 0.0
    %4886 = vmatpush2.msra.mxu0 %v4328
    %4887 = vmatprep.subr.mxu0 0.0
    %4888 = vmatpush2.msra.mxu0 %v4325
    %4889 = vmatprep.mubr.f32.mxu0 %v4410
    %4890 = vmatmul.mubr.f32.gmra.mxu0 %v4367
    %v4891 = vpop.f32.mrf.mxu0
    %v4892 = vadd.f32 %v4812, %v4891
    %v4893 = vpop.f32.mrf.mxu0
    %4894 = vmatprep.mubr.f32.mxu0 %v4412
    %4895 = vmatmul.mubr.f32.gmra.mxu0 %v4380
    %v4896 = vpop.f32.mrf.mxu0
    %v4897 = vadd.f32 %v4817, %v4896
    %v4898 = vpop.f32.mrf.mxu0
    %4899 = vmatprep.mubr.f32.mxu0 %v4414
    %4900 = vmatmul.mubr.f32.gmra.mxu0 %v4392
    %v4901 = vpop.f32.mrf.mxu0
    %v4902 = vadd.f32 %v4822, %v4901
    %v4903 = vpop.f32.mrf.mxu0
    %4904 = vdwg.mxu0
    %v4905 = vadd.f32 %v3826, %v4649
    %v4906 = vadd.f32 %v3828, %v4651
    %v4907 = vadd.f32 %v4069, %v4892
    %v4908 = vadd.f32 %v3832, %v4655
    %v4909 = vadd.f32 %v3834, %v4657
    %v4910 = vadd.f32 %v4074, %v4897
    %v4911 = vadd.f32 %v3838, %v4661
    %v4912 = vadd.f32 %v3840, %v4663
    %v4913 = vadd.f32 %v4079, %v4902
    %v4914 = vld [vmem:[%s8] sm:$0x7]
    %v4916 = vlaneseq
    %v4917 = vshrl.u32 %v4916, 7
    %v4918 = vsub.s32 0, %v4917
    %v4919 = vrot.slane %v4914, %v4918
    %v4920 = vlaneseq
    %v4921 = vshrl.u32 %v4920, 7
    %v4922 = vsub.s32 1, %v4921
    %v4923 = vrot.slane %v4914, %v4922
    %v4924 = vlaneseq
    %v4925 = vshrl.u32 %v4924, 7
    %v4926 = vsub.s32 2, %v4925
    %v4927 = vrot.slane %v4914, %v4926
    %v4931 = vadd.f32 %v4905, %v4919
    %v4932 = vadd.f32 %v4906, %v4923
    %v4933 = vadd.f32 %v4907, %v4927
    %v4934 = vadd.f32 %v4908, %v4919
    %v4935 = vadd.f32 %v4909, %v4923
    %v4936 = vadd.f32 %v4910, %v4927
    %v4937 = vadd.f32 %v4911, %v4919
    %v4938 = vadd.f32 %v4912, %v4923
    %v4939 = vadd.f32 %v4913, %v4927
    %vm4940 = vcmp.gt.f32.partialorder %v4931, 0.0
    %vm4941 = vcmp.gt.f32.partialorder %v4932, 0.0
    %vm4942 = vcmp.gt.f32.partialorder %v4933, 0.0
    %vm4943 = vcmp.gt.f32.partialorder %v4934, 0.0
    %vm4944 = vcmp.gt.f32.partialorder %v4935, 0.0
    %vm4945 = vcmp.gt.f32.partialorder %v4936, 0.0
    %vm4946 = vcmp.gt.f32.partialorder %v4937, 0.0
    %vm4947 = vcmp.gt.f32.partialorder %v4938, 0.0
    %vm4948 = vcmp.gt.f32.partialorder %v4939, 0.0
    %v4949 = vmin.f32 %v4931, 0.0
    %v4950 = vmin.f32 %v4932, 0.0
    %v4951 = vmin.f32 %v4933, 0.0
    %v4952 = vmin.f32 %v4934, 0.0
    %v4953 = vmin.f32 %v4935, 0.0
    %v4954 = vmin.f32 %v4936, 0.0
    %v4955 = vmin.f32 %v4937, 0.0
    %v4956 = vmin.f32 %v4938, 0.0
    %v4957 = vmin.f32 %v4939, 0.0
    %v4958 = vmul.f32 %v4949, 1.442695
    %v4959 = vpow.pop %v4958
    %v4960 = vmul.f32 %v4950, 1.442695
    %v4961 = vpow.pop %v4960
    %v4962 = vmul.f32 %v4951, 1.442695
    %v4963 = vpow.pop %v4962
    %v4964 = vmul.f32 %v4952, 1.442695
    %v4965 = vpow.pop %v4964
    %v4966 = vmul.f32 %v4953, 1.442695
    %v4967 = vpow.pop %v4966
    %v4968 = vmul.f32 %v4954, 1.442695
    %v4969 = vpow.pop %v4968
    %v4970 = vmul.f32 %v4955, 1.442695
    %v4971 = vpow.pop %v4970
    %v4972 = vmul.f32 %v4956, 1.442695
    %v4973 = vpow.pop %v4972
    %v4974 = vmul.f32 %v4957, 1.442695
    %v4975 = vpow.pop %v4974
    %v4976 = vsub.f32 %v4959, 1.0
    %v4977 = vsub.f32 %v4961, 1.0
    %v4978 = vsub.f32 %v4963, 1.0
    %v4979 = vsub.f32 %v4965, 1.0
    %v4980 = vsub.f32 %v4967, 1.0
    %v4981 = vsub.f32 %v4969, 1.0
    %v4982 = vsub.f32 %v4971, 1.0
    %v4983 = vsub.f32 %v4973, 1.0
    %v4984 = vsub.f32 %v4975, 1.0
    %v4985 = vsel %vm4940, %v4931, %v4976
    %v4986 = vsel %vm4941, %v4932, %v4977
    %v4987 = vsel %vm4942, %v4933, %v4978
    %v4988 = vsel %vm4943, %v4934, %v4979
    %v4989 = vsel %vm4944, %v4935, %v4980
    %v4990 = vsel %vm4945, %v4936, %v4981
    %v4991 = vsel %vm4946, %v4937, %v4982
    %v4992 = vsel %vm4947, %v4938, %v4983
    %v4993 = vsel %vm4948, %v4939, %v4984
    %v4994 = vld [vmem:[%s9] sm:$0xff]
    %v4995 = vld [vmem:[%s9 + $0x8] sm:$0xff]
    %v4996 = vld [vmem:[%s9 + $0x10] sm:$0xff]
    %v4997 = vld [vmem:[%s9 + $0x18] sm:$0xff]
    %v4998 = vld [vmem:[%s9 + $0x20] sm:$0xf]
    %vm4999 = vcmask 179200
    %v5001 = vsel %vm4999, %v4994, 0
    %v5004 = vsel %vm4999, %v4995, 0
    %v5007 = vsel %vm4999, %v4996, 0
    %v5010 = vsel %vm4999, %v4997, 0
    %v5013 = vsel %vm4999, %v4998, 0
    %v5016 = vsel %vm625, %v4991, 0
    %v5019 = vsel %vm625, %v4992, 0
    %v5022 = vsel %vm625, %v4993, 0
    %5024 = vmatprep.subr.mxu0 0.0
    %5025 = vmatpush1.msra.mxu0 0.0
    %5026 = vmatprep.subr.mxu0 0.0
    %5027 = vmatpush1.msra.mxu0 0.0
    %5028 = vmatprep.subr.mxu0 0.0
    %5029 = vmatpush1.msra.mxu0 0.0
    %5030 = vmatprep.subr.mxu0 0.0
    %5031 = vmatpush1.msra.mxu0 0.0
    %5032 = vmatprep.subr.mxu0 0.0
    %5033 = vmatpush1.msra.mxu0 0.0
    %5034 = vmatprep.subr.mxu0 0.0
    %5035 = vmatpush1.msra.mxu0 0.0
    %5036 = vmatprep.subr.mxu0 0.0
    %5037 = vmatpush1.msra.mxu0 0.0
    %5038 = vmatprep.subr.mxu0 0.0
    %5039 = vmatpush1.msra.mxu0 0.0
    %5040 = vmatprep.subr.mxu0 0.0
    %5041 = vmatpush1.msra.mxu0 0.0
    %5042 = vmatprep.subr.mxu0 0.0
    %5043 = vmatpush1.msra.mxu0 0.0
    %5044 = vmatprep.subr.mxu0 0.0
    %5045 = vmatpush1.msra.mxu0 0.0
    %5046 = vmatprep.subr.mxu0 0.0
    %5047 = vmatpush1.msra.mxu0 0.0
    %5048 = vmatprep.subr.mxu0 0.0
    %5049 = vmatpush1.msra.mxu0 0.0
    %5050 = vmatprep.subr.mxu0 %v5019
    %5051 = vmatpush1.msra.mxu0 %v5016
    %5052 = vmatprep.subr.mxu0 %v4989
    %5053 = vmatpush1.msra.mxu0 %v4988
    %5054 = vmatprep.subr.mxu0 %v4986
    %5055 = vmatpush1.msra.mxu0 %v4985
    %5056 = vmatprep.subr.mxu0 0.0
    %5057 = vmatpush2.msra.mxu0 0.0
    %5058 = vmatprep.subr.mxu0 0.0
    %5059 = vmatpush2.msra.mxu0 0.0
    %5060 = vmatprep.subr.mxu0 0.0
    %5061 = vmatpush2.msra.mxu0 0.0
    %5062 = vmatprep.subr.mxu0 0.0
    %5063 = vmatpush2.msra.mxu0 0.0
    %5064 = vmatprep.subr.mxu0 0.0
    %5065 = vmatpush2.msra.mxu0 0.0
    %5066 = vmatprep.subr.mxu0 0.0
    %5067 = vmatpush2.msra.mxu0 0.0
    %5068 = vmatprep.subr.mxu0 0.0
    %5069 = vmatpush2.msra.mxu0 0.0
    %5070 = vmatprep.subr.mxu0 0.0
    %5071 = vmatpush2.msra.mxu0 0.0
    %5072 = vmatprep.subr.mxu0 0.0
    %5073 = vmatpush2.msra.mxu0 0.0
    %5074 = vmatprep.subr.mxu0 0.0
    %5075 = vmatpush2.msra.mxu0 0.0
    %5076 = vmatprep.subr.mxu0 0.0
    %5077 = vmatpush2.msra.mxu0 0.0
    %5078 = vmatprep.subr.mxu0 0.0
    %5079 = vmatpush2.msra.mxu0 0.0
    %5080 = vmatprep.subr.mxu0 0.0
    %5081 = vmatpush2.msra.mxu0 0.0
    %5082 = vmatprep.subr.mxu0 0.0
    %5083 = vmatpush2.msra.mxu0 0.0
    %5084 = vmatprep.subr.mxu0 0.0
    %5085 = vmatpush2.msra.mxu0 0.0
    %5086 = vmatprep.subr.mxu0 0.0
    %5087 = vmatpush2.msra.mxu0 0.0
    %5088 = vmatprep.mubr.f32.mxu0 0.0
    %5089 = vmatmul.mubr.f32.gmra.mxu0 %v5001
    %v5090 = vpop.f32.mrf.mxu0
    %v5091 = vadd.f32 0.0, %v5090
    %v5092 = vpop.f32.mrf.mxu0
    %v5093 = vadd.f32 0.0, %v5092
    %5094 = vmatprep.mubr.f32.mxu0 0.0
    %5095 = vmatmul.mubr.f32.gmra.mxu0 %v5004
    %v5096 = vpop.f32.mrf.mxu0
    %v5097 = vadd.f32 0.0, %v5096
    %v5098 = vpop.f32.mrf.mxu0
    %v5099 = vadd.f32 0.0, %v5098
    %5100 = vmatprep.mubr.f32.mxu0 0.0
    %5101 = vmatmul.mubr.f32.gmra.mxu0 %v5007
    %v5102 = vpop.f32.mrf.mxu0
    %v5103 = vadd.f32 0.0, %v5102
    %v5104 = vpop.f32.mrf.mxu0
    %v5105 = vadd.f32 0.0, %v5104
    %5106 = vmatprep.mubr.f32.mxu0 0.0
    %5107 = vmatmul.mubr.f32.gmra.mxu0 %v5010
    %v5108 = vpop.f32.mrf.mxu0
    %v5109 = vadd.f32 0.0, %v5108
    %v5110 = vpop.f32.mrf.mxu0
    %v5111 = vadd.f32 0.0, %v5110
    %5112 = vmatprep.mubr.f32.mxu0 0.0
    %5113 = vmatmul.mubr.f32.gmra.mxu0 %v5013
    %v5114 = vpop.f32.mrf.mxu0
    %v5115 = vadd.f32 0.0, %v5114
    %v5116 = vpop.f32.mrf.mxu0
    %v5117 = vadd.f32 0.0, %v5116
    %5118 = vdwg.mxu0
    %5119 = vmatprep.subr.mxu0 0.0
    %5120 = vmatpush1.msra.mxu0 0.0
    %5121 = vmatprep.subr.mxu0 0.0
    %5122 = vmatpush1.msra.mxu0 0.0
    %5123 = vmatprep.subr.mxu0 0.0
    %5124 = vmatpush1.msra.mxu0 0.0
    %5125 = vmatprep.subr.mxu0 0.0
    %5126 = vmatpush1.msra.mxu0 0.0
    %5127 = vmatprep.subr.mxu0 0.0
    %5128 = vmatpush1.msra.mxu0 0.0
    %5129 = vmatprep.subr.mxu0 0.0
    %5130 = vmatpush1.msra.mxu0 0.0
    %5131 = vmatprep.subr.mxu0 0.0
    %5132 = vmatpush1.msra.mxu0 0.0
    %5133 = vmatprep.subr.mxu0 0.0
    %5134 = vmatpush1.msra.mxu0 0.0
    %5135 = vmatprep.subr.mxu0 0.0
    %5136 = vmatpush1.msra.mxu0 0.0
    %5137 = vmatprep.subr.mxu0 0.0
    %5138 = vmatpush1.msra.mxu0 0.0
    %5139 = vmatprep.subr.mxu0 0.0
    %5140 = vmatpush1.msra.mxu0 0.0
    %5141 = vmatprep.subr.mxu0 0.0
    %5142 = vmatpush1.msra.mxu0 0.0
    %5143 = vmatprep.subr.mxu0 0.0
    %5144 = vmatpush1.msra.mxu0 0.0
    %5145 = vmatprep.subr.mxu0 0.0
    %5146 = vmatpush1.msra.mxu0 %v5022
    %5147 = vmatprep.subr.mxu0 0.0
    %5148 = vmatpush1.msra.mxu0 %v4990
    %5149 = vmatprep.subr.mxu0 0.0
    %5150 = vmatpush1.msra.mxu0 %v4987
    %5151 = vmatprep.subr.mxu0 0.0
    %5152 = vmatpush2.msra.mxu0 0.0
    %5153 = vmatprep.subr.mxu0 0.0
    %5154 = vmatpush2.msra.mxu0 0.0
    %5155 = vmatprep.subr.mxu0 0.0
    %5156 = vmatpush2.msra.mxu0 0.0
    %5157 = vmatprep.subr.mxu0 0.0
    %5158 = vmatpush2.msra.mxu0 0.0
    %5159 = vmatprep.subr.mxu0 0.0
    %5160 = vmatpush2.msra.mxu0 0.0
    %5161 = vmatprep.subr.mxu0 0.0
    %5162 = vmatpush2.msra.mxu0 0.0
    %5163 = vmatprep.subr.mxu0 0.0
    %5164 = vmatpush2.msra.mxu0 0.0
    %5165 = vmatprep.subr.mxu0 0.0
    %5166 = vmatpush2.msra.mxu0 0.0
    %5167 = vmatprep.subr.mxu0 0.0
    %5168 = vmatpush2.msra.mxu0 0.0
    %5169 = vmatprep.subr.mxu0 0.0
    %5170 = vmatpush2.msra.mxu0 0.0
    %5171 = vmatprep.subr.mxu0 0.0
    %5172 = vmatpush2.msra.mxu0 0.0
    %5173 = vmatprep.subr.mxu0 0.0
    %5174 = vmatpush2.msra.mxu0 0.0
    %5175 = vmatprep.subr.mxu0 0.0
    %5176 = vmatpush2.msra.mxu0 0.0
    %5177 = vmatprep.subr.mxu0 0.0
    %5178 = vmatpush2.msra.mxu0 0.0
    %5179 = vmatprep.subr.mxu0 0.0
    %5180 = vmatpush2.msra.mxu0 0.0
    %5181 = vmatprep.subr.mxu0 0.0
    %5182 = vmatpush2.msra.mxu0 0.0
    %5183 = vmatprep.mubr.f32.mxu0 0.0
    %5184 = vmatmul.mubr.f32.gmra.mxu0 %v5001
    %v5185 = vpop.f32.mrf.mxu0
    %v5186 = vadd.f32 0.0, %v5185
    %v5187 = vpop.f32.mrf.mxu0
    %5188 = vmatprep.mubr.f32.mxu0 0.0
    %5189 = vmatmul.mubr.f32.gmra.mxu0 %v5004
    %v5190 = vpop.f32.mrf.mxu0
    %v5191 = vadd.f32 0.0, %v5190
    %v5192 = vpop.f32.mrf.mxu0
    %5193 = vmatprep.mubr.f32.mxu0 0.0
    %5194 = vmatmul.mubr.f32.gmra.mxu0 %v5007
    %v5195 = vpop.f32.mrf.mxu0
    %v5196 = vadd.f32 0.0, %v5195
    %v5197 = vpop.f32.mrf.mxu0
    %5198 = vmatprep.mubr.f32.mxu0 0.0
    %5199 = vmatmul.mubr.f32.gmra.mxu0 %v5010
    %v5200 = vpop.f32.mrf.mxu0
    %v5201 = vadd.f32 0.0, %v5200
    %v5202 = vpop.f32.mrf.mxu0
    %5203 = vmatprep.mubr.f32.mxu0 0.0
    %5204 = vmatmul.mubr.f32.gmra.mxu0 %v5013
    %v5205 = vpop.f32.mrf.mxu0
    %v5206 = vadd.f32 0.0, %v5205
    %v5207 = vpop.f32.mrf.mxu0
    %5208 = vdwg.mxu0
    %v5209 = vld [vmem:[%s10] sm:$0xff]
    %v5210 = vld [vmem:[%s10 + $0x8] sm:$0xff]
    %v5211 = vld [vmem:[%s10 + $0x10] sm:$0xff]
    %v5212 = vld [vmem:[%s10 + $0x18] sm:$0xff]
    %v5213 = vld [vmem:[%s10 + $0x20] sm:$0xff]
    %v5214 = vld [vmem:[%s10 + $0x28] sm:$0xff]
    %v5215 = vld [vmem:[%s10 + $0x30] sm:$0xff]
    %v5216 = vld [vmem:[%s10 + $0x38] sm:$0xff]
    %v5217 = vld [vmem:[%s10 + $0x40] sm:$0xff]
    %v5218 = vld [vmem:[%s10 + $0x48] sm:$0xff]
    %v5219 = vld [vmem:[%s10 + $0x50] sm:$0xff]
    %v5220 = vld [vmem:[%s10 + $0x58] sm:$0xff]
    %v5221 = vld [vmem:[%s10 + $0x60] sm:$0xff]
    %v5222 = vld [vmem:[%s10 + $0x68] sm:$0xff]
    %v5223 = vld [vmem:[%s10 + $0x70] sm:$0xff]
    %v5224 = vld [vmem:[%s10 + $0x78] sm:$0xff]
    %v5225 = vld [vmem:[%s10 + $0x80] sm:$0xff]
    %v5226 = vld [vmem:[%s10 + $0x88] sm:$0xff]
    %v5227 = vld [vmem:[%s10 + $0x90] sm:$0xff]
    %v5228 = vld [vmem:[%s10 + $0x98] sm:$0xff]
    %v5229 = vld [vmem:[%s10 + $0xa0] sm:$0xff]
    %v5230 = vld [vmem:[%s10 + $0xa8] sm:$0xff]
    %v5231 = vld [vmem:[%s10 + $0xb0] sm:$0xff]
    %v5232 = vld [vmem:[%s10 + $0xb8] sm:$0xff]
    %v5233 = vld [vmem:[%s10 + $0xc0] sm:$0xff]
    %v5234 = vld [vmem:[%s10 + $0xc8] sm:$0xff]
    %v5235 = vld [vmem:[%s10 + $0xd0] sm:$0xff]
    %v5236 = vld [vmem:[%s10 + $0xd8] sm:$0xff]
    %v5237 = vld [vmem:[%s10 + $0xe0] sm:$0xff]
    %v5238 = vld [vmem:[%s10 + $0xe8] sm:$0xff]
    %v5239 = vld [vmem:[%s10 + $0xf0] sm:$0xff]
    %v5240 = vld [vmem:[%s10 + $0xf8] sm:$0xff]
    %v5241 = vld [vmem:[%s10 + $0x100] sm:$0xff]
    %v5242 = vld [vmem:[%s10 + $0x108] sm:$0xff]
    %v5243 = vld [vmem:[%s10 + $0x110] sm:$0xff]
    %v5244 = vld [vmem:[%s10 + $0x118] sm:$0xff]
    %v5245 = vld [vmem:[%s10 + $0x120] sm:$0xff]
    %v5246 = vld [vmem:[%s10 + $0x128] sm:$0xff]
    %v5247 = vld [vmem:[%s10 + $0x130] sm:$0xff]
    %v5248 = vld [vmem:[%s10 + $0x138] sm:$0xff]
    %v5249 = vld [vmem:[%s10 + $0x140] sm:$0xff]
    %v5250 = vld [vmem:[%s10 + $0x148] sm:$0xff]
    %v5251 = vld [vmem:[%s10 + $0x150] sm:$0xff]
    %v5252 = vld [vmem:[%s10 + $0x158] sm:$0xff]
    %v5253 = vld [vmem:[%s10 + $0x160] sm:$0xff]
    %v5254 = vld [vmem:[%s10 + $0x168] sm:$0xff]
    %v5255 = vld [vmem:[%s10 + $0x170] sm:$0xff]
    %v5256 = vld [vmem:[%s10 + $0x178] sm:$0xff]
    %v5257 = vld [vmem:[%s10 + $0x180] sm:$0xff]
    %v5258 = vld [vmem:[%s10 + $0x188] sm:$0xff]
    %v5259 = vld [vmem:[%s10 + $0x190] sm:$0xff]
    %v5260 = vld [vmem:[%s10 + $0x198] sm:$0xff]
    %v5261 = vld [vmem:[%s10 + $0x1a0] sm:$0xff]
    %v5262 = vld [vmem:[%s10 + $0x1a8] sm:$0xff]
    %v5263 = vld [vmem:[%s10 + $0x1b0] sm:$0xff]
    %v5264 = vld [vmem:[%s10 + $0x1b8] sm:$0xff]
    %v5265 = vld [vmem:[%s10 + $0x1c0] sm:$0xff]
    %v5266 = vld [vmem:[%s10 + $0x1c8] sm:$0xff]
    %v5267 = vld [vmem:[%s10 + $0x1d0] sm:$0xff]
    %v5268 = vld [vmem:[%s10 + $0x1d8] sm:$0xff]
    %v5269 = vld [vmem:[%s10 + $0x1e0] sm:$0xff]
    %v5270 = vld [vmem:[%s10 + $0x1e8] sm:$0xff]
    %v5271 = vld [vmem:[%s10 + $0x1f0] sm:$0xff]
    %v5272 = vld [vmem:[%s10 + $0x1f8] sm:$0xff]
    %v5273 = vld [vmem:[%s10 + $0x200] sm:$0xff]
    %v5274 = vld [vmem:[%s10 + $0x208] sm:$0xff]
    %v5275 = vld [vmem:[%s10 + $0x210] sm:$0xff]
    %v5276 = vld [vmem:[%s10 + $0x218] sm:$0xff]
    %v5277 = vld [vmem:[%s10 + $0x220] sm:$0xff]
    %v5278 = vld [vmem:[%s10 + $0x228] sm:$0xff]
    %v5279 = vld [vmem:[%s10 + $0x230] sm:$0xff]
    %v5280 = vld [vmem:[%s10 + $0x238] sm:$0xff]
    %v5281 = vld [vmem:[%s10 + $0x240] sm:$0xff]
    %v5282 = vld [vmem:[%s10 + $0x248] sm:$0xff]
    %v5283 = vld [vmem:[%s10 + $0x250] sm:$0xff]
    %v5284 = vld [vmem:[%s10 + $0x258] sm:$0xff]
    %v5285 = vld [vmem:[%s10 + $0x260] sm:$0xff]
    %v5286 = vld [vmem:[%s10 + $0x268] sm:$0xff]
    %v5287 = vld [vmem:[%s10 + $0x270] sm:$0xff]
    %v5288 = vld [vmem:[%s10 + $0x278] sm:$0xff]
    %v5289 = vld [vmem:[%s10 + $0x280] sm:$0xff]
    %v5290 = vld [vmem:[%s10 + $0x288] sm:$0xff]
    %v5291 = vld [vmem:[%s10 + $0x290] sm:$0xff]
    %v5292 = vld [vmem:[%s10 + $0x298] sm:$0xff]
    %v5293 = vld [vmem:[%s10 + $0x2a0] sm:$0xff]
    %v5294 = vld [vmem:[%s10 + $0x2a8] sm:$0xff]
    %v5295 = vld [vmem:[%s10 + $0x2b0] sm:$0xff]
    %v5296 = vld [vmem:[%s10 + $0x2b8] sm:$0xff]
    %s5297 = scalar_lea.vmem %s10, 704
    %v5298 = vld [vmem:[%s5297] sm:$0xff]
    %v5299 = vld [vmem:[%s5297 + $0x8] sm:$0xff]
    %v5300 = vld [vmem:[%s5297 + $0x10] sm:$0xff]
    %v5301 = vld [vmem:[%s5297 + $0x18] sm:$0xff]
    %v5302 = vld [vmem:[%s5297 + $0x20] sm:$0xff]
    %v5303 = vld [vmem:[%s5297 + $0x28] sm:$0xff]
    %v5304 = vld [vmem:[%s5297 + $0x30] sm:$0xff]
    %v5305 = vld [vmem:[%s5297 + $0x38] sm:$0xff]
    %v5306 = vld [vmem:[%s5297 + $0x40] sm:$0xff]
    %v5307 = vld [vmem:[%s5297 + $0x48] sm:$0xff]
    %v5308 = vld [vmem:[%s5297 + $0x50] sm:$0xff]
    %v5309 = vld [vmem:[%s5297 + $0x58] sm:$0xff]
    %v5310 = vld [vmem:[%s5297 + $0x60] sm:$0xff]
    %v5311 = vld [vmem:[%s5297 + $0x68] sm:$0xff]
    %v5312 = vld [vmem:[%s5297 + $0x70] sm:$0xff]
    %v5313 = vld [vmem:[%s5297 + $0x78] sm:$0xff]
    %v5314 = vld [vmem:[%s5297 + $0x80] sm:$0xff]
    %v5315 = vld [vmem:[%s5297 + $0x88] sm:$0xff]
    %v5316 = vld [vmem:[%s5297 + $0x90] sm:$0xff]
    %v5317 = vld [vmem:[%s5297 + $0x98] sm:$0xff]
    %v5318 = vld [vmem:[%s5297 + $0xa0] sm:$0xff]
    %v5319 = vld [vmem:[%s5297 + $0xa8] sm:$0xff]
    %v5320 = vld [vmem:[%s5297 + $0xb0] sm:$0xff]
    %v5321 = vld [vmem:[%s5297 + $0xb8] sm:$0xff]
    %v5322 = vld [vmem:[%s5297 + $0xc0] sm:$0xff]
    %v5323 = vld [vmem:[%s5297 + $0xc8] sm:$0xff]
    %v5324 = vld [vmem:[%s5297 + $0xd0] sm:$0xff]
    %v5325 = vld [vmem:[%s5297 + $0xd8] sm:$0xff]
    %v5326 = vld [vmem:[%s5297 + $0xe0] sm:$0xff]
    %v5327 = vld [vmem:[%s5297 + $0xe8] sm:$0xff]
    %v5328 = vld [vmem:[%s5297 + $0xf0] sm:$0xff]
    %v5329 = vld [vmem:[%s5297 + $0xf8] sm:$0xff]
    %v5330 = vld [vmem:[%s5297 + $0x100] sm:$0xff]
    %v5331 = vld [vmem:[%s5297 + $0x108] sm:$0xff]
    %v5332 = vld [vmem:[%s5297 + $0x110] sm:$0xff]
    %v5333 = vld [vmem:[%s5297 + $0x118] sm:$0xff]
    %v5334 = vld [vmem:[%s5297 + $0x120] sm:$0xff]
    %v5335 = vld [vmem:[%s5297 + $0x128] sm:$0xff]
    %v5336 = vld [vmem:[%s5297 + $0x130] sm:$0xff]
    %v5337 = vld [vmem:[%s5297 + $0x138] sm:$0xff]
    %v5338 = vld [vmem:[%s5297 + $0x140] sm:$0xff]
    %v5339 = vld [vmem:[%s5297 + $0x148] sm:$0xff]
    %v5340 = vld [vmem:[%s5297 + $0x150] sm:$0xff]
    %v5341 = vld [vmem:[%s5297 + $0x158] sm:$0xff]
    %v5342 = vld [vmem:[%s5297 + $0x160] sm:$0xff]
    %v5343 = vld [vmem:[%s5297 + $0x168] sm:$0xff]
    %v5344 = vld [vmem:[%s5297 + $0x170] sm:$0xff]
    %v5345 = vld [vmem:[%s5297 + $0x178] sm:$0xff]
    %v5346 = vld [vmem:[%s5297 + $0x180] sm:$0xff]
    %v5347 = vld [vmem:[%s5297 + $0x188] sm:$0xff]
    %v5348 = vld [vmem:[%s5297 + $0x190] sm:$0xff]
    %v5349 = vld [vmem:[%s5297 + $0x198] sm:$0xff]
    %v5350 = vld [vmem:[%s5297 + $0x1a0] sm:$0xff]
    %v5351 = vld [vmem:[%s5297 + $0x1a8] sm:$0xff]
    %v5352 = vld [vmem:[%s5297 + $0x1b0] sm:$0xff]
    %v5353 = vld [vmem:[%s5297 + $0x1b8] sm:$0xff]
    %v5354 = vld [vmem:[%s5297 + $0x1c0] sm:$0xff]
    %v5355 = vld [vmem:[%s5297 + $0x1c8] sm:$0xff]
    %v5356 = vld [vmem:[%s5297 + $0x1d0] sm:$0xff]
    %v5357 = vld [vmem:[%s5297 + $0x1d8] sm:$0xff]
    %v5358 = vld [vmem:[%s5297 + $0x1e0] sm:$0xff]
    %v5359 = vld [vmem:[%s5297 + $0x1e8] sm:$0xff]
    %v5360 = vld [vmem:[%s5297 + $0x1f0] sm:$0xff]
    %v5361 = vld [vmem:[%s5297 + $0x1f8] sm:$0xff]
    %v5362 = vld [vmem:[%s5297 + $0x200] sm:$0xff]
    %v5363 = vld [vmem:[%s5297 + $0x208] sm:$0xff]
    %v5364 = vld [vmem:[%s5297 + $0x210] sm:$0xff]
    %v5365 = vld [vmem:[%s5297 + $0x218] sm:$0xff]
    %v5366 = vld [vmem:[%s5297 + $0x220] sm:$0xff]
    %v5367 = vld [vmem:[%s5297 + $0x228] sm:$0xff]
    %v5368 = vld [vmem:[%s5297 + $0x230] sm:$0xff]
    %v5369 = vld [vmem:[%s5297 + $0x238] sm:$0xff]
    %v5370 = vld [vmem:[%s5297 + $0x240] sm:$0xff]
    %v5371 = vld [vmem:[%s5297 + $0x248] sm:$0xff]
    %v5372 = vld [vmem:[%s5297 + $0x250] sm:$0xff]
    %v5373 = vld [vmem:[%s5297 + $0x258] sm:$0xff]
    %v5374 = vld [vmem:[%s5297 + $0x260] sm:$0xff]
    %v5375 = vld [vmem:[%s5297 + $0x268] sm:$0xff]
    %v5376 = vld [vmem:[%s5297 + $0x270] sm:$0xff]
    %v5377 = vld [vmem:[%s5297 + $0x278] sm:$0xff]
    %v5378 = vld [vmem:[%s5297 + $0x280] sm:$0xff]
    %v5379 = vld [vmem:[%s5297 + $0x288] sm:$0xff]
    %v5380 = vld [vmem:[%s5297 + $0x290] sm:$0xff]
    %v5381 = vld [vmem:[%s5297 + $0x298] sm:$0xff]
    %v5382 = vld [vmem:[%s5297 + $0x2a0] sm:$0xff]
    %v5383 = vld [vmem:[%s5297 + $0x2a8] sm:$0xff]
    %v5384 = vld [vmem:[%s5297 + $0x2b0] sm:$0xff]
    %v5385 = vld [vmem:[%s5297 + $0x2b8] sm:$0xff]
    %v5392 = vrot.slane %v5097, 4
    %v5393 = vrot.slane %v5103, 4
    %v5394 = vsel %vm192, %v5392, %v5393
    %v5395 = vrot.slane %v5099, 4
    %v5396 = vrot.slane %v5105, 4
    %v5397 = vsel %vm192, %v5395, %v5396
    %v5398 = vrot.slane %v5191, 4
    %v5399 = vrot.slane %v5196, 4
    %v5400 = vsel %vm192, %v5398, %v5399
    %vm5405 = vcmask 785408
    %v5406 = vsel %vm5405, %v5400, 0
    %v5408 = vsel %vm5405, %v5399, 0
    %5410 = vmatprep.subr.mxu0 %v5329
    %5411 = vmatpush1.msra.mxu0 %v5328
    %5412 = vmatprep.subr.mxu0 %v5327
    %5413 = vmatpush1.msra.mxu0 %v5326
    %5414 = vmatprep.subr.mxu0 %v5325
    %5415 = vmatpush1.msra.mxu0 %v5324
    %5416 = vmatprep.subr.mxu0 %v5323
    %5417 = vmatpush1.msra.mxu0 %v5322
    %5418 = vmatprep.subr.mxu0 %v5321
    %5419 = vmatpush1.msra.mxu0 %v5320
    %5420 = vmatprep.subr.mxu0 %v5319
    %5421 = vmatpush1.msra.mxu0 %v5318
    %5422 = vmatprep.subr.mxu0 %v5317
    %5423 = vmatpush1.msra.mxu0 %v5316
    %5424 = vmatprep.subr.mxu0 %v5315
    %5425 = vmatpush1.msra.mxu0 %v5314
    %5426 = vmatprep.subr.mxu0 %v5313
    %5427 = vmatpush1.msra.mxu0 %v5312
    %5428 = vmatprep.subr.mxu0 %v5311
    %5429 = vmatpush1.msra.mxu0 %v5310
    %5430 = vmatprep.subr.mxu0 %v5309
    %5431 = vmatpush1.msra.mxu0 %v5308
    %5432 = vmatprep.subr.mxu0 %v5307
    %5433 = vmatpush1.msra.mxu0 %v5306
    %5434 = vmatprep.subr.mxu0 %v5305
    %5435 = vmatpush1.msra.mxu0 %v5304
    %5436 = vmatprep.subr.mxu0 %v5303
    %5437 = vmatpush1.msra.mxu0 %v5302
    %5438 = vmatprep.subr.mxu0 %v5301
    %5439 = vmatpush1.msra.mxu0 %v5300
    %5440 = vmatprep.subr.mxu0 %v5299
    %5441 = vmatpush1.msra.mxu0 %v5298
    %5442 = vmatprep.subr.mxu0 %v5361
    %5443 = vmatpush2.msra.mxu0 %v5360
    %5444 = vmatprep.subr.mxu0 %v5359
    %5445 = vmatpush2.msra.mxu0 %v5358
    %5446 = vmatprep.subr.mxu0 %v5357
    %5447 = vmatpush2.msra.mxu0 %v5356
    %5448 = vmatprep.subr.mxu0 %v5355
    %5449 = vmatpush2.msra.mxu0 %v5354
    %5450 = vmatprep.subr.mxu0 %v5353
    %5451 = vmatpush2.msra.mxu0 %v5352
    %5452 = vmatprep.subr.mxu0 %v5351
    %5453 = vmatpush2.msra.mxu0 %v5350
    %5454 = vmatprep.subr.mxu0 %v5349
    %5455 = vmatpush2.msra.mxu0 %v5348
    %5456 = vmatprep.subr.mxu0 %v5347
    %5457 = vmatpush2.msra.mxu0 %v5346
    %5458 = vmatprep.subr.mxu0 %v5345
    %5459 = vmatpush2.msra.mxu0 %v5344
    %5460 = vmatprep.subr.mxu0 %v5343
    %5461 = vmatpush2.msra.mxu0 %v5342
    %5462 = vmatprep.subr.mxu0 %v5341
    %5463 = vmatpush2.msra.mxu0 %v5340
    %5464 = vmatprep.subr.mxu0 %v5339
    %5465 = vmatpush2.msra.mxu0 %v5338
    %5466 = vmatprep.subr.mxu0 %v5337
    %5467 = vmatpush2.msra.mxu0 %v5336
    %5468 = vmatprep.subr.mxu0 %v5335
    %5469 = vmatpush2.msra.mxu0 %v5334
    %5470 = vmatprep.subr.mxu0 %v5333
    %5471 = vmatpush2.msra.mxu0 %v5332
    %5472 = vmatprep.subr.mxu0 %v5331
    %5473 = vmatpush2.msra.mxu0 %v5330
    %5474 = vmatprep.mubr.f32.mxu0 %v5397
    %5475 = vmatmul.mubr.f32.gmra.mxu0 %v5394
    %v5476 = vpop.f32.mrf.mxu0
    %v5477 = vadd.f32 0.0, %v5476
    %v5478 = vpop.f32.mrf.mxu0
    %v5479 = vadd.f32 0.0, %v5478
    %5480 = vmatprep.mubr.f32.mxu0 %v5396
    %5481 = vmatmul.mubr.f32.gmra.mxu0 %v5393
    %v5482 = vpop.f32.mrf.mxu0
    %v5483 = vadd.f32 0.0, %v5482
    %v5484 = vpop.f32.mrf.mxu0
    %v5485 = vadd.f32 0.0, %v5484
    %5486 = vdwg.mxu0
    %5487 = vmatprep.subr.mxu0 0.0
    %5488 = vmatpush1.msra.mxu0 0.0
    %5489 = vmatprep.subr.mxu0 0.0
    %5490 = vmatpush1.msra.mxu0 0.0
    %5491 = vmatprep.subr.mxu0 0.0
    %5492 = vmatpush1.msra.mxu0 0.0
    %5493 = vmatprep.subr.mxu0 0.0
    %5494 = vmatpush1.msra.mxu0 0.0
    %5495 = vmatprep.subr.mxu0 %v5385
    %5496 = vmatpush1.msra.mxu0 %v5384
    %5497 = vmatprep.subr.mxu0 %v5383
    %5498 = vmatpush1.msra.mxu0 %v5382
    %5499 = vmatprep.subr.mxu0 %v5381
    %5500 = vmatpush1.msra.mxu0 %v5380
    %5501 = vmatprep.subr.mxu0 %v5379
    %5502 = vmatpush1.msra.mxu0 %v5378
    %5503 = vmatprep.subr.mxu0 %v5377
    %5504 = vmatpush1.msra.mxu0 %v5376
    %5505 = vmatprep.subr.mxu0 %v5375
    %5506 = vmatpush1.msra.mxu0 %v5374
    %5507 = vmatprep.subr.mxu0 %v5373
    %5508 = vmatpush1.msra.mxu0 %v5372
    %5509 = vmatprep.subr.mxu0 %v5371
    %5510 = vmatpush1.msra.mxu0 %v5370
    %5511 = vmatprep.subr.mxu0 %v5369
    %5512 = vmatpush1.msra.mxu0 %v5368
    %5513 = vmatprep.subr.mxu0 %v5367
    %5514 = vmatpush1.msra.mxu0 %v5366
    %5515 = vmatprep.subr.mxu0 %v5365
    %5516 = vmatpush1.msra.mxu0 %v5364
    %5517 = vmatprep.subr.mxu0 %v5363
    %5518 = vmatpush1.msra.mxu0 %v5362
    %5519 = vmatprep.subr.mxu0 0.0
    %5520 = vmatpush2.msra.mxu0 0.0
    %5521 = vmatprep.subr.mxu0 0.0
    %5522 = vmatpush2.msra.mxu0 0.0
    %5523 = vmatprep.subr.mxu0 0.0
    %5524 = vmatpush2.msra.mxu0 0.0
    %5525 = vmatprep.subr.mxu0 0.0
    %5526 = vmatpush2.msra.mxu0 0.0
    %5527 = vmatprep.subr.mxu0 0.0
    %5528 = vmatpush2.msra.mxu0 0.0
    %5529 = vmatprep.subr.mxu0 0.0
    %5530 = vmatpush2.msra.mxu0 0.0
    %5531 = vmatprep.subr.mxu0 0.0
    %5532 = vmatpush2.msra.mxu0 0.0
    %5533 = vmatprep.subr.mxu0 0.0
    %5534 = vmatpush2.msra.mxu0 0.0
    %5535 = vmatprep.subr.mxu0 0.0
    %5536 = vmatpush2.msra.mxu0 0.0
    %5537 = vmatprep.subr.mxu0 0.0
    %5538 = vmatpush2.msra.mxu0 0.0
    %5539 = vmatprep.subr.mxu0 0.0
    %5540 = vmatpush2.msra.mxu0 0.0
    %5541 = vmatprep.subr.mxu0 0.0
    %5542 = vmatpush2.msra.mxu0 0.0
    %5543 = vmatprep.subr.mxu0 0.0
    %5544 = vmatpush2.msra.mxu0 0.0
    %5545 = vmatprep.subr.mxu0 0.0
    %5546 = vmatpush2.msra.mxu0 0.0
    %5547 = vmatprep.subr.mxu0 0.0
    %5548 = vmatpush2.msra.mxu0 0.0
    %5549 = vmatprep.subr.mxu0 0.0
    %5550 = vmatpush2.msra.mxu0 0.0
    %5551 = vmatprep.mubr.f32.mxu0 0.0
    %5552 = vmatmul.mubr.f32.gmra.mxu0 %v5406
    %v5553 = vpop.f32.mrf.mxu0
    %v5554 = vadd.f32 %v5477, %v5553
    %v5555 = vpop.f32.mrf.mxu0
    %v5556 = vadd.f32 %v5479, %v5555
    %5557 = vmatprep.mubr.f32.mxu0 0.0
    %5558 = vmatmul.mubr.f32.gmra.mxu0 %v5408
    %v5559 = vpop.f32.mrf.mxu0
    %v5560 = vadd.f32 %v5483, %v5559
    %v5561 = vpop.f32.mrf.mxu0
    %v5562 = vadd.f32 %v5485, %v5561
    %5563 = vdwg.mxu0
    %v5565 = vsel %vm5405, %v5186, 0
    %v5567 = vsel %vm5405, %v5191, 0
    %5569 = vmatprep.subr.mxu0 %v5240
    %5570 = vmatpush1.msra.mxu0 %v5239
    %5571 = vmatprep.subr.mxu0 %v5238
    %5572 = vmatpush1.msra.mxu0 %v5237
    %5573 = vmatprep.subr.mxu0 %v5236
    %5574 = vmatpush1.msra.mxu0 %v5235
    %5575 = vmatprep.subr.mxu0 %v5234
    %5576 = vmatpush1.msra.mxu0 %v5233
    %5577 = vmatprep.subr.mxu0 %v5232
    %5578 = vmatpush1.msra.mxu0 %v5231
    %5579 = vmatprep.subr.mxu0 %v5230
    %5580 = vmatpush1.msra.mxu0 %v5229
    %5581 = vmatprep.subr.mxu0 %v5228
    %5582 = vmatpush1.msra.mxu0 %v5227
    %5583 = vmatprep.subr.mxu0 %v5226
    %5584 = vmatpush1.msra.mxu0 %v5225
    %5585 = vmatprep.subr.mxu0 %v5224
    %5586 = vmatpush1.msra.mxu0 %v5223
    %5587 = vmatprep.subr.mxu0 %v5222
    %5588 = vmatpush1.msra.mxu0 %v5221
    %5589 = vmatprep.subr.mxu0 %v5220
    %5590 = vmatpush1.msra.mxu0 %v5219
    %5591 = vmatprep.subr.mxu0 %v5218
    %5592 = vmatpush1.msra.mxu0 %v5217
    %5593 = vmatprep.subr.mxu0 %v5216
    %5594 = vmatpush1.msra.mxu0 %v5215
    %5595 = vmatprep.subr.mxu0 %v5214
    %5596 = vmatpush1.msra.mxu0 %v5213
    %5597 = vmatprep.subr.mxu0 %v5212
    %5598 = vmatpush1.msra.mxu0 %v5211
    %5599 = vmatprep.subr.mxu0 %v5210
    %5600 = vmatpush1.msra.mxu0 %v5209
    %5601 = vmatprep.subr.mxu0 %v5272
    %5602 = vmatpush2.msra.mxu0 %v5271
    %5603 = vmatprep.subr.mxu0 %v5270
    %5604 = vmatpush2.msra.mxu0 %v5269
    %5605 = vmatprep.subr.mxu0 %v5268
    %5606 = vmatpush2.msra.mxu0 %v5267
    %5607 = vmatprep.subr.mxu0 %v5266
    %5608 = vmatpush2.msra.mxu0 %v5265
    %5609 = vmatprep.subr.mxu0 %v5264
    %5610 = vmatpush2.msra.mxu0 %v5263
    %5611 = vmatprep.subr.mxu0 %v5262
    %5612 = vmatpush2.msra.mxu0 %v5261
    %5613 = vmatprep.subr.mxu0 %v5260
    %5614 = vmatpush2.msra.mxu0 %v5259
    %5615 = vmatprep.subr.mxu0 %v5258
    %5616 = vmatpush2.msra.mxu0 %v5257
    %5617 = vmatprep.subr.mxu0 %v5256
    %5618 = vmatpush2.msra.mxu0 %v5255
    %5619 = vmatprep.subr.mxu0 %v5254
    %5620 = vmatpush2.msra.mxu0 %v5253
    %5621 = vmatprep.subr.mxu0 %v5252
    %5622 = vmatpush2.msra.mxu0 %v5251
    %5623 = vmatprep.subr.mxu0 %v5250
    %5624 = vmatpush2.msra.mxu0 %v5249
    %5625 = vmatprep.subr.mxu0 %v5248
    %5626 = vmatpush2.msra.mxu0 %v5247
    %5627 = vmatprep.subr.mxu0 %v5246
    %5628 = vmatpush2.msra.mxu0 %v5245
    %5629 = vmatprep.subr.mxu0 %v5244
    %5630 = vmatpush2.msra.mxu0 %v5243
    %5631 = vmatprep.subr.mxu0 %v5242
    %5632 = vmatpush2.msra.mxu0 %v5241
    %5633 = vmatprep.mubr.f32.mxu0 %v5093
    %5634 = vmatmul.mubr.f32.gmra.mxu0 %v5091
    %v5635 = vpop.f32.mrf.mxu0
    %v5636 = vadd.f32 %v5554, %v5635
    %v5637 = vpop.f32.mrf.mxu0
    %v5638 = vadd.f32 %v5556, %v5637
    %5639 = vmatprep.mubr.f32.mxu0 %v5099
    %5640 = vmatmul.mubr.f32.gmra.mxu0 %v5097
    %v5641 = vpop.f32.mrf.mxu0
    %v5642 = vadd.f32 %v5560, %v5641
    %v5643 = vpop.f32.mrf.mxu0
    %v5644 = vadd.f32 %v5562, %v5643
    %5645 = vdwg.mxu0
    %5646 = vmatprep.subr.mxu0 0.0
    %5647 = vmatpush1.msra.mxu0 0.0
    %5648 = vmatprep.subr.mxu0 0.0
    %5649 = vmatpush1.msra.mxu0 0.0
    %5650 = vmatprep.subr.mxu0 0.0
    %5651 = vmatpush1.msra.mxu0 0.0
    %5652 = vmatprep.subr.mxu0 0.0
    %5653 = vmatpush1.msra.mxu0 0.0
    %5654 = vmatprep.subr.mxu0 %v5296
    %5655 = vmatpush1.msra.mxu0 %v5295
    %5656 = vmatprep.subr.mxu0 %v5294
    %5657 = vmatpush1.msra.mxu0 %v5293
    %5658 = vmatprep.subr.mxu0 %v5292
    %5659 = vmatpush1.msra.mxu0 %v5291
    %5660 = vmatprep.subr.mxu0 %v5290
    %5661 = vmatpush1.msra.mxu0 %v5289
    %5662 = vmatprep.subr.mxu0 %v5288
    %5663 = vmatpush1.msra.mxu0 %v5287
    %5664 = vmatprep.subr.mxu0 %v5286
    %5665 = vmatpush1.msra.mxu0 %v5285
    %5666 = vmatprep.subr.mxu0 %v5284
    %5667 = vmatpush1.msra.mxu0 %v5283
    %5668 = vmatprep.subr.mxu0 %v5282
    %5669 = vmatpush1.msra.mxu0 %v5281
    %5670 = vmatprep.subr.mxu0 %v5280
    %5671 = vmatpush1.msra.mxu0 %v5279
    %5672 = vmatprep.subr.mxu0 %v5278
    %5673 = vmatpush1.msra.mxu0 %v5277
    %5674 = vmatprep.subr.mxu0 %v5276
    %5675 = vmatpush1.msra.mxu0 %v5275
    %5676 = vmatprep.subr.mxu0 %v5274
    %5677 = vmatpush1.msra.mxu0 %v5273
    %5678 = vmatprep.subr.mxu0 0.0
    %5679 = vmatpush2.msra.mxu0 0.0
    %5680 = vmatprep.subr.mxu0 0.0
    %5681 = vmatpush2.msra.mxu0 0.0
    %5682 = vmatprep.subr.mxu0 0.0
    %5683 = vmatpush2.msra.mxu0 0.0
    %5684 = vmatprep.subr.mxu0 0.0
    %5685 = vmatpush2.msra.mxu0 0.0
    %5686 = vmatprep.subr.mxu0 0.0
    %5687 = vmatpush2.msra.mxu0 0.0
    %5688 = vmatprep.subr.mxu0 0.0
    %5689 = vmatpush2.msra.mxu0 0.0
    %5690 = vmatprep.subr.mxu0 0.0
    %5691 = vmatpush2.msra.mxu0 0.0
    %5692 = vmatprep.subr.mxu0 0.0
    %5693 = vmatpush2.msra.mxu0 0.0
    %5694 = vmatprep.subr.mxu0 0.0
    %5695 = vmatpush2.msra.mxu0 0.0
    %5696 = vmatprep.subr.mxu0 0.0
    %5697 = vmatpush2.msra.mxu0 0.0
    %5698 = vmatprep.subr.mxu0 0.0
    %5699 = vmatpush2.msra.mxu0 0.0
    %5700 = vmatprep.subr.mxu0 0.0
    %5701 = vmatpush2.msra.mxu0 0.0
    %5702 = vmatprep.subr.mxu0 0.0
    %5703 = vmatpush2.msra.mxu0 0.0
    %5704 = vmatprep.subr.mxu0 0.0
    %5705 = vmatpush2.msra.mxu0 0.0
    %5706 = vmatprep.subr.mxu0 0.0
    %5707 = vmatpush2.msra.mxu0 0.0
    %5708 = vmatprep.subr.mxu0 0.0
    %5709 = vmatpush2.msra.mxu0 0.0
    %5710 = vmatprep.mubr.f32.mxu0 0.0
    %5711 = vmatmul.mubr.f32.gmra.mxu0 %v5565
    %v5712 = vpop.f32.mrf.mxu0
    %v5713 = vadd.f32 %v5636, %v5712
    %v5714 = vpop.f32.mrf.mxu0
    %v5715 = vadd.f32 %v5638, %v5714
    %5716 = vmatprep.mubr.f32.mxu0 0.0
    %5717 = vmatmul.mubr.f32.gmra.mxu0 %v5567
    %v5718 = vpop.f32.mrf.mxu0
    %v5719 = vadd.f32 %v5642, %v5718
    %v5720 = vpop.f32.mrf.mxu0
    %v5721 = vadd.f32 %v5644, %v5720
    %5722 = vdwg.mxu0
    %s5723 = scalar_lea.vmem %s10, 1408
    %v5724 = vld [vmem:[%s5723] sm:$0xff]
    %v5725 = vld [vmem:[%s5723 + $0x8] sm:$0xff]
    %v5726 = vld [vmem:[%s5723 + $0x10] sm:$0xff]
    %v5727 = vld [vmem:[%s5723 + $0x18] sm:$0xff]
    %v5728 = vld [vmem:[%s5723 + $0x20] sm:$0xff]
    %v5729 = vld [vmem:[%s5723 + $0x28] sm:$0xff]
    %v5730 = vld [vmem:[%s5723 + $0x30] sm:$0xff]
    %v5731 = vld [vmem:[%s5723 + $0x38] sm:$0xff]
    %v5732 = vld [vmem:[%s5723 + $0x40] sm:$0xff]
    %v5733 = vld [vmem:[%s5723 + $0x48] sm:$0xff]
    %v5734 = vld [vmem:[%s5723 + $0x50] sm:$0xff]
    %v5735 = vld [vmem:[%s5723 + $0x58] sm:$0xff]
    %v5736 = vld [vmem:[%s5723 + $0x60] sm:$0xff]
    %v5737 = vld [vmem:[%s5723 + $0x68] sm:$0xff]
    %v5738 = vld [vmem:[%s5723 + $0x70] sm:$0xff]
    %v5739 = vld [vmem:[%s5723 + $0x78] sm:$0xff]
    %v5740 = vld [vmem:[%s5723 + $0x80] sm:$0xff]
    %v5741 = vld [vmem:[%s5723 + $0x88] sm:$0xff]
    %v5742 = vld [vmem:[%s5723 + $0x90] sm:$0xff]
    %v5743 = vld [vmem:[%s5723 + $0x98] sm:$0xff]
    %v5744 = vld [vmem:[%s5723 + $0xa0] sm:$0xff]
    %v5745 = vld [vmem:[%s5723 + $0xa8] sm:$0xff]
    %v5746 = vld [vmem:[%s5723 + $0xb0] sm:$0xff]
    %v5747 = vld [vmem:[%s5723 + $0xb8] sm:$0xff]
    %v5748 = vld [vmem:[%s5723 + $0xc0] sm:$0xff]
    %v5749 = vld [vmem:[%s5723 + $0xc8] sm:$0xff]
    %v5750 = vld [vmem:[%s5723 + $0xd0] sm:$0xff]
    %v5751 = vld [vmem:[%s5723 + $0xd8] sm:$0xff]
    %v5752 = vld [vmem:[%s5723 + $0xe0] sm:$0xff]
    %v5753 = vld [vmem:[%s5723 + $0xe8] sm:$0xff]
    %v5754 = vld [vmem:[%s5723 + $0xf0] sm:$0xff]
    %v5755 = vld [vmem:[%s5723 + $0xf8] sm:$0xff]
    %v5756 = vld [vmem:[%s5723 + $0x100] sm:$0xff]
    %v5757 = vld [vmem:[%s5723 + $0x108] sm:$0xff]
    %v5758 = vld [vmem:[%s5723 + $0x110] sm:$0xff]
    %v5759 = vld [vmem:[%s5723 + $0x118] sm:$0xff]
    %v5760 = vld [vmem:[%s5723 + $0x120] sm:$0xff]
    %v5761 = vld [vmem:[%s5723 + $0x128] sm:$0xff]
    %v5762 = vld [vmem:[%s5723 + $0x130] sm:$0xff]
    %v5763 = vld [vmem:[%s5723 + $0x138] sm:$0xff]
    %v5764 = vld [vmem:[%s5723 + $0x140] sm:$0xff]
    %v5765 = vld [vmem:[%s5723 + $0x148] sm:$0xff]
    %v5766 = vld [vmem:[%s5723 + $0x150] sm:$0xff]
    %v5767 = vld [vmem:[%s5723 + $0x158] sm:$0xff]
    %v5768 = vld [vmem:[%s5723 + $0x160] sm:$0xff]
    %v5769 = vld [vmem:[%s5723 + $0x168] sm:$0xff]
    %v5770 = vld [vmem:[%s5723 + $0x170] sm:$0xff]
    %v5771 = vld [vmem:[%s5723 + $0x178] sm:$0xff]
    %v5772 = vld [vmem:[%s5723 + $0x180] sm:$0xff]
    %v5773 = vld [vmem:[%s5723 + $0x188] sm:$0xff]
    %v5774 = vld [vmem:[%s5723 + $0x190] sm:$0xff]
    %v5775 = vld [vmem:[%s5723 + $0x198] sm:$0xff]
    %v5776 = vld [vmem:[%s5723 + $0x1a0] sm:$0xff]
    %v5777 = vld [vmem:[%s5723 + $0x1a8] sm:$0xff]
    %v5778 = vld [vmem:[%s5723 + $0x1b0] sm:$0xff]
    %v5779 = vld [vmem:[%s5723 + $0x1b8] sm:$0xff]
    %v5780 = vld [vmem:[%s5723 + $0x1c0] sm:$0xff]
    %v5781 = vld [vmem:[%s5723 + $0x1c8] sm:$0xff]
    %v5782 = vld [vmem:[%s5723 + $0x1d0] sm:$0xff]
    %v5783 = vld [vmem:[%s5723 + $0x1d8] sm:$0xff]
    %v5784 = vld [vmem:[%s5723 + $0x1e0] sm:$0xff]
    %v5785 = vld [vmem:[%s5723 + $0x1e8] sm:$0xff]
    %v5786 = vld [vmem:[%s5723 + $0x1f0] sm:$0xff]
    %v5787 = vld [vmem:[%s5723 + $0x1f8] sm:$0xff]
    %v5788 = vld [vmem:[%s5723 + $0x200] sm:$0xff]
    %v5789 = vld [vmem:[%s5723 + $0x208] sm:$0xff]
    %v5790 = vld [vmem:[%s5723 + $0x210] sm:$0xff]
    %v5791 = vld [vmem:[%s5723 + $0x218] sm:$0xff]
    %v5792 = vld [vmem:[%s5723 + $0x220] sm:$0xff]
    %v5793 = vld [vmem:[%s5723 + $0x228] sm:$0xff]
    %v5794 = vld [vmem:[%s5723 + $0x230] sm:$0xff]
    %v5795 = vld [vmem:[%s5723 + $0x238] sm:$0xff]
    %v5796 = vld [vmem:[%s5723 + $0x240] sm:$0xff]
    %v5797 = vld [vmem:[%s5723 + $0x248] sm:$0xff]
    %v5798 = vld [vmem:[%s5723 + $0x250] sm:$0xff]
    %v5799 = vld [vmem:[%s5723 + $0x258] sm:$0xff]
    %v5800 = vld [vmem:[%s5723 + $0x260] sm:$0xff]
    %v5801 = vld [vmem:[%s5723 + $0x268] sm:$0xff]
    %v5802 = vld [vmem:[%s5723 + $0x270] sm:$0xff]
    %v5803 = vld [vmem:[%s5723 + $0x278] sm:$0xff]
    %v5804 = vld [vmem:[%s5723 + $0x280] sm:$0xff]
    %v5805 = vld [vmem:[%s5723 + $0x288] sm:$0xff]
    %v5806 = vld [vmem:[%s5723 + $0x290] sm:$0xff]
    %v5807 = vld [vmem:[%s5723 + $0x298] sm:$0xff]
    %v5808 = vld [vmem:[%s5723 + $0x2a0] sm:$0xff]
    %v5809 = vld [vmem:[%s5723 + $0x2a8] sm:$0xff]
    %v5810 = vld [vmem:[%s5723 + $0x2b0] sm:$0xff]
    %v5811 = vld [vmem:[%s5723 + $0x2b8] sm:$0xff]
    %v5813 = vsel %vm5405, %v5201, 0
    %v5816 = vsel %vm5405, %v5206, 0
    %5818 = vmatprep.subr.mxu0 %v5755
    %5819 = vmatpush1.msra.mxu0 %v5754
    %5820 = vmatprep.subr.mxu0 %v5753
    %5821 = vmatpush1.msra.mxu0 %v5752
    %5822 = vmatprep.subr.mxu0 %v5751
    %5823 = vmatpush1.msra.mxu0 %v5750
    %5824 = vmatprep.subr.mxu0 %v5749
    %5825 = vmatpush1.msra.mxu0 %v5748
    %5826 = vmatprep.subr.mxu0 %v5747
    %5827 = vmatpush1.msra.mxu0 %v5746
    %5828 = vmatprep.subr.mxu0 %v5745
    %5829 = vmatpush1.msra.mxu0 %v5744
    %5830 = vmatprep.subr.mxu0 %v5743
    %5831 = vmatpush1.msra.mxu0 %v5742
    %5832 = vmatprep.subr.mxu0 %v5741
    %5833 = vmatpush1.msra.mxu0 %v5740
    %5834 = vmatprep.subr.mxu0 %v5739
    %5835 = vmatpush1.msra.mxu0 %v5738
    %5836 = vmatprep.subr.mxu0 %v5737
    %5837 = vmatpush1.msra.mxu0 %v5736
    %5838 = vmatprep.subr.mxu0 %v5735
    %5839 = vmatpush1.msra.mxu0 %v5734
    %5840 = vmatprep.subr.mxu0 %v5733
    %5841 = vmatpush1.msra.mxu0 %v5732
    %5842 = vmatprep.subr.mxu0 %v5731
    %5843 = vmatpush1.msra.mxu0 %v5730
    %5844 = vmatprep.subr.mxu0 %v5729
    %5845 = vmatpush1.msra.mxu0 %v5728
    %5846 = vmatprep.subr.mxu0 %v5727
    %5847 = vmatpush1.msra.mxu0 %v5726
    %5848 = vmatprep.subr.mxu0 %v5725
    %5849 = vmatpush1.msra.mxu0 %v5724
    %5850 = vmatprep.subr.mxu0 %v5787
    %5851 = vmatpush2.msra.mxu0 %v5786
    %5852 = vmatprep.subr.mxu0 %v5785
    %5853 = vmatpush2.msra.mxu0 %v5784
    %5854 = vmatprep.subr.mxu0 %v5783
    %5855 = vmatpush2.msra.mxu0 %v5782
    %5856 = vmatprep.subr.mxu0 %v5781
    %5857 = vmatpush2.msra.mxu0 %v5780
    %5858 = vmatprep.subr.mxu0 %v5779
    %5859 = vmatpush2.msra.mxu0 %v5778
    %5860 = vmatprep.subr.mxu0 %v5777
    %5861 = vmatpush2.msra.mxu0 %v5776
    %5862 = vmatprep.subr.mxu0 %v5775
    %5863 = vmatpush2.msra.mxu0 %v5774
    %5864 = vmatprep.subr.mxu0 %v5773
    %5865 = vmatpush2.msra.mxu0 %v5772
    %5866 = vmatprep.subr.mxu0 %v5771
    %5867 = vmatpush2.msra.mxu0 %v5770
    %5868 = vmatprep.subr.mxu0 %v5769
    %5869 = vmatpush2.msra.mxu0 %v5768
    %5870 = vmatprep.subr.mxu0 %v5767
    %5871 = vmatpush2.msra.mxu0 %v5766
    %5872 = vmatprep.subr.mxu0 %v5765
    %5873 = vmatpush2.msra.mxu0 %v5764
    %5874 = vmatprep.subr.mxu0 %v5763
    %5875 = vmatpush2.msra.mxu0 %v5762
    %5876 = vmatprep.subr.mxu0 %v5761
    %5877 = vmatpush2.msra.mxu0 %v5760
    %5878 = vmatprep.subr.mxu0 %v5759
    %5879 = vmatpush2.msra.mxu0 %v5758
    %5880 = vmatprep.subr.mxu0 %v5757
    %5881 = vmatpush2.msra.mxu0 %v5756
    %5882 = vmatprep.mubr.f32.mxu0 %v5111
    %5883 = vmatmul.mubr.f32.gmra.mxu0 %v5109
    %v5884 = vpop.f32.mrf.mxu0
    %v5885 = vadd.f32 0.0, %v5884
    %v5886 = vpop.f32.mrf.mxu0
    %v5887 = vadd.f32 0.0, %v5886
    %5888 = vmatprep.mubr.f32.mxu0 %v5117
    %5889 = vmatmul.mubr.f32.gmra.mxu0 %v5115
    %v5890 = vpop.f32.mrf.mxu0
    %v5891 = vadd.f32 0.0, %v5890
    %v5892 = vpop.f32.mrf.mxu0
    %v5893 = vadd.f32 0.0, %v5892
    %5894 = vdwg.mxu0
    %5895 = vmatprep.subr.mxu0 0.0
    %5896 = vmatpush1.msra.mxu0 0.0
    %5897 = vmatprep.subr.mxu0 0.0
    %5898 = vmatpush1.msra.mxu0 0.0
    %5899 = vmatprep.subr.mxu0 0.0
    %5900 = vmatpush1.msra.mxu0 0.0
    %5901 = vmatprep.subr.mxu0 0.0
    %5902 = vmatpush1.msra.mxu0 0.0
    %5903 = vmatprep.subr.mxu0 %v5811
    %5904 = vmatpush1.msra.mxu0 %v5810
    %5905 = vmatprep.subr.mxu0 %v5809
    %5906 = vmatpush1.msra.mxu0 %v5808
    %5907 = vmatprep.subr.mxu0 %v5807
    %5908 = vmatpush1.msra.mxu0 %v5806
    %5909 = vmatprep.subr.mxu0 %v5805
    %5910 = vmatpush1.msra.mxu0 %v5804
    %5911 = vmatprep.subr.mxu0 %v5803
    %5912 = vmatpush1.msra.mxu0 %v5802
    %5913 = vmatprep.subr.mxu0 %v5801
    %5914 = vmatpush1.msra.mxu0 %v5800
    %5915 = vmatprep.subr.mxu0 %v5799
    %5916 = vmatpush1.msra.mxu0 %v5798
    %5917 = vmatprep.subr.mxu0 %v5797
    %5918 = vmatpush1.msra.mxu0 %v5796
    %5919 = vmatprep.subr.mxu0 %v5795
    %5920 = vmatpush1.msra.mxu0 %v5794
    %5921 = vmatprep.subr.mxu0 %v5793
    %5922 = vmatpush1.msra.mxu0 %v5792
    %5923 = vmatprep.subr.mxu0 %v5791
    %5924 = vmatpush1.msra.mxu0 %v5790
    %5925 = vmatprep.subr.mxu0 %v5789
    %5926 = vmatpush1.msra.mxu0 %v5788
    %5927 = vmatprep.subr.mxu0 0.0
    %5928 = vmatpush2.msra.mxu0 0.0
    %5929 = vmatprep.subr.mxu0 0.0
    %5930 = vmatpush2.msra.mxu0 0.0
    %5931 = vmatprep.subr.mxu0 0.0
    %5932 = vmatpush2.msra.mxu0 0.0
    %5933 = vmatprep.subr.mxu0 0.0
    %5934 = vmatpush2.msra.mxu0 0.0
    %5935 = vmatprep.subr.mxu0 0.0
    %5936 = vmatpush2.msra.mxu0 0.0
    %5937 = vmatprep.subr.mxu0 0.0
    %5938 = vmatpush2.msra.mxu0 0.0
    %5939 = vmatprep.subr.mxu0 0.0
    %5940 = vmatpush2.msra.mxu0 0.0
    %5941 = vmatprep.subr.mxu0 0.0
    %5942 = vmatpush2.msra.mxu0 0.0
    %5943 = vmatprep.subr.mxu0 0.0
    %5944 = vmatpush2.msra.mxu0 0.0
    %5945 = vmatprep.subr.mxu0 0.0
    %5946 = vmatpush2.msra.mxu0 0.0
    %5947 = vmatprep.subr.mxu0 0.0
    %5948 = vmatpush2.msra.mxu0 0.0
    %5949 = vmatprep.subr.mxu0 0.0
    %5950 = vmatpush2.msra.mxu0 0.0
    %5951 = vmatprep.subr.mxu0 0.0
    %5952 = vmatpush2.msra.mxu0 0.0
    %5953 = vmatprep.subr.mxu0 0.0
    %5954 = vmatpush2.msra.mxu0 0.0
    %5955 = vmatprep.subr.mxu0 0.0
    %5956 = vmatpush2.msra.mxu0 0.0
    %5957 = vmatprep.subr.mxu0 0.0
    %5958 = vmatpush2.msra.mxu0 0.0
    %5959 = vmatprep.mubr.f32.mxu0 0.0
    %5960 = vmatmul.mubr.f32.gmra.mxu0 %v5813
    %v5961 = vpop.f32.mrf.mxu0
    %v5962 = vadd.f32 %v5885, %v5961
    %v5963 = vpop.f32.mrf.mxu0
    %v5964 = vadd.f32 %v5887, %v5963
    %5965 = vmatprep.mubr.f32.mxu0 0.0
    %5966 = vmatmul.mubr.f32.gmra.mxu0 %v5816
    %v5967 = vpop.f32.mrf.mxu0
    %v5968 = vadd.f32 %v5891, %v5967
    %v5969 = vpop.f32.mrf.mxu0
    %v5970 = vadd.f32 %v5893, %v5969
    %5971 = vdwg.mxu0
    %v5972 = vadd.f32 %v5713, %v5962
    %v5973 = vadd.f32 %v5715, %v5964
    %v5974 = vadd.f32 %v5719, %v5968
    %v5975 = vadd.f32 %v5721, %v5970
    %v5976 = vld [vmem:[%s11] sm:$0x3]
    %v5978 = vlaneseq
    %v5979 = vshrl.u32 %v5978, 7
    %v5980 = vsub.s32 0, %v5979
    %v5981 = vrot.slane %v5976, %v5980
    %v5982 = vlaneseq
    %v5983 = vshrl.u32 %v5982, 7
    %v5984 = vsub.s32 1, %v5983
    %v5985 = vrot.slane %v5976, %v5984
    %v5988 = vadd.f32 %v5972, %v5981
    %v5989 = vadd.f32 %v5973, %v5985
    %v5990 = vadd.f32 %v5974, %v5981
    %v5991 = vadd.f32 %v5975, %v5985
    %vm5992 = vcmp.gt.f32.partialorder %v5988, 0.0
    %vm5993 = vcmp.gt.f32.partialorder %v5989, 0.0
    %vm5994 = vcmp.gt.f32.partialorder %v5990, 0.0
    %vm5995 = vcmp.gt.f32.partialorder %v5991, 0.0
    %v5996 = vmin.f32 %v5988, 0.0
    %v5997 = vmin.f32 %v5989, 0.0
    %v5998 = vmin.f32 %v5990, 0.0
    %v5999 = vmin.f32 %v5991, 0.0
    %v6000 = vmul.f32 %v5996, 1.442695
    %v6001 = vpow.pop %v6000
    %v6002 = vmul.f32 %v5997, 1.442695
    %v6003 = vpow.pop %v6002
    %v6004 = vmul.f32 %v5998, 1.442695
    %v6005 = vpow.pop %v6004
    %v6006 = vmul.f32 %v5999, 1.442695
    %v6007 = vpow.pop %v6006
    %v6008 = vsub.f32 %v6001, 1.0
    %v6009 = vsub.f32 %v6003, 1.0
    %v6010 = vsub.f32 %v6005, 1.0
    %v6011 = vsub.f32 %v6007, 1.0
    %v6012 = vsel %vm5992, %v5988, %v6008
    %v6013 = vsel %vm5993, %v5989, %v6009
    %v6014 = vsel %vm5994, %v5990, %v6010
    %v6015 = vsel %vm5995, %v5991, %v6011
    %v6016 = vld [vmem:[%s12] sm:$0xff]
    %v6017 = vld [vmem:[%s12 + $0x8] sm:$0xff]
    %v6018 = vld [vmem:[%s12 + $0x10] sm:$0x3]
    %vm6019 = vcmask 97280
    %v6021 = vsel %vm6019, %v6016, 0
    %v6024 = vsel %vm6019, %v6017, 0
    %v6027 = vsel %vm6019, %v6018, 0
    %v6030 = vsel %vm192, %v6014, 0
    %v6033 = vsel %vm192, %v6015, 0
    %6035 = vmatprep.subr.mxu0 0.0
    %6036 = vmatpush1.msra.mxu0 0.0
    %6037 = vmatprep.subr.mxu0 0.0
    %6038 = vmatpush1.msra.mxu0 0.0
    %6039 = vmatprep.subr.mxu0 0.0
    %6040 = vmatpush1.msra.mxu0 0.0
    %6041 = vmatprep.subr.mxu0 0.0
    %6042 = vmatpush1.msra.mxu0 0.0
    %6043 = vmatprep.subr.mxu0 0.0
    %6044 = vmatpush1.msra.mxu0 0.0
    %6045 = vmatprep.subr.mxu0 0.0
    %6046 = vmatpush1.msra.mxu0 0.0
    %6047 = vmatprep.subr.mxu0 0.0
    %6048 = vmatpush1.msra.mxu0 0.0
    %6049 = vmatprep.subr.mxu0 0.0
    %6050 = vmatpush1.msra.mxu0 0.0
    %6051 = vmatprep.subr.mxu0 0.0
    %6052 = vmatpush1.msra.mxu0 0.0
    %6053 = vmatprep.subr.mxu0 0.0
    %6054 = vmatpush1.msra.mxu0 0.0
    %6055 = vmatprep.subr.mxu0 0.0
    %6056 = vmatpush1.msra.mxu0 0.0
    %6057 = vmatprep.subr.mxu0 0.0
    %6058 = vmatpush1.msra.mxu0 0.0
    %6059 = vmatprep.subr.mxu0 0.0
    %6060 = vmatpush1.msra.mxu0 0.0
    %6061 = vmatprep.subr.mxu0 0.0
    %6062 = vmatpush1.msra.mxu0 0.0
    %6063 = vmatprep.subr.mxu0 %v6033
    %6064 = vmatpush1.msra.mxu0 %v6030
    %6065 = vmatprep.subr.mxu0 %v6013
    %6066 = vmatpush1.msra.mxu0 %v6012
    %6067 = vmatprep.subr.mxu0 0.0
    %6068 = vmatpush2.msra.mxu0 0.0
    %6069 = vmatprep.subr.mxu0 0.0
    %6070 = vmatpush2.msra.mxu0 0.0
    %6071 = vmatprep.subr.mxu0 0.0
    %6072 = vmatpush2.msra.mxu0 0.0
    %6073 = vmatprep.subr.mxu0 0.0
    %6074 = vmatpush2.msra.mxu0 0.0
    %6075 = vmatprep.subr.mxu0 0.0
    %6076 = vmatpush2.msra.mxu0 0.0
    %6077 = vmatprep.subr.mxu0 0.0
    %6078 = vmatpush2.msra.mxu0 0.0
    %6079 = vmatprep.subr.mxu0 0.0
    %6080 = vmatpush2.msra.mxu0 0.0
    %6081 = vmatprep.subr.mxu0 0.0
    %6082 = vmatpush2.msra.mxu0 0.0
    %6083 = vmatprep.subr.mxu0 0.0
    %6084 = vmatpush2.msra.mxu0 0.0
    %6085 = vmatprep.subr.mxu0 0.0
    %6086 = vmatpush2.msra.mxu0 0.0
    %6087 = vmatprep.subr.mxu0 0.0
    %6088 = vmatpush2.msra.mxu0 0.0
    %6089 = vmatprep.subr.mxu0 0.0
    %6090 = vmatpush2.msra.mxu0 0.0
    %6091 = vmatprep.subr.mxu0 0.0
    %6092 = vmatpush2.msra.mxu0 0.0
    %6093 = vmatprep.subr.mxu0 0.0
    %6094 = vmatpush2.msra.mxu0 0.0
    %6095 = vmatprep.subr.mxu0 0.0
    %6096 = vmatpush2.msra.mxu0 0.0
    %6097 = vmatprep.subr.mxu0 0.0
    %6098 = vmatpush2.msra.mxu0 0.0
    %6099 = vmatprep.mubr.f32.mxu0 0.0
    %6100 = vmatmul.mubr.f32.gmra.mxu0 %v6021
    %v6101 = vpop.f32.mrf.mxu0
    %v6102 = vadd.f32 0.0, %v6101
    %v6103 = vpop.f32.mrf.mxu0
    %v6104 = vadd.f32 0.0, %v6103
    %6105 = vmatprep.mubr.f32.mxu0 0.0
    %6106 = vmatmul.mubr.f32.gmra.mxu0 %v6024
    %v6107 = vpop.f32.mrf.mxu0
    %v6108 = vadd.f32 0.0, %v6107
    %v6109 = vpop.f32.mrf.mxu0
    %v6110 = vadd.f32 0.0, %v6109
    %6111 = vmatprep.mubr.f32.mxu0 0.0
    %6112 = vmatmul.mubr.f32.gmra.mxu0 %v6027
    %v6113 = vpop.f32.mrf.mxu0
    %v6114 = vadd.f32 0.0, %v6113
    %v6115 = vpop.f32.mrf.mxu0
    %v6116 = vadd.f32 0.0, %v6115
    %6117 = vdwg.mxu0
    %v6118 = vld [vmem:[#allocation7] sm:$0xff]
    %v6119 = vld [vmem:[#allocation7 + $0x8] sm:$0xff]
    %v6120 = vld [vmem:[#allocation7 + $0x10] sm:$0xff]
    %v6121 = vld [vmem:[#allocation7 + $0x18] sm:$0xff]
    %v6122 = vld [vmem:[#allocation7 + $0x20] sm:$0xff]
    %v6123 = vld [vmem:[#allocation7 + $0x28] sm:$0xff]
    %v6124 = vld [vmem:[#allocation7 + $0x30] sm:$0xff]
    %v6125 = vld [vmem:[#allocation7 + $0x38] sm:$0xff]
    %v6126 = vld [vmem:[#allocation7 + $0x40] sm:$0xff]
    %v6127 = vld [vmem:[#allocation7 + $0x48] sm:$0xff]
    %v6128 = vld [vmem:[#allocation7 + $0x50] sm:$0xff]
    %v6129 = vld [vmem:[#allocation7 + $0x58] sm:$0xff]
    %v6130 = vld [vmem:[#allocation7 + $0x60] sm:$0xff]
    %v6131 = vld [vmem:[#allocation7 + $0x68] sm:$0xff]
    %v6132 = vld [vmem:[#allocation7 + $0x70] sm:$0xff]
    %v6133 = vld [vmem:[#allocation7 + $0x78] sm:$0xff]
    %v6134 = vld [vmem:[#allocation7 + $0x80] sm:$0xff]
    %v6135 = vld [vmem:[#allocation7 + $0x88] sm:$0xff]
    %v6136 = vld [vmem:[#allocation7 + $0x90] sm:$0xff]
    %v6137 = vld [vmem:[#allocation7 + $0x98] sm:$0xff]
    %v6138 = vld [vmem:[#allocation7 + $0xa0] sm:$0xff]
    %v6139 = vld [vmem:[#allocation7 + $0xa8] sm:$0xff]
    %v6140 = vld [vmem:[#allocation7 + $0xb0] sm:$0xff]
    %v6141 = vld [vmem:[#allocation7 + $0xb8] sm:$0xff]
    %s6142 = scalar_lea.vmem [#allocation7], 192
    %v6143 = vld [vmem:[%s6142] sm:$0xff]
    %v6144 = vld [vmem:[%s6142 + $0x8] sm:$0xff]
    %v6145 = vld [vmem:[%s6142 + $0x10] sm:$0xff]
    %v6146 = vld [vmem:[%s6142 + $0x18] sm:$0xff]
    %v6147 = vld [vmem:[%s6142 + $0x20] sm:$0xff]
    %v6148 = vld [vmem:[%s6142 + $0x28] sm:$0xff]
    %v6149 = vld [vmem:[%s6142 + $0x30] sm:$0xff]
    %v6150 = vld [vmem:[%s6142 + $0x38] sm:$0xff]
    %v6151 = vld [vmem:[%s6142 + $0x40] sm:$0xff]
    %v6152 = vld [vmem:[%s6142 + $0x48] sm:$0xff]
    %v6153 = vld [vmem:[%s6142 + $0x50] sm:$0xff]
    %v6154 = vld [vmem:[%s6142 + $0x58] sm:$0xff]
    %v6155 = vld [vmem:[%s6142 + $0x60] sm:$0xff]
    %v6156 = vld [vmem:[%s6142 + $0x68] sm:$0xff]
    %v6157 = vld [vmem:[%s6142 + $0x70] sm:$0xff]
    %v6158 = vld [vmem:[%s6142 + $0x78] sm:$0xff]
    %v6159 = vld [vmem:[%s6142 + $0x80] sm:$0xff]
    %v6160 = vld [vmem:[%s6142 + $0x88] sm:$0xff]
    %v6161 = vld [vmem:[%s6142 + $0x90] sm:$0xff]
    %v6162 = vld [vmem:[%s6142 + $0x98] sm:$0xff]
    %v6163 = vld [vmem:[%s6142 + $0xa0] sm:$0xff]
    %v6164 = vld [vmem:[%s6142 + $0xa8] sm:$0xff]
    %v6165 = vld [vmem:[%s6142 + $0xb0] sm:$0xff]
    %v6166 = vld [vmem:[%s6142 + $0xb8] sm:$0xff]
    %v6171 = vrot.slane %v6102, 6
    %v6172 = vrot.slane %v6108, 6
    %v6173 = vsel %vm2127, %v6171, %v6172
    %v6174 = vrot.slane %v6104, 6
    %v6175 = vrot.slane %v6110, 6
    %v6176 = vsel %vm2127, %v6174, %v6175
    %vm6178 = vcmask 523264
    %v6179 = vsel %vm6178, %v6176, 0
    %6181 = vmatprep.subr.mxu0 0.0
    %6182 = vmatpush1.msra.mxu0 %v6158
    %6183 = vmatprep.subr.mxu0 0.0
    %6184 = vmatpush1.msra.mxu0 %v6157
    %6185 = vmatprep.subr.mxu0 0.0
    %6186 = vmatpush1.msra.mxu0 %v6156
    %6187 = vmatprep.subr.mxu0 0.0
    %6188 = vmatpush1.msra.mxu0 %v6155
    %6189 = vmatprep.subr.mxu0 0.0
    %6190 = vmatpush1.msra.mxu0 %v6154
    %6191 = vmatprep.subr.mxu0 0.0
    %6192 = vmatpush1.msra.mxu0 %v6153
    %6193 = vmatprep.subr.mxu0 0.0
    %6194 = vmatpush1.msra.mxu0 %v6152
    %6195 = vmatprep.subr.mxu0 0.0
    %6196 = vmatpush1.msra.mxu0 %v6151
    %6197 = vmatprep.subr.mxu0 0.0
    %6198 = vmatpush1.msra.mxu0 %v6150
    %6199 = vmatprep.subr.mxu0 0.0
    %6200 = vmatpush1.msra.mxu0 %v6149
    %6201 = vmatprep.subr.mxu0 0.0
    %6202 = vmatpush1.msra.mxu0 %v6148
    %6203 = vmatprep.subr.mxu0 0.0
    %6204 = vmatpush1.msra.mxu0 %v6147
    %6205 = vmatprep.subr.mxu0 0.0
    %6206 = vmatpush1.msra.mxu0 %v6146
    %6207 = vmatprep.subr.mxu0 0.0
    %6208 = vmatpush1.msra.mxu0 %v6145
    %6209 = vmatprep.subr.mxu0 0.0
    %6210 = vmatpush1.msra.mxu0 %v6144
    %6211 = vmatprep.subr.mxu0 0.0
    %6212 = vmatpush1.msra.mxu0 %v6143
    %6213 = vmatprep.subr.mxu0 0.0
    %6214 = vmatpush2.msra.mxu0 0.0
    %6215 = vmatprep.subr.mxu0 0.0
    %6216 = vmatpush2.msra.mxu0 0.0
    %6217 = vmatprep.subr.mxu0 0.0
    %6218 = vmatpush2.msra.mxu0 0.0
    %6219 = vmatprep.subr.mxu0 0.0
    %6220 = vmatpush2.msra.mxu0 0.0
    %6221 = vmatprep.subr.mxu0 0.0
    %6222 = vmatpush2.msra.mxu0 0.0
    %6223 = vmatprep.subr.mxu0 0.0
    %6224 = vmatpush2.msra.mxu0 0.0
    %6225 = vmatprep.subr.mxu0 0.0
    %6226 = vmatpush2.msra.mxu0 0.0
    %6227 = vmatprep.subr.mxu0 0.0
    %6228 = vmatpush2.msra.mxu0 0.0
    %6229 = vmatprep.subr.mxu0 0.0
    %6230 = vmatpush2.msra.mxu0 %v6166
    %6231 = vmatprep.subr.mxu0 0.0
    %6232 = vmatpush2.msra.mxu0 %v6165
    %6233 = vmatprep.subr.mxu0 0.0
    %6234 = vmatpush2.msra.mxu0 %v6164
    %6235 = vmatprep.subr.mxu0 0.0
    %6236 = vmatpush2.msra.mxu0 %v6163
    %6237 = vmatprep.subr.mxu0 0.0
    %6238 = vmatpush2.msra.mxu0 %v6162
    %6239 = vmatprep.subr.mxu0 0.0
    %6240 = vmatpush2.msra.mxu0 %v6161
    %6241 = vmatprep.subr.mxu0 0.0
    %6242 = vmatpush2.msra.mxu0 %v6160
    %6243 = vmatprep.subr.mxu0 0.0
    %6244 = vmatpush2.msra.mxu0 %v6159
    %6245 = vmatprep.mubr.f32.mxu0 %v6179
    %6246 = vmatmul.mubr.f32.gmra.mxu0 %v6173
    %v6247 = vpop.f32.mrf.mxu0
    %v6248 = vadd.f32 0.0, %v6247
    %v6249 = vpop.f32.mrf.mxu0
    %6250 = vdwg.mxu0
    %v6251 = vsel %vm6178, %v6104, 0
    %6253 = vmatprep.subr.mxu0 0.0
    %6254 = vmatpush1.msra.mxu0 %v6133
    %6255 = vmatprep.subr.mxu0 0.0
    %6256 = vmatpush1.msra.mxu0 %v6132
    %6257 = vmatprep.subr.mxu0 0.0
    %6258 = vmatpush1.msra.mxu0 %v6131
    %6259 = vmatprep.subr.mxu0 0.0
    %6260 = vmatpush1.msra.mxu0 %v6130
    %6261 = vmatprep.subr.mxu0 0.0
    %6262 = vmatpush1.msra.mxu0 %v6129
    %6263 = vmatprep.subr.mxu0 0.0
    %6264 = vmatpush1.msra.mxu0 %v6128
    %6265 = vmatprep.subr.mxu0 0.0
    %6266 = vmatpush1.msra.mxu0 %v6127
    %6267 = vmatprep.subr.mxu0 0.0
    %6268 = vmatpush1.msra.mxu0 %v6126
    %6269 = vmatprep.subr.mxu0 0.0
    %6270 = vmatpush1.msra.mxu0 %v6125
    %6271 = vmatprep.subr.mxu0 0.0
    %6272 = vmatpush1.msra.mxu0 %v6124
    %6273 = vmatprep.subr.mxu0 0.0
    %6274 = vmatpush1.msra.mxu0 %v6123
    %6275 = vmatprep.subr.mxu0 0.0
    %6276 = vmatpush1.msra.mxu0 %v6122
    %6277 = vmatprep.subr.mxu0 0.0
    %6278 = vmatpush1.msra.mxu0 %v6121
    %6279 = vmatprep.subr.mxu0 0.0
    %6280 = vmatpush1.msra.mxu0 %v6120
    %6281 = vmatprep.subr.mxu0 0.0
    %6282 = vmatpush1.msra.mxu0 %v6119
    %6283 = vmatprep.subr.mxu0 0.0
    %6284 = vmatpush1.msra.mxu0 %v6118
    %6285 = vmatprep.subr.mxu0 0.0
    %6286 = vmatpush2.msra.mxu0 0.0
    %6287 = vmatprep.subr.mxu0 0.0
    %6288 = vmatpush2.msra.mxu0 0.0
    %6289 = vmatprep.subr.mxu0 0.0
    %6290 = vmatpush2.msra.mxu0 0.0
    %6291 = vmatprep.subr.mxu0 0.0
    %6292 = vmatpush2.msra.mxu0 0.0
    %6293 = vmatprep.subr.mxu0 0.0
    %6294 = vmatpush2.msra.mxu0 0.0
    %6295 = vmatprep.subr.mxu0 0.0
    %6296 = vmatpush2.msra.mxu0 0.0
    %6297 = vmatprep.subr.mxu0 0.0
    %6298 = vmatpush2.msra.mxu0 0.0
    %6299 = vmatprep.subr.mxu0 0.0
    %6300 = vmatpush2.msra.mxu0 0.0
    %6301 = vmatprep.subr.mxu0 0.0
    %6302 = vmatpush2.msra.mxu0 %v6141
    %6303 = vmatprep.subr.mxu0 0.0
    %6304 = vmatpush2.msra.mxu0 %v6140
    %6305 = vmatprep.subr.mxu0 0.0
    %6306 = vmatpush2.msra.mxu0 %v6139
    %6307 = vmatprep.subr.mxu0 0.0
    %6308 = vmatpush2.msra.mxu0 %v6138
    %6309 = vmatprep.subr.mxu0 0.0
    %6310 = vmatpush2.msra.mxu0 %v6137
    %6311 = vmatprep.subr.mxu0 0.0
    %6312 = vmatpush2.msra.mxu0 %v6136
    %6313 = vmatprep.subr.mxu0 0.0
    %6314 = vmatpush2.msra.mxu0 %v6135
    %6315 = vmatprep.subr.mxu0 0.0
    %6316 = vmatpush2.msra.mxu0 %v6134
    %6317 = vmatprep.mubr.f32.mxu0 %v6251
    %6318 = vmatmul.mubr.f32.gmra.mxu0 %v6102
    %v6319 = vpop.f32.mrf.mxu0
    %v6320 = vadd.f32 %v6248, %v6319
    %v6321 = vpop.f32.mrf.mxu0
    %6322 = vdwg.mxu0
    %s6323 = scalar_lea.vmem [#allocation7], 384
    %v6324 = vld [vmem:[%s6323] sm:$0xff]
    %v6325 = vld [vmem:[%s6323 + $0x8] sm:$0xff]
    %v6326 = vld [vmem:[%s6323 + $0x10] sm:$0xff]
    %v6327 = vld [vmem:[%s6323 + $0x18] sm:$0xff]
    %v6328 = vld [vmem:[%s6323 + $0x20] sm:$0xff]
    %v6329 = vld [vmem:[%s6323 + $0x28] sm:$0xff]
    %v6330 = vld [vmem:[%s6323 + $0x30] sm:$0xff]
    %v6331 = vld [vmem:[%s6323 + $0x38] sm:$0xff]
    %v6332 = vld [vmem:[%s6323 + $0x40] sm:$0xff]
    %v6333 = vld [vmem:[%s6323 + $0x48] sm:$0xff]
    %v6334 = vld [vmem:[%s6323 + $0x50] sm:$0xff]
    %v6335 = vld [vmem:[%s6323 + $0x58] sm:$0xff]
    %v6336 = vld [vmem:[%s6323 + $0x60] sm:$0xff]
    %v6337 = vld [vmem:[%s6323 + $0x68] sm:$0xff]
    %v6338 = vld [vmem:[%s6323 + $0x70] sm:$0xff]
    %v6339 = vld [vmem:[%s6323 + $0x78] sm:$0xff]
    %v6340 = vld [vmem:[%s6323 + $0x80] sm:$0xff]
    %v6341 = vld [vmem:[%s6323 + $0x88] sm:$0xff]
    %v6342 = vld [vmem:[%s6323 + $0x90] sm:$0xff]
    %v6343 = vld [vmem:[%s6323 + $0x98] sm:$0xff]
    %v6344 = vld [vmem:[%s6323 + $0xa0] sm:$0xff]
    %v6345 = vld [vmem:[%s6323 + $0xa8] sm:$0xff]
    %v6346 = vld [vmem:[%s6323 + $0xb0] sm:$0xff]
    %v6347 = vld [vmem:[%s6323 + $0xb8] sm:$0xff]
    %v6350 = vrot.slane %v6108, 4
    %v6351 = vrot.slane %v6114, 4
    %v6352 = vsel %vm192, %v6350, %v6351
    %v6353 = vrot.slane %v6110, 4
    %v6354 = vrot.slane %v6116, 4
    %v6355 = vsel %vm192, %v6353, %v6354
    %v6357 = vsel %vm6178, %v6355, 0
    %6359 = vmatprep.subr.mxu0 0.0
    %6360 = vmatpush1.msra.mxu0 %v6339
    %6361 = vmatprep.subr.mxu0 0.0
    %6362 = vmatpush1.msra.mxu0 %v6338
    %6363 = vmatprep.subr.mxu0 0.0
    %6364 = vmatpush1.msra.mxu0 %v6337
    %6365 = vmatprep.subr.mxu0 0.0
    %6366 = vmatpush1.msra.mxu0 %v6336
    %6367 = vmatprep.subr.mxu0 0.0
    %6368 = vmatpush1.msra.mxu0 %v6335
    %6369 = vmatprep.subr.mxu0 0.0
    %6370 = vmatpush1.msra.mxu0 %v6334
    %6371 = vmatprep.subr.mxu0 0.0
    %6372 = vmatpush1.msra.mxu0 %v6333
    %6373 = vmatprep.subr.mxu0 0.0
    %6374 = vmatpush1.msra.mxu0 %v6332
    %6375 = vmatprep.subr.mxu0 0.0
    %6376 = vmatpush1.msra.mxu0 %v6331
    %6377 = vmatprep.subr.mxu0 0.0
    %6378 = vmatpush1.msra.mxu0 %v6330
    %6379 = vmatprep.subr.mxu0 0.0
    %6380 = vmatpush1.msra.mxu0 %v6329
    %6381 = vmatprep.subr.mxu0 0.0
    %6382 = vmatpush1.msra.mxu0 %v6328
    %6383 = vmatprep.subr.mxu0 0.0
    %6384 = vmatpush1.msra.mxu0 %v6327
    %6385 = vmatprep.subr.mxu0 0.0
    %6386 = vmatpush1.msra.mxu0 %v6326
    %6387 = vmatprep.subr.mxu0 0.0
    %6388 = vmatpush1.msra.mxu0 %v6325
    %6389 = vmatprep.subr.mxu0 0.0
    %6390 = vmatpush1.msra.mxu0 %v6324
    %6391 = vmatprep.subr.mxu0 0.0
    %6392 = vmatpush2.msra.mxu0 0.0
    %6393 = vmatprep.subr.mxu0 0.0
    %6394 = vmatpush2.msra.mxu0 0.0
    %6395 = vmatprep.subr.mxu0 0.0
    %6396 = vmatpush2.msra.mxu0 0.0
    %6397 = vmatprep.subr.mxu0 0.0
    %6398 = vmatpush2.msra.mxu0 0.0
    %6399 = vmatprep.subr.mxu0 0.0
    %6400 = vmatpush2.msra.mxu0 0.0
    %6401 = vmatprep.subr.mxu0 0.0
    %6402 = vmatpush2.msra.mxu0 0.0
    %6403 = vmatprep.subr.mxu0 0.0
    %6404 = vmatpush2.msra.mxu0 0.0
    %6405 = vmatprep.subr.mxu0 0.0
    %6406 = vmatpush2.msra.mxu0 0.0
    %6407 = vmatprep.subr.mxu0 0.0
    %6408 = vmatpush2.msra.mxu0 %v6347
    %6409 = vmatprep.subr.mxu0 0.0
    %6410 = vmatpush2.msra.mxu0 %v6346
    %6411 = vmatprep.subr.mxu0 0.0
    %6412 = vmatpush2.msra.mxu0 %v6345
    %6413 = vmatprep.subr.mxu0 0.0
    %6414 = vmatpush2.msra.mxu0 %v6344
    %6415 = vmatprep.subr.mxu0 0.0
    %6416 = vmatpush2.msra.mxu0 %v6343
    %6417 = vmatprep.subr.mxu0 0.0
    %6418 = vmatpush2.msra.mxu0 %v6342
    %6419 = vmatprep.subr.mxu0 0.0
    %6420 = vmatpush2.msra.mxu0 %v6341
    %6421 = vmatprep.subr.mxu0 0.0
    %6422 = vmatpush2.msra.mxu0 %v6340
    %6423 = vmatprep.mubr.f32.mxu0 %v6357
    %6424 = vmatmul.mubr.f32.gmra.mxu0 %v6352
    %v6425 = vpop.f32.mrf.mxu0
    %v6426 = vadd.f32 0.0, %v6425
    %v6427 = vpop.f32.mrf.mxu0
    %6428 = vdwg.mxu0
    %v6429 = vadd.f32 %v6320, %v6426
    %v6430 = vld [vmem:[%s14] sm:$0x1]
    %v6432 = vlaneseq
    %v6433 = vshrl.u32 %v6432, 7
    %v6434 = vsub.s32 0, %v6433
    %v6435 = vrot.slane %v6430, %v6434
    %v6437 = vadd.f32 %v6429, %v6435
    %vm6438 = vcmp.gt.f32.partialorder %v6437, 0.0
    %v6439 = vmin.f32 %v6437, 0.0
    %v6440 = vmul.f32 %v6439, 1.442695
    %v6441 = vpow.pop %v6440
    %v6442 = vsub.f32 %v6441, 1.0
    %v6443 = vsel %vm6438, %v6437, %v6442
    %v6444 = vld [vmem:[%s1] sm:$0xf]
    %v6446 = vrot.slane %v6443, 1
    %6447 = vrot.lane.b32.xlu0 %v6446, 96
    %v6448 = vpop.permute.xlu0 %6447
    %v6450 = vrot.slane %v6443, 2
    %6451 = vrot.lane.b32.xlu0 %v6450, 64
    %v6452 = vpop.permute.xlu0 %6451
    %v6455 = vlaneseq
    %v6456 = vshrl.u32 %v6455, 7
    %v6457 = vsub.s32 0, %v6456
    %v6458 = vrot.slane %v6444, %v6457
    %v6459 = vlaneseq
    %v6460 = vshrl.u32 %v6459, 7
    %v6461 = vsub.s32 2, %v6460
    %v6462 = vrot.slane %v6444, %v6461
    %6463 = vrot.lane.b32.xlu0 %v6458, 32
    %v6464 = vpop.permute.xlu0 %6463
    %6465 = vrot.lane.b32.xlu0 %v6462, 32
    %v6466 = vpop.permute.xlu0 %6465
    %v6467 = vsel %vm3089, %v6464, %v6466
    %v6471 = vsel %vm5405, %v6443, %v6448
    %v6472 = vsel %vm6178, %v6448, %v6452
    %v6473 = vsel %vm3089, %v6452, %v6464
    %v6474 = vlaneseq
    %v6475 = vshrl.u32 %v6474, 7
    %v6476 = vsub.s32 1, %v6475
    %v6477 = vrot.slane %v6444, %v6476
    %v6478 = vlaneseq
    %v6479 = vshrl.u32 %v6478, 7
    %v6480 = vsub.s32 3, %v6479
    %v6481 = vrot.slane %v6444, %v6480
    %6482 = vrot.lane.b32.xlu0 %v6477, 32
    %v6483 = vpop.permute.xlu0 %6482
    %6484 = vrot.lane.b32.xlu0 %v6481, 32
    %v6485 = vpop.permute.xlu0 %6484
    %v6486 = vsel %vm3089, %v6483, %v6485
    %v6488 = vsel %vm3089, %v6452, %v6483
    %v6492 = vrot.slane %v6471, 2
    %v6493 = vrot.slane %v6472, 2
    %v6494 = vrot.slane %v6488, 2
    %v6495 = vrot.slane %v6486, 2
    %v6496 = vrot.slane %v6485, 2
    %vm6502 = vcmask 1040384
    %v6503 = vsel %vm6502, %v6471, %v6492
    %v6504 = vsel %vm6502, %v6472, %v6493
    %v6505 = vsel %vm6502, %v6473, %v6494
    %v6506 = vsel %vm6502, %v6467, %v6495
    %v6507 = vsel %vm6502, %v6466, %v6496
    %s6508 = smul.u32 8, 68
    %s6509 = smul.u32 %s6508, 8
    %s6510 = sshll.u32 %s6509, 4
    %6511 = dma.done [#allocation3], %s6510
    %v6512 = vld [vmem:[#allocation2] sm:$0xff]
    %v6513 = vld [vmem:[#allocation2 + $0x8] sm:$0xff]
    %v6514 = vld [vmem:[#allocation2 + $0x10] sm:$0xff]
    %v6515 = vld [vmem:[#allocation2 + $0x18] sm:$0xff]
    %v6516 = vld [vmem:[#allocation2 + $0x20] sm:$0xff]
    %v6517 = vld [vmem:[#allocation2 + $0x28] sm:$0xff]
    %v6518 = vld [vmem:[#allocation2 + $0x30] sm:$0xff]
    %v6519 = vld [vmem:[#allocation2 + $0x38] sm:$0xff]
    %v6520 = vld [vmem:[#allocation2 + $0x40] sm:$0xff]
    %v6521 = vld [vmem:[#allocation2 + $0x48] sm:$0xff]
    %v6522 = vld [vmem:[#allocation2 + $0x50] sm:$0xff]
    %v6523 = vld [vmem:[#allocation2 + $0x58] sm:$0xff]
    %v6524 = vld [vmem:[#allocation2 + $0x60] sm:$0xff]
    %v6525 = vld [vmem:[#allocation2 + $0x68] sm:$0xff]
    %v6526 = vld [vmem:[#allocation2 + $0x70] sm:$0xff]
    %v6527 = vld [vmem:[#allocation2 + $0x78] sm:$0xff]
    %v6528 = vld [vmem:[#allocation2 + $0x80] sm:$0xff]
    %v6529 = vld [vmem:[#allocation2 + $0x88] sm:$0xff]
    %v6530 = vld [vmem:[#allocation2 + $0x90] sm:$0xff]
    %v6531 = vld [vmem:[#allocation2 + $0x98] sm:$0xff]
    %v6532 = vld [vmem:[#allocation2 + $0xa0] sm:$0xff]
    %v6533 = vld [vmem:[#allocation2 + $0xa8] sm:$0xff]
    %v6534 = vld [vmem:[#allocation2 + $0xb0] sm:$0xff]
    %v6535 = vld [vmem:[#allocation2 + $0xb8] sm:$0xff]
    %v6536 = vld [vmem:[#allocation2 + $0xc0] sm:$0xff]
    %v6537 = vld [vmem:[#allocation2 + $0xc8] sm:$0xff]
    %v6538 = vld [vmem:[#allocation2 + $0xd0] sm:$0xff]
    %v6539 = vld [vmem:[#allocation2 + $0xd8] sm:$0xff]
    %v6540 = vld [vmem:[#allocation2 + $0xe0] sm:$0xff]
    %v6541 = vld [vmem:[#allocation2 + $0xe8] sm:$0xff]
    %v6542 = vld [vmem:[#allocation2 + $0xf0] sm:$0xff]
    %v6543 = vld [vmem:[#allocation2 + $0xf8] sm:$0xff]
    %v6544 = vld [vmem:[#allocation2 + $0x100] sm:$0xff]
    %v6545 = vld [vmem:[#allocation2 + $0x108] sm:$0xff]
    %v6546 = vld [vmem:[#allocation2 + $0x110] sm:$0xff]
    %v6547 = vld [vmem:[#allocation2 + $0x118] sm:$0xff]
    %v6548 = vld [vmem:[#allocation2 + $0x120] sm:$0xff]
    %v6549 = vld [vmem:[#allocation2 + $0x128] sm:$0xff]
    %v6550 = vld [vmem:[#allocation2 + $0x130] sm:$0xff]
    %v6551 = vld [vmem:[#allocation2 + $0x138] sm:$0xff]
    %v6552 = vld [vmem:[#allocation2 + $0x140] sm:$0xff]
    %v6553 = vld [vmem:[#allocation2 + $0x148] sm:$0xff]
    %v6554 = vld [vmem:[#allocation2 + $0x150] sm:$0xff]
    %v6555 = vld [vmem:[#allocation2 + $0x158] sm:$0xff]
    %v6556 = vld [vmem:[#allocation2 + $0x160] sm:$0xff]
    %v6557 = vld [vmem:[#allocation2 + $0x168] sm:$0xff]
    %v6558 = vld [vmem:[#allocation2 + $0x170] sm:$0xff]
    %v6559 = vld [vmem:[#allocation2 + $0x178] sm:$0xff]
    %v6560 = vld [vmem:[#allocation2 + $0x180] sm:$0xff]
    %v6561 = vld [vmem:[#allocation2 + $0x188] sm:$0xff]
    %v6562 = vld [vmem:[#allocation2 + $0x190] sm:$0xff]
    %v6563 = vld [vmem:[#allocation2 + $0x198] sm:$0xff]
    %v6564 = vld [vmem:[#allocation2 + $0x1a0] sm:$0xff]
    %v6565 = vld [vmem:[#allocation2 + $0x1a8] sm:$0xff]
    %v6566 = vld [vmem:[#allocation2 + $0x1b0] sm:$0xff]
    %v6567 = vld [vmem:[#allocation2 + $0x1b8] sm:$0xff]
    %v6568 = vld [vmem:[#allocation2 + $0x1c0] sm:$0xff]
    %v6569 = vld [vmem:[#allocation2 + $0x1c8] sm:$0xff]
    %v6570 = vld [vmem:[#allocation2 + $0x1d0] sm:$0xff]
    %v6571 = vld [vmem:[#allocation2 + $0x1d8] sm:$0xff]
    %v6572 = vld [vmem:[#allocation2 + $0x1e0] sm:$0xff]
    %v6573 = vld [vmem:[#allocation2 + $0x1e8] sm:$0xff]
    %v6574 = vld [vmem:[#allocation2 + $0x1f0] sm:$0xff]
    %v6575 = vld [vmem:[#allocation2 + $0x1f8] sm:$0xff]
    %v6576 = vld [vmem:[#allocation2 + $0x200] sm:$0xff]
    %v6577 = vld [vmem:[#allocation2 + $0x208] sm:$0xff]
    %v6578 = vld [vmem:[#allocation2 + $0x210] sm:$0xff]
    %v6579 = vld [vmem:[#allocation2 + $0x218] sm:$0xff]
    %v6580 = vld [vmem:[#allocation2 + $0x220] sm:$0xff]
    %v6581 = vld [vmem:[#allocation2 + $0x228] sm:$0xff]
    %v6582 = vld [vmem:[#allocation2 + $0x230] sm:$0xff]
    %v6583 = vld [vmem:[#allocation2 + $0x238] sm:$0xff]
    %v6584 = vld [vmem:[#allocation2 + $0x240] sm:$0xff]
    %v6585 = vld [vmem:[#allocation2 + $0x248] sm:$0xff]
    %v6586 = vld [vmem:[#allocation2 + $0x250] sm:$0xff]
    %v6587 = vld [vmem:[#allocation2 + $0x258] sm:$0xff]
    %v6588 = vld [vmem:[#allocation2 + $0x260] sm:$0xff]
    %v6589 = vld [vmem:[#allocation2 + $0x268] sm:$0xff]
    %v6590 = vld [vmem:[#allocation2 + $0x270] sm:$0xff]
    %v6591 = vld [vmem:[#allocation2 + $0x278] sm:$0xff]
    %v6592 = vld [vmem:[#allocation2 + $0x280] sm:$0xff]
    %v6593 = vld [vmem:[#allocation2 + $0x288] sm:$0xff]
    %v6594 = vld [vmem:[#allocation2 + $0x290] sm:$0xff]
    %v6595 = vld [vmem:[#allocation2 + $0x298] sm:$0xff]
    %v6596 = vld [vmem:[#allocation2 + $0x2a0] sm:$0xff]
    %v6597 = vld [vmem:[#allocation2 + $0x2a8] sm:$0xff]
    %v6598 = vld [vmem:[#allocation2 + $0x2b0] sm:$0xff]
    %v6599 = vld [vmem:[#allocation2 + $0x2b8] sm:$0xff]
    %v6600 = vld [vmem:[#allocation2 + $0x2c0] sm:$0xff]
    %v6601 = vld [vmem:[#allocation2 + $0x2c8] sm:$0xff]
    %v6602 = vld [vmem:[#allocation2 + $0x2d0] sm:$0xff]
    %v6603 = vld [vmem:[#allocation2 + $0x2d8] sm:$0xff]
    %v6604 = vld [vmem:[#allocation2 + $0x2e0] sm:$0xff]
    %v6605 = vld [vmem:[#allocation2 + $0x2e8] sm:$0xff]
    %v6606 = vld [vmem:[#allocation2 + $0x2f0] sm:$0xff]
    %v6607 = vld [vmem:[#allocation2 + $0x2f8] sm:$0xff]
    %v6608 = vld [vmem:[#allocation2 + $0x300] sm:$0xff]
    %v6609 = vld [vmem:[#allocation2 + $0x308] sm:$0xff]
    %v6610 = vld [vmem:[#allocation2 + $0x310] sm:$0xff]
    %v6611 = vld [vmem:[#allocation2 + $0x318] sm:$0xff]
    %v6612 = vld [vmem:[#allocation2 + $0x320] sm:$0xff]
    %v6613 = vld [vmem:[#allocation2 + $0x328] sm:$0xff]
    %v6614 = vld [vmem:[#allocation2 + $0x330] sm:$0xff]
    %v6615 = vld [vmem:[#allocation2 + $0x338] sm:$0xff]
    %v6616 = vld [vmem:[#allocation2 + $0x340] sm:$0xff]
    %v6617 = vld [vmem:[#allocation2 + $0x348] sm:$0xff]
    %v6618 = vld [vmem:[#allocation2 + $0x350] sm:$0xff]
    %v6619 = vld [vmem:[#allocation2 + $0x358] sm:$0xff]
    %v6620 = vld [vmem:[#allocation2 + $0x360] sm:$0xff]
    %v6621 = vld [vmem:[#allocation2 + $0x368] sm:$0xff]
    %v6622 = vld [vmem:[#allocation2 + $0x370] sm:$0xff]
    %v6623 = vld [vmem:[#allocation2 + $0x378] sm:$0xff]
    %v6624 = vld [vmem:[#allocation2 + $0x380] sm:$0xff]
    %v6625 = vld [vmem:[#allocation2 + $0x388] sm:$0xff]
    %v6626 = vld [vmem:[#allocation2 + $0x390] sm:$0xff]
    %v6627 = vld [vmem:[#allocation2 + $0x398] sm:$0xff]
    %v6628 = vld [vmem:[#allocation2 + $0x3a0] sm:$0xff]
    %v6629 = vld [vmem:[#allocation2 + $0x3a8] sm:$0xff]
    %v6630 = vld [vmem:[#allocation2 + $0x3b0] sm:$0xff]
    %v6631 = vld [vmem:[#allocation2 + $0x3b8] sm:$0xff]
    %v6632 = vld [vmem:[#allocation2 + $0x3c0] sm:$0xff]
    %v6633 = vld [vmem:[#allocation2 + $0x3c8] sm:$0xff]
    %v6634 = vld [vmem:[#allocation2 + $0x3d0] sm:$0xff]
    %v6635 = vld [vmem:[#allocation2 + $0x3d8] sm:$0xff]
    %v6636 = vld [vmem:[#allocation2 + $0x3e0] sm:$0xff]
    %v6637 = vld [vmem:[#allocation2 + $0x3e8] sm:$0xff]
    %v6638 = vld [vmem:[#allocation2 + $0x3f0] sm:$0xff]
    %v6639 = vld [vmem:[#allocation2 + $0x3f8] sm:$0xff]
    %v6640 = vld [vmem:[#allocation2 + $0x400] sm:$0xff]
    %v6641 = vld [vmem:[#allocation2 + $0x408] sm:$0xff]
    %v6642 = vld [vmem:[#allocation2 + $0x410] sm:$0xff]
    %v6643 = vld [vmem:[#allocation2 + $0x418] sm:$0xff]
    %v6644 = vld [vmem:[#allocation2 + $0x420] sm:$0xff]
    %v6645 = vld [vmem:[#allocation2 + $0x428] sm:$0xff]
    %v6646 = vld [vmem:[#allocation2 + $0x430] sm:$0xff]
    %v6647 = vld [vmem:[#allocation2 + $0x438] sm:$0xff]
    %v6648 = vld [vmem:[#allocation2 + $0x440] sm:$0xff]
    %v6649 = vld [vmem:[#allocation2 + $0x448] sm:$0xff]
    %v6650 = vld [vmem:[#allocation2 + $0x450] sm:$0xff]
    %v6651 = vld [vmem:[#allocation2 + $0x458] sm:$0xff]
    %v6652 = vld [vmem:[#allocation2 + $0x460] sm:$0xff]
    %v6653 = vld [vmem:[#allocation2 + $0x468] sm:$0xff]
    %v6654 = vld [vmem:[#allocation2 + $0x470] sm:$0xff]
    %v6655 = vld [vmem:[#allocation2 + $0x478] sm:$0xff]
    %v6656 = vld [vmem:[#allocation2 + $0x480] sm:$0xff]
    %v6657 = vld [vmem:[#allocation2 + $0x488] sm:$0xff]
    %v6658 = vld [vmem:[#allocation2 + $0x490] sm:$0xff]
    %v6659 = vld [vmem:[#allocation2 + $0x498] sm:$0xff]
    %v6660 = vld [vmem:[#allocation2 + $0x4a0] sm:$0xff]
    %v6661 = vld [vmem:[#allocation2 + $0x4a8] sm:$0xff]
    %v6662 = vld [vmem:[#allocation2 + $0x4b0] sm:$0xff]
    %v6663 = vld [vmem:[#allocation2 + $0x4b8] sm:$0xff]
    %v6664 = vld [vmem:[#allocation2 + $0x4c0] sm:$0xff]
    %v6665 = vld [vmem:[#allocation2 + $0x4c8] sm:$0xff]
    %v6666 = vld [vmem:[#allocation2 + $0x4d0] sm:$0xff]
    %v6667 = vld [vmem:[#allocation2 + $0x4d8] sm:$0xff]
    %v6668 = vld [vmem:[#allocation2 + $0x4e0] sm:$0xff]
    %v6669 = vld [vmem:[#allocation2 + $0x4e8] sm:$0xff]
    %v6670 = vld [vmem:[#allocation2 + $0x4f0] sm:$0xff]
    %v6671 = vld [vmem:[#allocation2 + $0x4f8] sm:$0xff]
    %v6672 = vld [vmem:[#allocation2 + $0x500] sm:$0xff]
    %v6673 = vld [vmem:[#allocation2 + $0x508] sm:$0xff]
    %v6674 = vld [vmem:[#allocation2 + $0x510] sm:$0xff]
    %v6675 = vld [vmem:[#allocation2 + $0x518] sm:$0xff]
    %v6676 = vld [vmem:[#allocation2 + $0x520] sm:$0xff]
    %v6677 = vld [vmem:[#allocation2 + $0x528] sm:$0xff]
    %v6678 = vld [vmem:[#allocation2 + $0x530] sm:$0xff]
    %v6679 = vld [vmem:[#allocation2 + $0x538] sm:$0xff]
    %v6680 = vld [vmem:[#allocation2 + $0x540] sm:$0xff]
    %v6681 = vld [vmem:[#allocation2 + $0x548] sm:$0xff]
    %v6682 = vld [vmem:[#allocation2 + $0x550] sm:$0xff]
    %v6683 = vld [vmem:[#allocation2 + $0x558] sm:$0xff]
    %v6684 = vld [vmem:[#allocation2 + $0x560] sm:$0xff]
    %v6685 = vld [vmem:[#allocation2 + $0x568] sm:$0xff]
    %v6686 = vld [vmem:[#allocation2 + $0x570] sm:$0xff]
    %v6687 = vld [vmem:[#allocation2 + $0x578] sm:$0xff]
    %v6688 = vld [vmem:[#allocation2 + $0x580] sm:$0xff]
    %v6689 = vld [vmem:[#allocation2 + $0x588] sm:$0xff]
    %v6690 = vld [vmem:[#allocation2 + $0x590] sm:$0xff]
    %v6691 = vld [vmem:[#allocation2 + $0x598] sm:$0xff]
    %v6692 = vld [vmem:[#allocation2 + $0x5a0] sm:$0xff]
    %v6693 = vld [vmem:[#allocation2 + $0x5a8] sm:$0xff]
    %v6694 = vld [vmem:[#allocation2 + $0x5b0] sm:$0xff]
    %v6695 = vld [vmem:[#allocation2 + $0x5b8] sm:$0xff]
    %v6696 = vld [vmem:[#allocation2 + $0x5c0] sm:$0xff]
    %v6697 = vld [vmem:[#allocation2 + $0x5c8] sm:$0xff]
    %v6698 = vld [vmem:[#allocation2 + $0x5d0] sm:$0xff]
    %v6699 = vld [vmem:[#allocation2 + $0x5d8] sm:$0xff]
    %v6700 = vld [vmem:[#allocation2 + $0x5e0] sm:$0xff]
    %v6701 = vld [vmem:[#allocation2 + $0x5e8] sm:$0xff]
    %v6702 = vld [vmem:[#allocation2 + $0x5f0] sm:$0xff]
    %v6703 = vld [vmem:[#allocation2 + $0x5f8] sm:$0xff]
    %v6704 = vld [vmem:[#allocation2 + $0x600] sm:$0xff]
    %v6705 = vld [vmem:[#allocation2 + $0x608] sm:$0xff]
    %v6706 = vld [vmem:[#allocation2 + $0x610] sm:$0xff]
    %v6707 = vld [vmem:[#allocation2 + $0x618] sm:$0xff]
    %v6708 = vld [vmem:[#allocation2 + $0x620] sm:$0xff]
    %v6709 = vld [vmem:[#allocation2 + $0x628] sm:$0xff]
    %v6710 = vld [vmem:[#allocation2 + $0x630] sm:$0xff]
    %v6711 = vld [vmem:[#allocation2 + $0x638] sm:$0xff]
    %v6712 = vld [vmem:[#allocation2 + $0x640] sm:$0xff]
    %v6713 = vld [vmem:[#allocation2 + $0x648] sm:$0xff]
    %v6714 = vld [vmem:[#allocation2 + $0x650] sm:$0xff]
    %v6715 = vld [vmem:[#allocation2 + $0x658] sm:$0xff]
    %v6716 = vld [vmem:[#allocation2 + $0x660] sm:$0xff]
    %v6717 = vld [vmem:[#allocation2 + $0x668] sm:$0xff]
    %v6718 = vld [vmem:[#allocation2 + $0x670] sm:$0xff]
    %v6719 = vld [vmem:[#allocation2 + $0x678] sm:$0xff]
    %v6720 = vld [vmem:[#allocation2 + $0x680] sm:$0xff]
    %v6721 = vld [vmem:[#allocation2 + $0x688] sm:$0xff]
    %v6722 = vld [vmem:[#allocation2 + $0x690] sm:$0xff]
    %v6723 = vld [vmem:[#allocation2 + $0x698] sm:$0xff]
    %v6724 = vld [vmem:[#allocation2 + $0x6a0] sm:$0xff]
    %v6725 = vld [vmem:[#allocation2 + $0x6a8] sm:$0xff]
    %v6726 = vld [vmem:[#allocation2 + $0x6b0] sm:$0xff]
    %v6727 = vld [vmem:[#allocation2 + $0x6b8] sm:$0xff]
    %v6728 = vld [vmem:[#allocation2 + $0x6c0] sm:$0xff]
    %v6729 = vld [vmem:[#allocation2 + $0x6c8] sm:$0xff]
    %v6730 = vld [vmem:[#allocation2 + $0x6d0] sm:$0xff]
    %v6731 = vld [vmem:[#allocation2 + $0x6d8] sm:$0xff]
    %v6732 = vld [vmem:[#allocation2 + $0x6e0] sm:$0xff]
    %v6733 = vld [vmem:[#allocation2 + $0x6e8] sm:$0xff]
    %v6734 = vld [vmem:[#allocation2 + $0x6f0] sm:$0xff]
    %v6735 = vld [vmem:[#allocation2 + $0x6f8] sm:$0xff]
    %v6736 = vld [vmem:[#allocation2 + $0x700] sm:$0xff]
    %v6737 = vld [vmem:[#allocation2 + $0x708] sm:$0xff]
    %v6738 = vld [vmem:[#allocation2 + $0x710] sm:$0xff]
    %v6739 = vld [vmem:[#allocation2 + $0x718] sm:$0xff]
    %v6740 = vld [vmem:[#allocation2 + $0x720] sm:$0xff]
    %v6741 = vld [vmem:[#allocation2 + $0x728] sm:$0xff]
    %v6742 = vld [vmem:[#allocation2 + $0x730] sm:$0xff]
    %v6743 = vld [vmem:[#allocation2 + $0x738] sm:$0xff]
    %v6744 = vld [vmem:[#allocation2 + $0x740] sm:$0xff]
    %v6745 = vld [vmem:[#allocation2 + $0x748] sm:$0xff]
    %v6746 = vld [vmem:[#allocation2 + $0x750] sm:$0xff]
    %v6747 = vld [vmem:[#allocation2 + $0x758] sm:$0xff]
    %v6748 = vld [vmem:[#allocation2 + $0x760] sm:$0xff]
    %v6749 = vld [vmem:[#allocation2 + $0x768] sm:$0xff]
    %v6750 = vld [vmem:[#allocation2 + $0x770] sm:$0xff]
    %v6751 = vld [vmem:[#allocation2 + $0x778] sm:$0xff]
    %v6752 = vld [vmem:[#allocation2 + $0x780] sm:$0xff]
    %v6753 = vld [vmem:[#allocation2 + $0x788] sm:$0xff]
    %v6754 = vld [vmem:[#allocation2 + $0x790] sm:$0xff]
    %v6755 = vld [vmem:[#allocation2 + $0x798] sm:$0xff]
    %v6756 = vld [vmem:[#allocation2 + $0x7a0] sm:$0xff]
    %v6757 = vld [vmem:[#allocation2 + $0x7a8] sm:$0xff]
    %v6758 = vld [vmem:[#allocation2 + $0x7b0] sm:$0xff]
    %v6759 = vld [vmem:[#allocation2 + $0x7b8] sm:$0xff]
    %v6760 = vld [vmem:[#allocation2 + $0x7c0] sm:$0xff]
    %v6761 = vld [vmem:[#allocation2 + $0x7c8] sm:$0xff]
    %v6762 = vld [vmem:[#allocation2 + $0x7d0] sm:$0xff]
    %v6763 = vld [vmem:[#allocation2 + $0x7d8] sm:$0xff]
    %v6764 = vld [vmem:[#allocation2 + $0x7e0] sm:$0xff]
    %v6765 = vld [vmem:[#allocation2 + $0x7e8] sm:$0xff]
    %v6766 = vld [vmem:[#allocation2 + $0x7f0] sm:$0xff]
    %v6767 = vld [vmem:[#allocation2 + $0x7f8] sm:$0xff]
    %v6768 = vld [vmem:[#allocation2 + $0x800] sm:$0xff]
    %v6769 = vld [vmem:[#allocation2 + $0x808] sm:$0xff]
    %v6770 = vld [vmem:[#allocation2 + $0x810] sm:$0xff]
    %v6771 = vld [vmem:[#allocation2 + $0x818] sm:$0xff]
    %v6772 = vld [vmem:[#allocation2 + $0x820] sm:$0xff]
    %v6773 = vld [vmem:[#allocation2 + $0x828] sm:$0xff]
    %v6774 = vld [vmem:[#allocation2 + $0x830] sm:$0xff]
    %v6775 = vld [vmem:[#allocation2 + $0x838] sm:$0xff]
    %v6776 = vld [vmem:[#allocation2 + $0x840] sm:$0xff]
    %v6777 = vld [vmem:[#allocation2 + $0x848] sm:$0xff]
    %v6778 = vld [vmem:[#allocation2 + $0x850] sm:$0xff]
    %v6779 = vld [vmem:[#allocation2 + $0x858] sm:$0xff]
    %v6780 = vld [vmem:[#allocation2 + $0x860] sm:$0xff]
    %v6781 = vld [vmem:[#allocation2 + $0x868] sm:$0xff]
    %v6782 = vld [vmem:[#allocation2 + $0x870] sm:$0xff]
    %v6783 = vld [vmem:[#allocation2 + $0x878] sm:$0xff]
    %v6784 = vld [vmem:[#allocation2 + $0x880] sm:$0xff]
    %v6785 = vld [vmem:[#allocation2 + $0x888] sm:$0xff]
    %v6786 = vld [vmem:[#allocation2 + $0x890] sm:$0xff]
    %v6787 = vld [vmem:[#allocation2 + $0x898] sm:$0xff]
    %v6788 = vld [vmem:[#allocation2 + $0x8a0] sm:$0xff]
    %v6789 = vld [vmem:[#allocation2 + $0x8a8] sm:$0xff]
    %v6790 = vld [vmem:[#allocation2 + $0x8b0] sm:$0xff]
    %v6791 = vld [vmem:[#allocation2 + $0x8b8] sm:$0xff]
    %v6792 = vld [vmem:[#allocation2 + $0x8c0] sm:$0xff]
    %v6793 = vld [vmem:[#allocation2 + $0x8c8] sm:$0xff]
    %v6794 = vld [vmem:[#allocation2 + $0x8d0] sm:$0xff]
    %v6795 = vld [vmem:[#allocation2 + $0x8d8] sm:$0xff]
    %v6796 = vld [vmem:[#allocation2 + $0x8e0] sm:$0xff]
    %v6797 = vld [vmem:[#allocation2 + $0x8e8] sm:$0xff]
    %v6798 = vld [vmem:[#allocation2 + $0x8f0] sm:$0xff]
    %v6799 = vld [vmem:[#allocation2 + $0x8f8] sm:$0xff]
    %v6800 = vld [vmem:[#allocation2 + $0x900] sm:$0xff]
    %v6801 = vld [vmem:[#allocation2 + $0x908] sm:$0xff]
    %v6802 = vld [vmem:[#allocation2 + $0x910] sm:$0xff]
    %v6803 = vld [vmem:[#allocation2 + $0x918] sm:$0xff]
    %v6804 = vld [vmem:[#allocation2 + $0x920] sm:$0xff]
    %v6805 = vld [vmem:[#allocation2 + $0x928] sm:$0xff]
    %v6806 = vld [vmem:[#allocation2 + $0x930] sm:$0xff]
    %v6807 = vld [vmem:[#allocation2 + $0x938] sm:$0xff]
    %v6808 = vld [vmem:[#allocation2 + $0x940] sm:$0xff]
    %v6809 = vld [vmem:[#allocation2 + $0x948] sm:$0xff]
    %v6810 = vld [vmem:[#allocation2 + $0x950] sm:$0xff]
    %v6811 = vld [vmem:[#allocation2 + $0x958] sm:$0xff]
    %v6812 = vld [vmem:[#allocation2 + $0x960] sm:$0xff]
    %v6813 = vld [vmem:[#allocation2 + $0x968] sm:$0xff]
    %v6814 = vld [vmem:[#allocation2 + $0x970] sm:$0xff]
    %v6815 = vld [vmem:[#allocation2 + $0x978] sm:$0xff]
    %v6816 = vld [vmem:[#allocation2 + $0x980] sm:$0xff]
    %v6817 = vld [vmem:[#allocation2 + $0x988] sm:$0xff]
    %v6818 = vld [vmem:[#allocation2 + $0x990] sm:$0xff]
    %v6819 = vld [vmem:[#allocation2 + $0x998] sm:$0xff]
    %v6820 = vld [vmem:[#allocation2 + $0x9a0] sm:$0xff]
    %v6821 = vld [vmem:[#allocation2 + $0x9a8] sm:$0xff]
    %v6822 = vld [vmem:[#allocation2 + $0x9b0] sm:$0xff]
    %v6823 = vld [vmem:[#allocation2 + $0x9b8] sm:$0xff]
    %v6824 = vld [vmem:[#allocation2 + $0x9c0] sm:$0xff]
    %v6825 = vld [vmem:[#allocation2 + $0x9c8] sm:$0xff]
    %v6826 = vld [vmem:[#allocation2 + $0x9d0] sm:$0xff]
    %v6827 = vld [vmem:[#allocation2 + $0x9d8] sm:$0xff]
    %v6828 = vld [vmem:[#allocation2 + $0x9e0] sm:$0xff]
    %v6829 = vld [vmem:[#allocation2 + $0x9e8] sm:$0xff]
    %v6830 = vld [vmem:[#allocation2 + $0x9f0] sm:$0xff]
    %v6831 = vld [vmem:[#allocation2 + $0x9f8] sm:$0xff]
    %v6832 = vld [vmem:[#allocation2 + $0xa00] sm:$0xff]
    %v6833 = vld [vmem:[#allocation2 + $0xa08] sm:$0xff]
    %v6834 = vld [vmem:[#allocation2 + $0xa10] sm:$0xff]
    %v6835 = vld [vmem:[#allocation2 + $0xa18] sm:$0xff]
    %v6836 = vld [vmem:[#allocation2 + $0xa20] sm:$0xff]
    %v6837 = vld [vmem:[#allocation2 + $0xa28] sm:$0xff]
    %v6838 = vld [vmem:[#allocation2 + $0xa30] sm:$0xff]
    %v6839 = vld [vmem:[#allocation2 + $0xa38] sm:$0xff]
    %v6840 = vld [vmem:[#allocation2 + $0xa40] sm:$0xff]
    %v6841 = vld [vmem:[#allocation2 + $0xa48] sm:$0xff]
    %v6842 = vld [vmem:[#allocation2 + $0xa50] sm:$0xff]
    %v6843 = vld [vmem:[#allocation2 + $0xa58] sm:$0xff]
    %v6844 = vld [vmem:[#allocation2 + $0xa60] sm:$0xff]
    %v6845 = vld [vmem:[#allocation2 + $0xa68] sm:$0xff]
    %v6846 = vld [vmem:[#allocation2 + $0xa70] sm:$0xff]
    %v6847 = vld [vmem:[#allocation2 + $0xa78] sm:$0xff]
    %v6848 = vld [vmem:[#allocation2 + $0xa80] sm:$0xff]
    %v6849 = vld [vmem:[#allocation2 + $0xa88] sm:$0xff]
    %v6850 = vld [vmem:[#allocation2 + $0xa90] sm:$0xff]
    %v6851 = vld [vmem:[#allocation2 + $0xa98] sm:$0xff]
    %v6852 = vld [vmem:[#allocation2 + $0xaa0] sm:$0xff]
    %v6853 = vld [vmem:[#allocation2 + $0xaa8] sm:$0xff]
    %v6854 = vld [vmem:[#allocation2 + $0xab0] sm:$0xff]
    %v6855 = vld [vmem:[#allocation2 + $0xab8] sm:$0xff]
    %v6856 = vld [vmem:[#allocation2 + $0xac0] sm:$0xff]
    %v6857 = vld [vmem:[#allocation2 + $0xac8] sm:$0xff]
    %v6858 = vld [vmem:[#allocation2 + $0xad0] sm:$0xff]
    %v6859 = vld [vmem:[#allocation2 + $0xad8] sm:$0xff]
    %v6860 = vld [vmem:[#allocation2 + $0xae0] sm:$0xff]
    %v6861 = vld [vmem:[#allocation2 + $0xae8] sm:$0xff]
    %v6862 = vld [vmem:[#allocation2 + $0xaf0] sm:$0xff]
    %v6863 = vld [vmem:[#allocation2 + $0xaf8] sm:$0xff]
    %v6864 = vld [vmem:[#allocation2 + $0xb00] sm:$0xff]
    %v6865 = vld [vmem:[#allocation2 + $0xb08] sm:$0xff]
    %v6866 = vld [vmem:[#allocation2 + $0xb10] sm:$0xff]
    %v6867 = vld [vmem:[#allocation2 + $0xb18] sm:$0xff]
    %v6868 = vld [vmem:[#allocation2 + $0xb20] sm:$0xff]
    %v6869 = vld [vmem:[#allocation2 + $0xb28] sm:$0xff]
    %v6870 = vld [vmem:[#allocation2 + $0xb30] sm:$0xff]
    %v6871 = vld [vmem:[#allocation2 + $0xb38] sm:$0xff]
    %v6872 = vld [vmem:[#allocation2 + $0xb40] sm:$0xff]
    %v6873 = vld [vmem:[#allocation2 + $0xb48] sm:$0xff]
    %v6874 = vld [vmem:[#allocation2 + $0xb50] sm:$0xff]
    %v6875 = vld [vmem:[#allocation2 + $0xb58] sm:$0xff]
    %v6876 = vld [vmem:[#allocation2 + $0xb60] sm:$0xff]
    %v6877 = vld [vmem:[#allocation2 + $0xb68] sm:$0xff]
    %v6878 = vld [vmem:[#allocation2 + $0xb70] sm:$0xff]
    %v6879 = vld [vmem:[#allocation2 + $0xb78] sm:$0xff]
    %v6880 = vld [vmem:[#allocation2 + $0xb80] sm:$0xff]
    %v6881 = vld [vmem:[#allocation2 + $0xb88] sm:$0xff]
    %v6882 = vld [vmem:[#allocation2 + $0xb90] sm:$0xff]
    %v6883 = vld [vmem:[#allocation2 + $0xb98] sm:$0xff]
    %v6884 = vld [vmem:[#allocation2 + $0xba0] sm:$0xff]
    %v6885 = vld [vmem:[#allocation2 + $0xba8] sm:$0xff]
    %v6886 = vld [vmem:[#allocation2 + $0xbb0] sm:$0xff]
    %v6887 = vld [vmem:[#allocation2 + $0xbb8] sm:$0xff]
    %v6888 = vld [vmem:[#allocation2 + $0xbc0] sm:$0xff]
    %v6889 = vld [vmem:[#allocation2 + $0xbc8] sm:$0xff]
    %v6890 = vld [vmem:[#allocation2 + $0xbd0] sm:$0xff]
    %v6891 = vld [vmem:[#allocation2 + $0xbd8] sm:$0xff]
    %v6892 = vld [vmem:[#allocation2 + $0xbe0] sm:$0xff]
    %v6893 = vld [vmem:[#allocation2 + $0xbe8] sm:$0xff]
    %v6894 = vld [vmem:[#allocation2 + $0xbf0] sm:$0xff]
    %v6895 = vld [vmem:[#allocation2 + $0xbf8] sm:$0xff]
    %v6896 = vld [vmem:[#allocation2 + $0xc00] sm:$0xff]
    %v6897 = vld [vmem:[#allocation2 + $0xc08] sm:$0xff]
    %v6898 = vld [vmem:[#allocation2 + $0xc10] sm:$0xff]
    %v6899 = vld [vmem:[#allocation2 + $0xc18] sm:$0xff]
    %v6900 = vld [vmem:[#allocation2 + $0xc20] sm:$0xff]
    %v6901 = vld [vmem:[#allocation2 + $0xc28] sm:$0xff]
    %v6902 = vld [vmem:[#allocation2 + $0xc30] sm:$0xff]
    %v6903 = vld [vmem:[#allocation2 + $0xc38] sm:$0xff]
    %v6904 = vld [vmem:[#allocation2 + $0xc40] sm:$0xff]
    %v6905 = vld [vmem:[#allocation2 + $0xc48] sm:$0xff]
    %v6906 = vld [vmem:[#allocation2 + $0xc50] sm:$0xff]
    %v6907 = vld [vmem:[#allocation2 + $0xc58] sm:$0xff]
    %v6908 = vld [vmem:[#allocation2 + $0xc60] sm:$0xff]
    %v6909 = vld [vmem:[#allocation2 + $0xc68] sm:$0xff]
    %v6910 = vld [vmem:[#allocation2 + $0xc70] sm:$0xff]
    %v6911 = vld [vmem:[#allocation2 + $0xc78] sm:$0xff]
    %v6912 = vld [vmem:[#allocation2 + $0xc80] sm:$0xff]
    %v6913 = vld [vmem:[#allocation2 + $0xc88] sm:$0xff]
    %v6914 = vld [vmem:[#allocation2 + $0xc90] sm:$0xff]
    %v6915 = vld [vmem:[#allocation2 + $0xc98] sm:$0xff]
    %v6916 = vld [vmem:[#allocation2 + $0xca0] sm:$0xff]
    %v6917 = vld [vmem:[#allocation2 + $0xca8] sm:$0xff]
    %v6918 = vld [vmem:[#allocation2 + $0xcb0] sm:$0xff]
    %v6919 = vld [vmem:[#allocation2 + $0xcb8] sm:$0xff]
    %v6920 = vld [vmem:[#allocation2 + $0xcc0] sm:$0xff]
    %v6921 = vld [vmem:[#allocation2 + $0xcc8] sm:$0xff]
    %v6922 = vld [vmem:[#allocation2 + $0xcd0] sm:$0xff]
    %v6923 = vld [vmem:[#allocation2 + $0xcd8] sm:$0xff]
    %v6924 = vld [vmem:[#allocation2 + $0xce0] sm:$0xff]
    %v6925 = vld [vmem:[#allocation2 + $0xce8] sm:$0xff]
    %v6926 = vld [vmem:[#allocation2 + $0xcf0] sm:$0xff]
    %v6927 = vld [vmem:[#allocation2 + $0xcf8] sm:$0xff]
    %v6928 = vld [vmem:[#allocation2 + $0xd00] sm:$0xff]
    %v6929 = vld [vmem:[#allocation2 + $0xd08] sm:$0xff]
    %v6930 = vld [vmem:[#allocation2 + $0xd10] sm:$0xff]
    %v6931 = vld [vmem:[#allocation2 + $0xd18] sm:$0xff]
    %v6932 = vld [vmem:[#allocation2 + $0xd20] sm:$0xff]
    %v6933 = vld [vmem:[#allocation2 + $0xd28] sm:$0xff]
    %v6934 = vld [vmem:[#allocation2 + $0xd30] sm:$0xff]
    %v6935 = vld [vmem:[#allocation2 + $0xd38] sm:$0xff]
    %v6936 = vld [vmem:[#allocation2 + $0xd40] sm:$0xff]
    %v6937 = vld [vmem:[#allocation2 + $0xd48] sm:$0xff]
    %v6938 = vld [vmem:[#allocation2 + $0xd50] sm:$0xff]
    %v6939 = vld [vmem:[#allocation2 + $0xd58] sm:$0xff]
    %v6940 = vld [vmem:[#allocation2 + $0xd60] sm:$0xff]
    %v6941 = vld [vmem:[#allocation2 + $0xd68] sm:$0xff]
    %v6942 = vld [vmem:[#allocation2 + $0xd70] sm:$0xff]
    %v6943 = vld [vmem:[#allocation2 + $0xd78] sm:$0xff]
    %v6944 = vld [vmem:[#allocation2 + $0xd80] sm:$0xff]
    %v6945 = vld [vmem:[#allocation2 + $0xd88] sm:$0xff]
    %v6946 = vld [vmem:[#allocation2 + $0xd90] sm:$0xff]
    %v6947 = vld [vmem:[#allocation2 + $0xd98] sm:$0xff]
    %v6948 = vld [vmem:[#allocation2 + $0xda0] sm:$0xff]
    %v6949 = vld [vmem:[#allocation2 + $0xda8] sm:$0xff]
    %v6950 = vld [vmem:[#allocation2 + $0xdb0] sm:$0xff]
    %v6951 = vld [vmem:[#allocation2 + $0xdb8] sm:$0xff]
    %v6952 = vld [vmem:[#allocation2 + $0xdc0] sm:$0xff]
    %v6953 = vld [vmem:[#allocation2 + $0xdc8] sm:$0xff]
    %v6954 = vld [vmem:[#allocation2 + $0xdd0] sm:$0xff]
    %v6955 = vld [vmem:[#allocation2 + $0xdd8] sm:$0xff]
    %v6956 = vld [vmem:[#allocation2 + $0xde0] sm:$0xff]
    %v6957 = vld [vmem:[#allocation2 + $0xde8] sm:$0xff]
    %v6958 = vld [vmem:[#allocation2 + $0xdf0] sm:$0xff]
    %v6959 = vld [vmem:[#allocation2 + $0xdf8] sm:$0xff]
    %v6960 = vld [vmem:[#allocation2 + $0xe00] sm:$0xff]
    %v6961 = vld [vmem:[#allocation2 + $0xe08] sm:$0xff]
    %v6962 = vld [vmem:[#allocation2 + $0xe10] sm:$0xff]
    %v6963 = vld [vmem:[#allocation2 + $0xe18] sm:$0xff]
    %v6964 = vld [vmem:[#allocation2 + $0xe20] sm:$0xff]
    %v6965 = vld [vmem:[#allocation2 + $0xe28] sm:$0xff]
    %v6966 = vld [vmem:[#allocation2 + $0xe30] sm:$0xff]
    %v6967 = vld [vmem:[#allocation2 + $0xe38] sm:$0xff]
    %v6968 = vld [vmem:[#allocation2 + $0xe40] sm:$0xff]
    %v6969 = vld [vmem:[#allocation2 + $0xe48] sm:$0xff]
    %v6970 = vld [vmem:[#allocation2 + $0xe50] sm:$0xff]
    %v6971 = vld [vmem:[#allocation2 + $0xe58] sm:$0xff]
    %v6972 = vld [vmem:[#allocation2 + $0xe60] sm:$0xff]
    %v6973 = vld [vmem:[#allocation2 + $0xe68] sm:$0xff]
    %v6974 = vld [vmem:[#allocation2 + $0xe70] sm:$0xff]
    %v6975 = vld [vmem:[#allocation2 + $0xe78] sm:$0xff]
    %v6976 = vld [vmem:[#allocation2 + $0xe80] sm:$0xff]
    %v6977 = vld [vmem:[#allocation2 + $0xe88] sm:$0xff]
    %v6978 = vld [vmem:[#allocation2 + $0xe90] sm:$0xff]
    %v6979 = vld [vmem:[#allocation2 + $0xe98] sm:$0xff]
    %v6980 = vld [vmem:[#allocation2 + $0xea0] sm:$0xff]
    %v6981 = vld [vmem:[#allocation2 + $0xea8] sm:$0xff]
    %v6982 = vld [vmem:[#allocation2 + $0xeb0] sm:$0xff]
    %v6983 = vld [vmem:[#allocation2 + $0xeb8] sm:$0xff]
    %v6984 = vld [vmem:[#allocation2 + $0xec0] sm:$0xff]
    %v6985 = vld [vmem:[#allocation2 + $0xec8] sm:$0xff]
    %v6986 = vld [vmem:[#allocation2 + $0xed0] sm:$0xff]
    %v6987 = vld [vmem:[#allocation2 + $0xed8] sm:$0xff]
    %v6988 = vld [vmem:[#allocation2 + $0xee0] sm:$0xff]
    %v6989 = vld [vmem:[#allocation2 + $0xee8] sm:$0xff]
    %v6990 = vld [vmem:[#allocation2 + $0xef0] sm:$0xff]
    %v6991 = vld [vmem:[#allocation2 + $0xef8] sm:$0xff]
    %v6992 = vld [vmem:[#allocation2 + $0xf00] sm:$0xff]
    %v6993 = vld [vmem:[#allocation2 + $0xf08] sm:$0xff]
    %v6994 = vld [vmem:[#allocation2 + $0xf10] sm:$0xff]
    %v6995 = vld [vmem:[#allocation2 + $0xf18] sm:$0xff]
    %v6996 = vld [vmem:[#allocation2 + $0xf20] sm:$0xff]
    %v6997 = vld [vmem:[#allocation2 + $0xf28] sm:$0xff]
    %v6998 = vld [vmem:[#allocation2 + $0xf30] sm:$0xff]
    %v6999 = vld [vmem:[#allocation2 + $0xf38] sm:$0xff]
    %v7000 = vld [vmem:[#allocation2 + $0xf40] sm:$0xff]
    %v7001 = vld [vmem:[#allocation2 + $0xf48] sm:$0xff]
    %v7002 = vld [vmem:[#allocation2 + $0xf50] sm:$0xff]
    %v7003 = vld [vmem:[#allocation2 + $0xf58] sm:$0xff]
    %v7004 = vld [vmem:[#allocation2 + $0xf60] sm:$0xff]
    %v7005 = vld [vmem:[#allocation2 + $0xf68] sm:$0xff]
    %v7006 = vld [vmem:[#allocation2 + $0xf70] sm:$0xff]
    %v7007 = vld [vmem:[#allocation2 + $0xf78] sm:$0xff]
    %v7008 = vld [vmem:[#allocation2 + $0xf80] sm:$0xff]
    %v7009 = vld [vmem:[#allocation2 + $0xf88] sm:$0xff]
    %v7010 = vld [vmem:[#allocation2 + $0xf90] sm:$0xff]
    %v7011 = vld [vmem:[#allocation2 + $0xf98] sm:$0xff]
    %v7012 = vld [vmem:[#allocation2 + $0xfa0] sm:$0xff]
    %v7013 = vld [vmem:[#allocation2 + $0xfa8] sm:$0xff]
    %v7014 = vld [vmem:[#allocation2 + $0xfb0] sm:$0xff]
    %v7015 = vld [vmem:[#allocation2 + $0xfb8] sm:$0xff]
    %v7016 = vld [vmem:[#allocation2 + $0xfc0] sm:$0xff]
    %v7017 = vld [vmem:[#allocation2 + $0xfc8] sm:$0xff]
    %v7018 = vld [vmem:[#allocation2 + $0xfd0] sm:$0xff]
    %v7019 = vld [vmem:[#allocation2 + $0xfd8] sm:$0xff]
    %v7020 = vld [vmem:[#allocation2 + $0xfe0] sm:$0xff]
    %v7021 = vld [vmem:[#allocation2 + $0xfe8] sm:$0xff]
    %v7022 = vld [vmem:[#allocation2 + $0xff0] sm:$0xff]
    %v7023 = vld [vmem:[#allocation2 + $0xff8] sm:$0xff]
    %v7024 = vld [vmem:[#allocation2 + $0x1000] sm:$0xff]
    %v7025 = vld [vmem:[#allocation2 + $0x1008] sm:$0xff]
    %v7026 = vld [vmem:[#allocation2 + $0x1010] sm:$0xff]
    %v7027 = vld [vmem:[#allocation2 + $0x1018] sm:$0xff]
    %v7028 = vld [vmem:[#allocation2 + $0x1020] sm:$0xff]
    %v7029 = vld [vmem:[#allocation2 + $0x1028] sm:$0xff]
    %v7030 = vld [vmem:[#allocation2 + $0x1030] sm:$0xff]
    %v7031 = vld [vmem:[#allocation2 + $0x1038] sm:$0xff]
    %v7032 = vld [vmem:[#allocation2 + $0x1040] sm:$0xff]
    %v7033 = vld [vmem:[#allocation2 + $0x1048] sm:$0xff]
    %v7034 = vld [vmem:[#allocation2 + $0x1050] sm:$0xff]
    %v7035 = vld [vmem:[#allocation2 + $0x1058] sm:$0xff]
    %v7036 = vld [vmem:[#allocation2 + $0x1060] sm:$0xff]
    %v7037 = vld [vmem:[#allocation2 + $0x1068] sm:$0xff]
    %v7038 = vld [vmem:[#allocation2 + $0x1070] sm:$0xff]
    %v7039 = vld [vmem:[#allocation2 + $0x1078] sm:$0xff]
    %v7040 = vld [vmem:[#allocation2 + $0x1080] sm:$0xff]
    %v7041 = vld [vmem:[#allocation2 + $0x1088] sm:$0xff]
    %v7042 = vld [vmem:[#allocation2 + $0x1090] sm:$0xff]
    %v7043 = vld [vmem:[#allocation2 + $0x1098] sm:$0xff]
    %v7044 = vld [vmem:[#allocation2 + $0x10a0] sm:$0xff]
    %v7045 = vld [vmem:[#allocation2 + $0x10a8] sm:$0xff]
    %v7046 = vld [vmem:[#allocation2 + $0x10b0] sm:$0xff]
    %v7047 = vld [vmem:[#allocation2 + $0x10b8] sm:$0xff]
    %v7048 = vld [vmem:[#allocation2 + $0x10c0] sm:$0xff]
    %v7049 = vld [vmem:[#allocation2 + $0x10c8] sm:$0xff]
    %v7050 = vld [vmem:[#allocation2 + $0x10d0] sm:$0xff]
    %v7051 = vld [vmem:[#allocation2 + $0x10d8] sm:$0xff]
    %v7052 = vld [vmem:[#allocation2 + $0x10e0] sm:$0xff]
    %v7053 = vld [vmem:[#allocation2 + $0x10e8] sm:$0xff]
    %v7054 = vld [vmem:[#allocation2 + $0x10f0] sm:$0xff]
    %v7055 = vld [vmem:[#allocation2 + $0x10f8] sm:$0xff]
    %v7056 = vld [vmem:[%s16] sm:$0xff]
    %v7058 = vlaneseq
    %v7059 = vshrl.u32 %v7058, 7
    %v7060 = vsub.s32 0, %v7059
    %v7061 = vrot.slane %v7056, %v7060
    %v7062 = vlaneseq
    %v7063 = vshrl.u32 %v7062, 7
    %v7064 = vsub.s32 1, %v7063
    %v7065 = vrot.slane %v7056, %v7064
    %v7066 = vlaneseq
    %v7067 = vshrl.u32 %v7066, 7
    %v7068 = vsub.s32 2, %v7067
    %v7069 = vrot.slane %v7056, %v7068
    %v7070 = vlaneseq
    %v7071 = vshrl.u32 %v7070, 7
    %v7072 = vsub.s32 3, %v7071
    %v7073 = vrot.slane %v7056, %v7072
    %v7074 = vlaneseq
    %v7075 = vshrl.u32 %v7074, 7
    %v7076 = vsub.s32 4, %v7075
    %v7077 = vrot.slane %v7056, %v7076
    %v7078 = vlaneseq
    %v7079 = vshrl.u32 %v7078, 7
    %v7080 = vsub.s32 5, %v7079
    %v7081 = vrot.slane %v7056, %v7080
    %v7082 = vlaneseq
    %v7083 = vshrl.u32 %v7082, 7
    %v7084 = vsub.s32 6, %v7083
    %v7085 = vrot.slane %v7056, %v7084
    %v7086 = vlaneseq
    %v7087 = vshrl.u32 %v7086, 7
    %v7088 = vsub.s32 7, %v7087
    %v7089 = vrot.slane %v7056, %v7088
    %v7099 = vsel %vm3089, %v6507, 0
    %7101 = vmatprep.subr.mxu0 %v6633
    %7102 = vmatpush1.msra.mxu0 %v6632
    %7103 = vmatprep.subr.mxu0 %v6625
    %7104 = vmatpush1.msra.mxu0 %v6624
    %7105 = vmatprep.subr.mxu0 %v6617
    %7106 = vmatpush1.msra.mxu0 %v6616
    %7107 = vmatprep.subr.mxu0 %v6609
    %7108 = vmatpush1.msra.mxu0 %v6608
    %7109 = vmatprep.subr.mxu0 %v6601
    %7110 = vmatpush1.msra.mxu0 %v6600
    %7111 = vmatprep.subr.mxu0 %v6593
    %7112 = vmatpush1.msra.mxu0 %v6592
    %7113 = vmatprep.subr.mxu0 %v6585
    %7114 = vmatpush1.msra.mxu0 %v6584
    %7115 = vmatprep.subr.mxu0 %v6577
    %7116 = vmatpush1.msra.mxu0 %v6576
    %7117 = vmatprep.subr.mxu0 %v6569
    %7118 = vmatpush1.msra.mxu0 %v6568
    %7119 = vmatprep.subr.mxu0 %v6561
    %7120 = vmatpush1.msra.mxu0 %v6560
    %7121 = vmatprep.subr.mxu0 %v6553
    %7122 = vmatpush1.msra.mxu0 %v6552
    %7123 = vmatprep.subr.mxu0 %v6545
    %7124 = vmatpush1.msra.mxu0 %v6544
    %7125 = vmatprep.subr.mxu0 %v6537
    %7126 = vmatpush1.msra.mxu0 %v6536
    %7127 = vmatprep.subr.mxu0 %v6529
    %7128 = vmatpush1.msra.mxu0 %v6528
    %7129 = vmatprep.subr.mxu0 %v6521
    %7130 = vmatpush1.msra.mxu0 %v6520
    %7131 = vmatprep.subr.mxu0 %v6513
    %7132 = vmatpush1.msra.mxu0 %v6512
    %7133 = vmatprep.subr.mxu0 %v6761
    %7134 = vmatpush2.msra.mxu0 %v6760
    %7135 = vmatprep.subr.mxu0 %v6753
    %7136 = vmatpush2.msra.mxu0 %v6752
    %7137 = vmatprep.subr.mxu0 %v6745
    %7138 = vmatpush2.msra.mxu0 %v6744
    %7139 = vmatprep.subr.mxu0 %v6737
    %7140 = vmatpush2.msra.mxu0 %v6736
    %7141 = vmatprep.subr.mxu0 %v6729
    %7142 = vmatpush2.msra.mxu0 %v6728
    %7143 = vmatprep.subr.mxu0 %v6721
    %7144 = vmatpush2.msra.mxu0 %v6720
    %7145 = vmatprep.subr.mxu0 %v6713
    %7146 = vmatpush2.msra.mxu0 %v6712
    %7147 = vmatprep.subr.mxu0 %v6705
    %7148 = vmatpush2.msra.mxu0 %v6704
    %7149 = vmatprep.subr.mxu0 %v6697
    %7150 = vmatpush2.msra.mxu0 %v6696
    %7151 = vmatprep.subr.mxu0 %v6689
    %7152 = vmatpush2.msra.mxu0 %v6688
    %7153 = vmatprep.subr.mxu0 %v6681
    %7154 = vmatpush2.msra.mxu0 %v6680
    %7155 = vmatprep.subr.mxu0 %v6673
    %7156 = vmatpush2.msra.mxu0 %v6672
    %7157 = vmatprep.subr.mxu0 %v6665
    %7158 = vmatpush2.msra.mxu0 %v6664
    %7159 = vmatprep.subr.mxu0 %v6657
    %7160 = vmatpush2.msra.mxu0 %v6656
    %7161 = vmatprep.subr.mxu0 %v6649
    %7162 = vmatpush2.msra.mxu0 %v6648
    %7163 = vmatprep.subr.mxu0 %v6641
    %7164 = vmatpush2.msra.mxu0 %v6640
    %7165 = vmatprep.mubr.f32.mxu0 %v6504
    %7166 = vmatmul.mubr.f32.gmra.mxu0 %v6503
    %v7167 = vpop.f32.mrf.mxu0
    %v7168 = vadd.f32 %v7061, %v7167
    %v7169 = vpop.f32.mrf.mxu0
    %v7170 = vadd.f32 %v7065, %v7169
    %7171 = vdwg.mxu0
    %7172 = vmatprep.subr.mxu0 %v6889
    %7173 = vmatpush1.msra.mxu0 %v6888
    %7174 = vmatprep.subr.mxu0 %v6881
    %7175 = vmatpush1.msra.mxu0 %v6880
    %7176 = vmatprep.subr.mxu0 %v6873
    %7177 = vmatpush1.msra.mxu0 %v6872
    %7178 = vmatprep.subr.mxu0 %v6865
    %7179 = vmatpush1.msra.mxu0 %v6864
    %7180 = vmatprep.subr.mxu0 %v6857
    %7181 = vmatpush1.msra.mxu0 %v6856
    %7182 = vmatprep.subr.mxu0 %v6849
    %7183 = vmatpush1.msra.mxu0 %v6848
    %7184 = vmatprep.subr.mxu0 %v6841
    %7185 = vmatpush1.msra.mxu0 %v6840
    %7186 = vmatprep.subr.mxu0 %v6833
    %7187 = vmatpush1.msra.mxu0 %v6832
    %7188 = vmatprep.subr.mxu0 %v6825
    %7189 = vmatpush1.msra.mxu0 %v6824
    %7190 = vmatprep.subr.mxu0 %v6817
    %7191 = vmatpush1.msra.mxu0 %v6816
    %7192 = vmatprep.subr.mxu0 %v6809
    %7193 = vmatpush1.msra.mxu0 %v6808
    %7194 = vmatprep.subr.mxu0 %v6801
    %7195 = vmatpush1.msra.mxu0 %v6800
    %7196 = vmatprep.subr.mxu0 %v6793
    %7197 = vmatpush1.msra.mxu0 %v6792
    %7198 = vmatprep.subr.mxu0 %v6785
    %7199 = vmatpush1.msra.mxu0 %v6784
    %7200 = vmatprep.subr.mxu0 %v6777
    %7201 = vmatpush1.msra.mxu0 %v6776
    %7202 = vmatprep.subr.mxu0 %v6769
    %7203 = vmatpush1.msra.mxu0 %v6768
    %7204 = vmatprep.subr.mxu0 %v7017
    %7205 = vmatpush2.msra.mxu0 %v7016
    %7206 = vmatprep.subr.mxu0 %v7009
    %7207 = vmatpush2.msra.mxu0 %v7008
    %7208 = vmatprep.subr.mxu0 %v7001
    %7209 = vmatpush2.msra.mxu0 %v7000
    %7210 = vmatprep.subr.mxu0 %v6993
    %7211 = vmatpush2.msra.mxu0 %v6992
    %7212 = vmatprep.subr.mxu0 %v6985
    %7213 = vmatpush2.msra.mxu0 %v6984
    %7214 = vmatprep.subr.mxu0 %v6977
    %7215 = vmatpush2.msra.mxu0 %v6976
    %7216 = vmatprep.subr.mxu0 %v6969
    %7217 = vmatpush2.msra.mxu0 %v6968
    %7218 = vmatprep.subr.mxu0 %v6961
    %7219 = vmatpush2.msra.mxu0 %v6960
    %7220 = vmatprep.subr.mxu0 %v6953
    %7221 = vmatpush2.msra.mxu0 %v6952
    %7222 = vmatprep.subr.mxu0 %v6945
    %7223 = vmatpush2.msra.mxu0 %v6944
    %7224 = vmatprep.subr.mxu0 %v6937
    %7225 = vmatpush2.msra.mxu0 %v6936
    %7226 = vmatprep.subr.mxu0 %v6929
    %7227 = vmatpush2.msra.mxu0 %v6928
    %7228 = vmatprep.subr.mxu0 %v6921
    %7229 = vmatpush2.msra.mxu0 %v6920
    %7230 = vmatprep.subr.mxu0 %v6913
    %7231 = vmatpush2.msra.mxu0 %v6912
    %7232 = vmatprep.subr.mxu0 %v6905
    %7233 = vmatpush2.msra.mxu0 %v6904
    %7234 = vmatprep.subr.mxu0 %v6897
    %7235 = vmatpush2.msra.mxu0 %v6896
    %7236 = vmatprep.mubr.f32.mxu0 %v6506
    %7237 = vmatmul.mubr.f32.gmra.mxu0 %v6505
    %v7238 = vpop.f32.mrf.mxu0
    %v7239 = vadd.f32 %v7168, %v7238
    %v7240 = vpop.f32.mrf.mxu0
    %v7241 = vadd.f32 %v7170, %v7240
    %7242 = vdwg.mxu0
    %7243 = vmatprep.subr.mxu0 0.0
    %7244 = vmatpush1.msra.mxu0 0.0
    %7245 = vmatprep.subr.mxu0 0.0
    %7246 = vmatpush1.msra.mxu0 0.0
    %7247 = vmatprep.subr.mxu0 0.0
    %7248 = vmatpush1.msra.mxu0 0.0
    %7249 = vmatprep.subr.mxu0 0.0
    %7250 = vmatpush1.msra.mxu0 0.0
    %7251 = vmatprep.subr.mxu0 0.0
    %7252 = vmatpush1.msra.mxu0 0.0
    %7253 = vmatprep.subr.mxu0 0.0
    %7254 = vmatpush1.msra.mxu0 0.0
    %7255 = vmatprep.subr.mxu0 0.0
    %7256 = vmatpush1.msra.mxu0 0.0
    %7257 = vmatprep.subr.mxu0 0.0
    %7258 = vmatpush1.msra.mxu0 0.0
    %7259 = vmatprep.subr.mxu0 0.0
    %7260 = vmatpush1.msra.mxu0 0.0
    %7261 = vmatprep.subr.mxu0 0.0
    %7262 = vmatpush1.msra.mxu0 0.0
    %7263 = vmatprep.subr.mxu0 0.0
    %7264 = vmatpush1.msra.mxu0 0.0
    %7265 = vmatprep.subr.mxu0 0.0
    %7266 = vmatpush1.msra.mxu0 0.0
    %7267 = vmatprep.subr.mxu0 %v7049
    %7268 = vmatpush1.msra.mxu0 %v7048
    %7269 = vmatprep.subr.mxu0 %v7041
    %7270 = vmatpush1.msra.mxu0 %v7040
    %7271 = vmatprep.subr.mxu0 %v7033
    %7272 = vmatpush1.msra.mxu0 %v7032
    %7273 = vmatprep.subr.mxu0 %v7025
    %7274 = vmatpush1.msra.mxu0 %v7024
    %7275 = vmatprep.subr.mxu0 0.0
    %7276 = vmatpush2.msra.mxu0 0.0
    %7277 = vmatprep.subr.mxu0 0.0
    %7278 = vmatpush2.msra.mxu0 0.0
    %7279 = vmatprep.subr.mxu0 0.0
    %7280 = vmatpush2.msra.mxu0 0.0
    %7281 = vmatprep.subr.mxu0 0.0
    %7282 = vmatpush2.msra.mxu0 0.0
    %7283 = vmatprep.subr.mxu0 0.0
    %7284 = vmatpush2.msra.mxu0 0.0
    %7285 = vmatprep.subr.mxu0 0.0
    %7286 = vmatpush2.msra.mxu0 0.0
    %7287 = vmatprep.subr.mxu0 0.0
    %7288 = vmatpush2.msra.mxu0 0.0
    %7289 = vmatprep.subr.mxu0 0.0
    %7290 = vmatpush2.msra.mxu0 0.0
    %7291 = vmatprep.subr.mxu0 0.0
    %7292 = vmatpush2.msra.mxu0 0.0
    %7293 = vmatprep.subr.mxu0 0.0
    %7294 = vmatpush2.msra.mxu0 0.0
    %7295 = vmatprep.subr.mxu0 0.0
    %7296 = vmatpush2.msra.mxu0 0.0
    %7297 = vmatprep.subr.mxu0 0.0
    %7298 = vmatpush2.msra.mxu0 0.0
    %7299 = vmatprep.subr.mxu0 0.0
    %7300 = vmatpush2.msra.mxu0 0.0
    %7301 = vmatprep.subr.mxu0 0.0
    %7302 = vmatpush2.msra.mxu0 0.0
    %7303 = vmatprep.subr.mxu0 0.0
    %7304 = vmatpush2.msra.mxu0 0.0
    %7305 = vmatprep.subr.mxu0 0.0
    %7306 = vmatpush2.msra.mxu0 0.0
    %7307 = vmatprep.mubr.f32.mxu0 0.0
    %7308 = vmatmul.mubr.f32.gmra.mxu0 %v7099
    %v7309 = vpop.f32.mrf.mxu0
    %v7310 = vadd.f32 %v7239, %v7309
    %v7311 = vpop.f32.mrf.mxu0
    %v7312 = vadd.f32 %v7241, %v7311
    %7313 = vdwg.mxu0
    %7314 = vmatprep.subr.mxu0 %v6635
    %7315 = vmatpush1.msra.mxu0 %v6634
    %7316 = vmatprep.subr.mxu0 %v6627
    %7317 = vmatpush1.msra.mxu0 %v6626
    %7318 = vmatprep.subr.mxu0 %v6619
    %7319 = vmatpush1.msra.mxu0 %v6618
    %7320 = vmatprep.subr.mxu0 %v6611
    %7321 = vmatpush1.msra.mxu0 %v6610
    %7322 = vmatprep.subr.mxu0 %v6603
    %7323 = vmatpush1.msra.mxu0 %v6602
    %7324 = vmatprep.subr.mxu0 %v6595
    %7325 = vmatpush1.msra.mxu0 %v6594
    %7326 = vmatprep.subr.mxu0 %v6587
    %7327 = vmatpush1.msra.mxu0 %v6586
    %7328 = vmatprep.subr.mxu0 %v6579
    %7329 = vmatpush1.msra.mxu0 %v6578
    %7330 = vmatprep.subr.mxu0 %v6571
    %7331 = vmatpush1.msra.mxu0 %v6570
    %7332 = vmatprep.subr.mxu0 %v6563
    %7333 = vmatpush1.msra.mxu0 %v6562
    %7334 = vmatprep.subr.mxu0 %v6555
    %7335 = vmatpush1.msra.mxu0 %v6554
    %7336 = vmatprep.subr.mxu0 %v6547
    %7337 = vmatpush1.msra.mxu0 %v6546
    %7338 = vmatprep.subr.mxu0 %v6539
    %7339 = vmatpush1.msra.mxu0 %v6538
    %7340 = vmatprep.subr.mxu0 %v6531
    %7341 = vmatpush1.msra.mxu0 %v6530
    %7342 = vmatprep.subr.mxu0 %v6523
    %7343 = vmatpush1.msra.mxu0 %v6522
    %7344 = vmatprep.subr.mxu0 %v6515
    %7345 = vmatpush1.msra.mxu0 %v6514
    %7346 = vmatprep.subr.mxu0 %v6763
    %7347 = vmatpush2.msra.mxu0 %v6762
    %7348 = vmatprep.subr.mxu0 %v6755
    %7349 = vmatpush2.msra.mxu0 %v6754
    %7350 = vmatprep.subr.mxu0 %v6747
    %7351 = vmatpush2.msra.mxu0 %v6746
    %7352 = vmatprep.subr.mxu0 %v6739
    %7353 = vmatpush2.msra.mxu0 %v6738
    %7354 = vmatprep.subr.mxu0 %v6731
    %7355 = vmatpush2.msra.mxu0 %v6730
    %7356 = vmatprep.subr.mxu0 %v6723
    %7357 = vmatpush2.msra.mxu0 %v6722
    %7358 = vmatprep.subr.mxu0 %v6715
    %7359 = vmatpush2.msra.mxu0 %v6714
    %7360 = vmatprep.subr.mxu0 %v6707
    %7361 = vmatpush2.msra.mxu0 %v6706
    %7362 = vmatprep.subr.mxu0 %v6699
    %7363 = vmatpush2.msra.mxu0 %v6698
    %7364 = vmatprep.subr.mxu0 %v6691
    %7365 = vmatpush2.msra.mxu0 %v6690
    %7366 = vmatprep.subr.mxu0 %v6683
    %7367 = vmatpush2.msra.mxu0 %v6682
    %7368 = vmatprep.subr.mxu0 %v6675
    %7369 = vmatpush2.msra.mxu0 %v6674
    %7370 = vmatprep.subr.mxu0 %v6667
    %7371 = vmatpush2.msra.mxu0 %v6666
    %7372 = vmatprep.subr.mxu0 %v6659
    %7373 = vmatpush2.msra.mxu0 %v6658
    %7374 = vmatprep.subr.mxu0 %v6651
    %7375 = vmatpush2.msra.mxu0 %v6650
    %7376 = vmatprep.subr.mxu0 %v6643
    %7377 = vmatpush2.msra.mxu0 %v6642
    %7378 = vmatprep.mubr.f32.mxu0 %v6504
    %7379 = vmatmul.mubr.f32.gmra.mxu0 %v6503
    %v7380 = vpop.f32.mrf.mxu0
    %v7381 = vadd.f32 %v7069, %v7380
    %v7382 = vpop.f32.mrf.mxu0
    %v7383 = vadd.f32 %v7073, %v7382
    %7384 = vdwg.mxu0
    %7385 = vmatprep.subr.mxu0 %v6891
    %7386 = vmatpush1.msra.mxu0 %v6890
    %7387 = vmatprep.subr.mxu0 %v6883
    %7388 = vmatpush1.msra.mxu0 %v6882
    %7389 = vmatprep.subr.mxu0 %v6875
    %7390 = vmatpush1.msra.mxu0 %v6874
    %7391 = vmatprep.subr.mxu0 %v6867
    %7392 = vmatpush1.msra.mxu0 %v6866
    %7393 = vmatprep.subr.mxu0 %v6859
    %7394 = vmatpush1.msra.mxu0 %v6858
    %7395 = vmatprep.subr.mxu0 %v6851
    %7396 = vmatpush1.msra.mxu0 %v6850
    %7397 = vmatprep.subr.mxu0 %v6843
    %7398 = vmatpush1.msra.mxu0 %v6842
    %7399 = vmatprep.subr.mxu0 %v6835
    %7400 = vmatpush1.msra.mxu0 %v6834
    %7401 = vmatprep.subr.mxu0 %v6827
    %7402 = vmatpush1.msra.mxu0 %v6826
    %7403 = vmatprep.subr.mxu0 %v6819
    %7404 = vmatpush1.msra.mxu0 %v6818
    %7405 = vmatprep.subr.mxu0 %v6811
    %7406 = vmatpush1.msra.mxu0 %v6810
    %7407 = vmatprep.subr.mxu0 %v6803
    %7408 = vmatpush1.msra.mxu0 %v6802
    %7409 = vmatprep.subr.mxu0 %v6795
    %7410 = vmatpush1.msra.mxu0 %v6794
    %7411 = vmatprep.subr.mxu0 %v6787
    %7412 = vmatpush1.msra.mxu0 %v6786
    %7413 = vmatprep.subr.mxu0 %v6779
    %7414 = vmatpush1.msra.mxu0 %v6778
    %7415 = vmatprep.subr.mxu0 %v6771
    %7416 = vmatpush1.msra.mxu0 %v6770
    %7417 = vmatprep.subr.mxu0 %v7019
    %7418 = vmatpush2.msra.mxu0 %v7018
    %7419 = vmatprep.subr.mxu0 %v7011
    %7420 = vmatpush2.msra.mxu0 %v7010
    %7421 = vmatprep.subr.mxu0 %v7003
    %7422 = vmatpush2.msra.mxu0 %v7002
    %7423 = vmatprep.subr.mxu0 %v6995
    %7424 = vmatpush2.msra.mxu0 %v6994
    %7425 = vmatprep.subr.mxu0 %v6987
    %7426 = vmatpush2.msra.mxu0 %v6986
    %7427 = vmatprep.subr.mxu0 %v6979
    %7428 = vmatpush2.msra.mxu0 %v6978
    %7429 = vmatprep.subr.mxu0 %v6971
    %7430 = vmatpush2.msra.mxu0 %v6970
    %7431 = vmatprep.subr.mxu0 %v6963
    %7432 = vmatpush2.msra.mxu0 %v6962
    %7433 = vmatprep.subr.mxu0 %v6955
    %7434 = vmatpush2.msra.mxu0 %v6954
    %7435 = vmatprep.subr.mxu0 %v6947
    %7436 = vmatpush2.msra.mxu0 %v6946
    %7437 = vmatprep.subr.mxu0 %v6939
    %7438 = vmatpush2.msra.mxu0 %v6938
    %7439 = vmatprep.subr.mxu0 %v6931
    %7440 = vmatpush2.msra.mxu0 %v6930
    %7441 = vmatprep.subr.mxu0 %v6923
    %7442 = vmatpush2.msra.mxu0 %v6922
    %7443 = vmatprep.subr.mxu0 %v6915
    %7444 = vmatpush2.msra.mxu0 %v6914
    %7445 = vmatprep.subr.mxu0 %v6907
    %7446 = vmatpush2.msra.mxu0 %v6906
    %7447 = vmatprep.subr.mxu0 %v6899
    %7448 = vmatpush2.msra.mxu0 %v6898
    %7449 = vmatprep.mubr.f32.mxu0 %v6506
    %7450 = vmatmul.mubr.f32.gmra.mxu0 %v6505
    %v7451 = vpop.f32.mrf.mxu0
    %v7452 = vadd.f32 %v7381, %v7451
    %v7453 = vpop.f32.mrf.mxu0
    %v7454 = vadd.f32 %v7383, %v7453
    %7455 = vdwg.mxu0
    %7456 = vmatprep.subr.mxu0 0.0
    %7457 = vmatpush1.msra.mxu0 0.0
    %7458 = vmatprep.subr.mxu0 0.0
    %7459 = vmatpush1.msra.mxu0 0.0
    %7460 = vmatprep.subr.mxu0 0.0
    %7461 = vmatpush1.msra.mxu0 0.0
    %7462 = vmatprep.subr.mxu0 0.0
    %7463 = vmatpush1.msra.mxu0 0.0
    %7464 = vmatprep.subr.mxu0 0.0
    %7465 = vmatpush1.msra.mxu0 0.0
    %7466 = vmatprep.subr.mxu0 0.0
    %7467 = vmatpush1.msra.mxu0 0.0
    %7468 = vmatprep.subr.mxu0 0.0
    %7469 = vmatpush1.msra.mxu0 0.0
    %7470 = vmatprep.subr.mxu0 0.0
    %7471 = vmatpush1.msra.mxu0 0.0
    %7472 = vmatprep.subr.mxu0 0.0
    %7473 = vmatpush1.msra.mxu0 0.0
    %7474 = vmatprep.subr.mxu0 0.0
    %7475 = vmatpush1.msra.mxu0 0.0
    %7476 = vmatprep.subr.mxu0 0.0
    %7477 = vmatpush1.msra.mxu0 0.0
    %7478 = vmatprep.subr.mxu0 0.0
    %7479 = vmatpush1.msra.mxu0 0.0
    %7480 = vmatprep.subr.mxu0 %v7051
    %7481 = vmatpush1.msra.mxu0 %v7050
    %7482 = vmatprep.subr.mxu0 %v7043
    %7483 = vmatpush1.msra.mxu0 %v7042
    %7484 = vmatprep.subr.mxu0 %v7035
    %7485 = vmatpush1.msra.mxu0 %v7034
    %7486 = vmatprep.subr.mxu0 %v7027
    %7487 = vmatpush1.msra.mxu0 %v7026
    %7488 = vmatprep.subr.mxu0 0.0
    %7489 = vmatpush2.msra.mxu0 0.0
    %7490 = vmatprep.subr.mxu0 0.0
    %7491 = vmatpush2.msra.mxu0 0.0
    %7492 = vmatprep.subr.mxu0 0.0
    %7493 = vmatpush2.msra.mxu0 0.0
    %7494 = vmatprep.subr.mxu0 0.0
    %7495 = vmatpush2.msra.mxu0 0.0
    %7496 = vmatprep.subr.mxu0 0.0
    %7497 = vmatpush2.msra.mxu0 0.0
    %7498 = vmatprep.subr.mxu0 0.0
    %7499 = vmatpush2.msra.mxu0 0.0
    %7500 = vmatprep.subr.mxu0 0.0
    %7501 = vmatpush2.msra.mxu0 0.0
    %7502 = vmatprep.subr.mxu0 0.0
    %7503 = vmatpush2.msra.mxu0 0.0
    %7504 = vmatprep.subr.mxu0 0.0
    %7505 = vmatpush2.msra.mxu0 0.0
    %7506 = vmatprep.subr.mxu0 0.0
    %7507 = vmatpush2.msra.mxu0 0.0
    %7508 = vmatprep.subr.mxu0 0.0
    %7509 = vmatpush2.msra.mxu0 0.0
    %7510 = vmatprep.subr.mxu0 0.0
    %7511 = vmatpush2.msra.mxu0 0.0
    %7512 = vmatprep.subr.mxu0 0.0
    %7513 = vmatpush2.msra.mxu0 0.0
    %7514 = vmatprep.subr.mxu0 0.0
    %7515 = vmatpush2.msra.mxu0 0.0
    %7516 = vmatprep.subr.mxu0 0.0
    %7517 = vmatpush2.msra.mxu0 0.0
    %7518 = vmatprep.subr.mxu0 0.0
    %7519 = vmatpush2.msra.mxu0 0.0
    %7520 = vmatprep.mubr.f32.mxu0 0.0
    %7521 = vmatmul.mubr.f32.gmra.mxu0 %v7099
    %v7522 = vpop.f32.mrf.mxu0
    %v7523 = vadd.f32 %v7452, %v7522
    %v7524 = vpop.f32.mrf.mxu0
    %v7525 = vadd.f32 %v7454, %v7524
    %7526 = vdwg.mxu0
    %7527 = vmatprep.subr.mxu0 %v6637
    %7528 = vmatpush1.msra.mxu0 %v6636
    %7529 = vmatprep.subr.mxu0 %v6629
    %7530 = vmatpush1.msra.mxu0 %v6628
    %7531 = vmatprep.subr.mxu0 %v6621
    %7532 = vmatpush1.msra.mxu0 %v6620
    %7533 = vmatprep.subr.mxu0 %v6613
    %7534 = vmatpush1.msra.mxu0 %v6612
    %7535 = vmatprep.subr.mxu0 %v6605
    %7536 = vmatpush1.msra.mxu0 %v6604
    %7537 = vmatprep.subr.mxu0 %v6597
    %7538 = vmatpush1.msra.mxu0 %v6596
    %7539 = vmatprep.subr.mxu0 %v6589
    %7540 = vmatpush1.msra.mxu0 %v6588
    %7541 = vmatprep.subr.mxu0 %v6581
    %7542 = vmatpush1.msra.mxu0 %v6580
    %7543 = vmatprep.subr.mxu0 %v6573
    %7544 = vmatpush1.msra.mxu0 %v6572
    %7545 = vmatprep.subr.mxu0 %v6565
    %7546 = vmatpush1.msra.mxu0 %v6564
    %7547 = vmatprep.subr.mxu0 %v6557
    %7548 = vmatpush1.msra.mxu0 %v6556
    %7549 = vmatprep.subr.mxu0 %v6549
    %7550 = vmatpush1.msra.mxu0 %v6548
    %7551 = vmatprep.subr.mxu0 %v6541
    %7552 = vmatpush1.msra.mxu0 %v6540
    %7553 = vmatprep.subr.mxu0 %v6533
    %7554 = vmatpush1.msra.mxu0 %v6532
    %7555 = vmatprep.subr.mxu0 %v6525
    %7556 = vmatpush1.msra.mxu0 %v6524
    %7557 = vmatprep.subr.mxu0 %v6517
    %7558 = vmatpush1.msra.mxu0 %v6516
    %7559 = vmatprep.subr.mxu0 %v6765
    %7560 = vmatpush2.msra.mxu0 %v6764
    %7561 = vmatprep.subr.mxu0 %v6757
    %7562 = vmatpush2.msra.mxu0 %v6756
    %7563 = vmatprep.subr.mxu0 %v6749
    %7564 = vmatpush2.msra.mxu0 %v6748
    %7565 = vmatprep.subr.mxu0 %v6741
    %7566 = vmatpush2.msra.mxu0 %v6740
    %7567 = vmatprep.subr.mxu0 %v6733
    %7568 = vmatpush2.msra.mxu0 %v6732
    %7569 = vmatprep.subr.mxu0 %v6725
    %7570 = vmatpush2.msra.mxu0 %v6724
    %7571 = vmatprep.subr.mxu0 %v6717
    %7572 = vmatpush2.msra.mxu0 %v6716
    %7573 = vmatprep.subr.mxu0 %v6709
    %7574 = vmatpush2.msra.mxu0 %v6708
    %7575 = vmatprep.subr.mxu0 %v6701
    %7576 = vmatpush2.msra.mxu0 %v6700
    %7577 = vmatprep.subr.mxu0 %v6693
    %7578 = vmatpush2.msra.mxu0 %v6692
    %7579 = vmatprep.subr.mxu0 %v6685
    %7580 = vmatpush2.msra.mxu0 %v6684
    %7581 = vmatprep.subr.mxu0 %v6677
    %7582 = vmatpush2.msra.mxu0 %v6676
    %7583 = vmatprep.subr.mxu0 %v6669
    %7584 = vmatpush2.msra.mxu0 %v6668
    %7585 = vmatprep.subr.mxu0 %v6661
    %7586 = vmatpush2.msra.mxu0 %v6660
    %7587 = vmatprep.subr.mxu0 %v6653
    %7588 = vmatpush2.msra.mxu0 %v6652
    %7589 = vmatprep.subr.mxu0 %v6645
    %7590 = vmatpush2.msra.mxu0 %v6644
    %7591 = vmatprep.mubr.f32.mxu0 %v6504
    %7592 = vmatmul.mubr.f32.gmra.mxu0 %v6503
    %v7593 = vpop.f32.mrf.mxu0
    %v7594 = vadd.f32 %v7077, %v7593
    %v7595 = vpop.f32.mrf.mxu0
    %v7596 = vadd.f32 %v7081, %v7595
    %7597 = vdwg.mxu0
    %7598 = vmatprep.subr.mxu0 %v6893
    %7599 = vmatpush1.msra.mxu0 %v6892
    %7600 = vmatprep.subr.mxu0 %v6885
    %7601 = vmatpush1.msra.mxu0 %v6884
    %7602 = vmatprep.subr.mxu0 %v6877
    %7603 = vmatpush1.msra.mxu0 %v6876
    %7604 = vmatprep.subr.mxu0 %v6869
    %7605 = vmatpush1.msra.mxu0 %v6868
    %7606 = vmatprep.subr.mxu0 %v6861
    %7607 = vmatpush1.msra.mxu0 %v6860
    %7608 = vmatprep.subr.mxu0 %v6853
    %7609 = vmatpush1.msra.mxu0 %v6852
    %7610 = vmatprep.subr.mxu0 %v6845
    %7611 = vmatpush1.msra.mxu0 %v6844
    %7612 = vmatprep.subr.mxu0 %v6837
    %7613 = vmatpush1.msra.mxu0 %v6836
    %7614 = vmatprep.subr.mxu0 %v6829
    %7615 = vmatpush1.msra.mxu0 %v6828
    %7616 = vmatprep.subr.mxu0 %v6821
    %7617 = vmatpush1.msra.mxu0 %v6820
    %7618 = vmatprep.subr.mxu0 %v6813
    %7619 = vmatpush1.msra.mxu0 %v6812
    %7620 = vmatprep.subr.mxu0 %v6805
    %7621 = vmatpush1.msra.mxu0 %v6804
    %7622 = vmatprep.subr.mxu0 %v6797
    %7623 = vmatpush1.msra.mxu0 %v6796
    %7624 = vmatprep.subr.mxu0 %v6789
    %7625 = vmatpush1.msra.mxu0 %v6788
    %7626 = vmatprep.subr.mxu0 %v6781
    %7627 = vmatpush1.msra.mxu0 %v6780
    %7628 = vmatprep.subr.mxu0 %v6773
    %7629 = vmatpush1.msra.mxu0 %v6772
    %7630 = vmatprep.subr.mxu0 %v7021
    %7631 = vmatpush2.msra.mxu0 %v7020
    %7632 = vmatprep.subr.mxu0 %v7013
    %7633 = vmatpush2.msra.mxu0 %v7012
    %7634 = vmatprep.subr.mxu0 %v7005
    %7635 = vmatpush2.msra.mxu0 %v7004
    %7636 = vmatprep.subr.mxu0 %v6997
    %7637 = vmatpush2.msra.mxu0 %v6996
    %7638 = vmatprep.subr.mxu0 %v6989
    %7639 = vmatpush2.msra.mxu0 %v6988
    %7640 = vmatprep.subr.mxu0 %v6981
    %7641 = vmatpush2.msra.mxu0 %v6980
    %7642 = vmatprep.subr.mxu0 %v6973
    %7643 = vmatpush2.msra.mxu0 %v6972
    %7644 = vmatprep.subr.mxu0 %v6965
    %7645 = vmatpush2.msra.mxu0 %v6964
    %7646 = vmatprep.subr.mxu0 %v6957
    %7647 = vmatpush2.msra.mxu0 %v6956
    %7648 = vmatprep.subr.mxu0 %v6949
    %7649 = vmatpush2.msra.mxu0 %v6948
    %7650 = vmatprep.subr.mxu0 %v6941
    %7651 = vmatpush2.msra.mxu0 %v6940
    %7652 = vmatprep.subr.mxu0 %v6933
    %7653 = vmatpush2.msra.mxu0 %v6932
    %7654 = vmatprep.subr.mxu0 %v6925
    %7655 = vmatpush2.msra.mxu0 %v6924
    %7656 = vmatprep.subr.mxu0 %v6917
    %7657 = vmatpush2.msra.mxu0 %v6916
    %7658 = vmatprep.subr.mxu0 %v6909
    %7659 = vmatpush2.msra.mxu0 %v6908
    %7660 = vmatprep.subr.mxu0 %v6901
    %7661 = vmatpush2.msra.mxu0 %v6900
    %7662 = vmatprep.mubr.f32.mxu0 %v6506
    %7663 = vmatmul.mubr.f32.gmra.mxu0 %v6505
    %v7664 = vpop.f32.mrf.mxu0
    %v7665 = vadd.f32 %v7594, %v7664
    %v7666 = vpop.f32.mrf.mxu0
    %v7667 = vadd.f32 %v7596, %v7666
    %7668 = vdwg.mxu0
    %7669 = vmatprep.subr.mxu0 0.0
    %7670 = vmatpush1.msra.mxu0 0.0
    %7671 = vmatprep.subr.mxu0 0.0
    %7672 = vmatpush1.msra.mxu0 0.0
    %7673 = vmatprep.subr.mxu0 0.0
    %7674 = vmatpush1.msra.mxu0 0.0
    %7675 = vmatprep.subr.mxu0 0.0
    %7676 = vmatpush1.msra.mxu0 0.0
    %7677 = vmatprep.subr.mxu0 0.0
    %7678 = vmatpush1.msra.mxu0 0.0
    %7679 = vmatprep.subr.mxu0 0.0
    %7680 = vmatpush1.msra.mxu0 0.0
    %7681 = vmatprep.subr.mxu0 0.0
    %7682 = vmatpush1.msra.mxu0 0.0
    %7683 = vmatprep.subr.mxu0 0.0
    %7684 = vmatpush1.msra.mxu0 0.0
    %7685 = vmatprep.subr.mxu0 0.0
    %7686 = vmatpush1.msra.mxu0 0.0
    %7687 = vmatprep.subr.mxu0 0.0
    %7688 = vmatpush1.msra.mxu0 0.0
    %7689 = vmatprep.subr.mxu0 0.0
    %7690 = vmatpush1.msra.mxu0 0.0
    %7691 = vmatprep.subr.mxu0 0.0
    %7692 = vmatpush1.msra.mxu0 0.0
    %7693 = vmatprep.subr.mxu0 %v7053
    %7694 = vmatpush1.msra.mxu0 %v7052
    %7695 = vmatprep.subr.mxu0 %v7045
    %7696 = vmatpush1.msra.mxu0 %v7044
    %7697 = vmatprep.subr.mxu0 %v7037
    %7698 = vmatpush1.msra.mxu0 %v7036
    %7699 = vmatprep.subr.mxu0 %v7029
    %7700 = vmatpush1.msra.mxu0 %v7028
    %7701 = vmatprep.subr.mxu0 0.0
    %7702 = vmatpush2.msra.mxu0 0.0
    %7703 = vmatprep.subr.mxu0 0.0
    %7704 = vmatpush2.msra.mxu0 0.0
    %7705 = vmatprep.subr.mxu0 0.0
    %7706 = vmatpush2.msra.mxu0 0.0
    %7707 = vmatprep.subr.mxu0 0.0
    %7708 = vmatpush2.msra.mxu0 0.0
    %7709 = vmatprep.subr.mxu0 0.0
    %7710 = vmatpush2.msra.mxu0 0.0
    %7711 = vmatprep.subr.mxu0 0.0
    %7712 = vmatpush2.msra.mxu0 0.0
    %7713 = vmatprep.subr.mxu0 0.0
    %7714 = vmatpush2.msra.mxu0 0.0
    %7715 = vmatprep.subr.mxu0 0.0
    %7716 = vmatpush2.msra.mxu0 0.0
    %7717 = vmatprep.subr.mxu0 0.0
    %7718 = vmatpush2.msra.mxu0 0.0
    %7719 = vmatprep.subr.mxu0 0.0
    %7720 = vmatpush2.msra.mxu0 0.0
    %7721 = vmatprep.subr.mxu0 0.0
    %7722 = vmatpush2.msra.mxu0 0.0
    %7723 = vmatprep.subr.mxu0 0.0
    %7724 = vmatpush2.msra.mxu0 0.0
    %7725 = vmatprep.subr.mxu0 0.0
    %7726 = vmatpush2.msra.mxu0 0.0
    %7727 = vmatprep.subr.mxu0 0.0
    %7728 = vmatpush2.msra.mxu0 0.0
    %7729 = vmatprep.subr.mxu0 0.0
    %7730 = vmatpush2.msra.mxu0 0.0
    %7731 = vmatprep.subr.mxu0 0.0
    %7732 = vmatpush2.msra.mxu0 0.0
    %7733 = vmatprep.mubr.f32.mxu0 0.0
    %7734 = vmatmul.mubr.f32.gmra.mxu0 %v7099
    %v7735 = vpop.f32.mrf.mxu0
    %v7736 = vadd.f32 %v7665, %v7735
    %v7737 = vpop.f32.mrf.mxu0
    %v7738 = vadd.f32 %v7667, %v7737
    %7739 = vdwg.mxu0
    %7740 = vmatprep.subr.mxu0 %v6639
    %7741 = vmatpush1.msra.mxu0 %v6638
    %7742 = vmatprep.subr.mxu0 %v6631
    %7743 = vmatpush1.msra.mxu0 %v6630
    %7744 = vmatprep.subr.mxu0 %v6623
    %7745 = vmatpush1.msra.mxu0 %v6622
    %7746 = vmatprep.subr.mxu0 %v6615
    %7747 = vmatpush1.msra.mxu0 %v6614
    %7748 = vmatprep.subr.mxu0 %v6607
    %7749 = vmatpush1.msra.mxu0 %v6606
    %7750 = vmatprep.subr.mxu0 %v6599
    %7751 = vmatpush1.msra.mxu0 %v6598
    %7752 = vmatprep.subr.mxu0 %v6591
    %7753 = vmatpush1.msra.mxu0 %v6590
    %7754 = vmatprep.subr.mxu0 %v6583
    %7755 = vmatpush1.msra.mxu0 %v6582
    %7756 = vmatprep.subr.mxu0 %v6575
    %7757 = vmatpush1.msra.mxu0 %v6574
    %7758 = vmatprep.subr.mxu0 %v6567
    %7759 = vmatpush1.msra.mxu0 %v6566
    %7760 = vmatprep.subr.mxu0 %v6559
    %7761 = vmatpush1.msra.mxu0 %v6558
    %7762 = vmatprep.subr.mxu0 %v6551
    %7763 = vmatpush1.msra.mxu0 %v6550
    %7764 = vmatprep.subr.mxu0 %v6543
    %7765 = vmatpush1.msra.mxu0 %v6542
    %7766 = vmatprep.subr.mxu0 %v6535
    %7767 = vmatpush1.msra.mxu0 %v6534
    %7768 = vmatprep.subr.mxu0 %v6527
    %7769 = vmatpush1.msra.mxu0 %v6526
    %7770 = vmatprep.subr.mxu0 %v6519
    %7771 = vmatpush1.msra.mxu0 %v6518
    %7772 = vmatprep.subr.mxu0 %v6767
    %7773 = vmatpush2.msra.mxu0 %v6766
    %7774 = vmatprep.subr.mxu0 %v6759
    %7775 = vmatpush2.msra.mxu0 %v6758
    %7776 = vmatprep.subr.mxu0 %v6751
    %7777 = vmatpush2.msra.mxu0 %v6750
    %7778 = vmatprep.subr.mxu0 %v6743
    %7779 = vmatpush2.msra.mxu0 %v6742
    %7780 = vmatprep.subr.mxu0 %v6735
    %7781 = vmatpush2.msra.mxu0 %v6734
    %7782 = vmatprep.subr.mxu0 %v6727
    %7783 = vmatpush2.msra.mxu0 %v6726
    %7784 = vmatprep.subr.mxu0 %v6719
    %7785 = vmatpush2.msra.mxu0 %v6718
    %7786 = vmatprep.subr.mxu0 %v6711
    %7787 = vmatpush2.msra.mxu0 %v6710
    %7788 = vmatprep.subr.mxu0 %v6703
    %7789 = vmatpush2.msra.mxu0 %v6702
    %7790 = vmatprep.subr.mxu0 %v6695
    %7791 = vmatpush2.msra.mxu0 %v6694
    %7792 = vmatprep.subr.mxu0 %v6687
    %7793 = vmatpush2.msra.mxu0 %v6686
    %7794 = vmatprep.subr.mxu0 %v6679
    %7795 = vmatpush2.msra.mxu0 %v6678
    %7796 = vmatprep.subr.mxu0 %v6671
    %7797 = vmatpush2.msra.mxu0 %v6670
    %7798 = vmatprep.subr.mxu0 %v6663
    %7799 = vmatpush2.msra.mxu0 %v6662
    %7800 = vmatprep.subr.mxu0 %v6655
    %7801 = vmatpush2.msra.mxu0 %v6654
    %7802 = vmatprep.subr.mxu0 %v6647
    %7803 = vmatpush2.msra.mxu0 %v6646
    %7804 = vmatprep.mubr.f32.mxu0 %v6504
    %7805 = vmatmul.mubr.f32.gmra.mxu0 %v6503
    %v7806 = vpop.f32.mrf.mxu0
    %v7807 = vadd.f32 %v7085, %v7806
    %v7808 = vpop.f32.mrf.mxu0
    %v7809 = vadd.f32 %v7089, %v7808
    %7810 = vdwg.mxu0
    %7811 = vmatprep.subr.mxu0 %v6895
    %7812 = vmatpush1.msra.mxu0 %v6894
    %7813 = vmatprep.subr.mxu0 %v6887
    %7814 = vmatpush1.msra.mxu0 %v6886
    %7815 = vmatprep.subr.mxu0 %v6879
    %7816 = vmatpush1.msra.mxu0 %v6878
    %7817 = vmatprep.subr.mxu0 %v6871
    %7818 = vmatpush1.msra.mxu0 %v6870
    %7819 = vmatprep.subr.mxu0 %v6863
    %7820 = vmatpush1.msra.mxu0 %v6862
    %7821 = vmatprep.subr.mxu0 %v6855
    %7822 = vmatpush1.msra.mxu0 %v6854
    %7823 = vmatprep.subr.mxu0 %v6847
    %7824 = vmatpush1.msra.mxu0 %v6846
    %7825 = vmatprep.subr.mxu0 %v6839
    %7826 = vmatpush1.msra.mxu0 %v6838
    %7827 = vmatprep.subr.mxu0 %v6831
    %7828 = vmatpush1.msra.mxu0 %v6830
    %7829 = vmatprep.subr.mxu0 %v6823
    %7830 = vmatpush1.msra.mxu0 %v6822
    %7831 = vmatprep.subr.mxu0 %v6815
    %7832 = vmatpush1.msra.mxu0 %v6814
    %7833 = vmatprep.subr.mxu0 %v6807
    %7834 = vmatpush1.msra.mxu0 %v6806
    %7835 = vmatprep.subr.mxu0 %v6799
    %7836 = vmatpush1.msra.mxu0 %v6798
    %7837 = vmatprep.subr.mxu0 %v6791
    %7838 = vmatpush1.msra.mxu0 %v6790
    %7839 = vmatprep.subr.mxu0 %v6783
    %7840 = vmatpush1.msra.mxu0 %v6782
    %7841 = vmatprep.subr.mxu0 %v6775
    %7842 = vmatpush1.msra.mxu0 %v6774
    %7843 = vmatprep.subr.mxu0 %v7023
    %7844 = vmatpush2.msra.mxu0 %v7022
    %7845 = vmatprep.subr.mxu0 %v7015
    %7846 = vmatpush2.msra.mxu0 %v7014
    %7847 = vmatprep.subr.mxu0 %v7007
    %7848 = vmatpush2.msra.mxu0 %v7006
    %7849 = vmatprep.subr.mxu0 %v6999
    %7850 = vmatpush2.msra.mxu0 %v6998
    %7851 = vmatprep.subr.mxu0 %v6991
    %7852 = vmatpush2.msra.mxu0 %v6990
    %7853 = vmatprep.subr.mxu0 %v6983
    %7854 = vmatpush2.msra.mxu0 %v6982
    %7855 = vmatprep.subr.mxu0 %v6975
    %7856 = vmatpush2.msra.mxu0 %v6974
    %7857 = vmatprep.subr.mxu0 %v6967
    %7858 = vmatpush2.msra.mxu0 %v6966
    %7859 = vmatprep.subr.mxu0 %v6959
    %7860 = vmatpush2.msra.mxu0 %v6958
    %7861 = vmatprep.subr.mxu0 %v6951
    %7862 = vmatpush2.msra.mxu0 %v6950
    %7863 = vmatprep.subr.mxu0 %v6943
    %7864 = vmatpush2.msra.mxu0 %v6942
    %7865 = vmatprep.subr.mxu0 %v6935
    %7866 = vmatpush2.msra.mxu0 %v6934
    %7867 = vmatprep.subr.mxu0 %v6927
    %7868 = vmatpush2.msra.mxu0 %v6926
    %7869 = vmatprep.subr.mxu0 %v6919
    %7870 = vmatpush2.msra.mxu0 %v6918
    %7871 = vmatprep.subr.mxu0 %v6911
    %7872 = vmatpush2.msra.mxu0 %v6910
    %7873 = vmatprep.subr.mxu0 %v6903
    %7874 = vmatpush2.msra.mxu0 %v6902
    %7875 = vmatprep.mubr.f32.mxu0 %v6506
    %7876 = vmatmul.mubr.f32.gmra.mxu0 %v6505
    %v7877 = vpop.f32.mrf.mxu0
    %v7878 = vadd.f32 %v7807, %v7877
    %v7879 = vpop.f32.mrf.mxu0
    %v7880 = vadd.f32 %v7809, %v7879
    %7881 = vdwg.mxu0
    %7882 = vmatprep.subr.mxu0 0.0
    %7883 = vmatpush1.msra.mxu0 0.0
    %7884 = vmatprep.subr.mxu0 0.0
    %7885 = vmatpush1.msra.mxu0 0.0
    %7886 = vmatprep.subr.mxu0 0.0
    %7887 = vmatpush1.msra.mxu0 0.0
    %7888 = vmatprep.subr.mxu0 0.0
    %7889 = vmatpush1.msra.mxu0 0.0
    %7890 = vmatprep.subr.mxu0 0.0
    %7891 = vmatpush1.msra.mxu0 0.0
    %7892 = vmatprep.subr.mxu0 0.0
    %7893 = vmatpush1.msra.mxu0 0.0
    %7894 = vmatprep.subr.mxu0 0.0
    %7895 = vmatpush1.msra.mxu0 0.0
    %7896 = vmatprep.subr.mxu0 0.0
    %7897 = vmatpush1.msra.mxu0 0.0
    %7898 = vmatprep.subr.mxu0 0.0
    %7899 = vmatpush1.msra.mxu0 0.0
    %7900 = vmatprep.subr.mxu0 0.0
    %7901 = vmatpush1.msra.mxu0 0.0
    %7902 = vmatprep.subr.mxu0 0.0
    %7903 = vmatpush1.msra.mxu0 0.0
    %7904 = vmatprep.subr.mxu0 0.0
    %7905 = vmatpush1.msra.mxu0 0.0
    %7906 = vmatprep.subr.mxu0 %v7055
    %7907 = vmatpush1.msra.mxu0 %v7054
    %7908 = vmatprep.subr.mxu0 %v7047
    %7909 = vmatpush1.msra.mxu0 %v7046
    %7910 = vmatprep.subr.mxu0 %v7039
    %7911 = vmatpush1.msra.mxu0 %v7038
    %7912 = vmatprep.subr.mxu0 %v7031
    %7913 = vmatpush1.msra.mxu0 %v7030
    %7914 = vmatprep.subr.mxu0 0.0
    %7915 = vmatpush2.msra.mxu0 0.0
    %7916 = vmatprep.subr.mxu0 0.0
    %7917 = vmatpush2.msra.mxu0 0.0
    %7918 = vmatprep.subr.mxu0 0.0
    %7919 = vmatpush2.msra.mxu0 0.0
    %7920 = vmatprep.subr.mxu0 0.0
    %7921 = vmatpush2.msra.mxu0 0.0
    %7922 = vmatprep.subr.mxu0 0.0
    %7923 = vmatpush2.msra.mxu0 0.0
    %7924 = vmatprep.subr.mxu0 0.0
    %7925 = vmatpush2.msra.mxu0 0.0
    %7926 = vmatprep.subr.mxu0 0.0
    %7927 = vmatpush2.msra.mxu0 0.0
    %7928 = vmatprep.subr.mxu0 0.0
    %7929 = vmatpush2.msra.mxu0 0.0
    %7930 = vmatprep.subr.mxu0 0.0
    %7931 = vmatpush2.msra.mxu0 0.0
    %7932 = vmatprep.subr.mxu0 0.0
    %7933 = vmatpush2.msra.mxu0 0.0
    %7934 = vmatprep.subr.mxu0 0.0
    %7935 = vmatpush2.msra.mxu0 0.0
    %7936 = vmatprep.subr.mxu0 0.0
    %7937 = vmatpush2.msra.mxu0 0.0
    %7938 = vmatprep.subr.mxu0 0.0
    %7939 = vmatpush2.msra.mxu0 0.0
    %7940 = vmatprep.subr.mxu0 0.0
    %7941 = vmatpush2.msra.mxu0 0.0
    %7942 = vmatprep.subr.mxu0 0.0
    %7943 = vmatpush2.msra.mxu0 0.0
    %7944 = vmatprep.subr.mxu0 0.0
    %7945 = vmatpush2.msra.mxu0 0.0
    %7946 = vmatprep.mubr.f32.mxu0 0.0
    %7947 = vmatmul.mubr.f32.gmra.mxu0 %v7099
    %v7948 = vpop.f32.mrf.mxu0
    %v7949 = vadd.f32 %v7878, %v7948
    %v7950 = vpop.f32.mrf.mxu0
    %v7951 = vadd.f32 %v7880, %v7950
    %7952 = vdwg.mxu0
    %v7953 = vxor.u32 %v7310, 2147483648
    %v7954 = vxor.u32 %v7312, 2147483648
    %v7955 = vmul.f32 %v7953, 1.442695
    %v7956 = vpow.pop %v7955
    %v7957 = vmul.f32 %v7954, 1.442695
    %v7958 = vpow.pop %v7957
    %v7959 = vadd.f32 %v7956, 1.0
    %v7960 = vadd.f32 %v7958, 1.0
    %v7961 = vrcp.pop %v7959
    %v7962 = vmul.f32 1.0, %v7961
    %v7963 = vrcp.pop %v7960
    %v7964 = vmul.f32 1.0, %v7963
    %v7965 = vxor.u32 %v7523, 2147483648
    %v7966 = vxor.u32 %v7525, 2147483648
    %v7967 = vmul.f32 %v7965, 1.442695
    %v7968 = vpow.pop %v7967
    %v7969 = vmul.f32 %v7966, 1.442695
    %v7970 = vpow.pop %v7969
    %v7971 = vadd.f32 %v7968, 1.0
    %v7972 = vadd.f32 %v7970, 1.0
    %v7973 = vrcp.pop %v7971
    %v7974 = vmul.f32 1.0, %v7973
    %v7975 = vrcp.pop %v7972
    %v7976 = vmul.f32 1.0, %v7975
    %v7977 = vtanh.pop %v7736
    %v7978 = vtanh.pop %v7738
    %v7979 = vxor.u32 %v7949, 2147483648
    %v7980 = vxor.u32 %v7951, 2147483648
    %v7981 = vmul.f32 %v7979, 1.442695
    %v7982 = vpow.pop %v7981
    %v7983 = vmul.f32 %v7980, 1.442695
    %v7984 = vpow.pop %v7983
    %v7985 = vadd.f32 %v7982, 1.0
    %v7986 = vadd.f32 %v7984, 1.0
    %v7987 = vrcp.pop %v7985
    %v7988 = vmul.f32 1.0, %v7987
    %v7989 = vrcp.pop %v7986
    %v7990 = vmul.f32 1.0, %v7989
    %v7991 = vld [vmem:[%s2] sm:$0xf]
    %v7994 = vunpack.c.l.s4 1983009808
    %v7995 = vunpack.c.0.s8 %v7994
    %v7996 = vlaneseq
    %v7997 = vshrl.u32 %v7996, 7
    %v7998 = vsub.s32 %v7995, %v7997
    %v7999 = vrot.slane %v7991, %v7998
    %v8000 = vcombine.high %v7999, %v7999
    %v8003 = vmul.f32 %v7974, %v7999
    %v8004 = vmul.f32 %v7976, %v8000
    %v8005 = vmul.f32 %v7962, %v7977
    %v8006 = vmul.f32 %v7964, %v7978
    %v8007 = vadd.f32 %v8003, %v8005
    %v8008 = vadd.f32 %v8004, %v8006
    %v8009 = vtanh.pop %v8007
    %v8010 = vtanh.pop %v8008
    %v8011 = vmul.f32 %v7988, %v8009
    %v8012 = vmul.f32 %v7990, %v8010
    %v8015 = vcombine.low %v8007, %v8008
    %v8017 = vunpack.c.l.s4 1983009808
    %v8018 = vunpack.c.0.s8 %v8017
    %v8019 = vlaneseq
    %v8020 = vshrl.u32 %v8019, 7
    %v8021 = vsub.s32 %v8018, %v8020
    %v8022 = vrot.slane %v8015, %v8021
    %8024 = vst [vmem:[#allocation12] sm:$0xf] %v8022
    %v8027 = vcombine.low %v8011, %v8012
    %v8029 = vunpack.c.l.s4 1983009808
    %v8030 = vunpack.c.0.s8 %v8029
    %v8031 = vlaneseq
    %v8032 = vshrl.u32 %v8031, 7
    %v8033 = vsub.s32 %v8030, %v8032
    %v8034 = vrot.slane %v8027, %v8033
    %8036 = vst [vmem:[#allocation10] sm:$0xf] %v8034
    %v8037 = vld [vmem:[%s17] sm:$0xff]
    %v8038 = vld [vmem:[%s17 + $0x8] sm:$0xff]
    %v8039 = vld [vmem:[%s17 + $0x10] sm:$0xff]
    %v8040 = vld [vmem:[%s17 + $0x18] sm:$0xff]
    %v8041 = vld [vmem:[%s17 + $0x20] sm:$0xff]
    %v8042 = vld [vmem:[%s17 + $0x28] sm:$0xff]
    %v8043 = vld [vmem:[%s17 + $0x30] sm:$0xff]
    %v8044 = vld [vmem:[%s17 + $0x38] sm:$0xff]
    %v8045 = vld [vmem:[%s17 + $0x40] sm:$0xff]
    %v8046 = vld [vmem:[%s17 + $0x48] sm:$0xff]
    %v8047 = vld [vmem:[%s17 + $0x50] sm:$0xff]
    %v8048 = vld [vmem:[%s17 + $0x58] sm:$0xff]
    %v8049 = vld [vmem:[%s17 + $0x60] sm:$0xff]
    %v8050 = vld [vmem:[%s17 + $0x68] sm:$0xff]
    %v8051 = vld [vmem:[%s17 + $0x70] sm:$0xff]
    %v8052 = vld [vmem:[%s17 + $0x78] sm:$0xff]
    %v8053 = vld [vmem:[%s17 + $0x80] sm:$0xff]
    %v8054 = vld [vmem:[%s17 + $0x88] sm:$0xff]
    %v8055 = vld [vmem:[%s17 + $0x90] sm:$0xff]
    %v8056 = vld [vmem:[%s17 + $0x98] sm:$0xff]
    %v8057 = vld [vmem:[%s17 + $0xa0] sm:$0xff]
    %v8058 = vld [vmem:[%s17 + $0xa8] sm:$0xff]
    %v8059 = vld [vmem:[%s17 + $0xb0] sm:$0xff]
    %v8060 = vld [vmem:[%s17 + $0xb8] sm:$0xff]
    %v8061 = vld [vmem:[%s17 + $0xc0] sm:$0xff]
    %v8062 = vld [vmem:[%s17 + $0xc8] sm:$0xff]
    %v8063 = vld [vmem:[%s17 + $0xd0] sm:$0xff]
    %v8064 = vld [vmem:[%s17 + $0xd8] sm:$0xff]
    %v8065 = vld [vmem:[%s17 + $0xe0] sm:$0xff]
    %v8066 = vld [vmem:[%s17 + $0xe8] sm:$0xff]
    %v8067 = vld [vmem:[%s17 + $0xf0] sm:$0xff]
    %v8068 = vld [vmem:[%s17 + $0xf8] sm:$0xff]
    %v8069 = vld [vmem:[%s18] sm:$0x1]
    %v8071 = vlaneseq
    %v8072 = vshrl.u32 %v8071, 7
    %v8073 = vsub.s32 0, %v8072
    %v8074 = vrot.slane %v8069, %v8073
    %8076 = vmatprep.subr.mxu0 0.0
    %8077 = vmatpush1.msra.mxu0 %v8052
    %8078 = vmatprep.subr.mxu0 0.0
    %8079 = vmatpush1.msra.mxu0 %v8051
    %8080 = vmatprep.subr.mxu0 0.0
    %8081 = vmatpush1.msra.mxu0 %v8050
    %8082 = vmatprep.subr.mxu0 0.0
    %8083 = vmatpush1.msra.mxu0 %v8049
    %8084 = vmatprep.subr.mxu0 0.0
    %8085 = vmatpush1.msra.mxu0 %v8048
    %8086 = vmatprep.subr.mxu0 0.0
    %8087 = vmatpush1.msra.mxu0 %v8047
    %8088 = vmatprep.subr.mxu0 0.0
    %8089 = vmatpush1.msra.mxu0 %v8046
    %8090 = vmatprep.subr.mxu0 0.0
    %8091 = vmatpush1.msra.mxu0 %v8045
    %8092 = vmatprep.subr.mxu0 0.0
    %8093 = vmatpush1.msra.mxu0 %v8044
    %8094 = vmatprep.subr.mxu0 0.0
    %8095 = vmatpush1.msra.mxu0 %v8043
    %8096 = vmatprep.subr.mxu0 0.0
    %8097 = vmatpush1.msra.mxu0 %v8042
    %8098 = vmatprep.subr.mxu0 0.0
    %8099 = vmatpush1.msra.mxu0 %v8041
    %8100 = vmatprep.subr.mxu0 0.0
    %8101 = vmatpush1.msra.mxu0 %v8040
    %8102 = vmatprep.subr.mxu0 0.0
    %8103 = vmatpush1.msra.mxu0 %v8039
    %8104 = vmatprep.subr.mxu0 0.0
    %8105 = vmatpush1.msra.mxu0 %v8038
    %8106 = vmatprep.subr.mxu0 0.0
    %8107 = vmatpush1.msra.mxu0 %v8037
    %8108 = vmatprep.subr.mxu0 0.0
    %8109 = vmatpush2.msra.mxu0 %v8068
    %8110 = vmatprep.subr.mxu0 0.0
    %8111 = vmatpush2.msra.mxu0 %v8067
    %8112 = vmatprep.subr.mxu0 0.0
    %8113 = vmatpush2.msra.mxu0 %v8066
    %8114 = vmatprep.subr.mxu0 0.0
    %8115 = vmatpush2.msra.mxu0 %v8065
    %8116 = vmatprep.subr.mxu0 0.0
    %8117 = vmatpush2.msra.mxu0 %v8064
    %8118 = vmatprep.subr.mxu0 0.0
    %8119 = vmatpush2.msra.mxu0 %v8063
    %8120 = vmatprep.subr.mxu0 0.0
    %8121 = vmatpush2.msra.mxu0 %v8062
    %8122 = vmatprep.subr.mxu0 0.0
    %8123 = vmatpush2.msra.mxu0 %v8061
    %8124 = vmatprep.subr.mxu0 0.0
    %8125 = vmatpush2.msra.mxu0 %v8060
    %8126 = vmatprep.subr.mxu0 0.0
    %8127 = vmatpush2.msra.mxu0 %v8059
    %8128 = vmatprep.subr.mxu0 0.0
    %8129 = vmatpush2.msra.mxu0 %v8058
    %8130 = vmatprep.subr.mxu0 0.0
    %8131 = vmatpush2.msra.mxu0 %v8057
    %8132 = vmatprep.subr.mxu0 0.0
    %8133 = vmatpush2.msra.mxu0 %v8056
    %8134 = vmatprep.subr.mxu0 0.0
    %8135 = vmatpush2.msra.mxu0 %v8055
    %8136 = vmatprep.subr.mxu0 0.0
    %8137 = vmatpush2.msra.mxu0 %v8054
    %8138 = vmatprep.subr.mxu0 0.0
    %8139 = vmatpush2.msra.mxu0 %v8053
    %8140 = vmatprep.mubr.f32.mxu0 %v8012
    %8141 = vmatmul.mubr.f32.gmra.mxu0 %v8011
    %v8142 = vpop.f32.mrf.mxu0
    %v8143 = vadd.f32 %v8074, %v8142
    %v8144 = vpop.f32.mrf.mxu0
    %8145 = vdwg.mxu0
    %vm8146 = vcmask 1024
    %8147 = vst.msk [vmem:[%s19] sm:$0x3] %vm8146, %v8143
    %vm8148 = vcmask 50184
    %v8149 = vsel %vm8148, %v8143, -inf
    %8150 = vmax.xlane.f32.xlu0 %v8149
    %v8151 = vpop.xlane.xlu0 %8150
    %v8152 = vsub.f32 %v8143, %v8151
    %v8153 = vmul.f32 %v8152, 1.442695
    %v8154 = vpow.pop %v8153
    %8156 = vrot.lane.b32.xlu0 %v8154, 127
    %v8157 = vpop.permute.xlu0 %8156
    %vm8159 = vcmask 41984
    %v8160 = vsel %vm8159, %v8157, 0.0
    %8161 = vadd.xlane.f32.xlu0 %v8160
    %v8162 = vpop.xlane.xlu0 %8161
    %v8163 = vrcp.pop %v8162
    %v8164 = vmul.f32 %v8154, %v8163
    %8166 = vrot.lane.b32.xlu0 %v8164, 127
    %v8167 = vpop.permute.xlu0 %8166
    %8169 = vst.msk [vmem:[#allocation9] sm:$0x3] %vm8159, %v8167
    // Predicated region
    $region86: #{actor_critic_forward.1} parent=1 // pred_check
      _
    $region87: #{actor_critic_forward.1} parent=1 // pred_check_branch
      %8171 = sbr.rel (0) target = $region89
    $region88: #{actor_critic_forward.1} parent=1 // pred_region
      _
    $region89: #{actor_critic_forward.1} parent=1 // pred_fallthru
      _
    // Predicated region
    $region90: #{actor_critic_forward.1} parent=1 // pred_check
      _
    $region91: #{actor_critic_forward.1} parent=1 // pred_check_branch
      %8173 = sbr.rel (0) target = $region93
    $region92: #{actor_critic_forward.1} parent=1 // pred_region
      %s8175 = ssub.s32 32, 32
      %8176 = vsyncadd [#allocation6], %s8175
      %s8178 = sshll.u32 [#allocation9], 4
      %s8179 = int_to_ptr.vmem [resolvable:$true] %s8178
      %8181 = dma.vmem_to_hbm [thread:$0]  %s8179, 32, %s20, [#allocation6]
    $region93: #{actor_critic_forward.1} parent=1 // pred_fallthru
      _
    // Predicated region
    $region94: #{actor_critic_forward.1} parent=1 // pred_check
      _
    $region95: #{actor_critic_forward.1} parent=1 // pred_check_branch
      %8183 = sbr.rel (0) target = $region97
    $region96: #{actor_critic_forward.1} parent=1 // pred_region
      %s8185 = ssub.s32 64, 64
      %8186 = vsyncadd [#allocation11], %s8185
      %s8188 = sshll.u32 [#allocation10], 4
      %s8189 = int_to_ptr.vmem [resolvable:$true] %s8188
      %8191 = dma.vmem_to_hbm [thread:$0]  %s8189, 64, %s21, [#allocation11]
    $region97: #{actor_critic_forward.1} parent=1 // pred_fallthru
      _
    // Predicated region
    $region98: #{actor_critic_forward.1} parent=1 // pred_check
      _
    $region99: #{actor_critic_forward.1} parent=1 // pred_check_branch
      %8193 = sbr.rel (0) target = $region101
    $region100: #{actor_critic_forward.1} parent=1 // pred_region
      %s8195 = ssub.s32 64, 64
      %8196 = vsyncadd [#allocation11], %s8195
      %s8198 = sshll.u32 [#allocation12], 4
      %s8199 = int_to_ptr.vmem [resolvable:$true] %s8198
      %8201 = dma.vmem_to_hbm [thread:$0]  %s8199, 64, %s22, [#allocation11]
    $region101: #{actor_critic_forward.1} parent=1 // pred_fallthru
      _
    // Predicated region
    $region102: #{actor_critic_forward.1} parent=1 // pred_check
      _
    $region103: #{actor_critic_forward.1} parent=1 // pred_check_branch
      %8203 = sbr.rel (0) target = $region105
    $region104: #{actor_critic_forward.1} parent=1 // pred_region
      _
    $region105: #{actor_critic_forward.1} parent=1 // pred_fallthru
      _
    // Predicated region
    $region106: #{actor_critic_forward.1} parent=1 // pred_check
      _
    $region107: #{actor_critic_forward.1} parent=1 // pred_check_branch
      %8205 = sbr.rel (0) target = $region109
    $region108: #{actor_critic_forward.1} parent=1 // pred_region
      %8206 = dma.done [#allocation6], 32
    $region109: #{actor_critic_forward.1} parent=1 // pred_fallthru
      _
    // Predicated region
    $region110: #{actor_critic_forward.1} parent=1 // pred_check
      _
    $region111: #{actor_critic_forward.1} parent=1 // pred_check_branch
      %8208 = sbr.rel (0) target = $region113
    $region112: #{actor_critic_forward.1} parent=1 // pred_region
      %8209 = dma.done [#allocation11], 64
    $region113: #{actor_critic_forward.1} parent=1 // pred_fallthru
      _
    // Predicated region
    $region114: #{actor_critic_forward.1} parent=1 // pred_check
      _
    $region115: #{actor_critic_forward.1} parent=1 // pred_check_branch
      %8211 = sbr.rel (0) target = $region117
    $region116: #{actor_critic_forward.1} parent=1 // pred_region
      %8212 = dma.done [#allocation11], 64
    $region117: #{actor_critic_forward.1} parent=1 // pred_fallthru
      _
    %8213 = vsyncpa [#allocation5], 1
    %8214 = vsyncpa [#allocation8], 1
    %8215 = vsyncpa [#allocation6], 1
    %8216 = vsyncpa [#allocation11], 1
  %8217 = vsyncmov [#allocation3]
  %s8218 = vpop.sfrf %8217
  %p8219 = scmp.eq.s32.totalorder %s8218, 0
  %p8220 = pneg %p8219
  %8222 = shalt.err (%p8220)

</llo_original>
